<compile_context>
chip_gen: v7x
topology: tpu7x:2x2x1
jax: 0.10.0
libtpu: 0.0.40
codegen_flags: <defaults>
</compile_context>

<pallas_src>
import functools

import jax
import jax.numpy as jnp
from jax.experimental import pallas as pl
from jax.experimental.pallas import tpu as pltpu


# ----------------------------------------------------------------------------
# In-kernel math helpers
# ----------------------------------------------------------------------------
def _erf(x):
    # Abramowitz & Stegun 7.1.26 rational approximation (max abs err ~1.5e-7),
    # i.e. exact to float32 precision.  torch nn.GELU() is the erf-based GELU.
    a1, a2, a3, a4, a5 = 0.254829592, -0.284496736, 1.421413741, -1.453152027, 1.061405429
    p = 0.3275911
    sign = jnp.where(x >= 0.0, 1.0, -1.0)
    ax = jnp.abs(x)
    t = 1.0 / (1.0 + p * ax)
    poly = ((((a5 * t + a4) * t + a3) * t + a2) * t + a1) * t
    return sign * (1.0 - poly * jnp.exp(-ax * ax))


def _gelu_exact(x):
    return 0.5 * x * (1.0 + _erf(x * 0.7071067811865476))


# ----------------------------------------------------------------------------
# Fused decoder kernel (one grid step == one batch element, all layers)
# ----------------------------------------------------------------------------
def _decoder_kernel(qpe_ref, keys_ref, kpe_ref,
                    sa_wq_ref, sa_wk_ref, sa_wv_ref, sa_wp_ref, sa_bp_ref,
                    ca_wq_ref, ca_wk_ref, ca_wv_ref, ca_wp_ref, ca_bp_ref,
                    ff_w1_ref, ff_b1_ref, ff_w2_ref, ff_b2_ref,
                    ln1_g_ref, ln1_b_ref, ln2_g_ref, ln2_b_ref,
                    ln3_g_ref, ln3_b_ref,
                    out_ref, *, depth, heads):
    f32 = jnp.float32
    q_pe = qpe_ref[0]          # (Nq, D) — point embedding (initial queries AND query_pe)
    keys = keys_ref[0]         # (Nk, D) — flattened image embedding
    k_pe = kpe_ref[0]          # (Nk, D) — flattened image positional encoding

    def bh(x):                 # broadcast along a new leading head axis
        return jnp.broadcast_to(x, (heads,) + x.shape)

    def layernorm(z, g, b):    # eps=1e-5 (torch default), biased variance
        mean = jnp.mean(z, axis=-1, keepdims=True)
        zc = z - mean
        var = jnp.mean(zc * zc, axis=-1, keepdims=True)
        return zc * jax.lax.rsqrt(var + 1e-5) * g + b

    def mha(xq_b, xk_b, xv_b, wq_h, wk_h, wv_h, wp_h, bp):
        # xq_b/xk_b/xv_b: (heads, N, D) head-broadcast activations
        # wq_h/wk_h/wv_h: (heads, D, dh)  (attention scale folded into wq_h)
        # wp_h: (heads, dh, D); bp: (1, D)
        qh = jnp.einsum('hnd,hde->hne', xq_b, wq_h, preferred_element_type=f32)
        kh = jnp.einsum('hnd,hde->hne', xk_b, wk_h, preferred_element_type=f32)
        vh = jnp.einsum('hnd,hde->hne', xv_b, wv_h, preferred_element_type=f32)
        dots = jnp.einsum('hqe,hke->hqk', qh, kh, preferred_element_type=f32)
        m = jnp.max(dots, axis=-1, keepdims=True)
        e = jnp.exp(dots - m)
        denom = jnp.sum(e, axis=-1, keepdims=True)
        attn = e * pl.reciprocal(denom, approx=True)        # divide on the EUP slot
        outh = jnp.einsum('hqk,hke->hqe', attn, vh, preferred_element_type=f32)
        proj = jnp.einsum('hqe,heo->hqo', outh, wp_h, preferred_element_type=f32)
        return jnp.sum(proj, axis=0) + bp                   # concat-free output proj

    # Hoisted out of the layer loop: image tokens (±pe) never change.
    keys_b = bh(keys)
    keys_pe_b = bh(keys + k_pe)

    queries = q_pe
    for l in range(depth):                                  # static unroll over layers
        # ---- self-attention ----
        if l == 0:
            # skip_first_layer_pe: queries = norm1(self_attn(q, q, q)), no residual
            qb = bh(queries)
            queries = mha(qb, qb, qb,
                          sa_wq_ref[l], sa_wk_ref[l], sa_wv_ref[l],
                          sa_wp_ref[l], sa_bp_ref[l])
        else:
            q_in = queries + q_pe
            qb = bh(q_in)
            attn = mha(qb, qb, bh(queries),
                       sa_wq_ref[l], sa_wk_ref[l], sa_wv_ref[l],
                       sa_wp_ref[l], sa_bp_ref[l])
            queries = queries + attn
        queries = layernorm(queries, ln1_g_ref[l], ln1_b_ref[l])

        # ---- cross-attention (queries attend to image tokens) ----
        qb = bh(queries + q_pe)
        attn = mha(qb, keys_pe_b, keys_b,
                   ca_wq_ref[l], ca_wk_ref[l], ca_wv_ref[l],
                   ca_wp_ref[l], ca_bp_ref[l])
        queries = queries + attn
        queries = layernorm(queries, ln2_g_ref[l], ln2_b_ref[l])

        # ---- MLP: Linear -> GELU(exact) -> Linear (dropout p=0 == identity) ----
        h = jnp.dot(queries, ff_w1_ref[l], preferred_element_type=f32) + ff_b1_ref[l]
        h = _gelu_exact(h)
        mlp = jnp.dot(h, ff_w2_ref[l], preferred_element_type=f32) + ff_b2_ref[l]
        queries = layernorm(queries + mlp, ln3_g_ref[l], ln3_b_ref[l])

    out_ref[0] = queries.astype(out_ref.dtype)


# ----------------------------------------------------------------------------
# pallas_call wrapper
# ----------------------------------------------------------------------------
_WEIGHT_ORDER = ("sa_wq", "sa_wk", "sa_wv", "sa_wp", "sa_bp",
                 "ca_wq", "ca_wk", "ca_wv", "ca_wp", "ca_bp",
                 "ff_w1", "ff_b1", "ff_w2", "ff_b2",
                 "ln1_g", "ln1_b", "ln2_g", "ln2_b", "ln3_g", "ln3_b")


def _run_decoder(packed, point_embedding, keys, key_pe, *, heads):
    B, Nq, D = point_embedding.shape
    Nk = keys.shape[1]
    depth = packed["sa_wq"].shape[0]

    kern = functools.partial(_decoder_kernel, depth=depth, heads=heads)

    def tok_spec(n):
        return pl.BlockSpec((1, n, D), lambda b: (b, 0, 0))

    def full_spec(arr):
        nd = arr.ndim                      # constant block index -> DMA'd once
        return pl.BlockSpec(arr.shape, lambda b: (0,) * nd)

    weights = [packed[name] for name in _WEIGHT_ORDER]
    in_specs = [tok_spec(Nq), tok_spec(Nk), tok_spec(Nk)] + [full_spec(w) for w in weights]

    return pl.pallas_call(
        kern,
        out_shape=jax.ShapeDtypeStruct((B, Nq, D), jnp.float32),
        grid=(B,),
        in_specs=in_specs,
        out_specs=pl.BlockSpec((1, Nq, D), lambda b: (b, 0, 0)),
        compiler_params=pltpu.CompilerParams(
            dimension_semantics=("parallel",)),   # batch across 2 TCs on v7x
    )(point_embedding, keys, key_pe, *weights)


@functools.partial(jax.jit, static_argnames=("heads",))
def transformer_decoder_forward(packed, image_embedding, image_pe, point_embedding, *, heads):
    """Matches TransformerDecoder.forward: returns (processed queries, flattened keys)."""
    bs, c, h, w = image_embedding.shape
    # flatten(2).permute(0, 2, 1): (B, C, H, W) -> (B, H*W, C)
    keys = image_embedding.reshape(bs, c, h * w).transpose(0, 2, 1)
    key_pe = image_pe.reshape(bs, c, h * w).transpose(0, 2, 1)
    queries = _run_decoder(packed, point_embedding, keys, key_pe, heads=heads)
    return queries, keys


# ----------------------------------------------------------------------------
# Parameter construction (deterministic, synthetic) + packing for the kernel
# ----------------------------------------------------------------------------
def _attn_params(key, dim, heads, dim_head):
    # to_q/to_k/to_v: bias=False (as in the reference); proj: bias=True.
    inner = heads * dim_head
    k1, k2, k3, k4 = jax.random.split(key, 4)
    s = 0.02
    return {
        "wq": (jax.random.normal(k1, (dim, inner)) * s).astype(jnp.float32),
        "wk": (jax.random.normal(k2, (dim, inner)) * s).astype(jnp.float32),
        "wv": (jax.random.normal(k3, (dim, inner)) * s).astype(jnp.float32),
        "wp": (jax.random.normal(k4, (inner, dim)) * s).astype(jnp.float32),
        "bp": jnp.zeros((1, dim), jnp.float32),
    }


def _ffn_params(key, dim, mlp_dim):
    k1, k2 = jax.random.split(key, 2)
    s = 0.02
    return {
        "w1": (jax.random.normal(k1, (dim, mlp_dim)) * s).astype(jnp.float32),
        "b1": jnp.zeros((1, mlp_dim), jnp.float32),
        "w2": (jax.random.normal(k2, (mlp_dim, dim)) * s).astype(jnp.float32),
        "b2": jnp.zeros((1, dim), jnp.float32),
    }


def _ln_params(dim):
    return {"g": jnp.ones((1, dim), jnp.float32), "b": jnp.zeros((1, dim), jnp.float32)}


def init_decoder_params(key, depth, dim, heads, dim_head, mlp_dim):
    layers = []
    for _ in range(depth):
        key, k_sa, k_ca, k_ff = jax.random.split(key, 4)
        layers.append({
            "self_attn": _attn_params(k_sa, dim, heads, dim_head),
            "cross_attn": _attn_params(k_ca, dim, heads, dim_head),
            "ffn": _ffn_params(k_ff, dim, mlp_dim),
            "norm1": _ln_params(dim),
            "norm2": _ln_params(dim),
            "norm3": _ln_params(dim),
        })
    return layers   # layer 0 is the skip_first_layer_pe layer (handled in-kernel)


def pack_decoder_params(layers, *, heads, dim_head):
    """Stack per-layer params along a leading layer axis and pre-split attention
    weights per head (so the kernel needs no activation reshapes).  The
    1/sqrt(dim_head) attention scale is folded into the Q weights."""
    scale = float(dim_head) ** -0.5

    def stack(fn):
        return jnp.stack([fn(p) for p in layers], axis=0)

    def head_in(w):   # (D, inner) -> (heads, D, dh); inner splits as (h, d)
        d_model, _ = w.shape
        return w.reshape(d_model, heads, dim_head).transpose(1, 0, 2)

    def head_out(w):  # (inner, D) -> (heads, dh, D)
        _, d_model = w.shape
        return w.reshape(heads, dim_head, d_model)

    packed = {}
    for src, dst in (("self_attn", "sa"), ("cross_attn", "ca")):
        packed[f"{dst}_wq"] = stack(lambda p, s=src: head_in(p[s]["wq"]) * scale)
        packed[f"{dst}_wk"] = stack(lambda p, s=src: head_in(p[s]["wk"]))
        packed[f"{dst}_wv"] = stack(lambda p, s=src: head_in(p[s]["wv"]))
        packed[f"{dst}_wp"] = stack(lambda p, s=src: head_out(p[s]["wp"]))
        packed[f"{dst}_bp"] = stack(lambda p, s=src: p[s]["bp"])
    packed["ff_w1"] = stack(lambda p: p["ffn"]["w1"])
    packed["ff_b1"] = stack(lambda p: p["ffn"]["b1"])
    packed["ff_w2"] = stack(lambda p: p["ffn"]["w2"])
    packed["ff_b2"] = stack(lambda p: p["ffn"]["b2"])
    for i, name in ((1, "norm1"), (2, "norm2"), (3, "norm3")):
        packed[f"ln{i}_g"] = stack(lambda p, n=name: p[n]["g"])
        packed[f"ln{i}_b"] = stack(lambda p, n=name: p[n]["b"])
    return packed


# ----------------------------------------------------------------------------
if __name__ == "__main__":
    depth = 2
    embedding_dim = 32
    num_heads = 4
    head_dim = 8
    mlp_dim = 64

    B, H, W = 2, 4, 4
    N_points = 8

    key = jax.random.PRNGKey(0)
    k_img, k_pe, k_pts, k_params = jax.random.split(key, 4)
    image_embedding = jax.random.normal(k_img, (B, embedding_dim, H, W), jnp.float32)
    image_pe = jax.random.normal(k_pe, (B, embedding_dim, H, W), jnp.float32)
    point_embedding = jax.random.normal(k_pts, (B, N_points, embedding_dim), jnp.float32)

    layer_params = init_decoder_params(k_params, depth, embedding_dim,
                                       num_heads, head_dim, mlp_dim)
    packed = pack_decoder_params(layer_params, heads=num_heads, dim_head=head_dim)

    queries_out, keys_out = transformer_decoder_forward(
        packed, image_embedding, image_pe, point_embedding, heads=num_heads)

    jax.block_until_ready((queries_out, keys_out))
    assert queries_out.shape == (B, N_points, embedding_dim)
    assert keys_out.shape == (B, H * W, embedding_dim)
    assert bool(jnp.all(jnp.isfinite(queries_out)))
    print("KERNEL_OK")
</pallas_src>

<mosaic_0001>
module attributes {stable_mosaic.version = 11 : i64} {
  func.func @_decoder_kernel(%arg0: i32, %arg1: memref<1x8x32xf32, #tpu.memory_space<vmem>>, %arg2: memref<1x16x32xf32, #tpu.memory_space<vmem>>, %arg3: memref<1x16x32xf32, #tpu.memory_space<vmem>>, %arg4: memref<2x4x32x8xf32, #tpu.memory_space<vmem>>, %arg5: memref<2x4x32x8xf32, #tpu.memory_space<vmem>>, %arg6: memref<2x4x32x8xf32, #tpu.memory_space<vmem>>, %arg7: memref<2x4x8x32xf32, #tpu.memory_space<vmem>>, %arg8: memref<2x1x32xf32, #tpu.memory_space<vmem>>, %arg9: memref<2x4x32x8xf32, #tpu.memory_space<vmem>>, %arg10: memref<2x4x32x8xf32, #tpu.memory_space<vmem>>, %arg11: memref<2x4x32x8xf32, #tpu.memory_space<vmem>>, %arg12: memref<2x4x8x32xf32, #tpu.memory_space<vmem>>, %arg13: memref<2x1x32xf32, #tpu.memory_space<vmem>>, %arg14: memref<2x32x64xf32, #tpu.memory_space<vmem>>, %arg15: memref<2x1x64xf32, #tpu.memory_space<vmem>>, %arg16: memref<2x64x32xf32, #tpu.memory_space<vmem>>, %arg17: memref<2x1x32xf32, #tpu.memory_space<vmem>>, %arg18: memref<2x1x32xf32, #tpu.memory_space<vmem>>, %arg19: memref<2x1x32xf32, #tpu.memory_space<vmem>>, %arg20: memref<2x1x32xf32, #tpu.memory_space<vmem>>, %arg21: memref<2x1x32xf32, #tpu.memory_space<vmem>>, %arg22: memref<2x1x32xf32, #tpu.memory_space<vmem>>, %arg23: memref<2x1x32xf32, #tpu.memory_space<vmem>>, %arg24: memref<1x8x32xf32, #tpu.memory_space<vmem>>) attributes {dimension_semantics = [#tpu.dimension_semantics<parallel>], iteration_bounds = array<i64: 2>, scalar_prefetch = 0 : i64, scratch_operands = 0 : i64, tpu.core_type = #tpu.core_type<tc>, window_params = [{transform_indices = @transform_0, window_bounds = array<i64: 1, 8, 32>}, {transform_indices = @transform_1, window_bounds = array<i64: 1, 16, 32>}, {transform_indices = @transform_2, window_bounds = array<i64: 1, 16, 32>}, {pipeline_mode = #tpu.pipeline_mode<synchronous>, transform_indices = @transform_3, window_bounds = array<i64: 2, 4, 32, 8>}, {pipeline_mode = #tpu.pipeline_mode<synchronous>, transform_indices = @transform_4, window_bounds = array<i64: 2, 4, 32, 8>}, {pipeline_mode = #tpu.pipeline_mode<synchronous>, transform_indices = @transform_5, window_bounds = array<i64: 2, 4, 32, 8>}, {pipeline_mode = #tpu.pipeline_mode<synchronous>, transform_indices = @transform_6, window_bounds = array<i64: 2, 4, 8, 32>}, {pipeline_mode = #tpu.pipeline_mode<synchronous>, transform_indices = @transform_7, window_bounds = array<i64: 2, 1, 32>}, {pipeline_mode = #tpu.pipeline_mode<synchronous>, transform_indices = @transform_8, window_bounds = array<i64: 2, 4, 32, 8>}, {pipeline_mode = #tpu.pipeline_mode<synchronous>, transform_indices = @transform_9, window_bounds = array<i64: 2, 4, 32, 8>}, {pipeline_mode = #tpu.pipeline_mode<synchronous>, transform_indices = @transform_10, window_bounds = array<i64: 2, 4, 32, 8>}, {pipeline_mode = #tpu.pipeline_mode<synchronous>, transform_indices = @transform_11, window_bounds = array<i64: 2, 4, 8, 32>}, {pipeline_mode = #tpu.pipeline_mode<synchronous>, transform_indices = @transform_12, window_bounds = array<i64: 2, 1, 32>}, {pipeline_mode = #tpu.pipeline_mode<synchronous>, transform_indices = @transform_13, window_bounds = array<i64: 2, 32, 64>}, {pipeline_mode = #tpu.pipeline_mode<synchronous>, transform_indices = @transform_14, window_bounds = array<i64: 2, 1, 64>}, {pipeline_mode = #tpu.pipeline_mode<synchronous>, transform_indices = @transform_15, window_bounds = array<i64: 2, 64, 32>}, {pipeline_mode = #tpu.pipeline_mode<synchronous>, transform_indices = @transform_16, window_bounds = array<i64: 2, 1, 32>}, {pipeline_mode = #tpu.pipeline_mode<synchronous>, transform_indices = @transform_17, window_bounds = array<i64: 2, 1, 32>}, {pipeline_mode = #tpu.pipeline_mode<synchronous>, transform_indices = @transform_18, window_bounds = array<i64: 2, 1, 32>}, {pipeline_mode = #tpu.pipeline_mode<synchronous>, transform_indices = @transform_19, window_bounds = array<i64: 2, 1, 32>}, {pipeline_mode = #tpu.pipeline_mode<synchronous>, transform_indices = @transform_20, window_bounds = array<i64: 2, 1, 32>}, {pipeline_mode = #tpu.pipeline_mode<synchronous>, transform_indices = @transform_21, window_bounds = array<i64: 2, 1, 32>}, {pipeline_mode = #tpu.pipeline_mode<synchronous>, transform_indices = @transform_22, window_bounds = array<i64: 2, 1, 32>}, {transform_indices = @transform_23, window_bounds = array<i64: 1, 8, 32>}]} {
    %c0 = arith.constant 0 : index
    %c0_0 = arith.constant 0 : index
    %c0_1 = arith.constant 0 : index
    %0 = vector.load %arg1[%c0, %c0_0, %c0_1] : memref<1x8x32xf32, #tpu.memory_space<vmem>>, vector<1x8x32xf32>
    %1 = vector.shape_cast %0 : vector<1x8x32xf32> to vector<8x32xf32>
    %c0_2 = arith.constant 0 : index
    %c0_3 = arith.constant 0 : index
    %c0_4 = arith.constant 0 : index
    %2 = vector.load %arg2[%c0_2, %c0_3, %c0_4] : memref<1x16x32xf32, #tpu.memory_space<vmem>>, vector<1x16x32xf32>
    %3 = vector.shape_cast %2 : vector<1x16x32xf32> to vector<16x32xf32>
    %c0_5 = arith.constant 0 : index
    %c0_6 = arith.constant 0 : index
    %c0_7 = arith.constant 0 : index
    %4 = vector.load %arg3[%c0_5, %c0_6, %c0_7] : memref<1x16x32xf32, #tpu.memory_space<vmem>>, vector<1x16x32xf32>
    %5 = vector.shape_cast %4 : vector<1x16x32xf32> to vector<16x32xf32>
    %6 = vector.shape_cast %3 : vector<16x32xf32> to vector<1x16x32xf32>
    %7 = vector.broadcast %6 : vector<1x16x32xf32> to vector<4x16x32xf32>
    %8 = arith.addf %3, %5 : vector<16x32xf32>
    %9 = vector.shape_cast %8 : vector<16x32xf32> to vector<1x16x32xf32>
    %10 = vector.broadcast %9 : vector<1x16x32xf32> to vector<4x16x32xf32>
    %11 = vector.shape_cast %1 : vector<8x32xf32> to vector<1x8x32xf32>
    %12 = vector.broadcast %11 : vector<1x8x32xf32> to vector<4x8x32xf32>
    %c0_8 = arith.constant 0 : index
    %c0_9 = arith.constant 0 : index
    %c0_10 = arith.constant 0 : index
    %c0_11 = arith.constant 0 : index
    %13 = vector.load %arg4[%c0_8, %c0_9, %c0_10, %c0_11] : memref<2x4x32x8xf32, #tpu.memory_space<vmem>>, vector<1x4x32x8xf32>
    %14 = vector.shape_cast %13 : vector<1x4x32x8xf32> to vector<4x32x8xf32>
    %c0_12 = arith.constant 0 : index
    %c0_13 = arith.constant 0 : index
    %c0_14 = arith.constant 0 : index
    %c0_15 = arith.constant 0 : index
    %15 = vector.load %arg5[%c0_12, %c0_13, %c0_14, %c0_15] : memref<2x4x32x8xf32, #tpu.memory_space<vmem>>, vector<1x4x32x8xf32>
    %16 = vector.shape_cast %15 : vector<1x4x32x8xf32> to vector<4x32x8xf32>
    %c0_16 = arith.constant 0 : index
    %c0_17 = arith.constant 0 : index
    %c0_18 = arith.constant 0 : index
    %c0_19 = arith.constant 0 : index
    %17 = vector.load %arg6[%c0_16, %c0_17, %c0_18, %c0_19] : memref<2x4x32x8xf32, #tpu.memory_space<vmem>>, vector<1x4x32x8xf32>
    %18 = vector.shape_cast %17 : vector<1x4x32x8xf32> to vector<4x32x8xf32>
    %c0_20 = arith.constant 0 : index
    %c0_21 = arith.constant 0 : index
    %c0_22 = arith.constant 0 : index
    %c0_23 = arith.constant 0 : index
    %19 = vector.load %arg7[%c0_20, %c0_21, %c0_22, %c0_23] : memref<2x4x8x32xf32, #tpu.memory_space<vmem>>, vector<1x4x8x32xf32>
    %20 = vector.shape_cast %19 : vector<1x4x8x32xf32> to vector<4x8x32xf32>
    %c0_24 = arith.constant 0 : index
    %c0_25 = arith.constant 0 : index
    %c0_26 = arith.constant 0 : index
    %21 = vector.load %arg8[%c0_24, %c0_25, %c0_26] : memref<2x1x32xf32, #tpu.memory_space<vmem>>, vector<1x1x32xf32>
    %22 = vector.shape_cast %21 : vector<1x1x32xf32> to vector<1x32xf32>
    "tpu.trace_start"() <{level = 10 : i32, message = "hnd,hde->hne"}> : () -> ()
    %cst = arith.constant dense<0.000000e+00> : vector<4x8x8xf32>
    %23 = tpu.matmul %12, %14, %cst {dimension_numbers = #tpu.dot_dimension_numbers<[2], [1], [1], [2], [0, 0, 0, 1, 1, 2], [0], [0]>} : vector<4x8x32xf32>, vector<4x32x8xf32>, vector<4x8x8xf32> -> vector<4x8x8xf32>
    %cst_27 = arith.constant dense<0.000000e+00> : vector<4x8x8xf32>
    %24 = tpu.matmul %12, %16, %cst_27 {dimension_numbers = #tpu.dot_dimension_numbers<[2], [1], [1], [2], [0, 0, 0, 1, 1, 2], [0], [0]>} : vector<4x8x32xf32>, vector<4x32x8xf32>, vector<4x8x8xf32> -> vector<4x8x8xf32>
    %cst_28 = arith.constant dense<0.000000e+00> : vector<4x8x8xf32>
    %25 = tpu.matmul %12, %18, %cst_28 {dimension_numbers = #tpu.dot_dimension_numbers<[2], [1], [1], [2], [0, 0, 0, 1, 1, 2], [0], [0]>} : vector<4x8x32xf32>, vector<4x32x8xf32>, vector<4x8x8xf32> -> vector<4x8x8xf32>
    "tpu.trace_stop"() : () -> ()
    "tpu.trace_start"() <{level = 10 : i32, message = "hqe,hke->hqk"}> : () -> ()
    %cst_29 = arith.constant dense<0.000000e+00> : vector<4x8x8xf32>
    %26 = tpu.matmul %23, %24, %cst_29 {dimension_numbers = #tpu.dot_dimension_numbers<[2], [2], [1], [1], [0, 0, 0, 1, 1, 1], [0], [0]>} : vector<4x8x8xf32>, vector<4x8x8xf32>, vector<4x8x8xf32> -> vector<4x8x8xf32>
    "tpu.trace_stop"() : () -> ()
    %cst_30 = arith.constant dense<0xFF800000> : vector<4x8xf32>
    %27 = vector.multi_reduction <maximumf>, %26, %cst_30 [2] : vector<4x8x8xf32> to vector<4x8xf32>
    %28 = vector.shape_cast %27 : vector<4x8xf32> to vector<4x8x1xf32>
    %29 = vector.broadcast %28 : vector<4x8x1xf32> to vector<4x8x8xf32>
    %30 = arith.subf %26, %29 : vector<4x8x8xf32>
    %31 = math.exp %30 : vector<4x8x8xf32>
    %cst_31 = arith.constant dense<0.000000e+00> : vector<4x8xf32>
    %32 = vector.multi_reduction <add>, %31, %cst_31 [2] : vector<4x8x8xf32> to vector<4x8xf32>
    %33 = vector.shape_cast %32 : vector<4x8xf32> to vector<4x8x1xf32>
    %34 = tpu.reciprocal %33 {approx = true} : vector<4x8x1xf32> -> vector<4x8x1xf32>
    %35 = vector.broadcast %34 : vector<4x8x1xf32> to vector<4x8x8xf32>
    %36 = arith.mulf %31, %35 : vector<4x8x8xf32>
    "tpu.trace_start"() <{level = 10 : i32, message = "hqk,hke->hqe"}> : () -> ()
    %cst_32 = arith.constant dense<0.000000e+00> : vector<4x8x8xf32>
    %37 = tpu.matmul %36, %25, %cst_32 {dimension_numbers = #tpu.dot_dimension_numbers<[2], [1], [1], [2], [0, 0, 0, 1, 1, 2], [0], [0]>} : vector<4x8x8xf32>, vector<4x8x8xf32>, vector<4x8x8xf32> -> vector<4x8x8xf32>
    "tpu.trace_stop"() : () -> ()
    "tpu.trace_start"() <{level = 10 : i32, message = "hqe,heo->hqo"}> : () -> ()
    %cst_33 = arith.constant dense<0.000000e+00> : vector<4x8x32xf32>
    %38 = tpu.matmul %37, %20, %cst_33 {dimension_numbers = #tpu.dot_dimension_numbers<[2], [1], [1], [2], [0, 0, 0, 1, 1, 2], [0], [0]>} : vector<4x8x8xf32>, vector<4x8x32xf32>, vector<4x8x32xf32> -> vector<4x8x32xf32>
    "tpu.trace_stop"() : () -> ()
    %cst_34 = arith.constant dense<0.000000e+00> : vector<8x32xf32>
    %39 = vector.multi_reduction <add>, %38, %cst_34 [0] : vector<4x8x32xf32> to vector<8x32xf32>
    %40 = vector.broadcast %22 : vector<1x32xf32> to vector<8x32xf32>
    %41 = arith.addf %39, %40 : vector<8x32xf32>
    %c0_35 = arith.constant 0 : index
    %c0_36 = arith.constant 0 : index
    %c0_37 = arith.constant 0 : index
    %42 = vector.load %arg18[%c0_35, %c0_36, %c0_37] : memref<2x1x32xf32, #tpu.memory_space<vmem>>, vector<1x1x32xf32>
    %43 = vector.shape_cast %42 : vector<1x1x32xf32> to vector<1x32xf32>
    %c0_38 = arith.constant 0 : index
    %c0_39 = arith.constant 0 : index
    %c0_40 = arith.constant 0 : index
    %44 = vector.load %arg19[%c0_38, %c0_39, %c0_40] : memref<2x1x32xf32, #tpu.memory_space<vmem>>, vector<1x1x32xf32>
    %45 = vector.shape_cast %44 : vector<1x1x32xf32> to vector<1x32xf32>
    %cst_41 = arith.constant dense<0.000000e+00> : vector<8xf32>
    %46 = vector.multi_reduction <add>, %41, %cst_41 [1] : vector<8x32xf32> to vector<8xf32>
    %47 = vector.shape_cast %46 : vector<8xf32> to vector<8x1xf32>
    %cst_42 = arith.constant 3.200000e+01 : f32
    %48 = vector.broadcast %cst_42 : f32 to vector<8x1xf32>
    %49 = arith.divf %47, %48 : vector<8x1xf32>
    %50 = vector.broadcast %49 : vector<8x1xf32> to vector<8x32xf32>
    %51 = arith.subf %41, %50 : vector<8x32xf32>
    %52 = arith.mulf %51, %51 : vector<8x32xf32>
    %cst_43 = arith.constant dense<0.000000e+00> : vector<8xf32>
    %53 = vector.multi_reduction <add>, %52, %cst_43 [1] : vector<8x32xf32> to vector<8xf32>
    %54 = vector.shape_cast %53 : vector<8xf32> to vector<8x1xf32>
    %cst_44 = arith.constant 3.200000e+01 : f32
    %55 = vector.broadcast %cst_44 : f32 to vector<8x1xf32>
    %56 = arith.divf %54, %55 : vector<8x1xf32>
    %cst_45 = arith.constant 9.99999974E-6 : f32
    %57 = vector.broadcast %cst_45 : f32 to vector<8x1xf32>
    %58 = arith.addf %56, %57 : vector<8x1xf32>
    %59 = math.rsqrt %58 : vector<8x1xf32>
    %60 = vector.broadcast %59 : vector<8x1xf32> to vector<8x32xf32>
    %61 = arith.mulf %51, %60 : vector<8x32xf32>
    %62 = vector.broadcast %43 : vector<1x32xf32> to vector<8x32xf32>
    %63 = arith.mulf %61, %62 : vector<8x32xf32>
    %64 = vector.broadcast %45 : vector<1x32xf32> to vector<8x32xf32>
    %65 = arith.addf %63, %64 : vector<8x32xf32>
    %66 = arith.addf %65, %1 : vector<8x32xf32>
    %67 = vector.shape_cast %66 : vector<8x32xf32> to vector<1x8x32xf32>
    %68 = vector.broadcast %67 : vector<1x8x32xf32> to vector<4x8x32xf32>
    %c0_46 = arith.constant 0 : index
    %c0_47 = arith.constant 0 : index
    %c0_48 = arith.constant 0 : index
    %c0_49 = arith.constant 0 : index
    %69 = vector.load %arg9[%c0_46, %c0_47, %c0_48, %c0_49] : memref<2x4x32x8xf32, #tpu.memory_space<vmem>>, vector<1x4x32x8xf32>
    %70 = vector.shape_cast %69 : vector<1x4x32x8xf32> to vector<4x32x8xf32>
    %c0_50 = arith.constant 0 : index
    %c0_51 = arith.constant 0 : index
    %c0_52 = arith.constant 0 : index
    %c0_53 = arith.constant 0 : index
    %71 = vector.load %arg10[%c0_50, %c0_51, %c0_52, %c0_53] : memref<2x4x32x8xf32, #tpu.memory_space<vmem>>, vector<1x4x32x8xf32>
    %72 = vector.shape_cast %71 : vector<1x4x32x8xf32> to vector<4x32x8xf32>
    %c0_54 = arith.constant 0 : index
    %c0_55 = arith.constant 0 : index
    %c0_56 = arith.constant 0 : index
    %c0_57 = arith.constant 0 : index
    %73 = vector.load %arg11[%c0_54, %c0_55, %c0_56, %c0_57] : memref<2x4x32x8xf32, #tpu.memory_space<vmem>>, vector<1x4x32x8xf32>
    %74 = vector.shape_cast %73 : vector<1x4x32x8xf32> to vector<4x32x8xf32>
    %c0_58 = arith.constant 0 : index
    %c0_59 = arith.constant 0 : index
    %c0_60 = arith.constant 0 : index
    %c0_61 = arith.constant 0 : index
    %75 = vector.load %arg12[%c0_58, %c0_59, %c0_60, %c0_61] : memref<2x4x8x32xf32, #tpu.memory_space<vmem>>, vector<1x4x8x32xf32>
    %76 = vector.shape_cast %75 : vector<1x4x8x32xf32> to vector<4x8x32xf32>
    %c0_62 = arith.constant 0 : index
    %c0_63 = arith.constant 0 : index
    %c0_64 = arith.constant 0 : index
    %77 = vector.load %arg13[%c0_62, %c0_63, %c0_64] : memref<2x1x32xf32, #tpu.memory_space<vmem>>, vector<1x1x32xf32>
    %78 = vector.shape_cast %77 : vector<1x1x32xf32> to vector<1x32xf32>
    "tpu.trace_start"() <{level = 10 : i32, message = "hnd,hde->hne"}> : () -> ()
    %cst_65 = arith.constant dense<0.000000e+00> : vector<4x8x8xf32>
    %79 = tpu.matmul %68, %70, %cst_65 {dimension_numbers = #tpu.dot_dimension_numbers<[2], [1], [1], [2], [0, 0, 0, 1, 1, 2], [0], [0]>} : vector<4x8x32xf32>, vector<4x32x8xf32>, vector<4x8x8xf32> -> vector<4x8x8xf32>
    %cst_66 = arith.constant dense<0.000000e+00> : vector<4x16x8xf32>
    %80 = tpu.matmul %10, %72, %cst_66 {dimension_numbers = #tpu.dot_dimension_numbers<[2], [1], [1], [2], [0, 0, 0, 1, 1, 2], [0], [0]>} : vector<4x16x32xf32>, vector<4x32x8xf32>, vector<4x16x8xf32> -> vector<4x16x8xf32>
    %cst_67 = arith.constant dense<0.000000e+00> : vector<4x16x8xf32>
    %81 = tpu.matmul %7, %74, %cst_67 {dimension_numbers = #tpu.dot_dimension_numbers<[2], [1], [1], [2], [0, 0, 0, 1, 1, 2], [0], [0]>} : vector<4x16x32xf32>, vector<4x32x8xf32>, vector<4x16x8xf32> -> vector<4x16x8xf32>
    "tpu.trace_stop"() : () -> ()
    "tpu.trace_start"() <{level = 10 : i32, message = "hqe,hke->hqk"}> : () -> ()
    %cst_68 = arith.constant dense<0.000000e+00> : vector<4x8x16xf32>
    %82 = tpu.matmul %79, %80, %cst_68 {dimension_numbers = #tpu.dot_dimension_numbers<[2], [2], [1], [1], [0, 0, 0, 1, 1, 1], [0], [0]>} : vector<4x8x8xf32>, vector<4x16x8xf32>, vector<4x8x16xf32> -> vector<4x8x16xf32>
    "tpu.trace_stop"() : () -> ()
    %cst_69 = arith.constant dense<0xFF800000> : vector<4x8xf32>
    %83 = vector.multi_reduction <maximumf>, %82, %cst_69 [2] : vector<4x8x16xf32> to vector<4x8xf32>
    %84 = vector.shape_cast %83 : vector<4x8xf32> to vector<4x8x1xf32>
    %85 = vector.broadcast %84 : vector<4x8x1xf32> to vector<4x8x16xf32>
    %86 = arith.subf %82, %85 : vector<4x8x16xf32>
    %87 = math.exp %86 : vector<4x8x16xf32>
    %cst_70 = arith.constant dense<0.000000e+00> : vector<4x8xf32>
    %88 = vector.multi_reduction <add>, %87, %cst_70 [2] : vector<4x8x16xf32> to vector<4x8xf32>
    %89 = vector.shape_cast %88 : vector<4x8xf32> to vector<4x8x1xf32>
    %90 = tpu.reciprocal %89 {approx = true} : vector<4x8x1xf32> -> vector<4x8x1xf32>
    %91 = vector.broadcast %90 : vector<4x8x1xf32> to vector<4x8x16xf32>
    %92 = arith.mulf %87, %91 : vector<4x8x16xf32>
    "tpu.trace_start"() <{level = 10 : i32, message = "hqk,hke->hqe"}> : () -> ()
    %cst_71 = arith.constant dense<0.000000e+00> : vector<4x8x8xf32>
    %93 = tpu.matmul %92, %81, %cst_71 {dimension_numbers = #tpu.dot_dimension_numbers<[2], [1], [1], [2], [0, 0, 0, 1, 1, 2], [0], [0]>} : vector<4x8x16xf32>, vector<4x16x8xf32>, vector<4x8x8xf32> -> vector<4x8x8xf32>
    "tpu.trace_stop"() : () -> ()
    "tpu.trace_start"() <{level = 10 : i32, message = "hqe,heo->hqo"}> : () -> ()
    %cst_72 = arith.constant dense<0.000000e+00> : vector<4x8x32xf32>
    %94 = tpu.matmul %93, %76, %cst_72 {dimension_numbers = #tpu.dot_dimension_numbers<[2], [1], [1], [2], [0, 0, 0, 1, 1, 2], [0], [0]>} : vector<4x8x8xf32>, vector<4x8x32xf32>, vector<4x8x32xf32> -> vector<4x8x32xf32>
    "tpu.trace_stop"() : () -> ()
    %cst_73 = arith.constant dense<0.000000e+00> : vector<8x32xf32>
    %95 = vector.multi_reduction <add>, %94, %cst_73 [0] : vector<4x8x32xf32> to vector<8x32xf32>
    %96 = vector.broadcast %78 : vector<1x32xf32> to vector<8x32xf32>
    %97 = arith.addf %95, %96 : vector<8x32xf32>
    %98 = arith.addf %65, %97 : vector<8x32xf32>
    %c0_74 = arith.constant 0 : index
    %c0_75 = arith.constant 0 : index
    %c0_76 = arith.constant 0 : index
    %99 = vector.load %arg20[%c0_74, %c0_75, %c0_76] : memref<2x1x32xf32, #tpu.memory_space<vmem>>, vector<1x1x32xf32>
    %100 = vector.shape_cast %99 : vector<1x1x32xf32> to vector<1x32xf32>
    %c0_77 = arith.constant 0 : index
    %c0_78 = arith.constant 0 : index
    %c0_79 = arith.constant 0 : index
    %101 = vector.load %arg21[%c0_77, %c0_78, %c0_79] : memref<2x1x32xf32, #tpu.memory_space<vmem>>, vector<1x1x32xf32>
    %102 = vector.shape_cast %101 : vector<1x1x32xf32> to vector<1x32xf32>
    %cst_80 = arith.constant dense<0.000000e+00> : vector<8xf32>
    %103 = vector.multi_reduction <add>, %98, %cst_80 [1] : vector<8x32xf32> to vector<8xf32>
    %104 = vector.shape_cast %103 : vector<8xf32> to vector<8x1xf32>
    %cst_81 = arith.constant 3.200000e+01 : f32
    %105 = vector.broadcast %cst_81 : f32 to vector<8x1xf32>
    %106 = arith.divf %104, %105 : vector<8x1xf32>
    %107 = vector.broadcast %106 : vector<8x1xf32> to vector<8x32xf32>
    %108 = arith.subf %98, %107 : vector<8x32xf32>
    %109 = arith.mulf %108, %108 : vector<8x32xf32>
    %cst_82 = arith.constant dense<0.000000e+00> : vector<8xf32>
    %110 = vector.multi_reduction <add>, %109, %cst_82 [1] : vector<8x32xf32> to vector<8xf32>
    %111 = vector.shape_cast %110 : vector<8xf32> to vector<8x1xf32>
    %cst_83 = arith.constant 3.200000e+01 : f32
    %112 = vector.broadcast %cst_83 : f32 to vector<8x1xf32>
    %113 = arith.divf %111, %112 : vector<8x1xf32>
    %cst_84 = arith.constant 9.99999974E-6 : f32
    %114 = vector.broadcast %cst_84 : f32 to vector<8x1xf32>
    %115 = arith.addf %113, %114 : vector<8x1xf32>
    %116 = math.rsqrt %115 : vector<8x1xf32>
    %117 = vector.broadcast %116 : vector<8x1xf32> to vector<8x32xf32>
    %118 = arith.mulf %108, %117 : vector<8x32xf32>
    %119 = vector.broadcast %100 : vector<1x32xf32> to vector<8x32xf32>
    %120 = arith.mulf %118, %119 : vector<8x32xf32>
    %121 = vector.broadcast %102 : vector<1x32xf32> to vector<8x32xf32>
    %122 = arith.addf %120, %121 : vector<8x32xf32>
    %c0_85 = arith.constant 0 : index
    %c0_86 = arith.constant 0 : index
    %c0_87 = arith.constant 0 : index
    %123 = vector.load %arg14[%c0_85, %c0_86, %c0_87] : memref<2x32x64xf32, #tpu.memory_space<vmem>>, vector<1x32x64xf32>
    %124 = vector.shape_cast %123 : vector<1x32x64xf32> to vector<32x64xf32>
    %cst_88 = arith.constant dense<0.000000e+00> : vector<8x64xf32>
    %125 = tpu.matmul %122, %124, %cst_88 {dimension_numbers = #tpu.dot_dimension_numbers<[1], [0], [0], [1], [0, 0, 1, 1], [], []>} : vector<8x32xf32>, vector<32x64xf32>, vector<8x64xf32> -> vector<8x64xf32>
    %c0_89 = arith.constant 0 : index
    %c0_90 = arith.constant 0 : index
    %c0_91 = arith.constant 0 : index
    %126 = vector.load %arg15[%c0_89, %c0_90, %c0_91] : memref<2x1x64xf32, #tpu.memory_space<vmem>>, vector<1x1x64xf32>
    %127 = vector.shape_cast %126 : vector<1x1x64xf32> to vector<1x64xf32>
    %128 = vector.broadcast %127 : vector<1x64xf32> to vector<8x64xf32>
    %129 = arith.addf %125, %128 : vector<8x64xf32>
    %cst_92 = arith.constant 5.000000e-01 : f32
    %130 = vector.broadcast %cst_92 : f32 to vector<8x64xf32>
    %131 = arith.mulf %130, %129 : vector<8x64xf32>
    %cst_93 = arith.constant 0.707106769 : f32
    %132 = vector.broadcast %cst_93 : f32 to vector<8x64xf32>
    %133 = arith.mulf %129, %132 : vector<8x64xf32>
    %cst_94 = arith.constant 0.000000e+00 : f32
    %134 = vector.broadcast %cst_94 : f32 to vector<8x64xf32>
    %135 = arith.cmpf oge, %133, %134 : vector<8x64xf32>
    %cst_95 = arith.constant 1.000000e+00 : f32
    %cst_96 = arith.constant -1.000000e+00 : f32
    %136 = vector.broadcast %cst_95 : f32 to vector<8x64xf32>
    %137 = vector.broadcast %cst_96 : f32 to vector<8x64xf32>
    %138 = arith.select %135, %136, %137 : vector<8x64xi1>, vector<8x64xf32>
    %139 = math.absf %133 : vector<8x64xf32>
    %cst_97 = arith.constant 0.327591091 : f32
    %140 = vector.broadcast %cst_97 : f32 to vector<8x64xf32>
    %141 = arith.mulf %140, %139 : vector<8x64xf32>
    %cst_98 = arith.constant 1.000000e+00 : f32
    %142 = vector.broadcast %cst_98 : f32 to vector<8x64xf32>
    %143 = arith.addf %142, %141 : vector<8x64xf32>
    %cst_99 = arith.constant 1.000000e+00 : f32
    %144 = vector.broadcast %cst_99 : f32 to vector<8x64xf32>
    %145 = arith.divf %144, %143 : vector<8x64xf32>
    %cst_100 = arith.constant 1.06140542 : f32
    %146 = vector.broadcast %cst_100 : f32 to vector<8x64xf32>
    %147 = arith.mulf %146, %145 : vector<8x64xf32>
    %cst_101 = arith.constant -1.45315206 : f32
    %148 = vector.broadcast %cst_101 : f32 to vector<8x64xf32>
    %149 = arith.addf %147, %148 : vector<8x64xf32>
    %150 = arith.mulf %149, %145 : vector<8x64xf32>
    %cst_102 = arith.constant 1.42141378 : f32
    %151 = vector.broadcast %cst_102 : f32 to vector<8x64xf32>
    %152 = arith.addf %150, %151 : vector<8x64xf32>
    %153 = arith.mulf %152, %145 : vector<8x64xf32>
    %cst_103 = arith.constant -0.284496725 : f32
    %154 = vector.broadcast %cst_103 : f32 to vector<8x64xf32>
    %155 = arith.addf %153, %154 : vector<8x64xf32>
    %156 = arith.mulf %155, %145 : vector<8x64xf32>
    %cst_104 = arith.constant 0.254829586 : f32
    %157 = vector.broadcast %cst_104 : f32 to vector<8x64xf32>
    %158 = arith.addf %156, %157 : vector<8x64xf32>
    %159 = arith.mulf %158, %145 : vector<8x64xf32>
    %cst_105 = arith.constant 0.000000e+00 : f32
    %160 = vector.broadcast %cst_105 : f32 to vector<8x64xf32>
    %161 = arith.subf %160, %139 : vector<8x64xf32>
    %162 = arith.mulf %161, %139 : vector<8x64xf32>
    %163 = math.exp %162 : vector<8x64xf32>
    %164 = arith.mulf %159, %163 : vector<8x64xf32>
    %cst_106 = arith.constant 1.000000e+00 : f32
    %165 = vector.broadcast %cst_106 : f32 to vector<8x64xf32>
    %166 = arith.subf %165, %164 : vector<8x64xf32>
    %167 = arith.mulf %138, %166 : vector<8x64xf32>
    %cst_107 = arith.constant 1.000000e+00 : f32
    %168 = vector.broadcast %cst_107 : f32 to vector<8x64xf32>
    %169 = arith.addf %168, %167 : vector<8x64xf32>
    %170 = arith.mulf %131, %169 : vector<8x64xf32>
    %c0_108 = arith.constant 0 : index
    %c0_109 = arith.constant 0 : index
    %c0_110 = arith.constant 0 : index
    %171 = vector.load %arg16[%c0_108, %c0_109, %c0_110] : memref<2x64x32xf32, #tpu.memory_space<vmem>>, vector<1x64x32xf32>
    %172 = vector.shape_cast %171 : vector<1x64x32xf32> to vector<64x32xf32>
    %cst_111 = arith.constant dense<0.000000e+00> : vector<8x32xf32>
    %173 = tpu.matmul %170, %172, %cst_111 {dimension_numbers = #tpu.dot_dimension_numbers<[1], [0], [0], [1], [0, 0, 1, 1], [], []>} : vector<8x64xf32>, vector<64x32xf32>, vector<8x32xf32> -> vector<8x32xf32>
    %c0_112 = arith.constant 0 : index
    %c0_113 = arith.constant 0 : index
    %c0_114 = arith.constant 0 : index
    %174 = vector.load %arg17[%c0_112, %c0_113, %c0_114] : memref<2x1x32xf32, #tpu.memory_space<vmem>>, vector<1x1x32xf32>
    %175 = vector.shape_cast %174 : vector<1x1x32xf32> to vector<1x32xf32>
    %176 = vector.broadcast %175 : vector<1x32xf32> to vector<8x32xf32>
    %177 = arith.addf %173, %176 : vector<8x32xf32>
    %178 = arith.addf %122, %177 : vector<8x32xf32>
    %c0_115 = arith.constant 0 : index
    %c0_116 = arith.constant 0 : index
    %c0_117 = arith.constant 0 : index
    %179 = vector.load %arg22[%c0_115, %c0_116, %c0_117] : memref<2x1x32xf32, #tpu.memory_space<vmem>>, vector<1x1x32xf32>
    %180 = vector.shape_cast %179 : vector<1x1x32xf32> to vector<1x32xf32>
    %c0_118 = arith.constant 0 : index
    %c0_119 = arith.constant 0 : index
    %c0_120 = arith.constant 0 : index
    %181 = vector.load %arg23[%c0_118, %c0_119, %c0_120] : memref<2x1x32xf32, #tpu.memory_space<vmem>>, vector<1x1x32xf32>
    %182 = vector.shape_cast %181 : vector<1x1x32xf32> to vector<1x32xf32>
    %cst_121 = arith.constant dense<0.000000e+00> : vector<8xf32>
    %183 = vector.multi_reduction <add>, %178, %cst_121 [1] : vector<8x32xf32> to vector<8xf32>
    %184 = vector.shape_cast %183 : vector<8xf32> to vector<8x1xf32>
    %cst_122 = arith.constant 3.200000e+01 : f32
    %185 = vector.broadcast %cst_122 : f32 to vector<8x1xf32>
    %186 = arith.divf %184, %185 : vector<8x1xf32>
    %187 = vector.broadcast %186 : vector<8x1xf32> to vector<8x32xf32>
    %188 = arith.subf %178, %187 : vector<8x32xf32>
    %189 = arith.mulf %188, %188 : vector<8x32xf32>
    %cst_123 = arith.constant dense<0.000000e+00> : vector<8xf32>
    %190 = vector.multi_reduction <add>, %189, %cst_123 [1] : vector<8x32xf32> to vector<8xf32>
    %191 = vector.shape_cast %190 : vector<8xf32> to vector<8x1xf32>
    %cst_124 = arith.constant 3.200000e+01 : f32
    %192 = vector.broadcast %cst_124 : f32 to vector<8x1xf32>
    %193 = arith.divf %191, %192 : vector<8x1xf32>
    %cst_125 = arith.constant 9.99999974E-6 : f32
    %194 = vector.broadcast %cst_125 : f32 to vector<8x1xf32>
    %195 = arith.addf %193, %194 : vector<8x1xf32>
    %196 = math.rsqrt %195 : vector<8x1xf32>
    %197 = vector.broadcast %196 : vector<8x1xf32> to vector<8x32xf32>
    %198 = arith.mulf %188, %197 : vector<8x32xf32>
    %199 = vector.broadcast %180 : vector<1x32xf32> to vector<8x32xf32>
    %200 = arith.mulf %198, %199 : vector<8x32xf32>
    %201 = vector.broadcast %182 : vector<1x32xf32> to vector<8x32xf32>
    %202 = arith.addf %200, %201 : vector<8x32xf32>
    %203 = arith.addf %202, %1 : vector<8x32xf32>
    %204 = vector.shape_cast %203 : vector<8x32xf32> to vector<1x8x32xf32>
    %205 = vector.broadcast %204 : vector<1x8x32xf32> to vector<4x8x32xf32>
    %206 = vector.shape_cast %202 : vector<8x32xf32> to vector<1x8x32xf32>
    %207 = vector.broadcast %206 : vector<1x8x32xf32> to vector<4x8x32xf32>
    %c1 = arith.constant 1 : index
    %c0_126 = arith.constant 0 : index
    %c0_127 = arith.constant 0 : index
    %c0_128 = arith.constant 0 : index
    %208 = vector.load %arg4[%c1, %c0_126, %c0_127, %c0_128] : memref<2x4x32x8xf32, #tpu.memory_space<vmem>>, vector<1x4x32x8xf32>
    %209 = vector.shape_cast %208 : vector<1x4x32x8xf32> to vector<4x32x8xf32>
    %c1_129 = arith.constant 1 : index
    %c0_130 = arith.constant 0 : index
    %c0_131 = arith.constant 0 : index
    %c0_132 = arith.constant 0 : index
    %210 = vector.load %arg5[%c1_129, %c0_130, %c0_131, %c0_132] : memref<2x4x32x8xf32, #tpu.memory_space<vmem>>, vector<1x4x32x8xf32>
    %211 = vector.shape_cast %210 : vector<1x4x32x8xf32> to vector<4x32x8xf32>
    %c1_133 = arith.constant 1 : index
    %c0_134 = arith.constant 0 : index
    %c0_135 = arith.constant 0 : index
    %c0_136 = arith.constant 0 : index
    %212 = vector.load %arg6[%c1_133, %c0_134, %c0_135, %c0_136] : memref<2x4x32x8xf32, #tpu.memory_space<vmem>>, vector<1x4x32x8xf32>
    %213 = vector.shape_cast %212 : vector<1x4x32x8xf32> to vector<4x32x8xf32>
    %c1_137 = arith.constant 1 : index
    %c0_138 = arith.constant 0 : index
    %c0_139 = arith.constant 0 : index
    %c0_140 = arith.constant 0 : index
    %214 = vector.load %arg7[%c1_137, %c0_138, %c0_139, %c0_140] : memref<2x4x8x32xf32, #tpu.memory_space<vmem>>, vector<1x4x8x32xf32>
    %215 = vector.shape_cast %214 : vector<1x4x8x32xf32> to vector<4x8x32xf32>
    %c1_141 = arith.constant 1 : index
    %c0_142 = arith.constant 0 : index
    %c0_143 = arith.constant 0 : index
    %216 = vector.load %arg8[%c1_141, %c0_142, %c0_143] : memref<2x1x32xf32, #tpu.memory_space<vmem>>, vector<1x1x32xf32>
    %217 = vector.shape_cast %216 : vector<1x1x32xf32> to vector<1x32xf32>
    "tpu.trace_start"() <{level = 10 : i32, message = "hnd,hde->hne"}> : () -> ()
    %cst_144 = arith.constant dense<0.000000e+00> : vector<4x8x8xf32>
    %218 = tpu.matmul %205, %209, %cst_144 {dimension_numbers = #tpu.dot_dimension_numbers<[2], [1], [1], [2], [0, 0, 0, 1, 1, 2], [0], [0]>} : vector<4x8x32xf32>, vector<4x32x8xf32>, vector<4x8x8xf32> -> vector<4x8x8xf32>
    %cst_145 = arith.constant dense<0.000000e+00> : vector<4x8x8xf32>
    %219 = tpu.matmul %205, %211, %cst_145 {dimension_numbers = #tpu.dot_dimension_numbers<[2], [1], [1], [2], [0, 0, 0, 1, 1, 2], [0], [0]>} : vector<4x8x32xf32>, vector<4x32x8xf32>, vector<4x8x8xf32> -> vector<4x8x8xf32>
    %cst_146 = arith.constant dense<0.000000e+00> : vector<4x8x8xf32>
    %220 = tpu.matmul %207, %213, %cst_146 {dimension_numbers = #tpu.dot_dimension_numbers<[2], [1], [1], [2], [0, 0, 0, 1, 1, 2], [0], [0]>} : vector<4x8x32xf32>, vector<4x32x8xf32>, vector<4x8x8xf32> -> vector<4x8x8xf32>
    "tpu.trace_stop"() : () -> ()
    "tpu.trace_start"() <{level = 10 : i32, message = "hqe,hke->hqk"}> : () -> ()
    %cst_147 = arith.constant dense<0.000000e+00> : vector<4x8x8xf32>
    %221 = tpu.matmul %218, %219, %cst_147 {dimension_numbers = #tpu.dot_dimension_numbers<[2], [2], [1], [1], [0, 0, 0, 1, 1, 1], [0], [0]>} : vector<4x8x8xf32>, vector<4x8x8xf32>, vector<4x8x8xf32> -> vector<4x8x8xf32>
    "tpu.trace_stop"() : () -> ()
    %cst_148 = arith.constant dense<0xFF800000> : vector<4x8xf32>
    %222 = vector.multi_reduction <maximumf>, %221, %cst_148 [2] : vector<4x8x8xf32> to vector<4x8xf32>
    %223 = vector.shape_cast %222 : vector<4x8xf32> to vector<4x8x1xf32>
    %224 = vector.broadcast %223 : vector<4x8x1xf32> to vector<4x8x8xf32>
    %225 = arith.subf %221, %224 : vector<4x8x8xf32>
    %226 = math.exp %225 : vector<4x8x8xf32>
    %cst_149 = arith.constant dense<0.000000e+00> : vector<4x8xf32>
    %227 = vector.multi_reduction <add>, %226, %cst_149 [2] : vector<4x8x8xf32> to vector<4x8xf32>
    %228 = vector.shape_cast %227 : vector<4x8xf32> to vector<4x8x1xf32>
    %229 = tpu.reciprocal %228 {approx = true} : vector<4x8x1xf32> -> vector<4x8x1xf32>
    %230 = vector.broadcast %229 : vector<4x8x1xf32> to vector<4x8x8xf32>
    %231 = arith.mulf %226, %230 : vector<4x8x8xf32>
    "tpu.trace_start"() <{level = 10 : i32, message = "hqk,hke->hqe"}> : () -> ()
    %cst_150 = arith.constant dense<0.000000e+00> : vector<4x8x8xf32>
    %232 = tpu.matmul %231, %220, %cst_150 {dimension_numbers = #tpu.dot_dimension_numbers<[2], [1], [1], [2], [0, 0, 0, 1, 1, 2], [0], [0]>} : vector<4x8x8xf32>, vector<4x8x8xf32>, vector<4x8x8xf32> -> vector<4x8x8xf32>
    "tpu.trace_stop"() : () -> ()
    "tpu.trace_start"() <{level = 10 : i32, message = "hqe,heo->hqo"}> : () -> ()
    %cst_151 = arith.constant dense<0.000000e+00> : vector<4x8x32xf32>
    %233 = tpu.matmul %232, %215, %cst_151 {dimension_numbers = #tpu.dot_dimension_numbers<[2], [1], [1], [2], [0, 0, 0, 1, 1, 2], [0], [0]>} : vector<4x8x8xf32>, vector<4x8x32xf32>, vector<4x8x32xf32> -> vector<4x8x32xf32>
    "tpu.trace_stop"() : () -> ()
    %cst_152 = arith.constant dense<0.000000e+00> : vector<8x32xf32>
    %234 = vector.multi_reduction <add>, %233, %cst_152 [0] : vector<4x8x32xf32> to vector<8x32xf32>
    %235 = vector.broadcast %217 : vector<1x32xf32> to vector<8x32xf32>
    %236 = arith.addf %234, %235 : vector<8x32xf32>
    %237 = arith.addf %202, %236 : vector<8x32xf32>
    %c1_153 = arith.constant 1 : index
    %c0_154 = arith.constant 0 : index
    %c0_155 = arith.constant 0 : index
    %238 = vector.load %arg18[%c1_153, %c0_154, %c0_155] : memref<2x1x32xf32, #tpu.memory_space<vmem>>, vector<1x1x32xf32>
    %239 = vector.shape_cast %238 : vector<1x1x32xf32> to vector<1x32xf32>
    %c1_156 = arith.constant 1 : index
    %c0_157 = arith.constant 0 : index
    %c0_158 = arith.constant 0 : index
    %240 = vector.load %arg19[%c1_156, %c0_157, %c0_158] : memref<2x1x32xf32, #tpu.memory_space<vmem>>, vector<1x1x32xf32>
    %241 = vector.shape_cast %240 : vector<1x1x32xf32> to vector<1x32xf32>
    %cst_159 = arith.constant dense<0.000000e+00> : vector<8xf32>
    %242 = vector.multi_reduction <add>, %237, %cst_159 [1] : vector<8x32xf32> to vector<8xf32>
    %243 = vector.shape_cast %242 : vector<8xf32> to vector<8x1xf32>
    %cst_160 = arith.constant 3.200000e+01 : f32
    %244 = vector.broadcast %cst_160 : f32 to vector<8x1xf32>
    %245 = arith.divf %243, %244 : vector<8x1xf32>
    %246 = vector.broadcast %245 : vector<8x1xf32> to vector<8x32xf32>
    %247 = arith.subf %237, %246 : vector<8x32xf32>
    %248 = arith.mulf %247, %247 : vector<8x32xf32>
    %cst_161 = arith.constant dense<0.000000e+00> : vector<8xf32>
    %249 = vector.multi_reduction <add>, %248, %cst_161 [1] : vector<8x32xf32> to vector<8xf32>
    %250 = vector.shape_cast %249 : vector<8xf32> to vector<8x1xf32>
    %cst_162 = arith.constant 3.200000e+01 : f32
    %251 = vector.broadcast %cst_162 : f32 to vector<8x1xf32>
    %252 = arith.divf %250, %251 : vector<8x1xf32>
    %cst_163 = arith.constant 9.99999974E-6 : f32
    %253 = vector.broadcast %cst_163 : f32 to vector<8x1xf32>
    %254 = arith.addf %252, %253 : vector<8x1xf32>
    %255 = math.rsqrt %254 : vector<8x1xf32>
    %256 = vector.broadcast %255 : vector<8x1xf32> to vector<8x32xf32>
    %257 = arith.mulf %247, %256 : vector<8x32xf32>
    %258 = vector.broadcast %239 : vector<1x32xf32> to vector<8x32xf32>
    %259 = arith.mulf %257, %258 : vector<8x32xf32>
    %260 = vector.broadcast %241 : vector<1x32xf32> to vector<8x32xf32>
    %261 = arith.addf %259, %260 : vector<8x32xf32>
    %262 = arith.addf %261, %1 : vector<8x32xf32>
    %263 = vector.shape_cast %262 : vector<8x32xf32> to vector<1x8x32xf32>
    %264 = vector.broadcast %263 : vector<1x8x32xf32> to vector<4x8x32xf32>
    %c1_164 = arith.constant 1 : index
    %c0_165 = arith.constant 0 : index
    %c0_166 = arith.constant 0 : index
    %c0_167 = arith.constant 0 : index
    %265 = vector.load %arg9[%c1_164, %c0_165, %c0_166, %c0_167] : memref<2x4x32x8xf32, #tpu.memory_space<vmem>>, vector<1x4x32x8xf32>
    %266 = vector.shape_cast %265 : vector<1x4x32x8xf32> to vector<4x32x8xf32>
    %c1_168 = arith.constant 1 : index
    %c0_169 = arith.constant 0 : index
    %c0_170 = arith.constant 0 : index
    %c0_171 = arith.constant 0 : index
    %267 = vector.load %arg10[%c1_168, %c0_169, %c0_170, %c0_171] : memref<2x4x32x8xf32, #tpu.memory_space<vmem>>, vector<1x4x32x8xf32>
    %268 = vector.shape_cast %267 : vector<1x4x32x8xf32> to vector<4x32x8xf32>
    %c1_172 = arith.constant 1 : index
    %c0_173 = arith.constant 0 : index
    %c0_174 = arith.constant 0 : index
    %c0_175 = arith.constant 0 : index
    %269 = vector.load %arg11[%c1_172, %c0_173, %c0_174, %c0_175] : memref<2x4x32x8xf32, #tpu.memory_space<vmem>>, vector<1x4x32x8xf32>
    %270 = vector.shape_cast %269 : vector<1x4x32x8xf32> to vector<4x32x8xf32>
    %c1_176 = arith.constant 1 : index
    %c0_177 = arith.constant 0 : index
    %c0_178 = arith.constant 0 : index
    %c0_179 = arith.constant 0 : index
    %271 = vector.load %arg12[%c1_176, %c0_177, %c0_178, %c0_179] : memref<2x4x8x32xf32, #tpu.memory_space<vmem>>, vector<1x4x8x32xf32>
    %272 = vector.shape_cast %271 : vector<1x4x8x32xf32> to vector<4x8x32xf32>
    %c1_180 = arith.constant 1 : index
    %c0_181 = arith.constant 0 : index
    %c0_182 = arith.constant 0 : index
    %273 = vector.load %arg13[%c1_180, %c0_181, %c0_182] : memref<2x1x32xf32, #tpu.memory_space<vmem>>, vector<1x1x32xf32>
    %274 = vector.shape_cast %273 : vector<1x1x32xf32> to vector<1x32xf32>
    "tpu.trace_start"() <{level = 10 : i32, message = "hnd,hde->hne"}> : () -> ()
    %cst_183 = arith.constant dense<0.000000e+00> : vector<4x8x8xf32>
    %275 = tpu.matmul %264, %266, %cst_183 {dimension_numbers = #tpu.dot_dimension_numbers<[2], [1], [1], [2], [0, 0, 0, 1, 1, 2], [0], [0]>} : vector<4x8x32xf32>, vector<4x32x8xf32>, vector<4x8x8xf32> -> vector<4x8x8xf32>
    %cst_184 = arith.constant dense<0.000000e+00> : vector<4x16x8xf32>
    %276 = tpu.matmul %10, %268, %cst_184 {dimension_numbers = #tpu.dot_dimension_numbers<[2], [1], [1], [2], [0, 0, 0, 1, 1, 2], [0], [0]>} : vector<4x16x32xf32>, vector<4x32x8xf32>, vector<4x16x8xf32> -> vector<4x16x8xf32>
    %cst_185 = arith.constant dense<0.000000e+00> : vector<4x16x8xf32>
    %277 = tpu.matmul %7, %270, %cst_185 {dimension_numbers = #tpu.dot_dimension_numbers<[2], [1], [1], [2], [0, 0, 0, 1, 1, 2], [0], [0]>} : vector<4x16x32xf32>, vector<4x32x8xf32>, vector<4x16x8xf32> -> vector<4x16x8xf32>
    "tpu.trace_stop"() : () -> ()
    "tpu.trace_start"() <{level = 10 : i32, message = "hqe,hke->hqk"}> : () -> ()
    %cst_186 = arith.constant dense<0.000000e+00> : vector<4x8x16xf32>
    %278 = tpu.matmul %275, %276, %cst_186 {dimension_numbers = #tpu.dot_dimension_numbers<[2], [2], [1], [1], [0, 0, 0, 1, 1, 1], [0], [0]>} : vector<4x8x8xf32>, vector<4x16x8xf32>, vector<4x8x16xf32> -> vector<4x8x16xf32>
    "tpu.trace_stop"() : () -> ()
    %cst_187 = arith.constant dense<0xFF800000> : vector<4x8xf32>
    %279 = vector.multi_reduction <maximumf>, %278, %cst_187 [2] : vector<4x8x16xf32> to vector<4x8xf32>
    %280 = vector.shape_cast %279 : vector<4x8xf32> to vector<4x8x1xf32>
    %281 = vector.broadcast %280 : vector<4x8x1xf32> to vector<4x8x16xf32>
    %282 = arith.subf %278, %281 : vector<4x8x16xf32>
    %283 = math.exp %282 : vector<4x8x16xf32>
    %cst_188 = arith.constant dense<0.000000e+00> : vector<4x8xf32>
    %284 = vector.multi_reduction <add>, %283, %cst_188 [2] : vector<4x8x16xf32> to vector<4x8xf32>
    %285 = vector.shape_cast %284 : vector<4x8xf32> to vector<4x8x1xf32>
    %286 = tpu.reciprocal %285 {approx = true} : vector<4x8x1xf32> -> vector<4x8x1xf32>
    %287 = vector.broadcast %286 : vector<4x8x1xf32> to vector<4x8x16xf32>
    %288 = arith.mulf %283, %287 : vector<4x8x16xf32>
    "tpu.trace_start"() <{level = 10 : i32, message = "hqk,hke->hqe"}> : () -> ()
    %cst_189 = arith.constant dense<0.000000e+00> : vector<4x8x8xf32>
    %289 = tpu.matmul %288, %277, %cst_189 {dimension_numbers = #tpu.dot_dimension_numbers<[2], [1], [1], [2], [0, 0, 0, 1, 1, 2], [0], [0]>} : vector<4x8x16xf32>, vector<4x16x8xf32>, vector<4x8x8xf32> -> vector<4x8x8xf32>
    "tpu.trace_stop"() : () -> ()
    "tpu.trace_start"() <{level = 10 : i32, message = "hqe,heo->hqo"}> : () -> ()
    %cst_190 = arith.constant dense<0.000000e+00> : vector<4x8x32xf32>
    %290 = tpu.matmul %289, %272, %cst_190 {dimension_numbers = #tpu.dot_dimension_numbers<[2], [1], [1], [2], [0, 0, 0, 1, 1, 2], [0], [0]>} : vector<4x8x8xf32>, vector<4x8x32xf32>, vector<4x8x32xf32> -> vector<4x8x32xf32>
    "tpu.trace_stop"() : () -> ()
    %cst_191 = arith.constant dense<0.000000e+00> : vector<8x32xf32>
    %291 = vector.multi_reduction <add>, %290, %cst_191 [0] : vector<4x8x32xf32> to vector<8x32xf32>
    %292 = vector.broadcast %274 : vector<1x32xf32> to vector<8x32xf32>
    %293 = arith.addf %291, %292 : vector<8x32xf32>
    %294 = arith.addf %261, %293 : vector<8x32xf32>
    %c1_192 = arith.constant 1 : index
    %c0_193 = arith.constant 0 : index
    %c0_194 = arith.constant 0 : index
    %295 = vector.load %arg20[%c1_192, %c0_193, %c0_194] : memref<2x1x32xf32, #tpu.memory_space<vmem>>, vector<1x1x32xf32>
    %296 = vector.shape_cast %295 : vector<1x1x32xf32> to vector<1x32xf32>
    %c1_195 = arith.constant 1 : index
    %c0_196 = arith.constant 0 : index
    %c0_197 = arith.constant 0 : index
    %297 = vector.load %arg21[%c1_195, %c0_196, %c0_197] : memref<2x1x32xf32, #tpu.memory_space<vmem>>, vector<1x1x32xf32>
    %298 = vector.shape_cast %297 : vector<1x1x32xf32> to vector<1x32xf32>
    %cst_198 = arith.constant dense<0.000000e+00> : vector<8xf32>
    %299 = vector.multi_reduction <add>, %294, %cst_198 [1] : vector<8x32xf32> to vector<8xf32>
    %300 = vector.shape_cast %299 : vector<8xf32> to vector<8x1xf32>
    %cst_199 = arith.constant 3.200000e+01 : f32
    %301 = vector.broadcast %cst_199 : f32 to vector<8x1xf32>
    %302 = arith.divf %300, %301 : vector<8x1xf32>
    %303 = vector.broadcast %302 : vector<8x1xf32> to vector<8x32xf32>
    %304 = arith.subf %294, %303 : vector<8x32xf32>
    %305 = arith.mulf %304, %304 : vector<8x32xf32>
    %cst_200 = arith.constant dense<0.000000e+00> : vector<8xf32>
    %306 = vector.multi_reduction <add>, %305, %cst_200 [1] : vector<8x32xf32> to vector<8xf32>
    %307 = vector.shape_cast %306 : vector<8xf32> to vector<8x1xf32>
    %cst_201 = arith.constant 3.200000e+01 : f32
    %308 = vector.broadcast %cst_201 : f32 to vector<8x1xf32>
    %309 = arith.divf %307, %308 : vector<8x1xf32>
    %cst_202 = arith.constant 9.99999974E-6 : f32
    %310 = vector.broadcast %cst_202 : f32 to vector<8x1xf32>
    %311 = arith.addf %309, %310 : vector<8x1xf32>
    %312 = math.rsqrt %311 : vector<8x1xf32>
    %313 = vector.broadcast %312 : vector<8x1xf32> to vector<8x32xf32>
    %314 = arith.mulf %304, %313 : vector<8x32xf32>
    %315 = vector.broadcast %296 : vector<1x32xf32> to vector<8x32xf32>
    %316 = arith.mulf %314, %315 : vector<8x32xf32>
    %317 = vector.broadcast %298 : vector<1x32xf32> to vector<8x32xf32>
    %318 = arith.addf %316, %317 : vector<8x32xf32>
    %c1_203 = arith.constant 1 : index
    %c0_204 = arith.constant 0 : index
    %c0_205 = arith.constant 0 : index
    %319 = vector.load %arg14[%c1_203, %c0_204, %c0_205] : memref<2x32x64xf32, #tpu.memory_space<vmem>>, vector<1x32x64xf32>
    %320 = vector.shape_cast %319 : vector<1x32x64xf32> to vector<32x64xf32>
    %cst_206 = arith.constant dense<0.000000e+00> : vector<8x64xf32>
    %321 = tpu.matmul %318, %320, %cst_206 {dimension_numbers = #tpu.dot_dimension_numbers<[1], [0], [0], [1], [0, 0, 1, 1], [], []>} : vector<8x32xf32>, vector<32x64xf32>, vector<8x64xf32> -> vector<8x64xf32>
    %c1_207 = arith.constant 1 : index
    %c0_208 = arith.constant 0 : index
    %c0_209 = arith.constant 0 : index
    %322 = vector.load %arg15[%c1_207, %c0_208, %c0_209] : memref<2x1x64xf32, #tpu.memory_space<vmem>>, vector<1x1x64xf32>
    %323 = vector.shape_cast %322 : vector<1x1x64xf32> to vector<1x64xf32>
    %324 = vector.broadcast %323 : vector<1x64xf32> to vector<8x64xf32>
    %325 = arith.addf %321, %324 : vector<8x64xf32>
    %cst_210 = arith.constant 5.000000e-01 : f32
    %326 = vector.broadcast %cst_210 : f32 to vector<8x64xf32>
    %327 = arith.mulf %326, %325 : vector<8x64xf32>
    %cst_211 = arith.constant 0.707106769 : f32
    %328 = vector.broadcast %cst_211 : f32 to vector<8x64xf32>
    %329 = arith.mulf %325, %328 : vector<8x64xf32>
    %cst_212 = arith.constant 0.000000e+00 : f32
    %330 = vector.broadcast %cst_212 : f32 to vector<8x64xf32>
    %331 = arith.cmpf oge, %329, %330 : vector<8x64xf32>
    %cst_213 = arith.constant 1.000000e+00 : f32
    %cst_214 = arith.constant -1.000000e+00 : f32
    %332 = vector.broadcast %cst_213 : f32 to vector<8x64xf32>
    %333 = vector.broadcast %cst_214 : f32 to vector<8x64xf32>
    %334 = arith.select %331, %332, %333 : vector<8x64xi1>, vector<8x64xf32>
    %335 = math.absf %329 : vector<8x64xf32>
    %cst_215 = arith.constant 0.327591091 : f32
    %336 = vector.broadcast %cst_215 : f32 to vector<8x64xf32>
    %337 = arith.mulf %336, %335 : vector<8x64xf32>
    %cst_216 = arith.constant 1.000000e+00 : f32
    %338 = vector.broadcast %cst_216 : f32 to vector<8x64xf32>
    %339 = arith.addf %338, %337 : vector<8x64xf32>
    %cst_217 = arith.constant 1.000000e+00 : f32
    %340 = vector.broadcast %cst_217 : f32 to vector<8x64xf32>
    %341 = arith.divf %340, %339 : vector<8x64xf32>
    %cst_218 = arith.constant 1.06140542 : f32
    %342 = vector.broadcast %cst_218 : f32 to vector<8x64xf32>
    %343 = arith.mulf %342, %341 : vector<8x64xf32>
    %cst_219 = arith.constant -1.45315206 : f32
    %344 = vector.broadcast %cst_219 : f32 to vector<8x64xf32>
    %345 = arith.addf %343, %344 : vector<8x64xf32>
    %346 = arith.mulf %345, %341 : vector<8x64xf32>
    %cst_220 = arith.constant 1.42141378 : f32
    %347 = vector.broadcast %cst_220 : f32 to vector<8x64xf32>
    %348 = arith.addf %346, %347 : vector<8x64xf32>
    %349 = arith.mulf %348, %341 : vector<8x64xf32>
    %cst_221 = arith.constant -0.284496725 : f32
    %350 = vector.broadcast %cst_221 : f32 to vector<8x64xf32>
    %351 = arith.addf %349, %350 : vector<8x64xf32>
    %352 = arith.mulf %351, %341 : vector<8x64xf32>
    %cst_222 = arith.constant 0.254829586 : f32
    %353 = vector.broadcast %cst_222 : f32 to vector<8x64xf32>
    %354 = arith.addf %352, %353 : vector<8x64xf32>
    %355 = arith.mulf %354, %341 : vector<8x64xf32>
    %cst_223 = arith.constant 0.000000e+00 : f32
    %356 = vector.broadcast %cst_223 : f32 to vector<8x64xf32>
    %357 = arith.subf %356, %335 : vector<8x64xf32>
    %358 = arith.mulf %357, %335 : vector<8x64xf32>
    %359 = math.exp %358 : vector<8x64xf32>
    %360 = arith.mulf %355, %359 : vector<8x64xf32>
    %cst_224 = arith.constant 1.000000e+00 : f32
    %361 = vector.broadcast %cst_224 : f32 to vector<8x64xf32>
    %362 = arith.subf %361, %360 : vector<8x64xf32>
    %363 = arith.mulf %334, %362 : vector<8x64xf32>
    %cst_225 = arith.constant 1.000000e+00 : f32
    %364 = vector.broadcast %cst_225 : f32 to vector<8x64xf32>
    %365 = arith.addf %364, %363 : vector<8x64xf32>
    %366 = arith.mulf %327, %365 : vector<8x64xf32>
    %c1_226 = arith.constant 1 : index
    %c0_227 = arith.constant 0 : index
    %c0_228 = arith.constant 0 : index
    %367 = vector.load %arg16[%c1_226, %c0_227, %c0_228] : memref<2x64x32xf32, #tpu.memory_space<vmem>>, vector<1x64x32xf32>
    %368 = vector.shape_cast %367 : vector<1x64x32xf32> to vector<64x32xf32>
    %cst_229 = arith.constant dense<0.000000e+00> : vector<8x32xf32>
    %369 = tpu.matmul %366, %368, %cst_229 {dimension_numbers = #tpu.dot_dimension_numbers<[1], [0], [0], [1], [0, 0, 1, 1], [], []>} : vector<8x64xf32>, vector<64x32xf32>, vector<8x32xf32> -> vector<8x32xf32>
    %c1_230 = arith.constant 1 : index
    %c0_231 = arith.constant 0 : index
    %c0_232 = arith.constant 0 : index
    %370 = vector.load %arg17[%c1_230, %c0_231, %c0_232] : memref<2x1x32xf32, #tpu.memory_space<vmem>>, vector<1x1x32xf32>
    %371 = vector.shape_cast %370 : vector<1x1x32xf32> to vector<1x32xf32>
    %372 = vector.broadcast %371 : vector<1x32xf32> to vector<8x32xf32>
    %373 = arith.addf %369, %372 : vector<8x32xf32>
    %374 = arith.addf %318, %373 : vector<8x32xf32>
    %c1_233 = arith.constant 1 : index
    %c0_234 = arith.constant 0 : index
    %c0_235 = arith.constant 0 : index
    %375 = vector.load %arg22[%c1_233, %c0_234, %c0_235] : memref<2x1x32xf32, #tpu.memory_space<vmem>>, vector<1x1x32xf32>
    %376 = vector.shape_cast %375 : vector<1x1x32xf32> to vector<1x32xf32>
    %c1_236 = arith.constant 1 : index
    %c0_237 = arith.constant 0 : index
    %c0_238 = arith.constant 0 : index
    %377 = vector.load %arg23[%c1_236, %c0_237, %c0_238] : memref<2x1x32xf32, #tpu.memory_space<vmem>>, vector<1x1x32xf32>
    %378 = vector.shape_cast %377 : vector<1x1x32xf32> to vector<1x32xf32>
    %cst_239 = arith.constant dense<0.000000e+00> : vector<8xf32>
    %379 = vector.multi_reduction <add>, %374, %cst_239 [1] : vector<8x32xf32> to vector<8xf32>
    %380 = vector.shape_cast %379 : vector<8xf32> to vector<8x1xf32>
    %cst_240 = arith.constant 3.200000e+01 : f32
    %381 = vector.broadcast %cst_240 : f32 to vector<8x1xf32>
    %382 = arith.divf %380, %381 : vector<8x1xf32>
    %383 = vector.broadcast %382 : vector<8x1xf32> to vector<8x32xf32>
    %384 = arith.subf %374, %383 : vector<8x32xf32>
    %385 = arith.mulf %384, %384 : vector<8x32xf32>
    %cst_241 = arith.constant dense<0.000000e+00> : vector<8xf32>
    %386 = vector.multi_reduction <add>, %385, %cst_241 [1] : vector<8x32xf32> to vector<8xf32>
    %387 = vector.shape_cast %386 : vector<8xf32> to vector<8x1xf32>
    %cst_242 = arith.constant 3.200000e+01 : f32
    %388 = vector.broadcast %cst_242 : f32 to vector<8x1xf32>
    %389 = arith.divf %387, %388 : vector<8x1xf32>
    %cst_243 = arith.constant 9.99999974E-6 : f32
    %390 = vector.broadcast %cst_243 : f32 to vector<8x1xf32>
    %391 = arith.addf %389, %390 : vector<8x1xf32>
    %392 = math.rsqrt %391 : vector<8x1xf32>
    %393 = vector.broadcast %392 : vector<8x1xf32> to vector<8x32xf32>
    %394 = arith.mulf %384, %393 : vector<8x32xf32>
    %395 = vector.broadcast %376 : vector<1x32xf32> to vector<8x32xf32>
    %396 = arith.mulf %394, %395 : vector<8x32xf32>
    %397 = vector.broadcast %378 : vector<1x32xf32> to vector<8x32xf32>
    %398 = arith.addf %396, %397 : vector<8x32xf32>
    %c0_244 = arith.constant 0 : index
    %c0_245 = arith.constant 0 : index
    %c0_246 = arith.constant 0 : index
    %399 = vector.load %arg24[%c0_244, %c0_245, %c0_246] : memref<1x8x32xf32, #tpu.memory_space<vmem>>, vector<1x8x32xf32>
    %400 = vector.shape_cast %399 : vector<1x8x32xf32> to vector<8x32xf32>
    %401 = vector.shape_cast %398 : vector<8x32xf32> to vector<1x8x32xf32>
    tpu.vector_store %arg24[%c0_244, %c0_245, %c0_246], %401 {strides = array<i32>} : memref<1x8x32xf32, #tpu.memory_space<vmem>>, vector<1x8x32xf32>,
    return
  }
  func.func @transform_0(%arg0: i32) -> (i32, i32, i32) {
    %c0_i32 = arith.constant 0 : i32
    %c0_i32_0 = arith.constant 0 : i32
    %c0_i32_1 = arith.constant 0 : i32
    return %arg0, %c0_i32, %c0_i32_0 : i32, i32, i32
  }
  func.func @transform_1(%arg0: i32) -> (i32, i32, i32) {
    %c0_i32 = arith.constant 0 : i32
    %c0_i32_0 = arith.constant 0 : i32
    %c0_i32_1 = arith.constant 0 : i32
    return %arg0, %c0_i32, %c0_i32_0 : i32, i32, i32
  }
  func.func @transform_2(%arg0: i32) -> (i32, i32, i32) {
    %c0_i32 = arith.constant 0 : i32
    %c0_i32_0 = arith.constant 0 : i32
    %c0_i32_1 = arith.constant 0 : i32
    return %arg0, %c0_i32, %c0_i32_0 : i32, i32, i32
  }
  func.func @transform_3(%arg0: i32) -> (i32, i32, i32, i32) {
    %c0_i32 = arith.constant 0 : i32
    %c0_i32_0 = arith.constant 0 : i32
    %c0_i32_1 = arith.constant 0 : i32
    %c0_i32_2 = arith.constant 0 : i32
    %c0_i32_3 = arith.constant 0 : i32
    return %c0_i32, %c0_i32_0, %c0_i32_1, %c0_i32_2 : i32, i32, i32, i32
  }
  func.func @transform_4(%arg0: i32) -> (i32, i32, i32, i32) {
    %c0_i32 = arith.constant 0 : i32
    %c0_i32_0 = arith.constant 0 : i32
    %c0_i32_1 = arith.constant 0 : i32
    %c0_i32_2 = arith.constant 0 : i32
    %c0_i32_3 = arith.constant 0 : i32
    return %c0_i32, %c0_i32_0, %c0_i32_1, %c0_i32_2 : i32, i32, i32, i32
  }
  func.func @transform_5(%arg0: i32) -> (i32, i32, i32, i32) {
    %c0_i32 = arith.constant 0 : i32
    %c0_i32_0 = arith.constant 0 : i32
    %c0_i32_1 = arith.constant 0 : i32
    %c0_i32_2 = arith.constant 0 : i32
    %c0_i32_3 = arith.constant 0 : i32
    return %c0_i32, %c0_i32_0, %c0_i32_1, %c0_i32_2 : i32, i32, i32, i32
  }
  func.func @transform_6(%arg0: i32) -> (i32, i32, i32, i32) {
    %c0_i32 = arith.constant 0 : i32
    %c0_i32_0 = arith.constant 0 : i32
    %c0_i32_1 = arith.constant 0 : i32
    %c0_i32_2 = arith.constant 0 : i32
    %c0_i32_3 = arith.constant 0 : i32
    return %c0_i32, %c0_i32_0, %c0_i32_1, %c0_i32_2 : i32, i32, i32, i32
  }
  func.func @transform_7(%arg0: i32) -> (i32, i32, i32) {
    %c0_i32 = arith.constant 0 : i32
    %c0_i32_0 = arith.constant 0 : i32
    %c0_i32_1 = arith.constant 0 : i32
    %c0_i32_2 = arith.constant 0 : i32
    return %c0_i32, %c0_i32_0, %c0_i32_1 : i32, i32, i32
  }
  func.func @transform_8(%arg0: i32) -> (i32, i32, i32, i32) {
    %c0_i32 = arith.constant 0 : i32
    %c0_i32_0 = arith.constant 0 : i32
    %c0_i32_1 = arith.constant 0 : i32
    %c0_i32_2 = arith.constant 0 : i32
    %c0_i32_3 = arith.constant 0 : i32
    return %c0_i32, %c0_i32_0, %c0_i32_1, %c0_i32_2 : i32, i32, i32, i32
  }
  func.func @transform_9(%arg0: i32) -> (i32, i32, i32, i32) {
    %c0_i32 = arith.constant 0 : i32
    %c0_i32_0 = arith.constant 0 : i32
    %c0_i32_1 = arith.constant 0 : i32
    %c0_i32_2 = arith.constant 0 : i32
    %c0_i32_3 = arith.constant 0 : i32
    return %c0_i32, %c0_i32_0, %c0_i32_1, %c0_i32_2 : i32, i32, i32, i32
  }
  func.func @transform_10(%arg0: i32) -> (i32, i32, i32, i32) {
    %c0_i32 = arith.constant 0 : i32
    %c0_i32_0 = arith.constant 0 : i32
    %c0_i32_1 = arith.constant 0 : i32
    %c0_i32_2 = arith.constant 0 : i32
    %c0_i32_3 = arith.constant 0 : i32
    return %c0_i32, %c0_i32_0, %c0_i32_1, %c0_i32_2 : i32, i32, i32, i32
  }
  func.func @transform_11(%arg0: i32) -> (i32, i32, i32, i32) {
    %c0_i32 = arith.constant 0 : i32
    %c0_i32_0 = arith.constant 0 : i32
    %c0_i32_1 = arith.constant 0 : i32
    %c0_i32_2 = arith.constant 0 : i32
    %c0_i32_3 = arith.constant 0 : i32
    return %c0_i32, %c0_i32_0, %c0_i32_1, %c0_i32_2 : i32, i32, i32, i32
  }
  func.func @transform_12(%arg0: i32) -> (i32, i32, i32) {
    %c0_i32 = arith.constant 0 : i32
    %c0_i32_0 = arith.constant 0 : i32
    %c0_i32_1 = arith.constant 0 : i32
    %c0_i32_2 = arith.constant 0 : i32
    return %c0_i32, %c0_i32_0, %c0_i32_1 : i32, i32, i32
  }
  func.func @transform_13(%arg0: i32) -> (i32, i32, i32) {
    %c0_i32 = arith.constant 0 : i32
    %c0_i32_0 = arith.constant 0 : i32
    %c0_i32_1 = arith.constant 0 : i32
    %c0_i32_2 = arith.constant 0 : i32
    return %c0_i32, %c0_i32_0, %c0_i32_1 : i32, i32, i32
  }
  func.func @transform_14(%arg0: i32) -> (i32, i32, i32) {
    %c0_i32 = arith.constant 0 : i32
    %c0_i32_0 = arith.constant 0 : i32
    %c0_i32_1 = arith.constant 0 : i32
    %c0_i32_2 = arith.constant 0 : i32
    return %c0_i32, %c0_i32_0, %c0_i32_1 : i32, i32, i32
  }
  func.func @transform_15(%arg0: i32) -> (i32, i32, i32) {
    %c0_i32 = arith.constant 0 : i32
    %c0_i32_0 = arith.constant 0 : i32
    %c0_i32_1 = arith.constant 0 : i32
    %c0_i32_2 = arith.constant 0 : i32
    return %c0_i32, %c0_i32_0, %c0_i32_1 : i32, i32, i32
  }
  func.func @transform_16(%arg0: i32) -> (i32, i32, i32) {
    %c0_i32 = arith.constant 0 : i32
    %c0_i32_0 = arith.constant 0 : i32
    %c0_i32_1 = arith.constant 0 : i32
    %c0_i32_2 = arith.constant 0 : i32
    return %c0_i32, %c0_i32_0, %c0_i32_1 : i32, i32, i32
  }
  func.func @transform_17(%arg0: i32) -> (i32, i32, i32) {
    %c0_i32 = arith.constant 0 : i32
    %c0_i32_0 = arith.constant 0 : i32
    %c0_i32_1 = arith.constant 0 : i32
    %c0_i32_2 = arith.constant 0 : i32
    return %c0_i32, %c0_i32_0, %c0_i32_1 : i32, i32, i32
  }
  func.func @transform_18(%arg0: i32) -> (i32, i32, i32) {
    %c0_i32 = arith.constant 0 : i32
    %c0_i32_0 = arith.constant 0 : i32
    %c0_i32_1 = arith.constant 0 : i32
    %c0_i32_2 = arith.constant 0 : i32
    return %c0_i32, %c0_i32_0, %c0_i32_1 : i32, i32, i32
  }
  func.func @transform_19(%arg0: i32) -> (i32, i32, i32) {
    %c0_i32 = arith.constant 0 : i32
    %c0_i32_0 = arith.constant 0 : i32
    %c0_i32_1 = arith.constant 0 : i32
    %c0_i32_2 = arith.constant 0 : i32
    return %c0_i32, %c0_i32_0, %c0_i32_1 : i32, i32, i32
  }
  func.func @transform_20(%arg0: i32) -> (i32, i32, i32) {
    %c0_i32 = arith.constant 0 : i32
    %c0_i32_0 = arith.constant 0 : i32
    %c0_i32_1 = arith.constant 0 : i32
    %c0_i32_2 = arith.constant 0 : i32
    return %c0_i32, %c0_i32_0, %c0_i32_1 : i32, i32, i32
  }
  func.func @transform_21(%arg0: i32) -> (i32, i32, i32) {
    %c0_i32 = arith.constant 0 : i32
    %c0_i32_0 = arith.constant 0 : i32
    %c0_i32_1 = arith.constant 0 : i32
    %c0_i32_2 = arith.constant 0 : i32
    return %c0_i32, %c0_i32_0, %c0_i32_1 : i32, i32, i32
  }
  func.func @transform_22(%arg0: i32) -> (i32, i32, i32) {
    %c0_i32 = arith.constant 0 : i32
    %c0_i32_0 = arith.constant 0 : i32
    %c0_i32_1 = arith.constant 0 : i32
    %c0_i32_2 = arith.constant 0 : i32
    return %c0_i32, %c0_i32_0, %c0_i32_1 : i32, i32, i32
  }
  func.func @transform_23(%arg0: i32) -> (i32, i32, i32) {
    %c0_i32 = arith.constant 0 : i32
    %c0_i32_0 = arith.constant 0 : i32
    %c0_i32_1 = arith.constant 0 : i32
    return %arg0, %c0_i32, %c0_i32_0 : i32, i32, i32
  }
}

</mosaic_0001>

<llo_original>
// kernel: transformer_decoder_forward.1
$region0: #{transformer_decoder_forward.1}
  #allocation0 [shape = 'u32[]', space=smem, size = 0x4, offset = 0x4, fixed_abs, tag = 'smem constant byte address 0x4 - core index']
  #allocation1 [shape = 'u32[144,128]{1,0:T(1,128)}', space=vmem, size = 0x12000, scoped, tag = 'internal scratch']
  %s0 = inlined_call_operand.vmem [shape: f32[2,8,32], index: 0, kind: input, shape index: {}]
  %s1 = inlined_call_operand.vmem [shape: f32[2,16,32], index: 1, kind: input, shape index: {}]
  %s2 = inlined_call_operand.vmem [shape: f32[2,16,32], index: 2, kind: input, shape index: {}]
  %s3 = inlined_call_operand.vmem [shape: f32[2,4,32,8], index: 3, kind: input, shape index: {}]
  %s4 = inlined_call_operand.vmem [shape: f32[2,4,32,8], index: 4, kind: input, shape index: {}]
  %s5 = inlined_call_operand.vmem [shape: f32[2,4,32,8], index: 5, kind: input, shape index: {}]
  %s6 = inlined_call_operand.vmem [shape: f32[2,4,8,32], index: 6, kind: input, shape index: {}]
  %s7 = inlined_call_operand.vmem [shape: f32[2,1,32], index: 7, kind: input, shape index: {}]
  %s8 = inlined_call_operand.vmem [shape: f32[2,4,32,8], index: 8, kind: input, shape index: {}]
  %s9 = inlined_call_operand.vmem [shape: f32[2,4,32,8], index: 9, kind: input, shape index: {}]
  %s10 = inlined_call_operand.vmem [shape: f32[2,4,32,8], index: 10, kind: input, shape index: {}]
  %s11 = inlined_call_operand.vmem [shape: f32[2,4,8,32], index: 11, kind: input, shape index: {}]
  %s12 = inlined_call_operand.vmem [shape: f32[2,1,32], index: 12, kind: input, shape index: {}]
  %s13 = inlined_call_operand.vmem [shape: f32[2,32,64], index: 13, kind: input, shape index: {}]
  %s14 = inlined_call_operand.vmem [shape: f32[2,1,64], index: 14, kind: input, shape index: {}]
  %s15 = inlined_call_operand.vmem [shape: f32[2,64,32], index: 15, kind: input, shape index: {}]
  %s16 = inlined_call_operand.vmem [shape: f32[2,1,32], index: 16, kind: input, shape index: {}]
  %s17 = inlined_call_operand.vmem [shape: f32[2,1,32], index: 17, kind: input, shape index: {}]
  %s18 = inlined_call_operand.vmem [shape: f32[2,1,32], index: 18, kind: input, shape index: {}]
  %s19 = inlined_call_operand.vmem [shape: f32[2,1,32], index: 19, kind: input, shape index: {}]
  %s20 = inlined_call_operand.vmem [shape: f32[2,1,32], index: 20, kind: input, shape index: {}]
  %s21 = inlined_call_operand.vmem [shape: f32[2,1,32], index: 21, kind: input, shape index: {}]
  %s22 = inlined_call_operand.vmem [shape: f32[2,1,32], index: 22, kind: input, shape index: {}]
  %s23 = inlined_call_operand.hbm [shape: f32[2,8,32], index: 23, kind: output, shape index: {}]
  %s24 = sld [smem:[#allocation0]]
  $region125: #{transformer_decoder_forward.1} parent=0
    _
  %s26 = ssub.s32 1, %s24
  %s27 = scalar_select 0, %s26, %s24
  $region1: #{transformer_decoder_forward.1} parent=0
    #allocation2 [shape = 'u8[8192]{0}', space=vmem, size = 0x2000, scoped, tag = 'output window, operand 0']
    #allocation3 [shape = 's32[2]{0}', space=sflag, size = 0x8, scoped, tag = 'scoped memory for transformer_decoder_forward.1']
    %28 = vsyncpa [#allocation3], 0
    %s29 = scalar_lea.sflag [#allocation3], 1
    %30 = vsyncpa %s29, 0
    loop: start=0, step=1, limit=4
    $region2: #{transformer_decoder_forward.1} parent=1 // loop_pre_header
      _
    $region3: #{transformer_decoder_forward.1} parent=1 // loop_header
      %s32 = sphi 0, %s36
      %p33 = scmp.ge.s32.totalorder %s32, 4
      %s42 = sphi 0, %s44
      %s45 = sphi 0, %s42
      %s46 = sphi 0, %s45
      %s62 = sphi 0, %s46
      %s68 = sphi 0, %s70
      %s71 = sphi 0, %s68
      %s72 = sphi 0, %s71
      %s88 = sphi 0, %s72
      %s94 = sphi 0, %s96
      %s97 = sphi 0, %s94
      %s98 = sphi 0, %s97
      %s114 = sphi 0, %s98
      %s118 = sphi 0, %s118
      %s120 = sphi 0, %s118
      %s121 = sphi 0, %s120
      %s135 = sphi 0, %s121
      %s139 = sphi 0, %s139
      %s141 = sphi 0, %s139
      %s142 = sphi 0, %s141
      %s156 = sphi 0, %s142
      %s160 = sphi 0, %s160
      %s162 = sphi 0, %s160
      %s163 = sphi 0, %s162
      %s177 = sphi 0, %s163
      %s181 = sphi 0, %s181
      %s183 = sphi 0, %s181
      %s184 = sphi 0, %s183
      %s198 = sphi 0, %s184
      %s202 = sphi 0, %s202
      %s204 = sphi 0, %s202
      %s205 = sphi 0, %s204
      %s219 = sphi 0, %s205
      %s223 = sphi 0, %s223
      %s225 = sphi 0, %s223
      %s226 = sphi 0, %s225
      %s240 = sphi 0, %s226
      %s244 = sphi 0, %s244
      %s246 = sphi 0, %s244
      %s247 = sphi 0, %s246
      %s261 = sphi 0, %s247
      %s265 = sphi 0, %s265
      %s267 = sphi 0, %s265
      %s268 = sphi 0, %s267
      %s282 = sphi 0, %s268
      %s286 = sphi 0, %s286
      %s288 = sphi 0, %s286
      %s289 = sphi 0, %s288
      %s303 = sphi 0, %s289
      %s307 = sphi 0, %s307
      %s309 = sphi 0, %s307
      %s310 = sphi 0, %s309
      %s324 = sphi 0, %s310
      %s328 = sphi 0, %s328
      %s330 = sphi 0, %s328
      %s331 = sphi 0, %s330
      %s345 = sphi 0, %s331
      %s349 = sphi 0, %s349
      %s351 = sphi 0, %s349
      %s352 = sphi 0, %s351
      %s366 = sphi 0, %s352
      %s370 = sphi 0, %s370
      %s372 = sphi 0, %s370
      %s373 = sphi 0, %s372
      %s387 = sphi 0, %s373
      %s391 = sphi 0, %s391
      %s393 = sphi 0, %s391
      %s394 = sphi 0, %s393
      %s408 = sphi 0, %s394
      %s412 = sphi 0, %s412
      %s414 = sphi 0, %s412
      %s415 = sphi 0, %s414
      %s429 = sphi 0, %s415
      %s433 = sphi 0, %s433
      %s435 = sphi 0, %s433
      %s436 = sphi 0, %s435
      %s450 = sphi 0, %s436
      %s454 = sphi 0, %s454
      %s456 = sphi 0, %s454
      %s457 = sphi 0, %s456
      %s471 = sphi 0, %s457
      %s475 = sphi 0, %s475
      %s477 = sphi 0, %s475
      %s478 = sphi 0, %s477
      %s492 = sphi 0, %s478
      %s496 = sphi 0, %s496
      %s498 = sphi 0, %s496
      %s499 = sphi 0, %s498
      %s513 = sphi 0, %s499
      %s517 = sphi 0, %s517
      %s519 = sphi 0, %s517
      %s520 = sphi 0, %s519
      %s534 = sphi 0, %s520
      %s540 = sphi 0, %s542
      %s543 = sphi 0, %s540
      %s544 = sphi 0, %s543
      %s560 = sphi 0, %s544
    $region4: #{transformer_decoder_forward.1} parent=1 // loop_header_branch
      %35 = sbr.rel (%p33) target = $region8
    $region5: #{transformer_decoder_forward.1} parent=1 // loop_body
      %s37 = ssub.s32 %s32, 1
      %s38 = ssub.s32 %s32, 2
      %s39 = sadd.s32 %s32, 1
      %s40 = ssub.s32 %s32, %s39
      %p41 = scmp.eq.s32.totalorder %s40, 0
      %s43 = sadd.s32 %s42, 1
      %s44 = scalar_select %p41, %s42, %s43
      %p47 = pneg %p41
      %p48 = scmp.eq.s32.totalorder %s32, 1
      %p49 = por %p47, %p48
      %p50 = scmp.ne.s32.totalorder %s42, %s45
      %p51 = scmp.eq.s32.totalorder %s32, 0
      %p52 = por %p50, %p51
      %p53 = scmp.ne.s32.totalorder %s42, %s45
      %p54 = scmp.eq.s32.totalorder %s37, 1
      %p55 = por %p53, %p54
      %p56 = scmp.ne.s32.totalorder %s45, %s46
      %p57 = scmp.eq.s32.totalorder %s37, 0
      %p58 = por %p56, %p57
      %p59 = scmp.ne.s32.totalorder %s45, %s46
      %p60 = scmp.eq.s32.totalorder %s38, 1
      %p61 = por %p59, %p60
      %p63 = scmp.ne.s32.totalorder %s46, %s62
      %p64 = scmp.eq.s32.totalorder %s38, 0
      %p65 = por %p63, %p64
      %s66 = ssub.s32 %s32, %s39
      %p67 = scmp.eq.s32.totalorder %s66, 0
      %s69 = sadd.s32 %s68, 1
      %s70 = scalar_select %p67, %s68, %s69
      %p73 = pneg %p67
      %p74 = scmp.eq.s32.totalorder %s32, 1
      %p75 = por %p73, %p74
      %p76 = scmp.ne.s32.totalorder %s68, %s71
      %p77 = scmp.eq.s32.totalorder %s32, 0
      %p78 = por %p76, %p77
      %p79 = scmp.ne.s32.totalorder %s68, %s71
      %p80 = scmp.eq.s32.totalorder %s37, 1
      %p81 = por %p79, %p80
      %p82 = scmp.ne.s32.totalorder %s71, %s72
      %p83 = scmp.eq.s32.totalorder %s37, 0
      %p84 = por %p82, %p83
      %p85 = scmp.ne.s32.totalorder %s71, %s72
      %p86 = scmp.eq.s32.totalorder %s38, 1
      %p87 = por %p85, %p86
      %p89 = scmp.ne.s32.totalorder %s72, %s88
      %p90 = scmp.eq.s32.totalorder %s38, 0
      %p91 = por %p89, %p90
      %s92 = ssub.s32 %s32, %s39
      %p93 = scmp.eq.s32.totalorder %s92, 0
      %s95 = sadd.s32 %s94, 1
      %s96 = scalar_select %p93, %s94, %s95
      %p99 = pneg %p93
      %p100 = scmp.eq.s32.totalorder %s32, 1
      %p101 = por %p99, %p100
      %p102 = scmp.ne.s32.totalorder %s94, %s97
      %p103 = scmp.eq.s32.totalorder %s32, 0
      %p104 = por %p102, %p103
      %p105 = scmp.ne.s32.totalorder %s94, %s97
      %p106 = scmp.eq.s32.totalorder %s37, 1
      %p107 = por %p105, %p106
      %p108 = scmp.ne.s32.totalorder %s97, %s98
      %p109 = scmp.eq.s32.totalorder %s37, 0
      %p110 = por %p108, %p109
      %p111 = scmp.ne.s32.totalorder %s97, %s98
      %p112 = scmp.eq.s32.totalorder %s38, 1
      %p113 = por %p111, %p112
      %p115 = scmp.ne.s32.totalorder %s98, %s114
      %p116 = scmp.eq.s32.totalorder %s38, 0
      %p117 = por %p115, %p116
      %s119 = sadd.s32 %s118, 1
      %p122 = scmp.eq.s32.totalorder %s32, 1
      %p123 = scmp.ne.s32.totalorder %s118, %s120
      %p124 = scmp.eq.s32.totalorder %s32, 0
      %p125 = por %p123, %p124
      %p126 = scmp.ne.s32.totalorder %s118, %s120
      %p127 = scmp.eq.s32.totalorder %s37, 1
      %p128 = por %p126, %p127
      %p129 = scmp.ne.s32.totalorder %s120, %s121
      %p130 = scmp.eq.s32.totalorder %s37, 0
      %p131 = por %p129, %p130
      %p132 = scmp.ne.s32.totalorder %s120, %s121
      %p133 = scmp.eq.s32.totalorder %s38, 1
      %p134 = por %p132, %p133
      %p136 = scmp.ne.s32.totalorder %s121, %s135
      %p137 = scmp.eq.s32.totalorder %s38, 0
      %p138 = por %p136, %p137
      %s140 = sadd.s32 %s139, 1
      %p143 = scmp.eq.s32.totalorder %s32, 1
      %p144 = scmp.ne.s32.totalorder %s139, %s141
      %p145 = scmp.eq.s32.totalorder %s32, 0
      %p146 = por %p144, %p145
      %p147 = scmp.ne.s32.totalorder %s139, %s141
      %p148 = scmp.eq.s32.totalorder %s37, 1
      %p149 = por %p147, %p148
      %p150 = scmp.ne.s32.totalorder %s141, %s142
      %p151 = scmp.eq.s32.totalorder %s37, 0
      %p152 = por %p150, %p151
      %p153 = scmp.ne.s32.totalorder %s141, %s142
      %p154 = scmp.eq.s32.totalorder %s38, 1
      %p155 = por %p153, %p154
      %p157 = scmp.ne.s32.totalorder %s142, %s156
      %p158 = scmp.eq.s32.totalorder %s38, 0
      %p159 = por %p157, %p158
      %s161 = sadd.s32 %s160, 1
      %p164 = scmp.eq.s32.totalorder %s32, 1
      %p165 = scmp.ne.s32.totalorder %s160, %s162
      %p166 = scmp.eq.s32.totalorder %s32, 0
      %p167 = por %p165, %p166
      %p168 = scmp.ne.s32.totalorder %s160, %s162
      %p169 = scmp.eq.s32.totalorder %s37, 1
      %p170 = por %p168, %p169
      %p171 = scmp.ne.s32.totalorder %s162, %s163
      %p172 = scmp.eq.s32.totalorder %s37, 0
      %p173 = por %p171, %p172
      %p174 = scmp.ne.s32.totalorder %s162, %s163
      %p175 = scmp.eq.s32.totalorder %s38, 1
      %p176 = por %p174, %p175
      %p178 = scmp.ne.s32.totalorder %s163, %s177
      %p179 = scmp.eq.s32.totalorder %s38, 0
      %p180 = por %p178, %p179
      %s182 = sadd.s32 %s181, 1
      %p185 = scmp.eq.s32.totalorder %s32, 1
      %p186 = scmp.ne.s32.totalorder %s181, %s183
      %p187 = scmp.eq.s32.totalorder %s32, 0
      %p188 = por %p186, %p187
      %p189 = scmp.ne.s32.totalorder %s181, %s183
      %p190 = scmp.eq.s32.totalorder %s37, 1
      %p191 = por %p189, %p190
      %p192 = scmp.ne.s32.totalorder %s183, %s184
      %p193 = scmp.eq.s32.totalorder %s37, 0
      %p194 = por %p192, %p193
      %p195 = scmp.ne.s32.totalorder %s183, %s184
      %p196 = scmp.eq.s32.totalorder %s38, 1
      %p197 = por %p195, %p196
      %p199 = scmp.ne.s32.totalorder %s184, %s198
      %p200 = scmp.eq.s32.totalorder %s38, 0
      %p201 = por %p199, %p200
      %s203 = sadd.s32 %s202, 1
      %p206 = scmp.eq.s32.totalorder %s32, 1
      %p207 = scmp.ne.s32.totalorder %s202, %s204
      %p208 = scmp.eq.s32.totalorder %s32, 0
      %p209 = por %p207, %p208
      %p210 = scmp.ne.s32.totalorder %s202, %s204
      %p211 = scmp.eq.s32.totalorder %s37, 1
      %p212 = por %p210, %p211
      %p213 = scmp.ne.s32.totalorder %s204, %s205
      %p214 = scmp.eq.s32.totalorder %s37, 0
      %p215 = por %p213, %p214
      %p216 = scmp.ne.s32.totalorder %s204, %s205
      %p217 = scmp.eq.s32.totalorder %s38, 1
      %p218 = por %p216, %p217
      %p220 = scmp.ne.s32.totalorder %s205, %s219
      %p221 = scmp.eq.s32.totalorder %s38, 0
      %p222 = por %p220, %p221
      %s224 = sadd.s32 %s223, 1
      %p227 = scmp.eq.s32.totalorder %s32, 1
      %p228 = scmp.ne.s32.totalorder %s223, %s225
      %p229 = scmp.eq.s32.totalorder %s32, 0
      %p230 = por %p228, %p229
      %p231 = scmp.ne.s32.totalorder %s223, %s225
      %p232 = scmp.eq.s32.totalorder %s37, 1
      %p233 = por %p231, %p232
      %p234 = scmp.ne.s32.totalorder %s225, %s226
      %p235 = scmp.eq.s32.totalorder %s37, 0
      %p236 = por %p234, %p235
      %p237 = scmp.ne.s32.totalorder %s225, %s226
      %p238 = scmp.eq.s32.totalorder %s38, 1
      %p239 = por %p237, %p238
      %p241 = scmp.ne.s32.totalorder %s226, %s240
      %p242 = scmp.eq.s32.totalorder %s38, 0
      %p243 = por %p241, %p242
      %s245 = sadd.s32 %s244, 1
      %p248 = scmp.eq.s32.totalorder %s32, 1
      %p249 = scmp.ne.s32.totalorder %s244, %s246
      %p250 = scmp.eq.s32.totalorder %s32, 0
      %p251 = por %p249, %p250
      %p252 = scmp.ne.s32.totalorder %s244, %s246
      %p253 = scmp.eq.s32.totalorder %s37, 1
      %p254 = por %p252, %p253
      %p255 = scmp.ne.s32.totalorder %s246, %s247
      %p256 = scmp.eq.s32.totalorder %s37, 0
      %p257 = por %p255, %p256
      %p258 = scmp.ne.s32.totalorder %s246, %s247
      %p259 = scmp.eq.s32.totalorder %s38, 1
      %p260 = por %p258, %p259
      %p262 = scmp.ne.s32.totalorder %s247, %s261
      %p263 = scmp.eq.s32.totalorder %s38, 0
      %p264 = por %p262, %p263
      %s266 = sadd.s32 %s265, 1
      %p269 = scmp.eq.s32.totalorder %s32, 1
      %p270 = scmp.ne.s32.totalorder %s265, %s267
      %p271 = scmp.eq.s32.totalorder %s32, 0
      %p272 = por %p270, %p271
      %p273 = scmp.ne.s32.totalorder %s265, %s267
      %p274 = scmp.eq.s32.totalorder %s37, 1
      %p275 = por %p273, %p274
      %p276 = scmp.ne.s32.totalorder %s267, %s268
      %p277 = scmp.eq.s32.totalorder %s37, 0
      %p278 = por %p276, %p277
      %p279 = scmp.ne.s32.totalorder %s267, %s268
      %p280 = scmp.eq.s32.totalorder %s38, 1
      %p281 = por %p279, %p280
      %p283 = scmp.ne.s32.totalorder %s268, %s282
      %p284 = scmp.eq.s32.totalorder %s38, 0
      %p285 = por %p283, %p284
      %s287 = sadd.s32 %s286, 1
      %p290 = scmp.eq.s32.totalorder %s32, 1
      %p291 = scmp.ne.s32.totalorder %s286, %s288
      %p292 = scmp.eq.s32.totalorder %s32, 0
      %p293 = por %p291, %p292
      %p294 = scmp.ne.s32.totalorder %s286, %s288
      %p295 = scmp.eq.s32.totalorder %s37, 1
      %p296 = por %p294, %p295
      %p297 = scmp.ne.s32.totalorder %s288, %s289
      %p298 = scmp.eq.s32.totalorder %s37, 0
      %p299 = por %p297, %p298
      %p300 = scmp.ne.s32.totalorder %s288, %s289
      %p301 = scmp.eq.s32.totalorder %s38, 1
      %p302 = por %p300, %p301
      %p304 = scmp.ne.s32.totalorder %s289, %s303
      %p305 = scmp.eq.s32.totalorder %s38, 0
      %p306 = por %p304, %p305
      %s308 = sadd.s32 %s307, 1
      %p311 = scmp.eq.s32.totalorder %s32, 1
      %p312 = scmp.ne.s32.totalorder %s307, %s309
      %p313 = scmp.eq.s32.totalorder %s32, 0
      %p314 = por %p312, %p313
      %p315 = scmp.ne.s32.totalorder %s307, %s309
      %p316 = scmp.eq.s32.totalorder %s37, 1
      %p317 = por %p315, %p316
      %p318 = scmp.ne.s32.totalorder %s309, %s310
      %p319 = scmp.eq.s32.totalorder %s37, 0
      %p320 = por %p318, %p319
      %p321 = scmp.ne.s32.totalorder %s309, %s310
      %p322 = scmp.eq.s32.totalorder %s38, 1
      %p323 = por %p321, %p322
      %p325 = scmp.ne.s32.totalorder %s310, %s324
      %p326 = scmp.eq.s32.totalorder %s38, 0
      %p327 = por %p325, %p326
      %s329 = sadd.s32 %s328, 1
      %p332 = scmp.eq.s32.totalorder %s32, 1
      %p333 = scmp.ne.s32.totalorder %s328, %s330
      %p334 = scmp.eq.s32.totalorder %s32, 0
      %p335 = por %p333, %p334
      %p336 = scmp.ne.s32.totalorder %s328, %s330
      %p337 = scmp.eq.s32.totalorder %s37, 1
      %p338 = por %p336, %p337
      %p339 = scmp.ne.s32.totalorder %s330, %s331
      %p340 = scmp.eq.s32.totalorder %s37, 0
      %p341 = por %p339, %p340
      %p342 = scmp.ne.s32.totalorder %s330, %s331
      %p343 = scmp.eq.s32.totalorder %s38, 1
      %p344 = por %p342, %p343
      %p346 = scmp.ne.s32.totalorder %s331, %s345
      %p347 = scmp.eq.s32.totalorder %s38, 0
      %p348 = por %p346, %p347
      %s350 = sadd.s32 %s349, 1
      %p353 = scmp.eq.s32.totalorder %s32, 1
      %p354 = scmp.ne.s32.totalorder %s349, %s351
      %p355 = scmp.eq.s32.totalorder %s32, 0
      %p356 = por %p354, %p355
      %p357 = scmp.ne.s32.totalorder %s349, %s351
      %p358 = scmp.eq.s32.totalorder %s37, 1
      %p359 = por %p357, %p358
      %p360 = scmp.ne.s32.totalorder %s351, %s352
      %p361 = scmp.eq.s32.totalorder %s37, 0
      %p362 = por %p360, %p361
      %p363 = scmp.ne.s32.totalorder %s351, %s352
      %p364 = scmp.eq.s32.totalorder %s38, 1
      %p365 = por %p363, %p364
      %p367 = scmp.ne.s32.totalorder %s352, %s366
      %p368 = scmp.eq.s32.totalorder %s38, 0
      %p369 = por %p367, %p368
      %s371 = sadd.s32 %s370, 1
      %p374 = scmp.eq.s32.totalorder %s32, 1
      %p375 = scmp.ne.s32.totalorder %s370, %s372
      %p376 = scmp.eq.s32.totalorder %s32, 0
      %p377 = por %p375, %p376
      %p378 = scmp.ne.s32.totalorder %s370, %s372
      %p379 = scmp.eq.s32.totalorder %s37, 1
      %p380 = por %p378, %p379
      %p381 = scmp.ne.s32.totalorder %s372, %s373
      %p382 = scmp.eq.s32.totalorder %s37, 0
      %p383 = por %p381, %p382
      %p384 = scmp.ne.s32.totalorder %s372, %s373
      %p385 = scmp.eq.s32.totalorder %s38, 1
      %p386 = por %p384, %p385
      %p388 = scmp.ne.s32.totalorder %s373, %s387
      %p389 = scmp.eq.s32.totalorder %s38, 0
      %p390 = por %p388, %p389
      %s392 = sadd.s32 %s391, 1
      %p395 = scmp.eq.s32.totalorder %s32, 1
      %p396 = scmp.ne.s32.totalorder %s391, %s393
      %p397 = scmp.eq.s32.totalorder %s32, 0
      %p398 = por %p396, %p397
      %p399 = scmp.ne.s32.totalorder %s391, %s393
      %p400 = scmp.eq.s32.totalorder %s37, 1
      %p401 = por %p399, %p400
      %p402 = scmp.ne.s32.totalorder %s393, %s394
      %p403 = scmp.eq.s32.totalorder %s37, 0
      %p404 = por %p402, %p403
      %p405 = scmp.ne.s32.totalorder %s393, %s394
      %p406 = scmp.eq.s32.totalorder %s38, 1
      %p407 = por %p405, %p406
      %p409 = scmp.ne.s32.totalorder %s394, %s408
      %p410 = scmp.eq.s32.totalorder %s38, 0
      %p411 = por %p409, %p410
      %s413 = sadd.s32 %s412, 1
      %p416 = scmp.eq.s32.totalorder %s32, 1
      %p417 = scmp.ne.s32.totalorder %s412, %s414
      %p418 = scmp.eq.s32.totalorder %s32, 0
      %p419 = por %p417, %p418
      %p420 = scmp.ne.s32.totalorder %s412, %s414
      %p421 = scmp.eq.s32.totalorder %s37, 1
      %p422 = por %p420, %p421
      %p423 = scmp.ne.s32.totalorder %s414, %s415
      %p424 = scmp.eq.s32.totalorder %s37, 0
      %p425 = por %p423, %p424
      %p426 = scmp.ne.s32.totalorder %s414, %s415
      %p427 = scmp.eq.s32.totalorder %s38, 1
      %p428 = por %p426, %p427
      %p430 = scmp.ne.s32.totalorder %s415, %s429
      %p431 = scmp.eq.s32.totalorder %s38, 0
      %p432 = por %p430, %p431
      %s434 = sadd.s32 %s433, 1
      %p437 = scmp.eq.s32.totalorder %s32, 1
      %p438 = scmp.ne.s32.totalorder %s433, %s435
      %p439 = scmp.eq.s32.totalorder %s32, 0
      %p440 = por %p438, %p439
      %p441 = scmp.ne.s32.totalorder %s433, %s435
      %p442 = scmp.eq.s32.totalorder %s37, 1
      %p443 = por %p441, %p442
      %p444 = scmp.ne.s32.totalorder %s435, %s436
      %p445 = scmp.eq.s32.totalorder %s37, 0
      %p446 = por %p444, %p445
      %p447 = scmp.ne.s32.totalorder %s435, %s436
      %p448 = scmp.eq.s32.totalorder %s38, 1
      %p449 = por %p447, %p448
      %p451 = scmp.ne.s32.totalorder %s436, %s450
      %p452 = scmp.eq.s32.totalorder %s38, 0
      %p453 = por %p451, %p452
      %s455 = sadd.s32 %s454, 1
      %p458 = scmp.eq.s32.totalorder %s32, 1
      %p459 = scmp.ne.s32.totalorder %s454, %s456
      %p460 = scmp.eq.s32.totalorder %s32, 0
      %p461 = por %p459, %p460
      %p462 = scmp.ne.s32.totalorder %s454, %s456
      %p463 = scmp.eq.s32.totalorder %s37, 1
      %p464 = por %p462, %p463
      %p465 = scmp.ne.s32.totalorder %s456, %s457
      %p466 = scmp.eq.s32.totalorder %s37, 0
      %p467 = por %p465, %p466
      %p468 = scmp.ne.s32.totalorder %s456, %s457
      %p469 = scmp.eq.s32.totalorder %s38, 1
      %p470 = por %p468, %p469
      %p472 = scmp.ne.s32.totalorder %s457, %s471
      %p473 = scmp.eq.s32.totalorder %s38, 0
      %p474 = por %p472, %p473
      %s476 = sadd.s32 %s475, 1
      %p479 = scmp.eq.s32.totalorder %s32, 1
      %p480 = scmp.ne.s32.totalorder %s475, %s477
      %p481 = scmp.eq.s32.totalorder %s32, 0
      %p482 = por %p480, %p481
      %p483 = scmp.ne.s32.totalorder %s475, %s477
      %p484 = scmp.eq.s32.totalorder %s37, 1
      %p485 = por %p483, %p484
      %p486 = scmp.ne.s32.totalorder %s477, %s478
      %p487 = scmp.eq.s32.totalorder %s37, 0
      %p488 = por %p486, %p487
      %p489 = scmp.ne.s32.totalorder %s477, %s478
      %p490 = scmp.eq.s32.totalorder %s38, 1
      %p491 = por %p489, %p490
      %p493 = scmp.ne.s32.totalorder %s478, %s492
      %p494 = scmp.eq.s32.totalorder %s38, 0
      %p495 = por %p493, %p494
      %s497 = sadd.s32 %s496, 1
      %p500 = scmp.eq.s32.totalorder %s32, 1
      %p501 = scmp.ne.s32.totalorder %s496, %s498
      %p502 = scmp.eq.s32.totalorder %s32, 0
      %p503 = por %p501, %p502
      %p504 = scmp.ne.s32.totalorder %s496, %s498
      %p505 = scmp.eq.s32.totalorder %s37, 1
      %p506 = por %p504, %p505
      %p507 = scmp.ne.s32.totalorder %s498, %s499
      %p508 = scmp.eq.s32.totalorder %s37, 0
      %p509 = por %p507, %p508
      %p510 = scmp.ne.s32.totalorder %s498, %s499
      %p511 = scmp.eq.s32.totalorder %s38, 1
      %p512 = por %p510, %p511
      %p514 = scmp.ne.s32.totalorder %s499, %s513
      %p515 = scmp.eq.s32.totalorder %s38, 0
      %p516 = por %p514, %p515
      %s518 = sadd.s32 %s517, 1
      %p521 = scmp.eq.s32.totalorder %s32, 1
      %p522 = scmp.ne.s32.totalorder %s517, %s519
      %p523 = scmp.eq.s32.totalorder %s32, 0
      %p524 = por %p522, %p523
      %p525 = scmp.ne.s32.totalorder %s517, %s519
      %p526 = scmp.eq.s32.totalorder %s37, 1
      %p527 = por %p525, %p526
      %p528 = scmp.ne.s32.totalorder %s519, %s520
      %p529 = scmp.eq.s32.totalorder %s37, 0
      %p530 = por %p528, %p529
      %p531 = scmp.ne.s32.totalorder %s519, %s520
      %p532 = scmp.eq.s32.totalorder %s38, 1
      %p533 = por %p531, %p532
      %p535 = scmp.ne.s32.totalorder %s520, %s534
      %p536 = scmp.eq.s32.totalorder %s38, 0
      %p537 = por %p535, %p536
      %s538 = ssub.s32 %s32, %s39
      %p539 = scmp.eq.s32.totalorder %s538, 0
      %s541 = sadd.s32 %s540, 1
      %s542 = scalar_select %p539, %s540, %s541
      %p545 = pneg %p539
      %p546 = scmp.eq.s32.totalorder %s32, 1
      %p547 = por %p545, %p546
      %p548 = scmp.ne.s32.totalorder %s540, %s543
      %p549 = scmp.eq.s32.totalorder %s32, 0
      %p550 = por %p548, %p549
      %p551 = scmp.ne.s32.totalorder %s540, %s543
      %p552 = scmp.eq.s32.totalorder %s37, 1
      %p553 = por %p551, %p552
      %p554 = scmp.ne.s32.totalorder %s543, %s544
      %p555 = scmp.eq.s32.totalorder %s37, 0
      %p556 = por %p554, %p555
      %p557 = scmp.ne.s32.totalorder %s543, %s544
      %p558 = scmp.eq.s32.totalorder %s38, 1
      %p559 = por %p557, %p558
      %p561 = scmp.ne.s32.totalorder %s544, %s560
      %p562 = scmp.eq.s32.totalorder %s38, 0
      %p563 = por %p561, %p562
      %p564 = scmp.le.s32.totalorder 1, %s32
      %p565 = scmp.lt.s32.totalorder %s32, 3
      %p566 = pnand %p564, %p565
      %p567 = pneg %p566
      // Predicated region
      $region9: #{transformer_decoder_forward.1} parent=5 // pred_check
        _
      $region10: #{transformer_decoder_forward.1} parent=5 // pred_check_branch
        %569 = sbr.rel (%p566) target = $region12
      $region11: #{transformer_decoder_forward.1} parent=5 // pred_region
        %s570 = ssub.s32 %s32, 1
        // Predicated region
        $region13: #{transformer_decoder_forward.1} parent=11 // pred_check
          %p571 = pneg %p131
        $region14: #{transformer_decoder_forward.1} parent=11 // pred_check_branch
          %573 = sbr.rel (%p571) target = $region16
        $region15: #{transformer_decoder_forward.1} parent=11 // pred_region
          _
        $region16: #{transformer_decoder_forward.1} parent=11 // pred_fallthru
          _
        // Predicated region
        $region17: #{transformer_decoder_forward.1} parent=11 // pred_check
          %p574 = pneg %p152
        $region18: #{transformer_decoder_forward.1} parent=11 // pred_check_branch
          %576 = sbr.rel (%p574) target = $region20
        $region19: #{transformer_decoder_forward.1} parent=11 // pred_region
          _
        $region20: #{transformer_decoder_forward.1} parent=11 // pred_fallthru
          _
        // Predicated region
        $region21: #{transformer_decoder_forward.1} parent=11 // pred_check
          %p577 = pneg %p173
        $region22: #{transformer_decoder_forward.1} parent=11 // pred_check_branch
          %579 = sbr.rel (%p577) target = $region24
        $region23: #{transformer_decoder_forward.1} parent=11 // pred_region
          _
        $region24: #{transformer_decoder_forward.1} parent=11 // pred_fallthru
          _
        // Predicated region
        $region25: #{transformer_decoder_forward.1} parent=11 // pred_check
          %p580 = pneg %p194
        $region26: #{transformer_decoder_forward.1} parent=11 // pred_check_branch
          %582 = sbr.rel (%p580) target = $region28
        $region27: #{transformer_decoder_forward.1} parent=11 // pred_region
          _
        $region28: #{transformer_decoder_forward.1} parent=11 // pred_fallthru
          _
        // Predicated region
        $region29: #{transformer_decoder_forward.1} parent=11 // pred_check
          %p583 = pneg %p215
        $region30: #{transformer_decoder_forward.1} parent=11 // pred_check_branch
          %585 = sbr.rel (%p583) target = $region32
        $region31: #{transformer_decoder_forward.1} parent=11 // pred_region
          _
        $region32: #{transformer_decoder_forward.1} parent=11 // pred_fallthru
          _
        // Predicated region
        $region33: #{transformer_decoder_forward.1} parent=11 // pred_check
          %p586 = pneg %p236
        $region34: #{transformer_decoder_forward.1} parent=11 // pred_check_branch
          %588 = sbr.rel (%p586) target = $region36
        $region35: #{transformer_decoder_forward.1} parent=11 // pred_region
          _
        $region36: #{transformer_decoder_forward.1} parent=11 // pred_fallthru
          _
        // Predicated region
        $region37: #{transformer_decoder_forward.1} parent=11 // pred_check
          %p589 = pneg %p257
        $region38: #{transformer_decoder_forward.1} parent=11 // pred_check_branch
          %591 = sbr.rel (%p589) target = $region40
        $region39: #{transformer_decoder_forward.1} parent=11 // pred_region
          _
        $region40: #{transformer_decoder_forward.1} parent=11 // pred_fallthru
          _
        // Predicated region
        $region41: #{transformer_decoder_forward.1} parent=11 // pred_check
          %p592 = pneg %p278
        $region42: #{transformer_decoder_forward.1} parent=11 // pred_check_branch
          %594 = sbr.rel (%p592) target = $region44
        $region43: #{transformer_decoder_forward.1} parent=11 // pred_region
          _
        $region44: #{transformer_decoder_forward.1} parent=11 // pred_fallthru
          _
        // Predicated region
        $region45: #{transformer_decoder_forward.1} parent=11 // pred_check
          %p595 = pneg %p299
        $region46: #{transformer_decoder_forward.1} parent=11 // pred_check_branch
          %597 = sbr.rel (%p595) target = $region48
        $region47: #{transformer_decoder_forward.1} parent=11 // pred_region
          _
        $region48: #{transformer_decoder_forward.1} parent=11 // pred_fallthru
          _
        // Predicated region
        $region49: #{transformer_decoder_forward.1} parent=11 // pred_check
          %p598 = pneg %p320
        $region50: #{transformer_decoder_forward.1} parent=11 // pred_check_branch
          %600 = sbr.rel (%p598) target = $region52
        $region51: #{transformer_decoder_forward.1} parent=11 // pred_region
          _
        $region52: #{transformer_decoder_forward.1} parent=11 // pred_fallthru
          _
        // Predicated region
        $region53: #{transformer_decoder_forward.1} parent=11 // pred_check
          %p601 = pneg %p341
        $region54: #{transformer_decoder_forward.1} parent=11 // pred_check_branch
          %603 = sbr.rel (%p601) target = $region56
        $region55: #{transformer_decoder_forward.1} parent=11 // pred_region
          _
        $region56: #{transformer_decoder_forward.1} parent=11 // pred_fallthru
          _
        // Predicated region
        $region57: #{transformer_decoder_forward.1} parent=11 // pred_check
          %p604 = pneg %p362
        $region58: #{transformer_decoder_forward.1} parent=11 // pred_check_branch
          %606 = sbr.rel (%p604) target = $region60
        $region59: #{transformer_decoder_forward.1} parent=11 // pred_region
          _
        $region60: #{transformer_decoder_forward.1} parent=11 // pred_fallthru
          _
        // Predicated region
        $region61: #{transformer_decoder_forward.1} parent=11 // pred_check
          %p607 = pneg %p383
        $region62: #{transformer_decoder_forward.1} parent=11 // pred_check_branch
          %609 = sbr.rel (%p607) target = $region64
        $region63: #{transformer_decoder_forward.1} parent=11 // pred_region
          _
        $region64: #{transformer_decoder_forward.1} parent=11 // pred_fallthru
          _
        // Predicated region
        $region65: #{transformer_decoder_forward.1} parent=11 // pred_check
          %p610 = pneg %p404
        $region66: #{transformer_decoder_forward.1} parent=11 // pred_check_branch
          %612 = sbr.rel (%p610) target = $region68
        $region67: #{transformer_decoder_forward.1} parent=11 // pred_region
          _
        $region68: #{transformer_decoder_forward.1} parent=11 // pred_fallthru
          _
        // Predicated region
        $region69: #{transformer_decoder_forward.1} parent=11 // pred_check
          %p613 = pneg %p425
        $region70: #{transformer_decoder_forward.1} parent=11 // pred_check_branch
          %615 = sbr.rel (%p613) target = $region72
        $region71: #{transformer_decoder_forward.1} parent=11 // pred_region
          _
        $region72: #{transformer_decoder_forward.1} parent=11 // pred_fallthru
          _
        // Predicated region
        $region73: #{transformer_decoder_forward.1} parent=11 // pred_check
          %p616 = pneg %p446
        $region74: #{transformer_decoder_forward.1} parent=11 // pred_check_branch
          %618 = sbr.rel (%p616) target = $region76
        $region75: #{transformer_decoder_forward.1} parent=11 // pred_region
          _
        $region76: #{transformer_decoder_forward.1} parent=11 // pred_fallthru
          _
        // Predicated region
        $region77: #{transformer_decoder_forward.1} parent=11 // pred_check
          %p619 = pneg %p467
        $region78: #{transformer_decoder_forward.1} parent=11 // pred_check_branch
          %621 = sbr.rel (%p619) target = $region80
        $region79: #{transformer_decoder_forward.1} parent=11 // pred_region
          _
        $region80: #{transformer_decoder_forward.1} parent=11 // pred_fallthru
          _
        // Predicated region
        $region81: #{transformer_decoder_forward.1} parent=11 // pred_check
          %p622 = pneg %p488
        $region82: #{transformer_decoder_forward.1} parent=11 // pred_check_branch
          %624 = sbr.rel (%p622) target = $region84
        $region83: #{transformer_decoder_forward.1} parent=11 // pred_region
          _
        $region84: #{transformer_decoder_forward.1} parent=11 // pred_fallthru
          _
        // Predicated region
        $region85: #{transformer_decoder_forward.1} parent=11 // pred_check
          %p625 = pneg %p509
        $region86: #{transformer_decoder_forward.1} parent=11 // pred_check_branch
          %627 = sbr.rel (%p625) target = $region88
        $region87: #{transformer_decoder_forward.1} parent=11 // pred_region
          _
        $region88: #{transformer_decoder_forward.1} parent=11 // pred_fallthru
          _
        // Predicated region
        $region89: #{transformer_decoder_forward.1} parent=11 // pred_check
          %p628 = pneg %p530
        $region90: #{transformer_decoder_forward.1} parent=11 // pred_check_branch
          %630 = sbr.rel (%p628) target = $region92
        $region91: #{transformer_decoder_forward.1} parent=11 // pred_region
          _
        $region92: #{transformer_decoder_forward.1} parent=11 // pred_fallthru
          _
      $region12: #{transformer_decoder_forward.1} parent=5 // pred_fallthru
        _
      %p631 = scmp.lt.s32.totalorder %s32, 2
      // Predicated region
      $region93: #{transformer_decoder_forward.1} parent=5 // pred_check
        %p632 = pneg %p631
      $region94: #{transformer_decoder_forward.1} parent=5 // pred_check_branch
        %634 = sbr.rel (%p632) target = $region96
      $region95: #{transformer_decoder_forward.1} parent=5 // pred_region
        // Predicated region
        $region97: #{transformer_decoder_forward.1} parent=95 // pred_check
          %p635 = pneg %p52
        $region98: #{transformer_decoder_forward.1} parent=95 // pred_check_branch
          %637 = sbr.rel (%p635) target = $region100
        $region99: #{transformer_decoder_forward.1} parent=95 // pred_region
          %p638 = scmp.lt.s32.totalorder %s32, 1
          %s639 = scalar_select %p638, %s32, 1
          %s640 = smul.addr %s639, 8
          %s641 = scalar_lea.vmem %s0, %s640
        $region100: #{transformer_decoder_forward.1} parent=95 // pred_fallthru
          _
        // Predicated region
        $region101: #{transformer_decoder_forward.1} parent=95 // pred_check
          %p642 = pneg %p78
        $region102: #{transformer_decoder_forward.1} parent=95 // pred_check_branch
          %644 = sbr.rel (%p642) target = $region104
        $region103: #{transformer_decoder_forward.1} parent=95 // pred_region
          %p645 = scmp.lt.s32.totalorder %s32, 1
          %s646 = scalar_select %p645, %s32, 1
          %s647 = smul.addr %s646, 2
          %s648 = smul.addr %s647, 8
          %s649 = scalar_lea.vmem %s1, %s648
        $region104: #{transformer_decoder_forward.1} parent=95 // pred_fallthru
          _
        // Predicated region
        $region105: #{transformer_decoder_forward.1} parent=95 // pred_check
          %p650 = pneg %p104
        $region106: #{transformer_decoder_forward.1} parent=95 // pred_check_branch
          %652 = sbr.rel (%p650) target = $region108
        $region107: #{transformer_decoder_forward.1} parent=95 // pred_region
          %p653 = scmp.lt.s32.totalorder %s32, 1
          %s654 = scalar_select %p653, %s32, 1
          %s655 = smul.addr %s654, 2
          %s656 = smul.addr %s655, 8
          %s657 = scalar_lea.vmem %s2, %s656
        $region108: #{transformer_decoder_forward.1} parent=95 // pred_fallthru
          _
      $region96: #{transformer_decoder_forward.1} parent=5 // pred_fallthru
        _
      %p658 = scmp.le.s32.totalorder 1, %s32
      %p659 = scmp.lt.s32.totalorder %s32, 3
      %p660 = pnand %p658, %p659
      %p661 = pneg %p660
      // Predicated region
      $region109: #{transformer_decoder_forward.1} parent=5 // pred_check
        _
      $region110: #{transformer_decoder_forward.1} parent=5 // pred_check_branch
        %663 = sbr.rel (%p660) target = $region112
      $region111: #{transformer_decoder_forward.1} parent=5 // pred_region
        %s664 = ssub.s32 %s32, 1
        %p665 = scmp.lt.s32.totalorder %s37, 1
        %s666 = scalar_select %p665, %s37, 1
        %s667 = smul.addr %s666, 8
        %s668 = scalar_lea.vmem %s0, %s667
        %p669 = pneg %p58
        %p670 = pneg %p55
        %p671 = scmp.lt.s32.totalorder %s37, 1
        %s672 = scalar_select %p671, %s37, 1
        %s673 = smul.addr %s672, 2
        %s674 = smul.addr %s673, 8
        %s675 = scalar_lea.vmem %s1, %s674
        %p676 = pneg %p84
        %p677 = pneg %p81
        %p678 = scmp.lt.s32.totalorder %s37, 1
        %s679 = scalar_select %p678, %s37, 1
        %s680 = smul.addr %s679, 2
        %s681 = smul.addr %s680, 8
        %s682 = scalar_lea.vmem %s2, %s681
        %p683 = pneg %p110
        %p684 = pneg %p107
        %p685 = pneg %p131
        %p686 = pneg %p128
        %p687 = pneg %p152
        %p688 = pneg %p149
        %p689 = pneg %p173
        %p690 = pneg %p170
        %p691 = pneg %p194
        %p692 = pneg %p191
        %p693 = pneg %p215
        %p694 = pneg %p212
        %p695 = pneg %p236
        %p696 = pneg %p233
        %p697 = pneg %p257
        %p698 = pneg %p254
        %p699 = pneg %p278
        %p700 = pneg %p275
        %p701 = pneg %p299
        %p702 = pneg %p296
        %p703 = pneg %p320
        %p704 = pneg %p317
        %p705 = pneg %p341
        %p706 = pneg %p338
        %p707 = pneg %p362
        %p708 = pneg %p359
        %p709 = pneg %p383
        %p710 = pneg %p380
        %p711 = pneg %p404
        %p712 = pneg %p401
        %p713 = pneg %p425
        %p714 = pneg %p422
        %p715 = pneg %p446
        %p716 = pneg %p443
        %p717 = pneg %p467
        %p718 = pneg %p464
        %p719 = pneg %p488
        %p720 = pneg %p485
        %p721 = pneg %p509
        %p722 = pneg %p506
        %p723 = pneg %p530
        %p724 = pneg %p527
        %p725 = pneg %p556
        %p726 = pneg %p553
        %s727 = sand.u32 %s543, 1
        %s728 = scalar_lea.sflag [#allocation3], %s727
        %s729 = sand.u32 %s543, 1
        %s730 = smul.addr %s729, 8
        %s731 = scalar_lea.vmem [#allocation2], %s730
        %p732 = scmp.lt.s32.totalorder %s37, 1
        %s733 = scalar_select %p732, %s37, 1
        %s734 = smul.addr %s733, 8
        %s735 = scalar_lea.vmem %s0, %s734
        %p736 = scmp.lt.s32.totalorder %s37, 1
        %s737 = scalar_select %p736, %s37, 1
        %s738 = smul.addr %s737, 2
        %s739 = smul.addr %s738, 8
        %s740 = scalar_lea.vmem %s1, %s739
        %p741 = scmp.lt.s32.totalorder %s37, 1
        %s742 = scalar_select %p741, %s37, 1
        %s743 = smul.addr %s742, 2
        %s744 = smul.addr %s743, 8
        %s745 = scalar_lea.vmem %s2, %s744
        %v746 = vld [vmem:[%s735] sm:$0xff]
        %v747 = vld [vmem:[%s740] sm:$0xff]
        %v748 = vld [vmem:[%s740 + $0x8] sm:$0xff]
        %v749 = vld [vmem:[%s745] sm:$0xff]
        %v750 = vld [vmem:[%s745 + $0x8] sm:$0xff]
        %v751 = vadd.f32 %v747, %v749
        %v752 = vadd.f32 %v748, %v750
        %v753 = vld [vmem:[%s3] sm:$0xff]
        %v754 = vld [vmem:[%s3 + $0x8] sm:$0xff]
        %v755 = vld [vmem:[%s3 + $0x10] sm:$0xff]
        %v756 = vld [vmem:[%s3 + $0x18] sm:$0xff]
        %v757 = vld [vmem:[%s3 + $0x20] sm:$0xff]
        %v758 = vld [vmem:[%s3 + $0x28] sm:$0xff]
        %v759 = vld [vmem:[%s3 + $0x30] sm:$0xff]
        %v760 = vld [vmem:[%s3 + $0x38] sm:$0xff]
        %v761 = vld [vmem:[%s3 + $0x40] sm:$0xff]
        %v762 = vld [vmem:[%s3 + $0x48] sm:$0xff]
        %v763 = vld [vmem:[%s3 + $0x50] sm:$0xff]
        %v764 = vld [vmem:[%s3 + $0x58] sm:$0xff]
        %v765 = vld [vmem:[%s3 + $0x60] sm:$0xff]
        %v766 = vld [vmem:[%s3 + $0x68] sm:$0xff]
        %v767 = vld [vmem:[%s3 + $0x70] sm:$0xff]
        %v768 = vld [vmem:[%s3 + $0x78] sm:$0xff]
        %v769 = vld [vmem:[%s4] sm:$0xff]
        %v770 = vld [vmem:[%s4 + $0x8] sm:$0xff]
        %v771 = vld [vmem:[%s4 + $0x10] sm:$0xff]
        %v772 = vld [vmem:[%s4 + $0x18] sm:$0xff]
        %v773 = vld [vmem:[%s4 + $0x20] sm:$0xff]
        %v774 = vld [vmem:[%s4 + $0x28] sm:$0xff]
        %v775 = vld [vmem:[%s4 + $0x30] sm:$0xff]
        %v776 = vld [vmem:[%s4 + $0x38] sm:$0xff]
        %v777 = vld [vmem:[%s4 + $0x40] sm:$0xff]
        %v778 = vld [vmem:[%s4 + $0x48] sm:$0xff]
        %v779 = vld [vmem:[%s4 + $0x50] sm:$0xff]
        %v780 = vld [vmem:[%s4 + $0x58] sm:$0xff]
        %v781 = vld [vmem:[%s4 + $0x60] sm:$0xff]
        %v782 = vld [vmem:[%s4 + $0x68] sm:$0xff]
        %v783 = vld [vmem:[%s4 + $0x70] sm:$0xff]
        %v784 = vld [vmem:[%s4 + $0x78] sm:$0xff]
        %v785 = vld [vmem:[%s5] sm:$0xff]
        %v786 = vld [vmem:[%s5 + $0x8] sm:$0xff]
        %v787 = vld [vmem:[%s5 + $0x10] sm:$0xff]
        %v788 = vld [vmem:[%s5 + $0x18] sm:$0xff]
        %v789 = vld [vmem:[%s5 + $0x20] sm:$0xff]
        %v790 = vld [vmem:[%s5 + $0x28] sm:$0xff]
        %v791 = vld [vmem:[%s5 + $0x30] sm:$0xff]
        %v792 = vld [vmem:[%s5 + $0x38] sm:$0xff]
        %v793 = vld [vmem:[%s5 + $0x40] sm:$0xff]
        %v794 = vld [vmem:[%s5 + $0x48] sm:$0xff]
        %v795 = vld [vmem:[%s5 + $0x50] sm:$0xff]
        %v796 = vld [vmem:[%s5 + $0x58] sm:$0xff]
        %v797 = vld [vmem:[%s5 + $0x60] sm:$0xff]
        %v798 = vld [vmem:[%s5 + $0x68] sm:$0xff]
        %v799 = vld [vmem:[%s5 + $0x70] sm:$0xff]
        %v800 = vld [vmem:[%s5 + $0x78] sm:$0xff]
        %v801 = vld [vmem:[%s6] sm:$0xff]
        %v802 = vld [vmem:[%s6 + $0x8] sm:$0xff]
        %v803 = vld [vmem:[%s6 + $0x10] sm:$0xff]
        %v804 = vld [vmem:[%s6 + $0x18] sm:$0xff]
        %v805 = vld [vmem:[%s7] sm:$0x1]
        %vm806 = vcmask 261120
        %v808 = vsel %vm806, %v746, 0
        %810 = vmatprep.subr.mxu0 0.0
        %811 = vmatpush1.msra.mxu0 %v753
        %812 = vmatprep.subr.mxu0 0.0
        %813 = vmatpush1.msra.mxu0 %v754
        %814 = vmatprep.subr.mxu0 0.0
        %815 = vmatpush1.msra.mxu0 %v755
        %816 = vmatprep.subr.mxu0 0.0
        %817 = vmatpush1.msra.mxu0 %v756
        %818 = vmatprep.subr.mxu0 0.0
        %819 = vmatpush1.msra.mxu0 0.0
        %820 = vmatprep.subr.mxu0 0.0
        %821 = vmatpush1.msra.mxu0 0.0
        %822 = vmatprep.subr.mxu0 0.0
        %823 = vmatpush1.msra.mxu0 0.0
        %824 = vmatprep.subr.mxu0 0.0
        %825 = vmatpush1.msra.mxu0 0.0
        %826 = vmatprep.subr.mxu0 0.0
        %827 = vmatpush1.msra.mxu0 0.0
        %828 = vmatprep.subr.mxu0 0.0
        %829 = vmatpush1.msra.mxu0 0.0
        %830 = vmatprep.subr.mxu0 0.0
        %831 = vmatpush1.msra.mxu0 0.0
        %832 = vmatprep.subr.mxu0 0.0
        %833 = vmatpush1.msra.mxu0 0.0
        %834 = vmatprep.subr.mxu0 0.0
        %835 = vmatpush1.msra.mxu0 0.0
        %836 = vmatprep.subr.mxu0 0.0
        %837 = vmatpush1.msra.mxu0 0.0
        %838 = vmatprep.subr.mxu0 0.0
        %839 = vmatpush1.msra.mxu0 0.0
        %840 = vmatprep.subr.mxu0 0.0
        %841 = vmatpush1.msra.mxu0 0.0
        %842 = vmatprep.subr.mxu0 0.0
        %843 = vmatpush1.msra.mxu0 0.0
        %844 = vmatprep.subr.mxu0 0.0
        %845 = vmatpush1.msra.mxu0 0.0
        %846 = vmatprep.subr.mxu0 0.0
        %847 = vmatpush1.msra.mxu0 0.0
        %848 = vmatprep.subr.mxu0 0.0
        %849 = vmatpush1.msra.mxu0 0.0
        %850 = vmatprep.subr.mxu0 0.0
        %851 = vmatpush1.msra.mxu0 0.0
        %852 = vmatprep.subr.mxu0 0.0
        %853 = vmatpush1.msra.mxu0 0.0
        %854 = vmatprep.subr.mxu0 0.0
        %855 = vmatpush1.msra.mxu0 0.0
        %856 = vmatprep.subr.mxu0 0.0
        %857 = vmatpush1.msra.mxu0 0.0
        %858 = vmatprep.subr.mxu0 0.0
        %859 = vmatpush1.msra.mxu0 0.0
        %860 = vmatprep.subr.mxu0 0.0
        %861 = vmatpush1.msra.mxu0 0.0
        %862 = vmatprep.subr.mxu0 0.0
        %863 = vmatpush1.msra.mxu0 0.0
        %864 = vmatprep.subr.mxu0 0.0
        %865 = vmatpush1.msra.mxu0 0.0
        %866 = vmatprep.subr.mxu0 0.0
        %867 = vmatpush1.msra.mxu0 0.0
        %868 = vmatprep.subr.mxu0 0.0
        %869 = vmatpush1.msra.mxu0 0.0
        %870 = vmatprep.subr.mxu0 0.0
        %871 = vmatpush1.msra.mxu0 0.0
        %872 = vmatprep.subr.mxu0 0.0
        %873 = vmatpush1.msra.mxu0 0.0
        %874 = vmatprep.mubr.f32.mxu0 0.0
        %875 = vmatmul.mubr.f32.gmra.mrb[0].mxu0 %v808
        %v876 = vpop.f32.mrb[0].mxu0
        %v877 = vadd.f32 0.0, %v876
        %v878 = vpop.f32.mrb[0].mxu0
        %879 = vdwg.mxu0
        %880 = vmatprep.subr.mxu0 0.0
        %881 = vmatpush1.msra.mxu0 %v757
        %882 = vmatprep.subr.mxu0 0.0
        %883 = vmatpush1.msra.mxu0 %v758
        %884 = vmatprep.subr.mxu0 0.0
        %885 = vmatpush1.msra.mxu0 %v759
        %886 = vmatprep.subr.mxu0 0.0
        %887 = vmatpush1.msra.mxu0 %v760
        %888 = vmatprep.subr.mxu0 0.0
        %889 = vmatpush1.msra.mxu0 0.0
        %890 = vmatprep.subr.mxu0 0.0
        %891 = vmatpush1.msra.mxu0 0.0
        %892 = vmatprep.subr.mxu0 0.0
        %893 = vmatpush1.msra.mxu0 0.0
        %894 = vmatprep.subr.mxu0 0.0
        %895 = vmatpush1.msra.mxu0 0.0
        %896 = vmatprep.subr.mxu0 0.0
        %897 = vmatpush1.msra.mxu0 0.0
        %898 = vmatprep.subr.mxu0 0.0
        %899 = vmatpush1.msra.mxu0 0.0
        %900 = vmatprep.subr.mxu0 0.0
        %901 = vmatpush1.msra.mxu0 0.0
        %902 = vmatprep.subr.mxu0 0.0
        %903 = vmatpush1.msra.mxu0 0.0
        %904 = vmatprep.subr.mxu0 0.0
        %905 = vmatpush1.msra.mxu0 0.0
        %906 = vmatprep.subr.mxu0 0.0
        %907 = vmatpush1.msra.mxu0 0.0
        %908 = vmatprep.subr.mxu0 0.0
        %909 = vmatpush1.msra.mxu0 0.0
        %910 = vmatprep.subr.mxu0 0.0
        %911 = vmatpush1.msra.mxu0 0.0
        %912 = vmatprep.subr.mxu0 0.0
        %913 = vmatpush1.msra.mxu0 0.0
        %914 = vmatprep.subr.mxu0 0.0
        %915 = vmatpush1.msra.mxu0 0.0
        %916 = vmatprep.subr.mxu0 0.0
        %917 = vmatpush1.msra.mxu0 0.0
        %918 = vmatprep.subr.mxu0 0.0
        %919 = vmatpush1.msra.mxu0 0.0
        %920 = vmatprep.subr.mxu0 0.0
        %921 = vmatpush1.msra.mxu0 0.0
        %922 = vmatprep.subr.mxu0 0.0
        %923 = vmatpush1.msra.mxu0 0.0
        %924 = vmatprep.subr.mxu0 0.0
        %925 = vmatpush1.msra.mxu0 0.0
        %926 = vmatprep.subr.mxu0 0.0
        %927 = vmatpush1.msra.mxu0 0.0
        %928 = vmatprep.subr.mxu0 0.0
        %929 = vmatpush1.msra.mxu0 0.0
        %930 = vmatprep.subr.mxu0 0.0
        %931 = vmatpush1.msra.mxu0 0.0
        %932 = vmatprep.subr.mxu0 0.0
        %933 = vmatpush1.msra.mxu0 0.0
        %934 = vmatprep.subr.mxu0 0.0
        %935 = vmatpush1.msra.mxu0 0.0
        %936 = vmatprep.subr.mxu0 0.0
        %937 = vmatpush1.msra.mxu0 0.0
        %938 = vmatprep.subr.mxu0 0.0
        %939 = vmatpush1.msra.mxu0 0.0
        %940 = vmatprep.subr.mxu0 0.0
        %941 = vmatpush1.msra.mxu0 0.0
        %942 = vmatprep.subr.mxu0 0.0
        %943 = vmatpush1.msra.mxu0 0.0
        %944 = vmatprep.mubr.f32.mxu0 0.0
        %945 = vmatmul.mubr.f32.gmra.mrb[0].mxu0 %v808
        %v946 = vpop.f32.mrb[0].mxu0
        %v947 = vadd.f32 0.0, %v946
        %v948 = vpop.f32.mrb[0].mxu0
        %949 = vdwg.mxu0
        %950 = vmatprep.subr.mxu0 0.0
        %951 = vmatpush1.msra.mxu0 %v761
        %952 = vmatprep.subr.mxu0 0.0
        %953 = vmatpush1.msra.mxu0 %v762
        %954 = vmatprep.subr.mxu0 0.0
        %955 = vmatpush1.msra.mxu0 %v763
        %956 = vmatprep.subr.mxu0 0.0
        %957 = vmatpush1.msra.mxu0 %v764
        %958 = vmatprep.subr.mxu0 0.0
        %959 = vmatpush1.msra.mxu0 0.0
        %960 = vmatprep.subr.mxu0 0.0
        %961 = vmatpush1.msra.mxu0 0.0
        %962 = vmatprep.subr.mxu0 0.0
        %963 = vmatpush1.msra.mxu0 0.0
        %964 = vmatprep.subr.mxu0 0.0
        %965 = vmatpush1.msra.mxu0 0.0
        %966 = vmatprep.subr.mxu0 0.0
        %967 = vmatpush1.msra.mxu0 0.0
        %968 = vmatprep.subr.mxu0 0.0
        %969 = vmatpush1.msra.mxu0 0.0
        %970 = vmatprep.subr.mxu0 0.0
        %971 = vmatpush1.msra.mxu0 0.0
        %972 = vmatprep.subr.mxu0 0.0
        %973 = vmatpush1.msra.mxu0 0.0
        %974 = vmatprep.subr.mxu0 0.0
        %975 = vmatpush1.msra.mxu0 0.0
        %976 = vmatprep.subr.mxu0 0.0
        %977 = vmatpush1.msra.mxu0 0.0
        %978 = vmatprep.subr.mxu0 0.0
        %979 = vmatpush1.msra.mxu0 0.0
        %980 = vmatprep.subr.mxu0 0.0
        %981 = vmatpush1.msra.mxu0 0.0
        %982 = vmatprep.subr.mxu0 0.0
        %983 = vmatpush1.msra.mxu0 0.0
        %984 = vmatprep.subr.mxu0 0.0
        %985 = vmatpush1.msra.mxu0 0.0
        %986 = vmatprep.subr.mxu0 0.0
        %987 = vmatpush1.msra.mxu0 0.0
        %988 = vmatprep.subr.mxu0 0.0
        %989 = vmatpush1.msra.mxu0 0.0
        %990 = vmatprep.subr.mxu0 0.0
        %991 = vmatpush1.msra.mxu0 0.0
        %992 = vmatprep.subr.mxu0 0.0
        %993 = vmatpush1.msra.mxu0 0.0
        %994 = vmatprep.subr.mxu0 0.0
        %995 = vmatpush1.msra.mxu0 0.0
        %996 = vmatprep.subr.mxu0 0.0
        %997 = vmatpush1.msra.mxu0 0.0
        %998 = vmatprep.subr.mxu0 0.0
        %999 = vmatpush1.msra.mxu0 0.0
        %1000 = vmatprep.subr.mxu0 0.0
        %1001 = vmatpush1.msra.mxu0 0.0
        %1002 = vmatprep.subr.mxu0 0.0
        %1003 = vmatpush1.msra.mxu0 0.0
        %1004 = vmatprep.subr.mxu0 0.0
        %1005 = vmatpush1.msra.mxu0 0.0
        %1006 = vmatprep.subr.mxu0 0.0
        %1007 = vmatpush1.msra.mxu0 0.0
        %1008 = vmatprep.subr.mxu0 0.0
        %1009 = vmatpush1.msra.mxu0 0.0
        %1010 = vmatprep.subr.mxu0 0.0
        %1011 = vmatpush1.msra.mxu0 0.0
        %1012 = vmatprep.subr.mxu0 0.0
        %1013 = vmatpush1.msra.mxu0 0.0
        %1014 = vmatprep.mubr.f32.mxu0 0.0
        %1015 = vmatmul.mubr.f32.gmra.mrb[0].mxu0 %v808
        %v1016 = vpop.f32.mrb[0].mxu0
        %v1017 = vadd.f32 0.0, %v1016
        %v1018 = vpop.f32.mrb[0].mxu0
        %1019 = vdwg.mxu0
        %1020 = vmatprep.subr.mxu0 0.0
        %1021 = vmatpush1.msra.mxu0 %v765
        %1022 = vmatprep.subr.mxu0 0.0
        %1023 = vmatpush1.msra.mxu0 %v766
        %1024 = vmatprep.subr.mxu0 0.0
        %1025 = vmatpush1.msra.mxu0 %v767
        %1026 = vmatprep.subr.mxu0 0.0
        %1027 = vmatpush1.msra.mxu0 %v768
        %1028 = vmatprep.subr.mxu0 0.0
        %1029 = vmatpush1.msra.mxu0 0.0
        %1030 = vmatprep.subr.mxu0 0.0
        %1031 = vmatpush1.msra.mxu0 0.0
        %1032 = vmatprep.subr.mxu0 0.0
        %1033 = vmatpush1.msra.mxu0 0.0
        %1034 = vmatprep.subr.mxu0 0.0
        %1035 = vmatpush1.msra.mxu0 0.0
        %1036 = vmatprep.subr.mxu0 0.0
        %1037 = vmatpush1.msra.mxu0 0.0
        %1038 = vmatprep.subr.mxu0 0.0
        %1039 = vmatpush1.msra.mxu0 0.0
        %1040 = vmatprep.subr.mxu0 0.0
        %1041 = vmatpush1.msra.mxu0 0.0
        %1042 = vmatprep.subr.mxu0 0.0
        %1043 = vmatpush1.msra.mxu0 0.0
        %1044 = vmatprep.subr.mxu0 0.0
        %1045 = vmatpush1.msra.mxu0 0.0
        %1046 = vmatprep.subr.mxu0 0.0
        %1047 = vmatpush1.msra.mxu0 0.0
        %1048 = vmatprep.subr.mxu0 0.0
        %1049 = vmatpush1.msra.mxu0 0.0
        %1050 = vmatprep.subr.mxu0 0.0
        %1051 = vmatpush1.msra.mxu0 0.0
        %1052 = vmatprep.subr.mxu0 0.0
        %1053 = vmatpush1.msra.mxu0 0.0
        %1054 = vmatprep.subr.mxu0 0.0
        %1055 = vmatpush1.msra.mxu0 0.0
        %1056 = vmatprep.subr.mxu0 0.0
        %1057 = vmatpush1.msra.mxu0 0.0
        %1058 = vmatprep.subr.mxu0 0.0
        %1059 = vmatpush1.msra.mxu0 0.0
        %1060 = vmatprep.subr.mxu0 0.0
        %1061 = vmatpush1.msra.mxu0 0.0
        %1062 = vmatprep.subr.mxu0 0.0
        %1063 = vmatpush1.msra.mxu0 0.0
        %1064 = vmatprep.subr.mxu0 0.0
        %1065 = vmatpush1.msra.mxu0 0.0
        %1066 = vmatprep.subr.mxu0 0.0
        %1067 = vmatpush1.msra.mxu0 0.0
        %1068 = vmatprep.subr.mxu0 0.0
        %1069 = vmatpush1.msra.mxu0 0.0
        %1070 = vmatprep.subr.mxu0 0.0
        %1071 = vmatpush1.msra.mxu0 0.0
        %1072 = vmatprep.subr.mxu0 0.0
        %1073 = vmatpush1.msra.mxu0 0.0
        %1074 = vmatprep.subr.mxu0 0.0
        %1075 = vmatpush1.msra.mxu0 0.0
        %1076 = vmatprep.subr.mxu0 0.0
        %1077 = vmatpush1.msra.mxu0 0.0
        %1078 = vmatprep.subr.mxu0 0.0
        %1079 = vmatpush1.msra.mxu0 0.0
        %1080 = vmatprep.subr.mxu0 0.0
        %1081 = vmatpush1.msra.mxu0 0.0
        %1082 = vmatprep.subr.mxu0 0.0
        %1083 = vmatpush1.msra.mxu0 0.0
        %1084 = vmatprep.mubr.f32.mxu0 0.0
        %1085 = vmatmul.mubr.f32.gmra.mrb[0].mxu0 %v808
        %v1086 = vpop.f32.mrb[0].mxu0
        %v1087 = vadd.f32 0.0, %v1086
        %v1088 = vpop.f32.mrb[0].mxu0
        %1089 = vdwg.mxu0
        %1090 = vmatprep.subr.mxu0 0.0
        %1091 = vmatpush1.msra.mxu0 %v769
        %1092 = vmatprep.subr.mxu0 0.0
        %1093 = vmatpush1.msra.mxu0 %v770
        %1094 = vmatprep.subr.mxu0 0.0
        %1095 = vmatpush1.msra.mxu0 %v771
        %1096 = vmatprep.subr.mxu0 0.0
        %1097 = vmatpush1.msra.mxu0 %v772
        %1098 = vmatprep.subr.mxu0 0.0
        %1099 = vmatpush1.msra.mxu0 0.0
        %1100 = vmatprep.subr.mxu0 0.0
        %1101 = vmatpush1.msra.mxu0 0.0
        %1102 = vmatprep.subr.mxu0 0.0
        %1103 = vmatpush1.msra.mxu0 0.0
        %1104 = vmatprep.subr.mxu0 0.0
        %1105 = vmatpush1.msra.mxu0 0.0
        %1106 = vmatprep.subr.mxu0 0.0
        %1107 = vmatpush1.msra.mxu0 0.0
        %1108 = vmatprep.subr.mxu0 0.0
        %1109 = vmatpush1.msra.mxu0 0.0
        %1110 = vmatprep.subr.mxu0 0.0
        %1111 = vmatpush1.msra.mxu0 0.0
        %1112 = vmatprep.subr.mxu0 0.0
        %1113 = vmatpush1.msra.mxu0 0.0
        %1114 = vmatprep.subr.mxu0 0.0
        %1115 = vmatpush1.msra.mxu0 0.0
        %1116 = vmatprep.subr.mxu0 0.0
        %1117 = vmatpush1.msra.mxu0 0.0
        %1118 = vmatprep.subr.mxu0 0.0
        %1119 = vmatpush1.msra.mxu0 0.0
        %1120 = vmatprep.subr.mxu0 0.0
        %1121 = vmatpush1.msra.mxu0 0.0
        %1122 = vmatprep.subr.mxu0 0.0
        %1123 = vmatpush1.msra.mxu0 0.0
        %1124 = vmatprep.subr.mxu0 0.0
        %1125 = vmatpush1.msra.mxu0 0.0
        %1126 = vmatprep.subr.mxu0 0.0
        %1127 = vmatpush1.msra.mxu0 0.0
        %1128 = vmatprep.subr.mxu0 0.0
        %1129 = vmatpush1.msra.mxu0 0.0
        %1130 = vmatprep.subr.mxu0 0.0
        %1131 = vmatpush1.msra.mxu0 0.0
        %1132 = vmatprep.subr.mxu0 0.0
        %1133 = vmatpush1.msra.mxu0 0.0
        %1134 = vmatprep.subr.mxu0 0.0
        %1135 = vmatpush1.msra.mxu0 0.0
        %1136 = vmatprep.subr.mxu0 0.0
        %1137 = vmatpush1.msra.mxu0 0.0
        %1138 = vmatprep.subr.mxu0 0.0
        %1139 = vmatpush1.msra.mxu0 0.0
        %1140 = vmatprep.subr.mxu0 0.0
        %1141 = vmatpush1.msra.mxu0 0.0
        %1142 = vmatprep.subr.mxu0 0.0
        %1143 = vmatpush1.msra.mxu0 0.0
        %1144 = vmatprep.subr.mxu0 0.0
        %1145 = vmatpush1.msra.mxu0 0.0
        %1146 = vmatprep.subr.mxu0 0.0
        %1147 = vmatpush1.msra.mxu0 0.0
        %1148 = vmatprep.subr.mxu0 0.0
        %1149 = vmatpush1.msra.mxu0 0.0
        %1150 = vmatprep.subr.mxu0 0.0
        %1151 = vmatpush1.msra.mxu0 0.0
        %1152 = vmatprep.subr.mxu0 0.0
        %1153 = vmatpush1.msra.mxu0 0.0
        %1154 = vmatprep.mubr.f32.mxu0 0.0
        %1155 = vmatmul.mubr.f32.gmra.mrb[0].mxu0 %v808
        %v1156 = vpop.f32.mrb[0].mxu0
        %v1157 = vadd.f32 0.0, %v1156
        %v1158 = vpop.f32.mrb[0].mxu0
        %1159 = vdwg.mxu0
        %1160 = vmatprep.subr.mxu0 0.0
        %1161 = vmatpush1.msra.mxu0 %v773
        %1162 = vmatprep.subr.mxu0 0.0
        %1163 = vmatpush1.msra.mxu0 %v774
        %1164 = vmatprep.subr.mxu0 0.0
        %1165 = vmatpush1.msra.mxu0 %v775
        %1166 = vmatprep.subr.mxu0 0.0
        %1167 = vmatpush1.msra.mxu0 %v776
        %1168 = vmatprep.subr.mxu0 0.0
        %1169 = vmatpush1.msra.mxu0 0.0
        %1170 = vmatprep.subr.mxu0 0.0
        %1171 = vmatpush1.msra.mxu0 0.0
        %1172 = vmatprep.subr.mxu0 0.0
        %1173 = vmatpush1.msra.mxu0 0.0
        %1174 = vmatprep.subr.mxu0 0.0
        %1175 = vmatpush1.msra.mxu0 0.0
        %1176 = vmatprep.subr.mxu0 0.0
        %1177 = vmatpush1.msra.mxu0 0.0
        %1178 = vmatprep.subr.mxu0 0.0
        %1179 = vmatpush1.msra.mxu0 0.0
        %1180 = vmatprep.subr.mxu0 0.0
        %1181 = vmatpush1.msra.mxu0 0.0
        %1182 = vmatprep.subr.mxu0 0.0
        %1183 = vmatpush1.msra.mxu0 0.0
        %1184 = vmatprep.subr.mxu0 0.0
        %1185 = vmatpush1.msra.mxu0 0.0
        %1186 = vmatprep.subr.mxu0 0.0
        %1187 = vmatpush1.msra.mxu0 0.0
        %1188 = vmatprep.subr.mxu0 0.0
        %1189 = vmatpush1.msra.mxu0 0.0
        %1190 = vmatprep.subr.mxu0 0.0
        %1191 = vmatpush1.msra.mxu0 0.0
        %1192 = vmatprep.subr.mxu0 0.0
        %1193 = vmatpush1.msra.mxu0 0.0
        %1194 = vmatprep.subr.mxu0 0.0
        %1195 = vmatpush1.msra.mxu0 0.0
        %1196 = vmatprep.subr.mxu0 0.0
        %1197 = vmatpush1.msra.mxu0 0.0
        %1198 = vmatprep.subr.mxu0 0.0
        %1199 = vmatpush1.msra.mxu0 0.0
        %1200 = vmatprep.subr.mxu0 0.0
        %1201 = vmatpush1.msra.mxu0 0.0
        %1202 = vmatprep.subr.mxu0 0.0
        %1203 = vmatpush1.msra.mxu0 0.0
        %1204 = vmatprep.subr.mxu0 0.0
        %1205 = vmatpush1.msra.mxu0 0.0
        %1206 = vmatprep.subr.mxu0 0.0
        %1207 = vmatpush1.msra.mxu0 0.0
        %1208 = vmatprep.subr.mxu0 0.0
        %1209 = vmatpush1.msra.mxu0 0.0
        %1210 = vmatprep.subr.mxu0 0.0
        %1211 = vmatpush1.msra.mxu0 0.0
        %1212 = vmatprep.subr.mxu0 0.0
        %1213 = vmatpush1.msra.mxu0 0.0
        %1214 = vmatprep.subr.mxu0 0.0
        %1215 = vmatpush1.msra.mxu0 0.0
        %1216 = vmatprep.subr.mxu0 0.0
        %1217 = vmatpush1.msra.mxu0 0.0
        %1218 = vmatprep.subr.mxu0 0.0
        %1219 = vmatpush1.msra.mxu0 0.0
        %1220 = vmatprep.subr.mxu0 0.0
        %1221 = vmatpush1.msra.mxu0 0.0
        %1222 = vmatprep.subr.mxu0 0.0
        %1223 = vmatpush1.msra.mxu0 0.0
        %1224 = vmatprep.mubr.f32.mxu0 0.0
        %1225 = vmatmul.mubr.f32.gmra.mrb[0].mxu0 %v808
        %v1226 = vpop.f32.mrb[0].mxu0
        %v1227 = vadd.f32 0.0, %v1226
        %v1228 = vpop.f32.mrb[0].mxu0
        %1229 = vdwg.mxu0
        %1230 = vmatprep.subr.mxu0 0.0
        %1231 = vmatpush1.msra.mxu0 %v777
        %1232 = vmatprep.subr.mxu0 0.0
        %1233 = vmatpush1.msra.mxu0 %v778
        %1234 = vmatprep.subr.mxu0 0.0
        %1235 = vmatpush1.msra.mxu0 %v779
        %1236 = vmatprep.subr.mxu0 0.0
        %1237 = vmatpush1.msra.mxu0 %v780
        %1238 = vmatprep.subr.mxu0 0.0
        %1239 = vmatpush1.msra.mxu0 0.0
        %1240 = vmatprep.subr.mxu0 0.0
        %1241 = vmatpush1.msra.mxu0 0.0
        %1242 = vmatprep.subr.mxu0 0.0
        %1243 = vmatpush1.msra.mxu0 0.0
        %1244 = vmatprep.subr.mxu0 0.0
        %1245 = vmatpush1.msra.mxu0 0.0
        %1246 = vmatprep.subr.mxu0 0.0
        %1247 = vmatpush1.msra.mxu0 0.0
        %1248 = vmatprep.subr.mxu0 0.0
        %1249 = vmatpush1.msra.mxu0 0.0
        %1250 = vmatprep.subr.mxu0 0.0
        %1251 = vmatpush1.msra.mxu0 0.0
        %1252 = vmatprep.subr.mxu0 0.0
        %1253 = vmatpush1.msra.mxu0 0.0
        %1254 = vmatprep.subr.mxu0 0.0
        %1255 = vmatpush1.msra.mxu0 0.0
        %1256 = vmatprep.subr.mxu0 0.0
        %1257 = vmatpush1.msra.mxu0 0.0
        %1258 = vmatprep.subr.mxu0 0.0
        %1259 = vmatpush1.msra.mxu0 0.0
        %1260 = vmatprep.subr.mxu0 0.0
        %1261 = vmatpush1.msra.mxu0 0.0
        %1262 = vmatprep.subr.mxu0 0.0
        %1263 = vmatpush1.msra.mxu0 0.0
        %1264 = vmatprep.subr.mxu0 0.0
        %1265 = vmatpush1.msra.mxu0 0.0
        %1266 = vmatprep.subr.mxu0 0.0
        %1267 = vmatpush1.msra.mxu0 0.0
        %1268 = vmatprep.subr.mxu0 0.0
        %1269 = vmatpush1.msra.mxu0 0.0
        %1270 = vmatprep.subr.mxu0 0.0
        %1271 = vmatpush1.msra.mxu0 0.0
        %1272 = vmatprep.subr.mxu0 0.0
        %1273 = vmatpush1.msra.mxu0 0.0
        %1274 = vmatprep.subr.mxu0 0.0
        %1275 = vmatpush1.msra.mxu0 0.0
        %1276 = vmatprep.subr.mxu0 0.0
        %1277 = vmatpush1.msra.mxu0 0.0
        %1278 = vmatprep.subr.mxu0 0.0
        %1279 = vmatpush1.msra.mxu0 0.0
        %1280 = vmatprep.subr.mxu0 0.0
        %1281 = vmatpush1.msra.mxu0 0.0
        %1282 = vmatprep.subr.mxu0 0.0
        %1283 = vmatpush1.msra.mxu0 0.0
        %1284 = vmatprep.subr.mxu0 0.0
        %1285 = vmatpush1.msra.mxu0 0.0
        %1286 = vmatprep.subr.mxu0 0.0
        %1287 = vmatpush1.msra.mxu0 0.0
        %1288 = vmatprep.subr.mxu0 0.0
        %1289 = vmatpush1.msra.mxu0 0.0
        %1290 = vmatprep.subr.mxu0 0.0
        %1291 = vmatpush1.msra.mxu0 0.0
        %1292 = vmatprep.subr.mxu0 0.0
        %1293 = vmatpush1.msra.mxu0 0.0
        %1294 = vmatprep.mubr.f32.mxu0 0.0
        %1295 = vmatmul.mubr.f32.gmra.mrb[0].mxu0 %v808
        %v1296 = vpop.f32.mrb[0].mxu0
        %v1297 = vadd.f32 0.0, %v1296
        %v1298 = vpop.f32.mrb[0].mxu0
        %1299 = vdwg.mxu0
        %1300 = vmatprep.subr.mxu0 0.0
        %1301 = vmatpush1.msra.mxu0 %v781
        %1302 = vmatprep.subr.mxu0 0.0
        %1303 = vmatpush1.msra.mxu0 %v782
        %1304 = vmatprep.subr.mxu0 0.0
        %1305 = vmatpush1.msra.mxu0 %v783
        %1306 = vmatprep.subr.mxu0 0.0
        %1307 = vmatpush1.msra.mxu0 %v784
        %1308 = vmatprep.subr.mxu0 0.0
        %1309 = vmatpush1.msra.mxu0 0.0
        %1310 = vmatprep.subr.mxu0 0.0
        %1311 = vmatpush1.msra.mxu0 0.0
        %1312 = vmatprep.subr.mxu0 0.0
        %1313 = vmatpush1.msra.mxu0 0.0
        %1314 = vmatprep.subr.mxu0 0.0
        %1315 = vmatpush1.msra.mxu0 0.0
        %1316 = vmatprep.subr.mxu0 0.0
        %1317 = vmatpush1.msra.mxu0 0.0
        %1318 = vmatprep.subr.mxu0 0.0
        %1319 = vmatpush1.msra.mxu0 0.0
        %1320 = vmatprep.subr.mxu0 0.0
        %1321 = vmatpush1.msra.mxu0 0.0
        %1322 = vmatprep.subr.mxu0 0.0
        %1323 = vmatpush1.msra.mxu0 0.0
        %1324 = vmatprep.subr.mxu0 0.0
        %1325 = vmatpush1.msra.mxu0 0.0
        %1326 = vmatprep.subr.mxu0 0.0
        %1327 = vmatpush1.msra.mxu0 0.0
        %1328 = vmatprep.subr.mxu0 0.0
        %1329 = vmatpush1.msra.mxu0 0.0
        %1330 = vmatprep.subr.mxu0 0.0
        %1331 = vmatpush1.msra.mxu0 0.0
        %1332 = vmatprep.subr.mxu0 0.0
        %1333 = vmatpush1.msra.mxu0 0.0
        %1334 = vmatprep.subr.mxu0 0.0
        %1335 = vmatpush1.msra.mxu0 0.0
        %1336 = vmatprep.subr.mxu0 0.0
        %1337 = vmatpush1.msra.mxu0 0.0
        %1338 = vmatprep.subr.mxu0 0.0
        %1339 = vmatpush1.msra.mxu0 0.0
        %1340 = vmatprep.subr.mxu0 0.0
        %1341 = vmatpush1.msra.mxu0 0.0
        %1342 = vmatprep.subr.mxu0 0.0
        %1343 = vmatpush1.msra.mxu0 0.0
        %1344 = vmatprep.subr.mxu0 0.0
        %1345 = vmatpush1.msra.mxu0 0.0
        %1346 = vmatprep.subr.mxu0 0.0
        %1347 = vmatpush1.msra.mxu0 0.0
        %1348 = vmatprep.subr.mxu0 0.0
        %1349 = vmatpush1.msra.mxu0 0.0
        %1350 = vmatprep.subr.mxu0 0.0
        %1351 = vmatpush1.msra.mxu0 0.0
        %1352 = vmatprep.subr.mxu0 0.0
        %1353 = vmatpush1.msra.mxu0 0.0
        %1354 = vmatprep.subr.mxu0 0.0
        %1355 = vmatpush1.msra.mxu0 0.0
        %1356 = vmatprep.subr.mxu0 0.0
        %1357 = vmatpush1.msra.mxu0 0.0
        %1358 = vmatprep.subr.mxu0 0.0
        %1359 = vmatpush1.msra.mxu0 0.0
        %1360 = vmatprep.subr.mxu0 0.0
        %1361 = vmatpush1.msra.mxu0 0.0
        %1362 = vmatprep.subr.mxu0 0.0
        %1363 = vmatpush1.msra.mxu0 0.0
        %1364 = vmatprep.mubr.f32.mxu0 0.0
        %1365 = vmatmul.mubr.f32.gmra.mrb[0].mxu0 %v808
        %v1366 = vpop.f32.mrb[0].mxu0
        %v1367 = vadd.f32 0.0, %v1366
        %v1368 = vpop.f32.mrb[0].mxu0
        %1369 = vdwg.mxu0
        %1370 = vmatprep.subr.mxu0 0.0
        %1371 = vmatpush1.msra.mxu0 %v785
        %1372 = vmatprep.subr.mxu0 0.0
        %1373 = vmatpush1.msra.mxu0 %v786
        %1374 = vmatprep.subr.mxu0 0.0
        %1375 = vmatpush1.msra.mxu0 %v787
        %1376 = vmatprep.subr.mxu0 0.0
        %1377 = vmatpush1.msra.mxu0 %v788
        %1378 = vmatprep.subr.mxu0 0.0
        %1379 = vmatpush1.msra.mxu0 0.0
        %1380 = vmatprep.subr.mxu0 0.0
        %1381 = vmatpush1.msra.mxu0 0.0
        %1382 = vmatprep.subr.mxu0 0.0
        %1383 = vmatpush1.msra.mxu0 0.0
        %1384 = vmatprep.subr.mxu0 0.0
        %1385 = vmatpush1.msra.mxu0 0.0
        %1386 = vmatprep.subr.mxu0 0.0
        %1387 = vmatpush1.msra.mxu0 0.0
        %1388 = vmatprep.subr.mxu0 0.0
        %1389 = vmatpush1.msra.mxu0 0.0
        %1390 = vmatprep.subr.mxu0 0.0
        %1391 = vmatpush1.msra.mxu0 0.0
        %1392 = vmatprep.subr.mxu0 0.0
        %1393 = vmatpush1.msra.mxu0 0.0
        %1394 = vmatprep.subr.mxu0 0.0
        %1395 = vmatpush1.msra.mxu0 0.0
        %1396 = vmatprep.subr.mxu0 0.0
        %1397 = vmatpush1.msra.mxu0 0.0
        %1398 = vmatprep.subr.mxu0 0.0
        %1399 = vmatpush1.msra.mxu0 0.0
        %1400 = vmatprep.subr.mxu0 0.0
        %1401 = vmatpush1.msra.mxu0 0.0
        %1402 = vmatprep.subr.mxu0 0.0
        %1403 = vmatpush1.msra.mxu0 0.0
        %1404 = vmatprep.subr.mxu0 0.0
        %1405 = vmatpush1.msra.mxu0 0.0
        %1406 = vmatprep.subr.mxu0 0.0
        %1407 = vmatpush1.msra.mxu0 0.0
        %1408 = vmatprep.subr.mxu0 0.0
        %1409 = vmatpush1.msra.mxu0 0.0
        %1410 = vmatprep.subr.mxu0 0.0
        %1411 = vmatpush1.msra.mxu0 0.0
        %1412 = vmatprep.subr.mxu0 0.0
        %1413 = vmatpush1.msra.mxu0 0.0
        %1414 = vmatprep.subr.mxu0 0.0
        %1415 = vmatpush1.msra.mxu0 0.0
        %1416 = vmatprep.subr.mxu0 0.0
        %1417 = vmatpush1.msra.mxu0 0.0
        %1418 = vmatprep.subr.mxu0 0.0
        %1419 = vmatpush1.msra.mxu0 0.0
        %1420 = vmatprep.subr.mxu0 0.0
        %1421 = vmatpush1.msra.mxu0 0.0
        %1422 = vmatprep.subr.mxu0 0.0
        %1423 = vmatpush1.msra.mxu0 0.0
        %1424 = vmatprep.subr.mxu0 0.0
        %1425 = vmatpush1.msra.mxu0 0.0
        %1426 = vmatprep.subr.mxu0 0.0
        %1427 = vmatpush1.msra.mxu0 0.0
        %1428 = vmatprep.subr.mxu0 0.0
        %1429 = vmatpush1.msra.mxu0 0.0
        %1430 = vmatprep.subr.mxu0 0.0
        %1431 = vmatpush1.msra.mxu0 0.0
        %1432 = vmatprep.subr.mxu0 0.0
        %1433 = vmatpush1.msra.mxu0 0.0
        %1434 = vmatprep.mubr.f32.mxu0 0.0
        %1435 = vmatmul.mubr.f32.gmra.mrb[0].mxu0 %v808
        %v1436 = vpop.f32.mrb[0].mxu0
        %v1437 = vadd.f32 0.0, %v1436
        %v1438 = vpop.f32.mrb[0].mxu0
        %1439 = vdwg.mxu0
        %1440 = vmatprep.subr.mxu0 0.0
        %1441 = vmatpush1.msra.mxu0 %v789
        %1442 = vmatprep.subr.mxu0 0.0
        %1443 = vmatpush1.msra.mxu0 %v790
        %1444 = vmatprep.subr.mxu0 0.0
        %1445 = vmatpush1.msra.mxu0 %v791
        %1446 = vmatprep.subr.mxu0 0.0
        %1447 = vmatpush1.msra.mxu0 %v792
        %1448 = vmatprep.subr.mxu0 0.0
        %1449 = vmatpush1.msra.mxu0 0.0
        %1450 = vmatprep.subr.mxu0 0.0
        %1451 = vmatpush1.msra.mxu0 0.0
        %1452 = vmatprep.subr.mxu0 0.0
        %1453 = vmatpush1.msra.mxu0 0.0
        %1454 = vmatprep.subr.mxu0 0.0
        %1455 = vmatpush1.msra.mxu0 0.0
        %1456 = vmatprep.subr.mxu0 0.0
        %1457 = vmatpush1.msra.mxu0 0.0
        %1458 = vmatprep.subr.mxu0 0.0
        %1459 = vmatpush1.msra.mxu0 0.0
        %1460 = vmatprep.subr.mxu0 0.0
        %1461 = vmatpush1.msra.mxu0 0.0
        %1462 = vmatprep.subr.mxu0 0.0
        %1463 = vmatpush1.msra.mxu0 0.0
        %1464 = vmatprep.subr.mxu0 0.0
        %1465 = vmatpush1.msra.mxu0 0.0
        %1466 = vmatprep.subr.mxu0 0.0
        %1467 = vmatpush1.msra.mxu0 0.0
        %1468 = vmatprep.subr.mxu0 0.0
        %1469 = vmatpush1.msra.mxu0 0.0
        %1470 = vmatprep.subr.mxu0 0.0
        %1471 = vmatpush1.msra.mxu0 0.0
        %1472 = vmatprep.subr.mxu0 0.0
        %1473 = vmatpush1.msra.mxu0 0.0
        %1474 = vmatprep.subr.mxu0 0.0
        %1475 = vmatpush1.msra.mxu0 0.0
        %1476 = vmatprep.subr.mxu0 0.0
        %1477 = vmatpush1.msra.mxu0 0.0
        %1478 = vmatprep.subr.mxu0 0.0
        %1479 = vmatpush1.msra.mxu0 0.0
        %1480 = vmatprep.subr.mxu0 0.0
        %1481 = vmatpush1.msra.mxu0 0.0
        %1482 = vmatprep.subr.mxu0 0.0
        %1483 = vmatpush1.msra.mxu0 0.0
        %1484 = vmatprep.subr.mxu0 0.0
        %1485 = vmatpush1.msra.mxu0 0.0
        %1486 = vmatprep.subr.mxu0 0.0
        %1487 = vmatpush1.msra.mxu0 0.0
        %1488 = vmatprep.subr.mxu0 0.0
        %1489 = vmatpush1.msra.mxu0 0.0
        %1490 = vmatprep.subr.mxu0 0.0
        %1491 = vmatpush1.msra.mxu0 0.0
        %1492 = vmatprep.subr.mxu0 0.0
        %1493 = vmatpush1.msra.mxu0 0.0
        %1494 = vmatprep.subr.mxu0 0.0
        %1495 = vmatpush1.msra.mxu0 0.0
        %1496 = vmatprep.subr.mxu0 0.0
        %1497 = vmatpush1.msra.mxu0 0.0
        %1498 = vmatprep.subr.mxu0 0.0
        %1499 = vmatpush1.msra.mxu0 0.0
        %1500 = vmatprep.subr.mxu0 0.0
        %1501 = vmatpush1.msra.mxu0 0.0
        %1502 = vmatprep.subr.mxu0 0.0
        %1503 = vmatpush1.msra.mxu0 0.0
        %1504 = vmatprep.mubr.f32.mxu0 0.0
        %1505 = vmatmul.mubr.f32.gmra.mrb[0].mxu0 %v808
        %v1506 = vpop.f32.mrb[0].mxu0
        %v1507 = vadd.f32 0.0, %v1506
        %v1508 = vpop.f32.mrb[0].mxu0
        %1509 = vdwg.mxu0
        %1510 = vmatprep.subr.mxu0 0.0
        %1511 = vmatpush1.msra.mxu0 %v793
        %1512 = vmatprep.subr.mxu0 0.0
        %1513 = vmatpush1.msra.mxu0 %v794
        %1514 = vmatprep.subr.mxu0 0.0
        %1515 = vmatpush1.msra.mxu0 %v795
        %1516 = vmatprep.subr.mxu0 0.0
        %1517 = vmatpush1.msra.mxu0 %v796
        %1518 = vmatprep.subr.mxu0 0.0
        %1519 = vmatpush1.msra.mxu0 0.0
        %1520 = vmatprep.subr.mxu0 0.0
        %1521 = vmatpush1.msra.mxu0 0.0
        %1522 = vmatprep.subr.mxu0 0.0
        %1523 = vmatpush1.msra.mxu0 0.0
        %1524 = vmatprep.subr.mxu0 0.0
        %1525 = vmatpush1.msra.mxu0 0.0
        %1526 = vmatprep.subr.mxu0 0.0
        %1527 = vmatpush1.msra.mxu0 0.0
        %1528 = vmatprep.subr.mxu0 0.0
        %1529 = vmatpush1.msra.mxu0 0.0
        %1530 = vmatprep.subr.mxu0 0.0
        %1531 = vmatpush1.msra.mxu0 0.0
        %1532 = vmatprep.subr.mxu0 0.0
        %1533 = vmatpush1.msra.mxu0 0.0
        %1534 = vmatprep.subr.mxu0 0.0
        %1535 = vmatpush1.msra.mxu0 0.0
        %1536 = vmatprep.subr.mxu0 0.0
        %1537 = vmatpush1.msra.mxu0 0.0
        %1538 = vmatprep.subr.mxu0 0.0
        %1539 = vmatpush1.msra.mxu0 0.0
        %1540 = vmatprep.subr.mxu0 0.0
        %1541 = vmatpush1.msra.mxu0 0.0
        %1542 = vmatprep.subr.mxu0 0.0
        %1543 = vmatpush1.msra.mxu0 0.0
        %1544 = vmatprep.subr.mxu0 0.0
        %1545 = vmatpush1.msra.mxu0 0.0
        %1546 = vmatprep.subr.mxu0 0.0
        %1547 = vmatpush1.msra.mxu0 0.0
        %1548 = vmatprep.subr.mxu0 0.0
        %1549 = vmatpush1.msra.mxu0 0.0
        %1550 = vmatprep.subr.mxu0 0.0
        %1551 = vmatpush1.msra.mxu0 0.0
        %1552 = vmatprep.subr.mxu0 0.0
        %1553 = vmatpush1.msra.mxu0 0.0
        %1554 = vmatprep.subr.mxu0 0.0
        %1555 = vmatpush1.msra.mxu0 0.0
        %1556 = vmatprep.subr.mxu0 0.0
        %1557 = vmatpush1.msra.mxu0 0.0
        %1558 = vmatprep.subr.mxu0 0.0
        %1559 = vmatpush1.msra.mxu0 0.0
        %1560 = vmatprep.subr.mxu0 0.0
        %1561 = vmatpush1.msra.mxu0 0.0
        %1562 = vmatprep.subr.mxu0 0.0
        %1563 = vmatpush1.msra.mxu0 0.0
        %1564 = vmatprep.subr.mxu0 0.0
        %1565 = vmatpush1.msra.mxu0 0.0
        %1566 = vmatprep.subr.mxu0 0.0
        %1567 = vmatpush1.msra.mxu0 0.0
        %1568 = vmatprep.subr.mxu0 0.0
        %1569 = vmatpush1.msra.mxu0 0.0
        %1570 = vmatprep.subr.mxu0 0.0
        %1571 = vmatpush1.msra.mxu0 0.0
        %1572 = vmatprep.subr.mxu0 0.0
        %1573 = vmatpush1.msra.mxu0 0.0
        %1574 = vmatprep.mubr.f32.mxu0 0.0
        %1575 = vmatmul.mubr.f32.gmra.mrb[0].mxu0 %v808
        %v1576 = vpop.f32.mrb[0].mxu0
        %v1577 = vadd.f32 0.0, %v1576
        %v1578 = vpop.f32.mrb[0].mxu0
        %1579 = vdwg.mxu0
        %1580 = vmatprep.subr.mxu0 0.0
        %1581 = vmatpush1.msra.mxu0 %v797
        %1582 = vmatprep.subr.mxu0 0.0
        %1583 = vmatpush1.msra.mxu0 %v798
        %1584 = vmatprep.subr.mxu0 0.0
        %1585 = vmatpush1.msra.mxu0 %v799
        %1586 = vmatprep.subr.mxu0 0.0
        %1587 = vmatpush1.msra.mxu0 %v800
        %1588 = vmatprep.subr.mxu0 0.0
        %1589 = vmatpush1.msra.mxu0 0.0
        %1590 = vmatprep.subr.mxu0 0.0
        %1591 = vmatpush1.msra.mxu0 0.0
        %1592 = vmatprep.subr.mxu0 0.0
        %1593 = vmatpush1.msra.mxu0 0.0
        %1594 = vmatprep.subr.mxu0 0.0
        %1595 = vmatpush1.msra.mxu0 0.0
        %1596 = vmatprep.subr.mxu0 0.0
        %1597 = vmatpush1.msra.mxu0 0.0
        %1598 = vmatprep.subr.mxu0 0.0
        %1599 = vmatpush1.msra.mxu0 0.0
        %1600 = vmatprep.subr.mxu0 0.0
        %1601 = vmatpush1.msra.mxu0 0.0
        %1602 = vmatprep.subr.mxu0 0.0
        %1603 = vmatpush1.msra.mxu0 0.0
        %1604 = vmatprep.subr.mxu0 0.0
        %1605 = vmatpush1.msra.mxu0 0.0
        %1606 = vmatprep.subr.mxu0 0.0
        %1607 = vmatpush1.msra.mxu0 0.0
        %1608 = vmatprep.subr.mxu0 0.0
        %1609 = vmatpush1.msra.mxu0 0.0
        %1610 = vmatprep.subr.mxu0 0.0
        %1611 = vmatpush1.msra.mxu0 0.0
        %1612 = vmatprep.subr.mxu0 0.0
        %1613 = vmatpush1.msra.mxu0 0.0
        %1614 = vmatprep.subr.mxu0 0.0
        %1615 = vmatpush1.msra.mxu0 0.0
        %1616 = vmatprep.subr.mxu0 0.0
        %1617 = vmatpush1.msra.mxu0 0.0
        %1618 = vmatprep.subr.mxu0 0.0
        %1619 = vmatpush1.msra.mxu0 0.0
        %1620 = vmatprep.subr.mxu0 0.0
        %1621 = vmatpush1.msra.mxu0 0.0
        %1622 = vmatprep.subr.mxu0 0.0
        %1623 = vmatpush1.msra.mxu0 0.0
        %1624 = vmatprep.subr.mxu0 0.0
        %1625 = vmatpush1.msra.mxu0 0.0
        %1626 = vmatprep.subr.mxu0 0.0
        %1627 = vmatpush1.msra.mxu0 0.0
        %1628 = vmatprep.subr.mxu0 0.0
        %1629 = vmatpush1.msra.mxu0 0.0
        %1630 = vmatprep.subr.mxu0 0.0
        %1631 = vmatpush1.msra.mxu0 0.0
        %1632 = vmatprep.subr.mxu0 0.0
        %1633 = vmatpush1.msra.mxu0 0.0
        %1634 = vmatprep.subr.mxu0 0.0
        %1635 = vmatpush1.msra.mxu0 0.0
        %1636 = vmatprep.subr.mxu0 0.0
        %1637 = vmatpush1.msra.mxu0 0.0
        %1638 = vmatprep.subr.mxu0 0.0
        %1639 = vmatpush1.msra.mxu0 0.0
        %1640 = vmatprep.subr.mxu0 0.0
        %1641 = vmatpush1.msra.mxu0 0.0
        %1642 = vmatprep.subr.mxu0 0.0
        %1643 = vmatpush1.msra.mxu0 0.0
        %1644 = vmatprep.mubr.f32.mxu0 0.0
        %1645 = vmatmul.mubr.f32.gmra.mrb[0].mxu0 %v808
        %v1646 = vpop.f32.mrb[0].mxu0
        %v1647 = vadd.f32 0.0, %v1646
        %v1648 = vpop.f32.mrb[0].mxu0
        %1649 = vdwg.mxu0
        %vm1650 = vcmask 64512
        %v1652 = vsel %vm1650, %v877, 0
        %v1655 = vsel %vm1650, %v1157, 0
        %1657 = vmatprep.subr.mxu0 0.0
        %1658 = vmatpush1.xpose.msra.mxu0 %v1655
        %1659 = vmatprep.subr.mxu0 0.0
        %1660 = vmatpush1.xpose.msra.mxu0 0.0
        %1661 = vmatprep.subr.mxu0 0.0
        %1662 = vmatpush1.xpose.msra.mxu0 0.0
        %1663 = vmatprep.subr.mxu0 0.0
        %1664 = vmatpush1.xpose.msra.mxu0 0.0
        %1665 = vmatprep.subr.mxu0 0.0
        %1666 = vmatpush1.xpose.msra.mxu0 0.0
        %1667 = vmatprep.subr.mxu0 0.0
        %1668 = vmatpush1.xpose.msra.mxu0 0.0
        %1669 = vmatprep.subr.mxu0 0.0
        %1670 = vmatpush1.xpose.msra.mxu0 0.0
        %1671 = vmatprep.subr.mxu0 0.0
        %1672 = vmatpush1.xpose.msra.mxu0 0.0
        %1673 = vmatprep.subr.mxu0 0.0
        %1674 = vmatpush1.xpose.msra.mxu0 0.0
        %1675 = vmatprep.subr.mxu0 0.0
        %1676 = vmatpush1.xpose.msra.mxu0 0.0
        %1677 = vmatprep.subr.mxu0 0.0
        %1678 = vmatpush1.xpose.msra.mxu0 0.0
        %1679 = vmatprep.subr.mxu0 0.0
        %1680 = vmatpush1.xpose.msra.mxu0 0.0
        %1681 = vmatprep.subr.mxu0 0.0
        %1682 = vmatpush1.xpose.msra.mxu0 0.0
        %1683 = vmatprep.subr.mxu0 0.0
        %1684 = vmatpush1.xpose.msra.mxu0 0.0
        %1685 = vmatprep.subr.mxu0 0.0
        %1686 = vmatpush1.xpose.msra.mxu0 0.0
        %1687 = vmatprep.subr.mxu0 0.0
        %1688 = vmatpush1.xpose.msra.mxu0 0.0
        %1689 = vmatprep.subr.mxu0 0.0
        %1690 = vmatpush1.xpose.msra.mxu0 0.0
        %1691 = vmatprep.subr.mxu0 0.0
        %1692 = vmatpush1.xpose.msra.mxu0 0.0
        %1693 = vmatprep.subr.mxu0 0.0
        %1694 = vmatpush1.xpose.msra.mxu0 0.0
        %1695 = vmatprep.subr.mxu0 0.0
        %1696 = vmatpush1.xpose.msra.mxu0 0.0
        %1697 = vmatprep.subr.mxu0 0.0
        %1698 = vmatpush1.xpose.msra.mxu0 0.0
        %1699 = vmatprep.subr.mxu0 0.0
        %1700 = vmatpush1.xpose.msra.mxu0 0.0
        %1701 = vmatprep.subr.mxu0 0.0
        %1702 = vmatpush1.xpose.msra.mxu0 0.0
        %1703 = vmatprep.subr.mxu0 0.0
        %1704 = vmatpush1.xpose.msra.mxu0 0.0
        %1705 = vmatprep.subr.mxu0 0.0
        %1706 = vmatpush1.xpose.msra.mxu0 0.0
        %1707 = vmatprep.subr.mxu0 0.0
        %1708 = vmatpush1.xpose.msra.mxu0 0.0
        %1709 = vmatprep.subr.mxu0 0.0
        %1710 = vmatpush1.xpose.msra.mxu0 0.0
        %1711 = vmatprep.subr.mxu0 0.0
        %1712 = vmatpush1.xpose.msra.mxu0 0.0
        %1713 = vmatprep.subr.mxu0 0.0
        %1714 = vmatpush1.xpose.msra.mxu0 0.0
        %1715 = vmatprep.subr.mxu0 0.0
        %1716 = vmatpush1.xpose.msra.mxu0 0.0
        %1717 = vmatprep.subr.mxu0 0.0
        %1718 = vmatpush1.xpose.msra.mxu0 0.0
        %1719 = vmatprep.subr.mxu0 0.0
        %1720 = vmatpush1.xpose.msra.mxu0 0.0
        %1721 = vmatprep.mubr.f32.mxu0 0.0
        %1722 = vmatmul.mubr.f32.gmra.mrb[0].mxu0 %v1652
        %v1723 = vpop.f32.mrb[0].mxu0
        %v1724 = vadd.f32 0.0, %v1723
        %v1725 = vpop.f32.mrb[0].mxu0
        %1726 = vdwg.mxu0
        %v1728 = vsel %vm1650, %v947, 0
        %v1731 = vsel %vm1650, %v1227, 0
        %1733 = vmatprep.subr.mxu0 0.0
        %1734 = vmatpush1.xpose.msra.mxu0 %v1731
        %1735 = vmatprep.subr.mxu0 0.0
        %1736 = vmatpush1.xpose.msra.mxu0 0.0
        %1737 = vmatprep.subr.mxu0 0.0
        %1738 = vmatpush1.xpose.msra.mxu0 0.0
        %1739 = vmatprep.subr.mxu0 0.0
        %1740 = vmatpush1.xpose.msra.mxu0 0.0
        %1741 = vmatprep.subr.mxu0 0.0
        %1742 = vmatpush1.xpose.msra.mxu0 0.0
        %1743 = vmatprep.subr.mxu0 0.0
        %1744 = vmatpush1.xpose.msra.mxu0 0.0
        %1745 = vmatprep.subr.mxu0 0.0
        %1746 = vmatpush1.xpose.msra.mxu0 0.0
        %1747 = vmatprep.subr.mxu0 0.0
        %1748 = vmatpush1.xpose.msra.mxu0 0.0
        %1749 = vmatprep.subr.mxu0 0.0
        %1750 = vmatpush1.xpose.msra.mxu0 0.0
        %1751 = vmatprep.subr.mxu0 0.0
        %1752 = vmatpush1.xpose.msra.mxu0 0.0
        %1753 = vmatprep.subr.mxu0 0.0
        %1754 = vmatpush1.xpose.msra.mxu0 0.0
        %1755 = vmatprep.subr.mxu0 0.0
        %1756 = vmatpush1.xpose.msra.mxu0 0.0
        %1757 = vmatprep.subr.mxu0 0.0
        %1758 = vmatpush1.xpose.msra.mxu0 0.0
        %1759 = vmatprep.subr.mxu0 0.0
        %1760 = vmatpush1.xpose.msra.mxu0 0.0
        %1761 = vmatprep.subr.mxu0 0.0
        %1762 = vmatpush1.xpose.msra.mxu0 0.0
        %1763 = vmatprep.subr.mxu0 0.0
        %1764 = vmatpush1.xpose.msra.mxu0 0.0
        %1765 = vmatprep.subr.mxu0 0.0
        %1766 = vmatpush1.xpose.msra.mxu0 0.0
        %1767 = vmatprep.subr.mxu0 0.0
        %1768 = vmatpush1.xpose.msra.mxu0 0.0
        %1769 = vmatprep.subr.mxu0 0.0
        %1770 = vmatpush1.xpose.msra.mxu0 0.0
        %1771 = vmatprep.subr.mxu0 0.0
        %1772 = vmatpush1.xpose.msra.mxu0 0.0
        %1773 = vmatprep.subr.mxu0 0.0
        %1774 = vmatpush1.xpose.msra.mxu0 0.0
        %1775 = vmatprep.subr.mxu0 0.0
        %1776 = vmatpush1.xpose.msra.mxu0 0.0
        %1777 = vmatprep.subr.mxu0 0.0
        %1778 = vmatpush1.xpose.msra.mxu0 0.0
        %1779 = vmatprep.subr.mxu0 0.0
        %1780 = vmatpush1.xpose.msra.mxu0 0.0
        %1781 = vmatprep.subr.mxu0 0.0
        %1782 = vmatpush1.xpose.msra.mxu0 0.0
        %1783 = vmatprep.subr.mxu0 0.0
        %1784 = vmatpush1.xpose.msra.mxu0 0.0
        %1785 = vmatprep.subr.mxu0 0.0
        %1786 = vmatpush1.xpose.msra.mxu0 0.0
        %1787 = vmatprep.subr.mxu0 0.0
        %1788 = vmatpush1.xpose.msra.mxu0 0.0
        %1789 = vmatprep.subr.mxu0 0.0
        %1790 = vmatpush1.xpose.msra.mxu0 0.0
        %1791 = vmatprep.subr.mxu0 0.0
        %1792 = vmatpush1.xpose.msra.mxu0 0.0
        %1793 = vmatprep.subr.mxu0 0.0
        %1794 = vmatpush1.xpose.msra.mxu0 0.0
        %1795 = vmatprep.subr.mxu0 0.0
        %1796 = vmatpush1.xpose.msra.mxu0 0.0
        %1797 = vmatprep.mubr.f32.mxu0 0.0
        %1798 = vmatmul.mubr.f32.gmra.mrb[0].mxu0 %v1728
        %v1799 = vpop.f32.mrb[0].mxu0
        %v1800 = vadd.f32 0.0, %v1799
        %v1801 = vpop.f32.mrb[0].mxu0
        %1802 = vdwg.mxu0
        %v1804 = vsel %vm1650, %v1017, 0
        %v1807 = vsel %vm1650, %v1297, 0
        %1809 = vmatprep.subr.mxu0 0.0
        %1810 = vmatpush1.xpose.msra.mxu0 %v1807
        %1811 = vmatprep.subr.mxu0 0.0
        %1812 = vmatpush1.xpose.msra.mxu0 0.0
        %1813 = vmatprep.subr.mxu0 0.0
        %1814 = vmatpush1.xpose.msra.mxu0 0.0
        %1815 = vmatprep.subr.mxu0 0.0
        %1816 = vmatpush1.xpose.msra.mxu0 0.0
        %1817 = vmatprep.subr.mxu0 0.0
        %1818 = vmatpush1.xpose.msra.mxu0 0.0
        %1819 = vmatprep.subr.mxu0 0.0
        %1820 = vmatpush1.xpose.msra.mxu0 0.0
        %1821 = vmatprep.subr.mxu0 0.0
        %1822 = vmatpush1.xpose.msra.mxu0 0.0
        %1823 = vmatprep.subr.mxu0 0.0
        %1824 = vmatpush1.xpose.msra.mxu0 0.0
        %1825 = vmatprep.subr.mxu0 0.0
        %1826 = vmatpush1.xpose.msra.mxu0 0.0
        %1827 = vmatprep.subr.mxu0 0.0
        %1828 = vmatpush1.xpose.msra.mxu0 0.0
        %1829 = vmatprep.subr.mxu0 0.0
        %1830 = vmatpush1.xpose.msra.mxu0 0.0
        %1831 = vmatprep.subr.mxu0 0.0
        %1832 = vmatpush1.xpose.msra.mxu0 0.0
        %1833 = vmatprep.subr.mxu0 0.0
        %1834 = vmatpush1.xpose.msra.mxu0 0.0
        %1835 = vmatprep.subr.mxu0 0.0
        %1836 = vmatpush1.xpose.msra.mxu0 0.0
        %1837 = vmatprep.subr.mxu0 0.0
        %1838 = vmatpush1.xpose.msra.mxu0 0.0
        %1839 = vmatprep.subr.mxu0 0.0
        %1840 = vmatpush1.xpose.msra.mxu0 0.0
        %1841 = vmatprep.subr.mxu0 0.0
        %1842 = vmatpush1.xpose.msra.mxu0 0.0
        %1843 = vmatprep.subr.mxu0 0.0
        %1844 = vmatpush1.xpose.msra.mxu0 0.0
        %1845 = vmatprep.subr.mxu0 0.0
        %1846 = vmatpush1.xpose.msra.mxu0 0.0
        %1847 = vmatprep.subr.mxu0 0.0
        %1848 = vmatpush1.xpose.msra.mxu0 0.0
        %1849 = vmatprep.subr.mxu0 0.0
        %1850 = vmatpush1.xpose.msra.mxu0 0.0
        %1851 = vmatprep.subr.mxu0 0.0
        %1852 = vmatpush1.xpose.msra.mxu0 0.0
        %1853 = vmatprep.subr.mxu0 0.0
        %1854 = vmatpush1.xpose.msra.mxu0 0.0
        %1855 = vmatprep.subr.mxu0 0.0
        %1856 = vmatpush1.xpose.msra.mxu0 0.0
        %1857 = vmatprep.subr.mxu0 0.0
        %1858 = vmatpush1.xpose.msra.mxu0 0.0
        %1859 = vmatprep.subr.mxu0 0.0
        %1860 = vmatpush1.xpose.msra.mxu0 0.0
        %1861 = vmatprep.subr.mxu0 0.0
        %1862 = vmatpush1.xpose.msra.mxu0 0.0
        %1863 = vmatprep.subr.mxu0 0.0
        %1864 = vmatpush1.xpose.msra.mxu0 0.0
        %1865 = vmatprep.subr.mxu0 0.0
        %1866 = vmatpush1.xpose.msra.mxu0 0.0
        %1867 = vmatprep.subr.mxu0 0.0
        %1868 = vmatpush1.xpose.msra.mxu0 0.0
        %1869 = vmatprep.subr.mxu0 0.0
        %1870 = vmatpush1.xpose.msra.mxu0 0.0
        %1871 = vmatprep.subr.mxu0 0.0
        %1872 = vmatpush1.xpose.msra.mxu0 0.0
        %1873 = vmatprep.mubr.f32.mxu0 0.0
        %1874 = vmatmul.mubr.f32.gmra.mrb[0].mxu0 %v1804
        %v1875 = vpop.f32.mrb[0].mxu0
        %v1876 = vadd.f32 0.0, %v1875
        %v1877 = vpop.f32.mrb[0].mxu0
        %1878 = vdwg.mxu0
        %v1880 = vsel %vm1650, %v1087, 0
        %v1883 = vsel %vm1650, %v1367, 0
        %1885 = vmatprep.subr.mxu0 0.0
        %1886 = vmatpush1.xpose.msra.mxu0 %v1883
        %1887 = vmatprep.subr.mxu0 0.0
        %1888 = vmatpush1.xpose.msra.mxu0 0.0
        %1889 = vmatprep.subr.mxu0 0.0
        %1890 = vmatpush1.xpose.msra.mxu0 0.0
        %1891 = vmatprep.subr.mxu0 0.0
        %1892 = vmatpush1.xpose.msra.mxu0 0.0
        %1893 = vmatprep.subr.mxu0 0.0
        %1894 = vmatpush1.xpose.msra.mxu0 0.0
        %1895 = vmatprep.subr.mxu0 0.0
        %1896 = vmatpush1.xpose.msra.mxu0 0.0
        %1897 = vmatprep.subr.mxu0 0.0
        %1898 = vmatpush1.xpose.msra.mxu0 0.0
        %1899 = vmatprep.subr.mxu0 0.0
        %1900 = vmatpush1.xpose.msra.mxu0 0.0
        %1901 = vmatprep.subr.mxu0 0.0
        %1902 = vmatpush1.xpose.msra.mxu0 0.0
        %1903 = vmatprep.subr.mxu0 0.0
        %1904 = vmatpush1.xpose.msra.mxu0 0.0
        %1905 = vmatprep.subr.mxu0 0.0
        %1906 = vmatpush1.xpose.msra.mxu0 0.0
        %1907 = vmatprep.subr.mxu0 0.0
        %1908 = vmatpush1.xpose.msra.mxu0 0.0
        %1909 = vmatprep.subr.mxu0 0.0
        %1910 = vmatpush1.xpose.msra.mxu0 0.0
        %1911 = vmatprep.subr.mxu0 0.0
        %1912 = vmatpush1.xpose.msra.mxu0 0.0
        %1913 = vmatprep.subr.mxu0 0.0
        %1914 = vmatpush1.xpose.msra.mxu0 0.0
        %1915 = vmatprep.subr.mxu0 0.0
        %1916 = vmatpush1.xpose.msra.mxu0 0.0
        %1917 = vmatprep.subr.mxu0 0.0
        %1918 = vmatpush1.xpose.msra.mxu0 0.0
        %1919 = vmatprep.subr.mxu0 0.0
        %1920 = vmatpush1.xpose.msra.mxu0 0.0
        %1921 = vmatprep.subr.mxu0 0.0
        %1922 = vmatpush1.xpose.msra.mxu0 0.0
        %1923 = vmatprep.subr.mxu0 0.0
        %1924 = vmatpush1.xpose.msra.mxu0 0.0
        %1925 = vmatprep.subr.mxu0 0.0
        %1926 = vmatpush1.xpose.msra.mxu0 0.0
        %1927 = vmatprep.subr.mxu0 0.0
        %1928 = vmatpush1.xpose.msra.mxu0 0.0
        %1929 = vmatprep.subr.mxu0 0.0
        %1930 = vmatpush1.xpose.msra.mxu0 0.0
        %1931 = vmatprep.subr.mxu0 0.0
        %1932 = vmatpush1.xpose.msra.mxu0 0.0
        %1933 = vmatprep.subr.mxu0 0.0
        %1934 = vmatpush1.xpose.msra.mxu0 0.0
        %1935 = vmatprep.subr.mxu0 0.0
        %1936 = vmatpush1.xpose.msra.mxu0 0.0
        %1937 = vmatprep.subr.mxu0 0.0
        %1938 = vmatpush1.xpose.msra.mxu0 0.0
        %1939 = vmatprep.subr.mxu0 0.0
        %1940 = vmatpush1.xpose.msra.mxu0 0.0
        %1941 = vmatprep.subr.mxu0 0.0
        %1942 = vmatpush1.xpose.msra.mxu0 0.0
        %1943 = vmatprep.subr.mxu0 0.0
        %1944 = vmatpush1.xpose.msra.mxu0 0.0
        %1945 = vmatprep.subr.mxu0 0.0
        %1946 = vmatpush1.xpose.msra.mxu0 0.0
        %1947 = vmatprep.subr.mxu0 0.0
        %1948 = vmatpush1.xpose.msra.mxu0 0.0
        %1949 = vmatprep.mubr.f32.mxu0 0.0
        %1950 = vmatmul.mubr.f32.gmra.mrb[0].mxu0 %v1880
        %v1951 = vpop.f32.mrb[0].mxu0
        %v1952 = vadd.f32 0.0, %v1951
        %v1953 = vpop.f32.mrb[0].mxu0
        %1954 = vdwg.mxu0
        %v1955 = vsel %vm1650, %v1724, -inf
        %1956 = vmax.xlane.f32.xlu0 %v1955
        %v1957 = vpop.xlane.xlu0 %1956
        %v1958 = vsel %vm1650, %v1800, -inf
        %1959 = vmax.xlane.f32.xlu0 %v1958
        %v1960 = vpop.xlane.xlu0 %1959
        %v1961 = vsel %vm1650, %v1876, -inf
        %1962 = vmax.xlane.f32.xlu0 %v1961
        %v1963 = vpop.xlane.xlu0 %1962
        %v1964 = vsel %vm1650, %v1952, -inf
        %1965 = vmax.xlane.f32.xlu0 %v1964
        %v1966 = vpop.xlane.xlu0 %1965
        %v1967 = vsub.f32 %v1724, %v1957
        %v1968 = vsub.f32 %v1800, %v1960
        %v1969 = vsub.f32 %v1876, %v1963
        %v1970 = vsub.f32 %v1952, %v1966
        %v1971 = vmul.f32 %v1967, 1.442695
        %v1972 = vpow.pop %v1971
        %v1973 = vmul.f32 %v1968, 1.442695
        %v1974 = vpow.pop %v1973
        %v1975 = vmul.f32 %v1969, 1.442695
        %v1976 = vpow.pop %v1975
        %v1977 = vmul.f32 %v1970, 1.442695
        %v1978 = vpow.pop %v1977
        %v1979 = vsel %vm1650, %v1972, 0.0
        %1980 = vadd.xlane.f32.xlu0 %v1979
        %v1981 = vpop.xlane.xlu0 %1980
        %v1982 = vsel %vm1650, %v1974, 0.0
        %1983 = vadd.xlane.f32.xlu0 %v1982
        %v1984 = vpop.xlane.xlu0 %1983
        %v1985 = vsel %vm1650, %v1976, 0.0
        %1986 = vadd.xlane.f32.xlu0 %v1985
        %v1987 = vpop.xlane.xlu0 %1986
        %v1988 = vsel %vm1650, %v1978, 0.0
        %1989 = vadd.xlane.f32.xlu0 %v1988
        %v1990 = vpop.xlane.xlu0 %1989
        %v1991 = vrcp.pop %v1981
        %v1992 = vrcp.pop %v1984
        %v1993 = vrcp.pop %v1987
        %v1994 = vrcp.pop %v1990
        %v1995 = vmul.f32 %v1972, %v1991
        %v1996 = vmul.f32 %v1974, %v1992
        %v1997 = vmul.f32 %v1976, %v1993
        %v1998 = vmul.f32 %v1978, %v1994
        %v2000 = vsel %vm1650, %v1995, 0
        %2002 = vmatprep.subr.mxu0 0.0
        %2003 = vmatpush1.msra.mxu0 %v1437
        %2004 = vmatprep.subr.mxu0 0.0
        %2005 = vmatpush1.msra.mxu0 0.0
        %2006 = vmatprep.subr.mxu0 0.0
        %2007 = vmatpush1.msra.mxu0 0.0
        %2008 = vmatprep.subr.mxu0 0.0
        %2009 = vmatpush1.msra.mxu0 0.0
        %2010 = vmatprep.subr.mxu0 0.0
        %2011 = vmatpush1.msra.mxu0 0.0
        %2012 = vmatprep.subr.mxu0 0.0
        %2013 = vmatpush1.msra.mxu0 0.0
        %2014 = vmatprep.subr.mxu0 0.0
        %2015 = vmatpush1.msra.mxu0 0.0
        %2016 = vmatprep.subr.mxu0 0.0
        %2017 = vmatpush1.msra.mxu0 0.0
        %2018 = vmatprep.subr.mxu0 0.0
        %2019 = vmatpush1.msra.mxu0 0.0
        %2020 = vmatprep.subr.mxu0 0.0
        %2021 = vmatpush1.msra.mxu0 0.0
        %2022 = vmatprep.subr.mxu0 0.0
        %2023 = vmatpush1.msra.mxu0 0.0
        %2024 = vmatprep.subr.mxu0 0.0
        %2025 = vmatpush1.msra.mxu0 0.0
        %2026 = vmatprep.subr.mxu0 0.0
        %2027 = vmatpush1.msra.mxu0 0.0
        %2028 = vmatprep.subr.mxu0 0.0
        %2029 = vmatpush1.msra.mxu0 0.0
        %2030 = vmatprep.subr.mxu0 0.0
        %2031 = vmatpush1.msra.mxu0 0.0
        %2032 = vmatprep.subr.mxu0 0.0
        %2033 = vmatpush1.msra.mxu0 0.0
        %2034 = vmatprep.subr.mxu0 0.0
        %2035 = vmatpush1.msra.mxu0 0.0
        %2036 = vmatprep.subr.mxu0 0.0
        %2037 = vmatpush1.msra.mxu0 0.0
        %2038 = vmatprep.subr.mxu0 0.0
        %2039 = vmatpush1.msra.mxu0 0.0
        %2040 = vmatprep.subr.mxu0 0.0
        %2041 = vmatpush1.msra.mxu0 0.0
        %2042 = vmatprep.subr.mxu0 0.0
        %2043 = vmatpush1.msra.mxu0 0.0
        %2044 = vmatprep.subr.mxu0 0.0
        %2045 = vmatpush1.msra.mxu0 0.0
        %2046 = vmatprep.subr.mxu0 0.0
        %2047 = vmatpush1.msra.mxu0 0.0
        %2048 = vmatprep.subr.mxu0 0.0
        %2049 = vmatpush1.msra.mxu0 0.0
        %2050 = vmatprep.subr.mxu0 0.0
        %2051 = vmatpush1.msra.mxu0 0.0
        %2052 = vmatprep.subr.mxu0 0.0
        %2053 = vmatpush1.msra.mxu0 0.0
        %2054 = vmatprep.subr.mxu0 0.0
        %2055 = vmatpush1.msra.mxu0 0.0
        %2056 = vmatprep.subr.mxu0 0.0
        %2057 = vmatpush1.msra.mxu0 0.0
        %2058 = vmatprep.subr.mxu0 0.0
        %2059 = vmatpush1.msra.mxu0 0.0
        %2060 = vmatprep.subr.mxu0 0.0
        %2061 = vmatpush1.msra.mxu0 0.0
        %2062 = vmatprep.subr.mxu0 0.0
        %2063 = vmatpush1.msra.mxu0 0.0
        %2064 = vmatprep.subr.mxu0 0.0
        %2065 = vmatpush1.msra.mxu0 0.0
        %2066 = vmatprep.mubr.f32.mxu0 0.0
        %2067 = vmatmul.mubr.f32.gmra.mrb[0].mxu0 %v2000
        %v2068 = vpop.f32.mrb[0].mxu0
        %v2069 = vadd.f32 0.0, %v2068
        %v2070 = vpop.f32.mrb[0].mxu0
        %2071 = vdwg.mxu0
        %v2073 = vsel %vm1650, %v1996, 0
        %2075 = vmatprep.subr.mxu0 0.0
        %2076 = vmatpush1.msra.mxu0 %v1507
        %2077 = vmatprep.subr.mxu0 0.0
        %2078 = vmatpush1.msra.mxu0 0.0
        %2079 = vmatprep.subr.mxu0 0.0
        %2080 = vmatpush1.msra.mxu0 0.0
        %2081 = vmatprep.subr.mxu0 0.0
        %2082 = vmatpush1.msra.mxu0 0.0
        %2083 = vmatprep.subr.mxu0 0.0
        %2084 = vmatpush1.msra.mxu0 0.0
        %2085 = vmatprep.subr.mxu0 0.0
        %2086 = vmatpush1.msra.mxu0 0.0
        %2087 = vmatprep.subr.mxu0 0.0
        %2088 = vmatpush1.msra.mxu0 0.0
        %2089 = vmatprep.subr.mxu0 0.0
        %2090 = vmatpush1.msra.mxu0 0.0
        %2091 = vmatprep.subr.mxu0 0.0
        %2092 = vmatpush1.msra.mxu0 0.0
        %2093 = vmatprep.subr.mxu0 0.0
        %2094 = vmatpush1.msra.mxu0 0.0
        %2095 = vmatprep.subr.mxu0 0.0
        %2096 = vmatpush1.msra.mxu0 0.0
        %2097 = vmatprep.subr.mxu0 0.0
        %2098 = vmatpush1.msra.mxu0 0.0
        %2099 = vmatprep.subr.mxu0 0.0
        %2100 = vmatpush1.msra.mxu0 0.0
        %2101 = vmatprep.subr.mxu0 0.0
        %2102 = vmatpush1.msra.mxu0 0.0
        %2103 = vmatprep.subr.mxu0 0.0
        %2104 = vmatpush1.msra.mxu0 0.0
        %2105 = vmatprep.subr.mxu0 0.0
        %2106 = vmatpush1.msra.mxu0 0.0
        %2107 = vmatprep.subr.mxu0 0.0
        %2108 = vmatpush1.msra.mxu0 0.0
        %2109 = vmatprep.subr.mxu0 0.0
        %2110 = vmatpush1.msra.mxu0 0.0
        %2111 = vmatprep.subr.mxu0 0.0
        %2112 = vmatpush1.msra.mxu0 0.0
        %2113 = vmatprep.subr.mxu0 0.0
        %2114 = vmatpush1.msra.mxu0 0.0
        %2115 = vmatprep.subr.mxu0 0.0
        %2116 = vmatpush1.msra.mxu0 0.0
        %2117 = vmatprep.subr.mxu0 0.0
        %2118 = vmatpush1.msra.mxu0 0.0
        %2119 = vmatprep.subr.mxu0 0.0
        %2120 = vmatpush1.msra.mxu0 0.0
        %2121 = vmatprep.subr.mxu0 0.0
        %2122 = vmatpush1.msra.mxu0 0.0
        %2123 = vmatprep.subr.mxu0 0.0
        %2124 = vmatpush1.msra.mxu0 0.0
        %2125 = vmatprep.subr.mxu0 0.0
        %2126 = vmatpush1.msra.mxu0 0.0
        %2127 = vmatprep.subr.mxu0 0.0
        %2128 = vmatpush1.msra.mxu0 0.0
        %2129 = vmatprep.subr.mxu0 0.0
        %2130 = vmatpush1.msra.mxu0 0.0
        %2131 = vmatprep.subr.mxu0 0.0
        %2132 = vmatpush1.msra.mxu0 0.0
        %2133 = vmatprep.subr.mxu0 0.0
        %2134 = vmatpush1.msra.mxu0 0.0
        %2135 = vmatprep.subr.mxu0 0.0
        %2136 = vmatpush1.msra.mxu0 0.0
        %2137 = vmatprep.subr.mxu0 0.0
        %2138 = vmatpush1.msra.mxu0 0.0
        %2139 = vmatprep.mubr.f32.mxu0 0.0
        %2140 = vmatmul.mubr.f32.gmra.mrb[0].mxu0 %v2073
        %v2141 = vpop.f32.mrb[0].mxu0
        %v2142 = vadd.f32 0.0, %v2141
        %v2143 = vpop.f32.mrb[0].mxu0
        %2144 = vdwg.mxu0
        %v2146 = vsel %vm1650, %v1997, 0
        %2148 = vmatprep.subr.mxu0 0.0
        %2149 = vmatpush1.msra.mxu0 %v1577
        %2150 = vmatprep.subr.mxu0 0.0
        %2151 = vmatpush1.msra.mxu0 0.0
        %2152 = vmatprep.subr.mxu0 0.0
        %2153 = vmatpush1.msra.mxu0 0.0
        %2154 = vmatprep.subr.mxu0 0.0
        %2155 = vmatpush1.msra.mxu0 0.0
        %2156 = vmatprep.subr.mxu0 0.0
        %2157 = vmatpush1.msra.mxu0 0.0
        %2158 = vmatprep.subr.mxu0 0.0
        %2159 = vmatpush1.msra.mxu0 0.0
        %2160 = vmatprep.subr.mxu0 0.0
        %2161 = vmatpush1.msra.mxu0 0.0
        %2162 = vmatprep.subr.mxu0 0.0
        %2163 = vmatpush1.msra.mxu0 0.0
        %2164 = vmatprep.subr.mxu0 0.0
        %2165 = vmatpush1.msra.mxu0 0.0
        %2166 = vmatprep.subr.mxu0 0.0
        %2167 = vmatpush1.msra.mxu0 0.0
        %2168 = vmatprep.subr.mxu0 0.0
        %2169 = vmatpush1.msra.mxu0 0.0
        %2170 = vmatprep.subr.mxu0 0.0
        %2171 = vmatpush1.msra.mxu0 0.0
        %2172 = vmatprep.subr.mxu0 0.0
        %2173 = vmatpush1.msra.mxu0 0.0
        %2174 = vmatprep.subr.mxu0 0.0
        %2175 = vmatpush1.msra.mxu0 0.0
        %2176 = vmatprep.subr.mxu0 0.0
        %2177 = vmatpush1.msra.mxu0 0.0
        %2178 = vmatprep.subr.mxu0 0.0
        %2179 = vmatpush1.msra.mxu0 0.0
        %2180 = vmatprep.subr.mxu0 0.0
        %2181 = vmatpush1.msra.mxu0 0.0
        %2182 = vmatprep.subr.mxu0 0.0
        %2183 = vmatpush1.msra.mxu0 0.0
        %2184 = vmatprep.subr.mxu0 0.0
        %2185 = vmatpush1.msra.mxu0 0.0
        %2186 = vmatprep.subr.mxu0 0.0
        %2187 = vmatpush1.msra.mxu0 0.0
        %2188 = vmatprep.subr.mxu0 0.0
        %2189 = vmatpush1.msra.mxu0 0.0
        %2190 = vmatprep.subr.mxu0 0.0
        %2191 = vmatpush1.msra.mxu0 0.0
        %2192 = vmatprep.subr.mxu0 0.0
        %2193 = vmatpush1.msra.mxu0 0.0
        %2194 = vmatprep.subr.mxu0 0.0
        %2195 = vmatpush1.msra.mxu0 0.0
        %2196 = vmatprep.subr.mxu0 0.0
        %2197 = vmatpush1.msra.mxu0 0.0
        %2198 = vmatprep.subr.mxu0 0.0
        %2199 = vmatpush1.msra.mxu0 0.0
        %2200 = vmatprep.subr.mxu0 0.0
        %2201 = vmatpush1.msra.mxu0 0.0
        %2202 = vmatprep.subr.mxu0 0.0
        %2203 = vmatpush1.msra.mxu0 0.0
        %2204 = vmatprep.subr.mxu0 0.0
        %2205 = vmatpush1.msra.mxu0 0.0
        %2206 = vmatprep.subr.mxu0 0.0
        %2207 = vmatpush1.msra.mxu0 0.0
        %2208 = vmatprep.subr.mxu0 0.0
        %2209 = vmatpush1.msra.mxu0 0.0
        %2210 = vmatprep.subr.mxu0 0.0
        %2211 = vmatpush1.msra.mxu0 0.0
        %2212 = vmatprep.mubr.f32.mxu0 0.0
        %2213 = vmatmul.mubr.f32.gmra.mrb[0].mxu0 %v2146
        %v2214 = vpop.f32.mrb[0].mxu0
        %v2215 = vadd.f32 0.0, %v2214
        %v2216 = vpop.f32.mrb[0].mxu0
        %2217 = vdwg.mxu0
        %v2219 = vsel %vm1650, %v1998, 0
        %2221 = vmatprep.subr.mxu0 0.0
        %2222 = vmatpush1.msra.mxu0 %v1647
        %2223 = vmatprep.subr.mxu0 0.0
        %2224 = vmatpush1.msra.mxu0 0.0
        %2225 = vmatprep.subr.mxu0 0.0
        %2226 = vmatpush1.msra.mxu0 0.0
        %2227 = vmatprep.subr.mxu0 0.0
        %2228 = vmatpush1.msra.mxu0 0.0
        %2229 = vmatprep.subr.mxu0 0.0
        %2230 = vmatpush1.msra.mxu0 0.0
        %2231 = vmatprep.subr.mxu0 0.0
        %2232 = vmatpush1.msra.mxu0 0.0
        %2233 = vmatprep.subr.mxu0 0.0
        %2234 = vmatpush1.msra.mxu0 0.0
        %2235 = vmatprep.subr.mxu0 0.0
        %2236 = vmatpush1.msra.mxu0 0.0
        %2237 = vmatprep.subr.mxu0 0.0
        %2238 = vmatpush1.msra.mxu0 0.0
        %2239 = vmatprep.subr.mxu0 0.0
        %2240 = vmatpush1.msra.mxu0 0.0
        %2241 = vmatprep.subr.mxu0 0.0
        %2242 = vmatpush1.msra.mxu0 0.0
        %2243 = vmatprep.subr.mxu0 0.0
        %2244 = vmatpush1.msra.mxu0 0.0
        %2245 = vmatprep.subr.mxu0 0.0
        %2246 = vmatpush1.msra.mxu0 0.0
        %2247 = vmatprep.subr.mxu0 0.0
        %2248 = vmatpush1.msra.mxu0 0.0
        %2249 = vmatprep.subr.mxu0 0.0
        %2250 = vmatpush1.msra.mxu0 0.0
        %2251 = vmatprep.subr.mxu0 0.0
        %2252 = vmatpush1.msra.mxu0 0.0
        %2253 = vmatprep.subr.mxu0 0.0
        %2254 = vmatpush1.msra.mxu0 0.0
        %2255 = vmatprep.subr.mxu0 0.0
        %2256 = vmatpush1.msra.mxu0 0.0
        %2257 = vmatprep.subr.mxu0 0.0
        %2258 = vmatpush1.msra.mxu0 0.0
        %2259 = vmatprep.subr.mxu0 0.0
        %2260 = vmatpush1.msra.mxu0 0.0
        %2261 = vmatprep.subr.mxu0 0.0
        %2262 = vmatpush1.msra.mxu0 0.0
        %2263 = vmatprep.subr.mxu0 0.0
        %2264 = vmatpush1.msra.mxu0 0.0
        %2265 = vmatprep.subr.mxu0 0.0
        %2266 = vmatpush1.msra.mxu0 0.0
        %2267 = vmatprep.subr.mxu0 0.0
        %2268 = vmatpush1.msra.mxu0 0.0
        %2269 = vmatprep.subr.mxu0 0.0
        %2270 = vmatpush1.msra.mxu0 0.0
        %2271 = vmatprep.subr.mxu0 0.0
        %2272 = vmatpush1.msra.mxu0 0.0
        %2273 = vmatprep.subr.mxu0 0.0
        %2274 = vmatpush1.msra.mxu0 0.0
        %2275 = vmatprep.subr.mxu0 0.0
        %2276 = vmatpush1.msra.mxu0 0.0
        %2277 = vmatprep.subr.mxu0 0.0
        %2278 = vmatpush1.msra.mxu0 0.0
        %2279 = vmatprep.subr.mxu0 0.0
        %2280 = vmatpush1.msra.mxu0 0.0
        %2281 = vmatprep.subr.mxu0 0.0
        %2282 = vmatpush1.msra.mxu0 0.0
        %2283 = vmatprep.subr.mxu0 0.0
        %2284 = vmatpush1.msra.mxu0 0.0
        %2285 = vmatprep.mubr.f32.mxu0 0.0
        %2286 = vmatmul.mubr.f32.gmra.mrb[0].mxu0 %v2219
        %v2287 = vpop.f32.mrb[0].mxu0
        %v2288 = vadd.f32 0.0, %v2287
        %v2289 = vpop.f32.mrb[0].mxu0
        %2290 = vdwg.mxu0
        %v2292 = vsel %vm1650, %v2069, 0
        %2294 = vmatprep.subr.mxu0 0.0
        %2295 = vmatpush1.msra.mxu0 %v801
        %2296 = vmatprep.subr.mxu0 0.0
        %2297 = vmatpush1.msra.mxu0 0.0
        %2298 = vmatprep.subr.mxu0 0.0
        %2299 = vmatpush1.msra.mxu0 0.0
        %2300 = vmatprep.subr.mxu0 0.0
        %2301 = vmatpush1.msra.mxu0 0.0
        %2302 = vmatprep.subr.mxu0 0.0
        %2303 = vmatpush1.msra.mxu0 0.0
        %2304 = vmatprep.subr.mxu0 0.0
        %2305 = vmatpush1.msra.mxu0 0.0
        %2306 = vmatprep.subr.mxu0 0.0
        %2307 = vmatpush1.msra.mxu0 0.0
        %2308 = vmatprep.subr.mxu0 0.0
        %2309 = vmatpush1.msra.mxu0 0.0
        %2310 = vmatprep.subr.mxu0 0.0
        %2311 = vmatpush1.msra.mxu0 0.0
        %2312 = vmatprep.subr.mxu0 0.0
        %2313 = vmatpush1.msra.mxu0 0.0
        %2314 = vmatprep.subr.mxu0 0.0
        %2315 = vmatpush1.msra.mxu0 0.0
        %2316 = vmatprep.subr.mxu0 0.0
        %2317 = vmatpush1.msra.mxu0 0.0
        %2318 = vmatprep.subr.mxu0 0.0
        %2319 = vmatpush1.msra.mxu0 0.0
        %2320 = vmatprep.subr.mxu0 0.0
        %2321 = vmatpush1.msra.mxu0 0.0
        %2322 = vmatprep.subr.mxu0 0.0
        %2323 = vmatpush1.msra.mxu0 0.0
        %2324 = vmatprep.subr.mxu0 0.0
        %2325 = vmatpush1.msra.mxu0 0.0
        %2326 = vmatprep.subr.mxu0 0.0
        %2327 = vmatpush1.msra.mxu0 0.0
        %2328 = vmatprep.subr.mxu0 0.0
        %2329 = vmatpush1.msra.mxu0 0.0
        %2330 = vmatprep.subr.mxu0 0.0
        %2331 = vmatpush1.msra.mxu0 0.0
        %2332 = vmatprep.subr.mxu0 0.0
        %2333 = vmatpush1.msra.mxu0 0.0
        %2334 = vmatprep.subr.mxu0 0.0
        %2335 = vmatpush1.msra.mxu0 0.0
        %2336 = vmatprep.subr.mxu0 0.0
        %2337 = vmatpush1.msra.mxu0 0.0
        %2338 = vmatprep.subr.mxu0 0.0
        %2339 = vmatpush1.msra.mxu0 0.0
        %2340 = vmatprep.subr.mxu0 0.0
        %2341 = vmatpush1.msra.mxu0 0.0
        %2342 = vmatprep.subr.mxu0 0.0
        %2343 = vmatpush1.msra.mxu0 0.0
        %2344 = vmatprep.subr.mxu0 0.0
        %2345 = vmatpush1.msra.mxu0 0.0
        %2346 = vmatprep.subr.mxu0 0.0
        %2347 = vmatpush1.msra.mxu0 0.0
        %2348 = vmatprep.subr.mxu0 0.0
        %2349 = vmatpush1.msra.mxu0 0.0
        %2350 = vmatprep.subr.mxu0 0.0
        %2351 = vmatpush1.msra.mxu0 0.0
        %2352 = vmatprep.subr.mxu0 0.0
        %2353 = vmatpush1.msra.mxu0 0.0
        %2354 = vmatprep.subr.mxu0 0.0
        %2355 = vmatpush1.msra.mxu0 0.0
        %2356 = vmatprep.subr.mxu0 0.0
        %2357 = vmatpush1.msra.mxu0 0.0
        %2358 = vmatprep.mubr.f32.mxu0 0.0
        %2359 = vmatmul.mubr.f32.gmra.mrb[0].mxu0 %v2292
        %v2360 = vpop.f32.mrb[0].mxu0
        %v2361 = vadd.f32 0.0, %v2360
        %v2362 = vpop.f32.mrb[0].mxu0
        %2363 = vdwg.mxu0
        %v2365 = vsel %vm1650, %v2142, 0
        %2367 = vmatprep.subr.mxu0 0.0
        %2368 = vmatpush1.msra.mxu0 %v802
        %2369 = vmatprep.subr.mxu0 0.0
        %2370 = vmatpush1.msra.mxu0 0.0
        %2371 = vmatprep.subr.mxu0 0.0
        %2372 = vmatpush1.msra.mxu0 0.0
        %2373 = vmatprep.subr.mxu0 0.0
        %2374 = vmatpush1.msra.mxu0 0.0
        %2375 = vmatprep.subr.mxu0 0.0
        %2376 = vmatpush1.msra.mxu0 0.0
        %2377 = vmatprep.subr.mxu0 0.0
        %2378 = vmatpush1.msra.mxu0 0.0
        %2379 = vmatprep.subr.mxu0 0.0
        %2380 = vmatpush1.msra.mxu0 0.0
        %2381 = vmatprep.subr.mxu0 0.0
        %2382 = vmatpush1.msra.mxu0 0.0
        %2383 = vmatprep.subr.mxu0 0.0
        %2384 = vmatpush1.msra.mxu0 0.0
        %2385 = vmatprep.subr.mxu0 0.0
        %2386 = vmatpush1.msra.mxu0 0.0
        %2387 = vmatprep.subr.mxu0 0.0
        %2388 = vmatpush1.msra.mxu0 0.0
        %2389 = vmatprep.subr.mxu0 0.0
        %2390 = vmatpush1.msra.mxu0 0.0
        %2391 = vmatprep.subr.mxu0 0.0
        %2392 = vmatpush1.msra.mxu0 0.0
        %2393 = vmatprep.subr.mxu0 0.0
        %2394 = vmatpush1.msra.mxu0 0.0
        %2395 = vmatprep.subr.mxu0 0.0
        %2396 = vmatpush1.msra.mxu0 0.0
        %2397 = vmatprep.subr.mxu0 0.0
        %2398 = vmatpush1.msra.mxu0 0.0
        %2399 = vmatprep.subr.mxu0 0.0
        %2400 = vmatpush1.msra.mxu0 0.0
        %2401 = vmatprep.subr.mxu0 0.0
        %2402 = vmatpush1.msra.mxu0 0.0
        %2403 = vmatprep.subr.mxu0 0.0
        %2404 = vmatpush1.msra.mxu0 0.0
        %2405 = vmatprep.subr.mxu0 0.0
        %2406 = vmatpush1.msra.mxu0 0.0
        %2407 = vmatprep.subr.mxu0 0.0
        %2408 = vmatpush1.msra.mxu0 0.0
        %2409 = vmatprep.subr.mxu0 0.0
        %2410 = vmatpush1.msra.mxu0 0.0
        %2411 = vmatprep.subr.mxu0 0.0
        %2412 = vmatpush1.msra.mxu0 0.0
        %2413 = vmatprep.subr.mxu0 0.0
        %2414 = vmatpush1.msra.mxu0 0.0
        %2415 = vmatprep.subr.mxu0 0.0
        %2416 = vmatpush1.msra.mxu0 0.0
        %2417 = vmatprep.subr.mxu0 0.0
        %2418 = vmatpush1.msra.mxu0 0.0
        %2419 = vmatprep.subr.mxu0 0.0
        %2420 = vmatpush1.msra.mxu0 0.0
        %2421 = vmatprep.subr.mxu0 0.0
        %2422 = vmatpush1.msra.mxu0 0.0
        %2423 = vmatprep.subr.mxu0 0.0
        %2424 = vmatpush1.msra.mxu0 0.0
        %2425 = vmatprep.subr.mxu0 0.0
        %2426 = vmatpush1.msra.mxu0 0.0
        %2427 = vmatprep.subr.mxu0 0.0
        %2428 = vmatpush1.msra.mxu0 0.0
        %2429 = vmatprep.subr.mxu0 0.0
        %2430 = vmatpush1.msra.mxu0 0.0
        %2431 = vmatprep.mubr.f32.mxu0 0.0
        %2432 = vmatmul.mubr.f32.gmra.mrb[0].mxu0 %v2365
        %v2433 = vpop.f32.mrb[0].mxu0
        %v2434 = vadd.f32 0.0, %v2433
        %v2435 = vpop.f32.mrb[0].mxu0
        %2436 = vdwg.mxu0
        %v2438 = vsel %vm1650, %v2215, 0
        %2440 = vmatprep.subr.mxu0 0.0
        %2441 = vmatpush1.msra.mxu0 %v803
        %2442 = vmatprep.subr.mxu0 0.0
        %2443 = vmatpush1.msra.mxu0 0.0
        %2444 = vmatprep.subr.mxu0 0.0
        %2445 = vmatpush1.msra.mxu0 0.0
        %2446 = vmatprep.subr.mxu0 0.0
        %2447 = vmatpush1.msra.mxu0 0.0
        %2448 = vmatprep.subr.mxu0 0.0
        %2449 = vmatpush1.msra.mxu0 0.0
        %2450 = vmatprep.subr.mxu0 0.0
        %2451 = vmatpush1.msra.mxu0 0.0
        %2452 = vmatprep.subr.mxu0 0.0
        %2453 = vmatpush1.msra.mxu0 0.0
        %2454 = vmatprep.subr.mxu0 0.0
        %2455 = vmatpush1.msra.mxu0 0.0
        %2456 = vmatprep.subr.mxu0 0.0
        %2457 = vmatpush1.msra.mxu0 0.0
        %2458 = vmatprep.subr.mxu0 0.0
        %2459 = vmatpush1.msra.mxu0 0.0
        %2460 = vmatprep.subr.mxu0 0.0
        %2461 = vmatpush1.msra.mxu0 0.0
        %2462 = vmatprep.subr.mxu0 0.0
        %2463 = vmatpush1.msra.mxu0 0.0
        %2464 = vmatprep.subr.mxu0 0.0
        %2465 = vmatpush1.msra.mxu0 0.0
        %2466 = vmatprep.subr.mxu0 0.0
        %2467 = vmatpush1.msra.mxu0 0.0
        %2468 = vmatprep.subr.mxu0 0.0
        %2469 = vmatpush1.msra.mxu0 0.0
        %2470 = vmatprep.subr.mxu0 0.0
        %2471 = vmatpush1.msra.mxu0 0.0
        %2472 = vmatprep.subr.mxu0 0.0
        %2473 = vmatpush1.msra.mxu0 0.0
        %2474 = vmatprep.subr.mxu0 0.0
        %2475 = vmatpush1.msra.mxu0 0.0
        %2476 = vmatprep.subr.mxu0 0.0
        %2477 = vmatpush1.msra.mxu0 0.0
        %2478 = vmatprep.subr.mxu0 0.0
        %2479 = vmatpush1.msra.mxu0 0.0
        %2480 = vmatprep.subr.mxu0 0.0
        %2481 = vmatpush1.msra.mxu0 0.0
        %2482 = vmatprep.subr.mxu0 0.0
        %2483 = vmatpush1.msra.mxu0 0.0
        %2484 = vmatprep.subr.mxu0 0.0
        %2485 = vmatpush1.msra.mxu0 0.0
        %2486 = vmatprep.subr.mxu0 0.0
        %2487 = vmatpush1.msra.mxu0 0.0
        %2488 = vmatprep.subr.mxu0 0.0
        %2489 = vmatpush1.msra.mxu0 0.0
        %2490 = vmatprep.subr.mxu0 0.0
        %2491 = vmatpush1.msra.mxu0 0.0
        %2492 = vmatprep.subr.mxu0 0.0
        %2493 = vmatpush1.msra.mxu0 0.0
        %2494 = vmatprep.subr.mxu0 0.0
        %2495 = vmatpush1.msra.mxu0 0.0
        %2496 = vmatprep.subr.mxu0 0.0
        %2497 = vmatpush1.msra.mxu0 0.0
        %2498 = vmatprep.subr.mxu0 0.0
        %2499 = vmatpush1.msra.mxu0 0.0
        %2500 = vmatprep.subr.mxu0 0.0
        %2501 = vmatpush1.msra.mxu0 0.0
        %2502 = vmatprep.subr.mxu0 0.0
        %2503 = vmatpush1.msra.mxu0 0.0
        %2504 = vmatprep.mubr.f32.mxu0 0.0
        %2505 = vmatmul.mubr.f32.gmra.mrb[0].mxu0 %v2438
        %v2506 = vpop.f32.mrb[0].mxu0
        %v2507 = vadd.f32 0.0, %v2506
        %v2508 = vpop.f32.mrb[0].mxu0
        %2509 = vdwg.mxu0
        %v2511 = vsel %vm1650, %v2288, 0
        %2513 = vmatprep.subr.mxu0 0.0
        %2514 = vmatpush1.msra.mxu0 %v804
        %2515 = vmatprep.subr.mxu0 0.0
        %2516 = vmatpush1.msra.mxu0 0.0
        %2517 = vmatprep.subr.mxu0 0.0
        %2518 = vmatpush1.msra.mxu0 0.0
        %2519 = vmatprep.subr.mxu0 0.0
        %2520 = vmatpush1.msra.mxu0 0.0
        %2521 = vmatprep.subr.mxu0 0.0
        %2522 = vmatpush1.msra.mxu0 0.0
        %2523 = vmatprep.subr.mxu0 0.0
        %2524 = vmatpush1.msra.mxu0 0.0
        %2525 = vmatprep.subr.mxu0 0.0
        %2526 = vmatpush1.msra.mxu0 0.0
        %2527 = vmatprep.subr.mxu0 0.0
        %2528 = vmatpush1.msra.mxu0 0.0
        %2529 = vmatprep.subr.mxu0 0.0
        %2530 = vmatpush1.msra.mxu0 0.0
        %2531 = vmatprep.subr.mxu0 0.0
        %2532 = vmatpush1.msra.mxu0 0.0
        %2533 = vmatprep.subr.mxu0 0.0
        %2534 = vmatpush1.msra.mxu0 0.0
        %2535 = vmatprep.subr.mxu0 0.0
        %2536 = vmatpush1.msra.mxu0 0.0
        %2537 = vmatprep.subr.mxu0 0.0
        %2538 = vmatpush1.msra.mxu0 0.0
        %2539 = vmatprep.subr.mxu0 0.0
        %2540 = vmatpush1.msra.mxu0 0.0
        %2541 = vmatprep.subr.mxu0 0.0
        %2542 = vmatpush1.msra.mxu0 0.0
        %2543 = vmatprep.subr.mxu0 0.0
        %2544 = vmatpush1.msra.mxu0 0.0
        %2545 = vmatprep.subr.mxu0 0.0
        %2546 = vmatpush1.msra.mxu0 0.0
        %2547 = vmatprep.subr.mxu0 0.0
        %2548 = vmatpush1.msra.mxu0 0.0
        %2549 = vmatprep.subr.mxu0 0.0
        %2550 = vmatpush1.msra.mxu0 0.0
        %2551 = vmatprep.subr.mxu0 0.0
        %2552 = vmatpush1.msra.mxu0 0.0
        %2553 = vmatprep.subr.mxu0 0.0
        %2554 = vmatpush1.msra.mxu0 0.0
        %2555 = vmatprep.subr.mxu0 0.0
        %2556 = vmatpush1.msra.mxu0 0.0
        %2557 = vmatprep.subr.mxu0 0.0
        %2558 = vmatpush1.msra.mxu0 0.0
        %2559 = vmatprep.subr.mxu0 0.0
        %2560 = vmatpush1.msra.mxu0 0.0
        %2561 = vmatprep.subr.mxu0 0.0
        %2562 = vmatpush1.msra.mxu0 0.0
        %2563 = vmatprep.subr.mxu0 0.0
        %2564 = vmatpush1.msra.mxu0 0.0
        %2565 = vmatprep.subr.mxu0 0.0
        %2566 = vmatpush1.msra.mxu0 0.0
        %2567 = vmatprep.subr.mxu0 0.0
        %2568 = vmatpush1.msra.mxu0 0.0
        %2569 = vmatprep.subr.mxu0 0.0
        %2570 = vmatpush1.msra.mxu0 0.0
        %2571 = vmatprep.subr.mxu0 0.0
        %2572 = vmatpush1.msra.mxu0 0.0
        %2573 = vmatprep.subr.mxu0 0.0
        %2574 = vmatpush1.msra.mxu0 0.0
        %2575 = vmatprep.subr.mxu0 0.0
        %2576 = vmatpush1.msra.mxu0 0.0
        %2577 = vmatprep.mubr.f32.mxu0 0.0
        %2578 = vmatmul.mubr.f32.gmra.mrb[0].mxu0 %v2511
        %v2579 = vpop.f32.mrb[0].mxu0
        %v2580 = vadd.f32 0.0, %v2579
        %v2581 = vpop.f32.mrb[0].mxu0
        %2582 = vdwg.mxu0
        %v2583 = vsel %vm806, %v2361, 0.0
        %v2584 = vsel %vm806, %v2434, 0.0
        %v2585 = vadd.f32 %v2583, %v2584
        %v2586 = vsel %vm806, %v2507, 0.0
        %v2587 = vadd.f32 %v2585, %v2586
        %v2588 = vsel %vm806, %v2580, 0.0
        %v2589 = vadd.f32 %v2587, %v2588
        %v2591 = vlaneseq
        %v2592 = vshrl.u32 %v2591, 7
        %v2593 = vsub.s32 0, %v2592
        %v2594 = vrot.slane %v805, %v2593
        %v2596 = vadd.f32 %v2589, %v2594
        %v2597 = vld [vmem:[%s17] sm:$0x1]
        %v2598 = vld [vmem:[%s18] sm:$0x1]
        %v2599 = vsel %vm806, %v2596, 0.0
        %2600 = vadd.xlane.f32.xlu0 %v2599
        %v2601 = vpop.xlane.xlu0 %2600
        %v2602 = vrcp.pop 32.0
        %v2603 = vmul.f32 %v2601, %v2602
        %v2604 = vsub.f32 %v2596, %v2603
        %v2605 = vmul.f32 %v2604, %v2604
        %v2606 = vsel %vm806, %v2605, 0.0
        %2607 = vadd.xlane.f32.xlu0 %v2606
        %v2608 = vpop.xlane.xlu0 %2607
        %v2609 = vmul.f32 %v2608, %v2602
        %v2610 = vadd.f32 %v2609, 1e-05
        %v2611 = vrsqrt.pop %v2610
        %v2612 = vmul.f32 %v2604, %v2611
        %v2614 = vlaneseq
        %v2615 = vshrl.u32 %v2614, 7
        %v2616 = vsub.s32 0, %v2615
        %v2617 = vrot.slane %v2597, %v2616
        %v2619 = vmul.f32 %v2612, %v2617
        %v2621 = vlaneseq
        %v2622 = vshrl.u32 %v2621, 7
        %v2623 = vsub.s32 0, %v2622
        %v2624 = vrot.slane %v2598, %v2623
        %v2626 = vadd.f32 %v2619, %v2624
        %v2627 = vadd.f32 %v2626, %v746
        %v2628 = vld [vmem:[%s8] sm:$0xff]
        %v2629 = vld [vmem:[%s8 + $0x8] sm:$0xff]
        %v2630 = vld [vmem:[%s8 + $0x10] sm:$0xff]
        %v2631 = vld [vmem:[%s8 + $0x18] sm:$0xff]
        %v2632 = vld [vmem:[%s8 + $0x20] sm:$0xff]
        %v2633 = vld [vmem:[%s8 + $0x28] sm:$0xff]
        %v2634 = vld [vmem:[%s8 + $0x30] sm:$0xff]
        %v2635 = vld [vmem:[%s8 + $0x38] sm:$0xff]
        %v2636 = vld [vmem:[%s8 + $0x40] sm:$0xff]
        %v2637 = vld [vmem:[%s8 + $0x48] sm:$0xff]
        %v2638 = vld [vmem:[%s8 + $0x50] sm:$0xff]
        %v2639 = vld [vmem:[%s8 + $0x58] sm:$0xff]
        %v2640 = vld [vmem:[%s8 + $0x60] sm:$0xff]
        %v2641 = vld [vmem:[%s8 + $0x68] sm:$0xff]
        %v2642 = vld [vmem:[%s8 + $0x70] sm:$0xff]
        %v2643 = vld [vmem:[%s8 + $0x78] sm:$0xff]
        %v2644 = vld [vmem:[%s9] sm:$0xff]
        %v2645 = vld [vmem:[%s9 + $0x8] sm:$0xff]
        %v2646 = vld [vmem:[%s9 + $0x10] sm:$0xff]
        %v2647 = vld [vmem:[%s9 + $0x18] sm:$0xff]
        %v2648 = vld [vmem:[%s9 + $0x20] sm:$0xff]
        %v2649 = vld [vmem:[%s9 + $0x28] sm:$0xff]
        %v2650 = vld [vmem:[%s9 + $0x30] sm:$0xff]
        %v2651 = vld [vmem:[%s9 + $0x38] sm:$0xff]
        %v2652 = vld [vmem:[%s9 + $0x40] sm:$0xff]
        %v2653 = vld [vmem:[%s9 + $0x48] sm:$0xff]
        %v2654 = vld [vmem:[%s9 + $0x50] sm:$0xff]
        %v2655 = vld [vmem:[%s9 + $0x58] sm:$0xff]
        %v2656 = vld [vmem:[%s9 + $0x60] sm:$0xff]
        %v2657 = vld [vmem:[%s9 + $0x68] sm:$0xff]
        %v2658 = vld [vmem:[%s9 + $0x70] sm:$0xff]
        %v2659 = vld [vmem:[%s9 + $0x78] sm:$0xff]
        %v2660 = vld [vmem:[%s10] sm:$0xff]
        %v2661 = vld [vmem:[%s10 + $0x8] sm:$0xff]
        %v2662 = vld [vmem:[%s10 + $0x10] sm:$0xff]
        %v2663 = vld [vmem:[%s10 + $0x18] sm:$0xff]
        %v2664 = vld [vmem:[%s10 + $0x20] sm:$0xff]
        %v2665 = vld [vmem:[%s10 + $0x28] sm:$0xff]
        %v2666 = vld [vmem:[%s10 + $0x30] sm:$0xff]
        %v2667 = vld [vmem:[%s10 + $0x38] sm:$0xff]
        %v2668 = vld [vmem:[%s10 + $0x40] sm:$0xff]
        %v2669 = vld [vmem:[%s10 + $0x48] sm:$0xff]
        %v2670 = vld [vmem:[%s10 + $0x50] sm:$0xff]
        %v2671 = vld [vmem:[%s10 + $0x58] sm:$0xff]
        %v2672 = vld [vmem:[%s10 + $0x60] sm:$0xff]
        %v2673 = vld [vmem:[%s10 + $0x68] sm:$0xff]
        %v2674 = vld [vmem:[%s10 + $0x70] sm:$0xff]
        %v2675 = vld [vmem:[%s10 + $0x78] sm:$0xff]
        %v2676 = vld [vmem:[%s11] sm:$0xff]
        %v2677 = vld [vmem:[%s11 + $0x8] sm:$0xff]
        %v2678 = vld [vmem:[%s11 + $0x10] sm:$0xff]
        %v2679 = vld [vmem:[%s11 + $0x18] sm:$0xff]
        %v2680 = vld [vmem:[%s12] sm:$0x1]
        %v2682 = vsel %vm806, %v2627, 0
        %2684 = vmatprep.subr.mxu0 0.0
        %2685 = vmatpush1.msra.mxu0 %v2628
        %2686 = vmatprep.subr.mxu0 0.0
        %2687 = vmatpush1.msra.mxu0 %v2629
        %2688 = vmatprep.subr.mxu0 0.0
        %2689 = vmatpush1.msra.mxu0 %v2630
        %2690 = vmatprep.subr.mxu0 0.0
        %2691 = vmatpush1.msra.mxu0 %v2631
        %2692 = vmatprep.subr.mxu0 0.0
        %2693 = vmatpush1.msra.mxu0 0.0
        %2694 = vmatprep.subr.mxu0 0.0
        %2695 = vmatpush1.msra.mxu0 0.0
        %2696 = vmatprep.subr.mxu0 0.0
        %2697 = vmatpush1.msra.mxu0 0.0
        %2698 = vmatprep.subr.mxu0 0.0
        %2699 = vmatpush1.msra.mxu0 0.0
        %2700 = vmatprep.subr.mxu0 0.0
        %2701 = vmatpush1.msra.mxu0 0.0
        %2702 = vmatprep.subr.mxu0 0.0
        %2703 = vmatpush1.msra.mxu0 0.0
        %2704 = vmatprep.subr.mxu0 0.0
        %2705 = vmatpush1.msra.mxu0 0.0
        %2706 = vmatprep.subr.mxu0 0.0
        %2707 = vmatpush1.msra.mxu0 0.0
        %2708 = vmatprep.subr.mxu0 0.0
        %2709 = vmatpush1.msra.mxu0 0.0
        %2710 = vmatprep.subr.mxu0 0.0
        %2711 = vmatpush1.msra.mxu0 0.0
        %2712 = vmatprep.subr.mxu0 0.0
        %2713 = vmatpush1.msra.mxu0 0.0
        %2714 = vmatprep.subr.mxu0 0.0
        %2715 = vmatpush1.msra.mxu0 0.0
        %2716 = vmatprep.subr.mxu0 0.0
        %2717 = vmatpush1.msra.mxu0 0.0
        %2718 = vmatprep.subr.mxu0 0.0
        %2719 = vmatpush1.msra.mxu0 0.0
        %2720 = vmatprep.subr.mxu0 0.0
        %2721 = vmatpush1.msra.mxu0 0.0
        %2722 = vmatprep.subr.mxu0 0.0
        %2723 = vmatpush1.msra.mxu0 0.0
        %2724 = vmatprep.subr.mxu0 0.0
        %2725 = vmatpush1.msra.mxu0 0.0
        %2726 = vmatprep.subr.mxu0 0.0
        %2727 = vmatpush1.msra.mxu0 0.0
        %2728 = vmatprep.subr.mxu0 0.0
        %2729 = vmatpush1.msra.mxu0 0.0
        %2730 = vmatprep.subr.mxu0 0.0
        %2731 = vmatpush1.msra.mxu0 0.0
        %2732 = vmatprep.subr.mxu0 0.0
        %2733 = vmatpush1.msra.mxu0 0.0
        %2734 = vmatprep.subr.mxu0 0.0
        %2735 = vmatpush1.msra.mxu0 0.0
        %2736 = vmatprep.subr.mxu0 0.0
        %2737 = vmatpush1.msra.mxu0 0.0
        %2738 = vmatprep.subr.mxu0 0.0
        %2739 = vmatpush1.msra.mxu0 0.0
        %2740 = vmatprep.subr.mxu0 0.0
        %2741 = vmatpush1.msra.mxu0 0.0
        %2742 = vmatprep.subr.mxu0 0.0
        %2743 = vmatpush1.msra.mxu0 0.0
        %2744 = vmatprep.subr.mxu0 0.0
        %2745 = vmatpush1.msra.mxu0 0.0
        %2746 = vmatprep.subr.mxu0 0.0
        %2747 = vmatpush1.msra.mxu0 0.0
        %2748 = vmatprep.mubr.f32.mxu0 0.0
        %2749 = vmatmul.mubr.f32.gmra.mrb[0].mxu0 %v2682
        %v2750 = vpop.f32.mrb[0].mxu0
        %v2751 = vadd.f32 0.0, %v2750
        %v2752 = vpop.f32.mrb[0].mxu0
        %2753 = vdwg.mxu0
        %2754 = vmatprep.subr.mxu0 0.0
        %2755 = vmatpush1.msra.mxu0 %v2632
        %2756 = vmatprep.subr.mxu0 0.0
        %2757 = vmatpush1.msra.mxu0 %v2633
        %2758 = vmatprep.subr.mxu0 0.0
        %2759 = vmatpush1.msra.mxu0 %v2634
        %2760 = vmatprep.subr.mxu0 0.0
        %2761 = vmatpush1.msra.mxu0 %v2635
        %2762 = vmatprep.subr.mxu0 0.0
        %2763 = vmatpush1.msra.mxu0 0.0
        %2764 = vmatprep.subr.mxu0 0.0
        %2765 = vmatpush1.msra.mxu0 0.0
        %2766 = vmatprep.subr.mxu0 0.0
        %2767 = vmatpush1.msra.mxu0 0.0
        %2768 = vmatprep.subr.mxu0 0.0
        %2769 = vmatpush1.msra.mxu0 0.0
        %2770 = vmatprep.subr.mxu0 0.0
        %2771 = vmatpush1.msra.mxu0 0.0
        %2772 = vmatprep.subr.mxu0 0.0
        %2773 = vmatpush1.msra.mxu0 0.0
        %2774 = vmatprep.subr.mxu0 0.0
        %2775 = vmatpush1.msra.mxu0 0.0
        %2776 = vmatprep.subr.mxu0 0.0
        %2777 = vmatpush1.msra.mxu0 0.0
        %2778 = vmatprep.subr.mxu0 0.0
        %2779 = vmatpush1.msra.mxu0 0.0
        %2780 = vmatprep.subr.mxu0 0.0
        %2781 = vmatpush1.msra.mxu0 0.0
        %2782 = vmatprep.subr.mxu0 0.0
        %2783 = vmatpush1.msra.mxu0 0.0
        %2784 = vmatprep.subr.mxu0 0.0
        %2785 = vmatpush1.msra.mxu0 0.0
        %2786 = vmatprep.subr.mxu0 0.0
        %2787 = vmatpush1.msra.mxu0 0.0
        %2788 = vmatprep.subr.mxu0 0.0
        %2789 = vmatpush1.msra.mxu0 0.0
        %2790 = vmatprep.subr.mxu0 0.0
        %2791 = vmatpush1.msra.mxu0 0.0
        %2792 = vmatprep.subr.mxu0 0.0
        %2793 = vmatpush1.msra.mxu0 0.0
        %2794 = vmatprep.subr.mxu0 0.0
        %2795 = vmatpush1.msra.mxu0 0.0
        %2796 = vmatprep.subr.mxu0 0.0
        %2797 = vmatpush1.msra.mxu0 0.0
        %2798 = vmatprep.subr.mxu0 0.0
        %2799 = vmatpush1.msra.mxu0 0.0
        %2800 = vmatprep.subr.mxu0 0.0
        %2801 = vmatpush1.msra.mxu0 0.0
        %2802 = vmatprep.subr.mxu0 0.0
        %2803 = vmatpush1.msra.mxu0 0.0
        %2804 = vmatprep.subr.mxu0 0.0
        %2805 = vmatpush1.msra.mxu0 0.0
        %2806 = vmatprep.subr.mxu0 0.0
        %2807 = vmatpush1.msra.mxu0 0.0
        %2808 = vmatprep.subr.mxu0 0.0
        %2809 = vmatpush1.msra.mxu0 0.0
        %2810 = vmatprep.subr.mxu0 0.0
        %2811 = vmatpush1.msra.mxu0 0.0
        %2812 = vmatprep.subr.mxu0 0.0
        %2813 = vmatpush1.msra.mxu0 0.0
        %2814 = vmatprep.subr.mxu0 0.0
        %2815 = vmatpush1.msra.mxu0 0.0
        %2816 = vmatprep.subr.mxu0 0.0
        %2817 = vmatpush1.msra.mxu0 0.0
        %2818 = vmatprep.mubr.f32.mxu0 0.0
        %2819 = vmatmul.mubr.f32.gmra.mrb[0].mxu0 %v2682
        %v2820 = vpop.f32.mrb[0].mxu0
        %v2821 = vadd.f32 0.0, %v2820
        %v2822 = vpop.f32.mrb[0].mxu0
        %2823 = vdwg.mxu0
        %2824 = vmatprep.subr.mxu0 0.0
        %2825 = vmatpush1.msra.mxu0 %v2636
        %2826 = vmatprep.subr.mxu0 0.0
        %2827 = vmatpush1.msra.mxu0 %v2637
        %2828 = vmatprep.subr.mxu0 0.0
        %2829 = vmatpush1.msra.mxu0 %v2638
        %2830 = vmatprep.subr.mxu0 0.0
        %2831 = vmatpush1.msra.mxu0 %v2639
        %2832 = vmatprep.subr.mxu0 0.0
        %2833 = vmatpush1.msra.mxu0 0.0
        %2834 = vmatprep.subr.mxu0 0.0
        %2835 = vmatpush1.msra.mxu0 0.0
        %2836 = vmatprep.subr.mxu0 0.0
        %2837 = vmatpush1.msra.mxu0 0.0
        %2838 = vmatprep.subr.mxu0 0.0
        %2839 = vmatpush1.msra.mxu0 0.0
        %2840 = vmatprep.subr.mxu0 0.0
        %2841 = vmatpush1.msra.mxu0 0.0
        %2842 = vmatprep.subr.mxu0 0.0
        %2843 = vmatpush1.msra.mxu0 0.0
        %2844 = vmatprep.subr.mxu0 0.0
        %2845 = vmatpush1.msra.mxu0 0.0
        %2846 = vmatprep.subr.mxu0 0.0
        %2847 = vmatpush1.msra.mxu0 0.0
        %2848 = vmatprep.subr.mxu0 0.0
        %2849 = vmatpush1.msra.mxu0 0.0
        %2850 = vmatprep.subr.mxu0 0.0
        %2851 = vmatpush1.msra.mxu0 0.0
        %2852 = vmatprep.subr.mxu0 0.0
        %2853 = vmatpush1.msra.mxu0 0.0
        %2854 = vmatprep.subr.mxu0 0.0
        %2855 = vmatpush1.msra.mxu0 0.0
        %2856 = vmatprep.subr.mxu0 0.0
        %2857 = vmatpush1.msra.mxu0 0.0
        %2858 = vmatprep.subr.mxu0 0.0
        %2859 = vmatpush1.msra.mxu0 0.0
        %2860 = vmatprep.subr.mxu0 0.0
        %2861 = vmatpush1.msra.mxu0 0.0
        %2862 = vmatprep.subr.mxu0 0.0
        %2863 = vmatpush1.msra.mxu0 0.0
        %2864 = vmatprep.subr.mxu0 0.0
        %2865 = vmatpush1.msra.mxu0 0.0
        %2866 = vmatprep.subr.mxu0 0.0
        %2867 = vmatpush1.msra.mxu0 0.0
        %2868 = vmatprep.subr.mxu0 0.0
        %2869 = vmatpush1.msra.mxu0 0.0
        %2870 = vmatprep.subr.mxu0 0.0
        %2871 = vmatpush1.msra.mxu0 0.0
        %2872 = vmatprep.subr.mxu0 0.0
        %2873 = vmatpush1.msra.mxu0 0.0
        %2874 = vmatprep.subr.mxu0 0.0
        %2875 = vmatpush1.msra.mxu0 0.0
        %2876 = vmatprep.subr.mxu0 0.0
        %2877 = vmatpush1.msra.mxu0 0.0
        %2878 = vmatprep.subr.mxu0 0.0
        %2879 = vmatpush1.msra.mxu0 0.0
        %2880 = vmatprep.subr.mxu0 0.0
        %2881 = vmatpush1.msra.mxu0 0.0
        %2882 = vmatprep.subr.mxu0 0.0
        %2883 = vmatpush1.msra.mxu0 0.0
        %2884 = vmatprep.subr.mxu0 0.0
        %2885 = vmatpush1.msra.mxu0 0.0
        %2886 = vmatprep.subr.mxu0 0.0
        %2887 = vmatpush1.msra.mxu0 0.0
        %2888 = vmatprep.mubr.f32.mxu0 0.0
        %2889 = vmatmul.mubr.f32.gmra.mrb[0].mxu0 %v2682
        %v2890 = vpop.f32.mrb[0].mxu0
        %v2891 = vadd.f32 0.0, %v2890
        %v2892 = vpop.f32.mrb[0].mxu0
        %2893 = vdwg.mxu0
        %2894 = vmatprep.subr.mxu0 0.0
        %2895 = vmatpush1.msra.mxu0 %v2640
        %2896 = vmatprep.subr.mxu0 0.0
        %2897 = vmatpush1.msra.mxu0 %v2641
        %2898 = vmatprep.subr.mxu0 0.0
        %2899 = vmatpush1.msra.mxu0 %v2642
        %2900 = vmatprep.subr.mxu0 0.0
        %2901 = vmatpush1.msra.mxu0 %v2643
        %2902 = vmatprep.subr.mxu0 0.0
        %2903 = vmatpush1.msra.mxu0 0.0
        %2904 = vmatprep.subr.mxu0 0.0
        %2905 = vmatpush1.msra.mxu0 0.0
        %2906 = vmatprep.subr.mxu0 0.0
        %2907 = vmatpush1.msra.mxu0 0.0
        %2908 = vmatprep.subr.mxu0 0.0
        %2909 = vmatpush1.msra.mxu0 0.0
        %2910 = vmatprep.subr.mxu0 0.0
        %2911 = vmatpush1.msra.mxu0 0.0
        %2912 = vmatprep.subr.mxu0 0.0
        %2913 = vmatpush1.msra.mxu0 0.0
        %2914 = vmatprep.subr.mxu0 0.0
        %2915 = vmatpush1.msra.mxu0 0.0
        %2916 = vmatprep.subr.mxu0 0.0
        %2917 = vmatpush1.msra.mxu0 0.0
        %2918 = vmatprep.subr.mxu0 0.0
        %2919 = vmatpush1.msra.mxu0 0.0
        %2920 = vmatprep.subr.mxu0 0.0
        %2921 = vmatpush1.msra.mxu0 0.0
        %2922 = vmatprep.subr.mxu0 0.0
        %2923 = vmatpush1.msra.mxu0 0.0
        %2924 = vmatprep.subr.mxu0 0.0
        %2925 = vmatpush1.msra.mxu0 0.0
        %2926 = vmatprep.subr.mxu0 0.0
        %2927 = vmatpush1.msra.mxu0 0.0
        %2928 = vmatprep.subr.mxu0 0.0
        %2929 = vmatpush1.msra.mxu0 0.0
        %2930 = vmatprep.subr.mxu0 0.0
        %2931 = vmatpush1.msra.mxu0 0.0
        %2932 = vmatprep.subr.mxu0 0.0
        %2933 = vmatpush1.msra.mxu0 0.0
        %2934 = vmatprep.subr.mxu0 0.0
        %2935 = vmatpush1.msra.mxu0 0.0
        %2936 = vmatprep.subr.mxu0 0.0
        %2937 = vmatpush1.msra.mxu0 0.0
        %2938 = vmatprep.subr.mxu0 0.0
        %2939 = vmatpush1.msra.mxu0 0.0
        %2940 = vmatprep.subr.mxu0 0.0
        %2941 = vmatpush1.msra.mxu0 0.0
        %2942 = vmatprep.subr.mxu0 0.0
        %2943 = vmatpush1.msra.mxu0 0.0
        %2944 = vmatprep.subr.mxu0 0.0
        %2945 = vmatpush1.msra.mxu0 0.0
        %2946 = vmatprep.subr.mxu0 0.0
        %2947 = vmatpush1.msra.mxu0 0.0
        %2948 = vmatprep.subr.mxu0 0.0
        %2949 = vmatpush1.msra.mxu0 0.0
        %2950 = vmatprep.subr.mxu0 0.0
        %2951 = vmatpush1.msra.mxu0 0.0
        %2952 = vmatprep.subr.mxu0 0.0
        %2953 = vmatpush1.msra.mxu0 0.0
        %2954 = vmatprep.subr.mxu0 0.0
        %2955 = vmatpush1.msra.mxu0 0.0
        %2956 = vmatprep.subr.mxu0 0.0
        %2957 = vmatpush1.msra.mxu0 0.0
        %2958 = vmatprep.mubr.f32.mxu0 0.0
        %2959 = vmatmul.mubr.f32.gmra.mrb[0].mxu0 %v2682
        %v2960 = vpop.f32.mrb[0].mxu0
        %v2961 = vadd.f32 0.0, %v2960
        %v2962 = vpop.f32.mrb[0].mxu0
        %2963 = vdwg.mxu0
        %v2965 = vsel %vm806, %v751, 0
        %v2968 = vsel %vm806, %v752, 0
        %2970 = vmatprep.subr.mxu0 0.0
        %2971 = vmatpush1.msra.mxu0 %v2644
        %2972 = vmatprep.subr.mxu0 0.0
        %2973 = vmatpush1.msra.mxu0 %v2645
        %2974 = vmatprep.subr.mxu0 0.0
        %2975 = vmatpush1.msra.mxu0 %v2646
        %2976 = vmatprep.subr.mxu0 0.0
        %2977 = vmatpush1.msra.mxu0 %v2647
        %2978 = vmatprep.subr.mxu0 0.0
        %2979 = vmatpush1.msra.mxu0 0.0
        %2980 = vmatprep.subr.mxu0 0.0
        %2981 = vmatpush1.msra.mxu0 0.0
        %2982 = vmatprep.subr.mxu0 0.0
        %2983 = vmatpush1.msra.mxu0 0.0
        %2984 = vmatprep.subr.mxu0 0.0
        %2985 = vmatpush1.msra.mxu0 0.0
        %2986 = vmatprep.subr.mxu0 0.0
        %2987 = vmatpush1.msra.mxu0 0.0
        %2988 = vmatprep.subr.mxu0 0.0
        %2989 = vmatpush1.msra.mxu0 0.0
        %2990 = vmatprep.subr.mxu0 0.0
        %2991 = vmatpush1.msra.mxu0 0.0
        %2992 = vmatprep.subr.mxu0 0.0
        %2993 = vmatpush1.msra.mxu0 0.0
        %2994 = vmatprep.subr.mxu0 0.0
        %2995 = vmatpush1.msra.mxu0 0.0
        %2996 = vmatprep.subr.mxu0 0.0
        %2997 = vmatpush1.msra.mxu0 0.0
        %2998 = vmatprep.subr.mxu0 0.0
        %2999 = vmatpush1.msra.mxu0 0.0
        %3000 = vmatprep.subr.mxu0 0.0
        %3001 = vmatpush1.msra.mxu0 0.0
        %3002 = vmatprep.subr.mxu0 0.0
        %3003 = vmatpush1.msra.mxu0 0.0
        %3004 = vmatprep.subr.mxu0 0.0
        %3005 = vmatpush1.msra.mxu0 0.0
        %3006 = vmatprep.subr.mxu0 0.0
        %3007 = vmatpush1.msra.mxu0 0.0
        %3008 = vmatprep.subr.mxu0 0.0
        %3009 = vmatpush1.msra.mxu0 0.0
        %3010 = vmatprep.subr.mxu0 0.0
        %3011 = vmatpush1.msra.mxu0 0.0
        %3012 = vmatprep.subr.mxu0 0.0
        %3013 = vmatpush1.msra.mxu0 0.0
        %3014 = vmatprep.subr.mxu0 0.0
        %3015 = vmatpush1.msra.mxu0 0.0
        %3016 = vmatprep.subr.mxu0 0.0
        %3017 = vmatpush1.msra.mxu0 0.0
        %3018 = vmatprep.subr.mxu0 0.0
        %3019 = vmatpush1.msra.mxu0 0.0
        %3020 = vmatprep.subr.mxu0 0.0
        %3021 = vmatpush1.msra.mxu0 0.0
        %3022 = vmatprep.subr.mxu0 0.0
        %3023 = vmatpush1.msra.mxu0 0.0
        %3024 = vmatprep.subr.mxu0 0.0
        %3025 = vmatpush1.msra.mxu0 0.0
        %3026 = vmatprep.subr.mxu0 0.0
        %3027 = vmatpush1.msra.mxu0 0.0
        %3028 = vmatprep.subr.mxu0 0.0
        %3029 = vmatpush1.msra.mxu0 0.0
        %3030 = vmatprep.subr.mxu0 0.0
        %3031 = vmatpush1.msra.mxu0 0.0
        %3032 = vmatprep.subr.mxu0 0.0
        %3033 = vmatpush1.msra.mxu0 0.0
        %3034 = vmatprep.mubr.f32.mxu0 0.0
        %3035 = vmatmul.mubr.f32.gmra.mrb[0].mxu0 %v2965
        %v3036 = vpop.f32.mrb[0].mxu0
        %v3037 = vadd.f32 0.0, %v3036
        %v3038 = vpop.f32.mrb[0].mxu0
        %3039 = vmatprep.mubr.f32.mxu0 0.0
        %3040 = vmatmul.mubr.f32.gmra.mrb[0].mxu0 %v2968
        %v3041 = vpop.f32.mrb[0].mxu0
        %v3042 = vadd.f32 0.0, %v3041
        %v3043 = vpop.f32.mrb[0].mxu0
        %3044 = vdwg.mxu0
        %3045 = vmatprep.subr.mxu0 0.0
        %3046 = vmatpush1.msra.mxu0 %v2648
        %3047 = vmatprep.subr.mxu0 0.0
        %3048 = vmatpush1.msra.mxu0 %v2649
        %3049 = vmatprep.subr.mxu0 0.0
        %3050 = vmatpush1.msra.mxu0 %v2650
        %3051 = vmatprep.subr.mxu0 0.0
        %3052 = vmatpush1.msra.mxu0 %v2651
        %3053 = vmatprep.subr.mxu0 0.0
        %3054 = vmatpush1.msra.mxu0 0.0
        %3055 = vmatprep.subr.mxu0 0.0
        %3056 = vmatpush1.msra.mxu0 0.0
        %3057 = vmatprep.subr.mxu0 0.0
        %3058 = vmatpush1.msra.mxu0 0.0
        %3059 = vmatprep.subr.mxu0 0.0
        %3060 = vmatpush1.msra.mxu0 0.0
        %3061 = vmatprep.subr.mxu0 0.0
        %3062 = vmatpush1.msra.mxu0 0.0
        %3063 = vmatprep.subr.mxu0 0.0
        %3064 = vmatpush1.msra.mxu0 0.0
        %3065 = vmatprep.subr.mxu0 0.0
        %3066 = vmatpush1.msra.mxu0 0.0
        %3067 = vmatprep.subr.mxu0 0.0
        %3068 = vmatpush1.msra.mxu0 0.0
        %3069 = vmatprep.subr.mxu0 0.0
        %3070 = vmatpush1.msra.mxu0 0.0
        %3071 = vmatprep.subr.mxu0 0.0
        %3072 = vmatpush1.msra.mxu0 0.0
        %3073 = vmatprep.subr.mxu0 0.0
        %3074 = vmatpush1.msra.mxu0 0.0
        %3075 = vmatprep.subr.mxu0 0.0
        %3076 = vmatpush1.msra.mxu0 0.0
        %3077 = vmatprep.subr.mxu0 0.0
        %3078 = vmatpush1.msra.mxu0 0.0
        %3079 = vmatprep.subr.mxu0 0.0
        %3080 = vmatpush1.msra.mxu0 0.0
        %3081 = vmatprep.subr.mxu0 0.0
        %3082 = vmatpush1.msra.mxu0 0.0
        %3083 = vmatprep.subr.mxu0 0.0
        %3084 = vmatpush1.msra.mxu0 0.0
        %3085 = vmatprep.subr.mxu0 0.0
        %3086 = vmatpush1.msra.mxu0 0.0
        %3087 = vmatprep.subr.mxu0 0.0
        %3088 = vmatpush1.msra.mxu0 0.0
        %3089 = vmatprep.subr.mxu0 0.0
        %3090 = vmatpush1.msra.mxu0 0.0
        %3091 = vmatprep.subr.mxu0 0.0
        %3092 = vmatpush1.msra.mxu0 0.0
        %3093 = vmatprep.subr.mxu0 0.0
        %3094 = vmatpush1.msra.mxu0 0.0
        %3095 = vmatprep.subr.mxu0 0.0
        %3096 = vmatpush1.msra.mxu0 0.0
        %3097 = vmatprep.subr.mxu0 0.0
        %3098 = vmatpush1.msra.mxu0 0.0
        %3099 = vmatprep.subr.mxu0 0.0
        %3100 = vmatpush1.msra.mxu0 0.0
        %3101 = vmatprep.subr.mxu0 0.0
        %3102 = vmatpush1.msra.mxu0 0.0
        %3103 = vmatprep.subr.mxu0 0.0
        %3104 = vmatpush1.msra.mxu0 0.0
        %3105 = vmatprep.subr.mxu0 0.0
        %3106 = vmatpush1.msra.mxu0 0.0
        %3107 = vmatprep.subr.mxu0 0.0
        %3108 = vmatpush1.msra.mxu0 0.0
        %3109 = vmatprep.mubr.f32.mxu0 0.0
        %3110 = vmatmul.mubr.f32.gmra.mrb[0].mxu0 %v2965
        %v3111 = vpop.f32.mrb[0].mxu0
        %v3112 = vadd.f32 0.0, %v3111
        %v3113 = vpop.f32.mrb[0].mxu0
        %3114 = vmatprep.mubr.f32.mxu0 0.0
        %3115 = vmatmul.mubr.f32.gmra.mrb[0].mxu0 %v2968
        %v3116 = vpop.f32.mrb[0].mxu0
        %v3117 = vadd.f32 0.0, %v3116
        %v3118 = vpop.f32.mrb[0].mxu0
        %3119 = vdwg.mxu0
        %3120 = vmatprep.subr.mxu0 0.0
        %3121 = vmatpush1.msra.mxu0 %v2652
        %3122 = vmatprep.subr.mxu0 0.0
        %3123 = vmatpush1.msra.mxu0 %v2653
        %3124 = vmatprep.subr.mxu0 0.0
        %3125 = vmatpush1.msra.mxu0 %v2654
        %3126 = vmatprep.subr.mxu0 0.0
        %3127 = vmatpush1.msra.mxu0 %v2655
        %3128 = vmatprep.subr.mxu0 0.0
        %3129 = vmatpush1.msra.mxu0 0.0
        %3130 = vmatprep.subr.mxu0 0.0
        %3131 = vmatpush1.msra.mxu0 0.0
        %3132 = vmatprep.subr.mxu0 0.0
        %3133 = vmatpush1.msra.mxu0 0.0
        %3134 = vmatprep.subr.mxu0 0.0
        %3135 = vmatpush1.msra.mxu0 0.0
        %3136 = vmatprep.subr.mxu0 0.0
        %3137 = vmatpush1.msra.mxu0 0.0
        %3138 = vmatprep.subr.mxu0 0.0
        %3139 = vmatpush1.msra.mxu0 0.0
        %3140 = vmatprep.subr.mxu0 0.0
        %3141 = vmatpush1.msra.mxu0 0.0
        %3142 = vmatprep.subr.mxu0 0.0
        %3143 = vmatpush1.msra.mxu0 0.0
        %3144 = vmatprep.subr.mxu0 0.0
        %3145 = vmatpush1.msra.mxu0 0.0
        %3146 = vmatprep.subr.mxu0 0.0
        %3147 = vmatpush1.msra.mxu0 0.0
        %3148 = vmatprep.subr.mxu0 0.0
        %3149 = vmatpush1.msra.mxu0 0.0
        %3150 = vmatprep.subr.mxu0 0.0
        %3151 = vmatpush1.msra.mxu0 0.0
        %3152 = vmatprep.subr.mxu0 0.0
        %3153 = vmatpush1.msra.mxu0 0.0
        %3154 = vmatprep.subr.mxu0 0.0
        %3155 = vmatpush1.msra.mxu0 0.0
        %3156 = vmatprep.subr.mxu0 0.0
        %3157 = vmatpush1.msra.mxu0 0.0
        %3158 = vmatprep.subr.mxu0 0.0
        %3159 = vmatpush1.msra.mxu0 0.0
        %3160 = vmatprep.subr.mxu0 0.0
        %3161 = vmatpush1.msra.mxu0 0.0
        %3162 = vmatprep.subr.mxu0 0.0
        %3163 = vmatpush1.msra.mxu0 0.0
        %3164 = vmatprep.subr.mxu0 0.0
        %3165 = vmatpush1.msra.mxu0 0.0
        %3166 = vmatprep.subr.mxu0 0.0
        %3167 = vmatpush1.msra.mxu0 0.0
        %3168 = vmatprep.subr.mxu0 0.0
        %3169 = vmatpush1.msra.mxu0 0.0
        %3170 = vmatprep.subr.mxu0 0.0
        %3171 = vmatpush1.msra.mxu0 0.0
        %3172 = vmatprep.subr.mxu0 0.0
        %3173 = vmatpush1.msra.mxu0 0.0
        %3174 = vmatprep.subr.mxu0 0.0
        %3175 = vmatpush1.msra.mxu0 0.0
        %3176 = vmatprep.subr.mxu0 0.0
        %3177 = vmatpush1.msra.mxu0 0.0
        %3178 = vmatprep.subr.mxu0 0.0
        %3179 = vmatpush1.msra.mxu0 0.0
        %3180 = vmatprep.subr.mxu0 0.0
        %3181 = vmatpush1.msra.mxu0 0.0
        %3182 = vmatprep.subr.mxu0 0.0
        %3183 = vmatpush1.msra.mxu0 0.0
        %3184 = vmatprep.mubr.f32.mxu0 0.0
        %3185 = vmatmul.mubr.f32.gmra.mrb[0].mxu0 %v2965
        %v3186 = vpop.f32.mrb[0].mxu0
        %v3187 = vadd.f32 0.0, %v3186
        %v3188 = vpop.f32.mrb[0].mxu0
        %3189 = vmatprep.mubr.f32.mxu0 0.0
        %3190 = vmatmul.mubr.f32.gmra.mrb[0].mxu0 %v2968
        %v3191 = vpop.f32.mrb[0].mxu0
        %v3192 = vadd.f32 0.0, %v3191
        %v3193 = vpop.f32.mrb[0].mxu0
        %3194 = vdwg.mxu0
        %3195 = vmatprep.subr.mxu0 0.0
        %3196 = vmatpush1.msra.mxu0 %v2656
        %3197 = vmatprep.subr.mxu0 0.0
        %3198 = vmatpush1.msra.mxu0 %v2657
        %3199 = vmatprep.subr.mxu0 0.0
        %3200 = vmatpush1.msra.mxu0 %v2658
        %3201 = vmatprep.subr.mxu0 0.0
        %3202 = vmatpush1.msra.mxu0 %v2659
        %3203 = vmatprep.subr.mxu0 0.0
        %3204 = vmatpush1.msra.mxu0 0.0
        %3205 = vmatprep.subr.mxu0 0.0
        %3206 = vmatpush1.msra.mxu0 0.0
        %3207 = vmatprep.subr.mxu0 0.0
        %3208 = vmatpush1.msra.mxu0 0.0
        %3209 = vmatprep.subr.mxu0 0.0
        %3210 = vmatpush1.msra.mxu0 0.0
        %3211 = vmatprep.subr.mxu0 0.0
        %3212 = vmatpush1.msra.mxu0 0.0
        %3213 = vmatprep.subr.mxu0 0.0
        %3214 = vmatpush1.msra.mxu0 0.0
        %3215 = vmatprep.subr.mxu0 0.0
        %3216 = vmatpush1.msra.mxu0 0.0
        %3217 = vmatprep.subr.mxu0 0.0
        %3218 = vmatpush1.msra.mxu0 0.0
        %3219 = vmatprep.subr.mxu0 0.0
        %3220 = vmatpush1.msra.mxu0 0.0
        %3221 = vmatprep.subr.mxu0 0.0
        %3222 = vmatpush1.msra.mxu0 0.0
        %3223 = vmatprep.subr.mxu0 0.0
        %3224 = vmatpush1.msra.mxu0 0.0
        %3225 = vmatprep.subr.mxu0 0.0
        %3226 = vmatpush1.msra.mxu0 0.0
        %3227 = vmatprep.subr.mxu0 0.0
        %3228 = vmatpush1.msra.mxu0 0.0
        %3229 = vmatprep.subr.mxu0 0.0
        %3230 = vmatpush1.msra.mxu0 0.0
        %3231 = vmatprep.subr.mxu0 0.0
        %3232 = vmatpush1.msra.mxu0 0.0
        %3233 = vmatprep.subr.mxu0 0.0
        %3234 = vmatpush1.msra.mxu0 0.0
        %3235 = vmatprep.subr.mxu0 0.0
        %3236 = vmatpush1.msra.mxu0 0.0
        %3237 = vmatprep.subr.mxu0 0.0
        %3238 = vmatpush1.msra.mxu0 0.0
        %3239 = vmatprep.subr.mxu0 0.0
        %3240 = vmatpush1.msra.mxu0 0.0
        %3241 = vmatprep.subr.mxu0 0.0
        %3242 = vmatpush1.msra.mxu0 0.0
        %3243 = vmatprep.subr.mxu0 0.0
        %3244 = vmatpush1.msra.mxu0 0.0
        %3245 = vmatprep.subr.mxu0 0.0
        %3246 = vmatpush1.msra.mxu0 0.0
        %3247 = vmatprep.subr.mxu0 0.0
        %3248 = vmatpush1.msra.mxu0 0.0
        %3249 = vmatprep.subr.mxu0 0.0
        %3250 = vmatpush1.msra.mxu0 0.0
        %3251 = vmatprep.subr.mxu0 0.0
        %3252 = vmatpush1.msra.mxu0 0.0
        %3253 = vmatprep.subr.mxu0 0.0
        %3254 = vmatpush1.msra.mxu0 0.0
        %3255 = vmatprep.subr.mxu0 0.0
        %3256 = vmatpush1.msra.mxu0 0.0
        %3257 = vmatprep.subr.mxu0 0.0
        %3258 = vmatpush1.msra.mxu0 0.0
        %3259 = vmatprep.mubr.f32.mxu0 0.0
        %3260 = vmatmul.mubr.f32.gmra.mrb[0].mxu0 %v2965
        %v3261 = vpop.f32.mrb[0].mxu0
        %v3262 = vadd.f32 0.0, %v3261
        %v3263 = vpop.f32.mrb[0].mxu0
        %3264 = vmatprep.mubr.f32.mxu0 0.0
        %3265 = vmatmul.mubr.f32.gmra.mrb[0].mxu0 %v2968
        %v3266 = vpop.f32.mrb[0].mxu0
        %v3267 = vadd.f32 0.0, %v3266
        %v3268 = vpop.f32.mrb[0].mxu0
        %3269 = vdwg.mxu0
        %v3271 = vsel %vm806, %v747, 0
        %v3274 = vsel %vm806, %v748, 0
        %3276 = vmatprep.subr.mxu0 0.0
        %3277 = vmatpush1.msra.mxu0 %v2660
        %3278 = vmatprep.subr.mxu0 0.0
        %3279 = vmatpush1.msra.mxu0 %v2661
        %3280 = vmatprep.subr.mxu0 0.0
        %3281 = vmatpush1.msra.mxu0 %v2662
        %3282 = vmatprep.subr.mxu0 0.0
        %3283 = vmatpush1.msra.mxu0 %v2663
        %3284 = vmatprep.subr.mxu0 0.0
        %3285 = vmatpush1.msra.mxu0 0.0
        %3286 = vmatprep.subr.mxu0 0.0
        %3287 = vmatpush1.msra.mxu0 0.0
        %3288 = vmatprep.subr.mxu0 0.0
        %3289 = vmatpush1.msra.mxu0 0.0
        %3290 = vmatprep.subr.mxu0 0.0
        %3291 = vmatpush1.msra.mxu0 0.0
        %3292 = vmatprep.subr.mxu0 0.0
        %3293 = vmatpush1.msra.mxu0 0.0
        %3294 = vmatprep.subr.mxu0 0.0
        %3295 = vmatpush1.msra.mxu0 0.0
        %3296 = vmatprep.subr.mxu0 0.0
        %3297 = vmatpush1.msra.mxu0 0.0
        %3298 = vmatprep.subr.mxu0 0.0
        %3299 = vmatpush1.msra.mxu0 0.0
        %3300 = vmatprep.subr.mxu0 0.0
        %3301 = vmatpush1.msra.mxu0 0.0
        %3302 = vmatprep.subr.mxu0 0.0
        %3303 = vmatpush1.msra.mxu0 0.0
        %3304 = vmatprep.subr.mxu0 0.0
        %3305 = vmatpush1.msra.mxu0 0.0
        %3306 = vmatprep.subr.mxu0 0.0
        %3307 = vmatpush1.msra.mxu0 0.0
        %3308 = vmatprep.subr.mxu0 0.0
        %3309 = vmatpush1.msra.mxu0 0.0
        %3310 = vmatprep.subr.mxu0 0.0
        %3311 = vmatpush1.msra.mxu0 0.0
        %3312 = vmatprep.subr.mxu0 0.0
        %3313 = vmatpush1.msra.mxu0 0.0
        %3314 = vmatprep.subr.mxu0 0.0
        %3315 = vmatpush1.msra.mxu0 0.0
        %3316 = vmatprep.subr.mxu0 0.0
        %3317 = vmatpush1.msra.mxu0 0.0
        %3318 = vmatprep.subr.mxu0 0.0
        %3319 = vmatpush1.msra.mxu0 0.0
        %3320 = vmatprep.subr.mxu0 0.0
        %3321 = vmatpush1.msra.mxu0 0.0
        %3322 = vmatprep.subr.mxu0 0.0
        %3323 = vmatpush1.msra.mxu0 0.0
        %3324 = vmatprep.subr.mxu0 0.0
        %3325 = vmatpush1.msra.mxu0 0.0
        %3326 = vmatprep.subr.mxu0 0.0
        %3327 = vmatpush1.msra.mxu0 0.0
        %3328 = vmatprep.subr.mxu0 0.0
        %3329 = vmatpush1.msra.mxu0 0.0
        %3330 = vmatprep.subr.mxu0 0.0
        %3331 = vmatpush1.msra.mxu0 0.0
        %3332 = vmatprep.subr.mxu0 0.0
        %3333 = vmatpush1.msra.mxu0 0.0
        %3334 = vmatprep.subr.mxu0 0.0
        %3335 = vmatpush1.msra.mxu0 0.0
        %3336 = vmatprep.subr.mxu0 0.0
        %3337 = vmatpush1.msra.mxu0 0.0
        %3338 = vmatprep.subr.mxu0 0.0
        %3339 = vmatpush1.msra.mxu0 0.0
        %3340 = vmatprep.mubr.f32.mxu0 0.0
        %3341 = vmatmul.mubr.f32.gmra.mrb[0].mxu0 %v3271
        %v3342 = vpop.f32.mrb[0].mxu0
        %v3343 = vadd.f32 0.0, %v3342
        %v3344 = vpop.f32.mrb[0].mxu0
        %3345 = vmatprep.mubr.f32.mxu0 0.0
        %3346 = vmatmul.mubr.f32.gmra.mrb[0].mxu0 %v3274
        %v3347 = vpop.f32.mrb[0].mxu0
        %v3348 = vadd.f32 0.0, %v3347
        %v3349 = vpop.f32.mrb[0].mxu0
        %3350 = vdwg.mxu0
        %3351 = vmatprep.subr.mxu0 0.0
        %3352 = vmatpush1.msra.mxu0 %v2664
        %3353 = vmatprep.subr.mxu0 0.0
        %3354 = vmatpush1.msra.mxu0 %v2665
        %3355 = vmatprep.subr.mxu0 0.0
        %3356 = vmatpush1.msra.mxu0 %v2666
        %3357 = vmatprep.subr.mxu0 0.0
        %3358 = vmatpush1.msra.mxu0 %v2667
        %3359 = vmatprep.subr.mxu0 0.0
        %3360 = vmatpush1.msra.mxu0 0.0
        %3361 = vmatprep.subr.mxu0 0.0
        %3362 = vmatpush1.msra.mxu0 0.0
        %3363 = vmatprep.subr.mxu0 0.0
        %3364 = vmatpush1.msra.mxu0 0.0
        %3365 = vmatprep.subr.mxu0 0.0
        %3366 = vmatpush1.msra.mxu0 0.0
        %3367 = vmatprep.subr.mxu0 0.0
        %3368 = vmatpush1.msra.mxu0 0.0
        %3369 = vmatprep.subr.mxu0 0.0
        %3370 = vmatpush1.msra.mxu0 0.0
        %3371 = vmatprep.subr.mxu0 0.0
        %3372 = vmatpush1.msra.mxu0 0.0
        %3373 = vmatprep.subr.mxu0 0.0
        %3374 = vmatpush1.msra.mxu0 0.0
        %3375 = vmatprep.subr.mxu0 0.0
        %3376 = vmatpush1.msra.mxu0 0.0
        %3377 = vmatprep.subr.mxu0 0.0
        %3378 = vmatpush1.msra.mxu0 0.0
        %3379 = vmatprep.subr.mxu0 0.0
        %3380 = vmatpush1.msra.mxu0 0.0
        %3381 = vmatprep.subr.mxu0 0.0
        %3382 = vmatpush1.msra.mxu0 0.0
        %3383 = vmatprep.subr.mxu0 0.0
        %3384 = vmatpush1.msra.mxu0 0.0
        %3385 = vmatprep.subr.mxu0 0.0
        %3386 = vmatpush1.msra.mxu0 0.0
        %3387 = vmatprep.subr.mxu0 0.0
        %3388 = vmatpush1.msra.mxu0 0.0
        %3389 = vmatprep.subr.mxu0 0.0
        %3390 = vmatpush1.msra.mxu0 0.0
        %3391 = vmatprep.subr.mxu0 0.0
        %3392 = vmatpush1.msra.mxu0 0.0
        %3393 = vmatprep.subr.mxu0 0.0
        %3394 = vmatpush1.msra.mxu0 0.0
        %3395 = vmatprep.subr.mxu0 0.0
        %3396 = vmatpush1.msra.mxu0 0.0
        %3397 = vmatprep.subr.mxu0 0.0
        %3398 = vmatpush1.msra.mxu0 0.0
        %3399 = vmatprep.subr.mxu0 0.0
        %3400 = vmatpush1.msra.mxu0 0.0
        %3401 = vmatprep.subr.mxu0 0.0
        %3402 = vmatpush1.msra.mxu0 0.0
        %3403 = vmatprep.subr.mxu0 0.0
        %3404 = vmatpush1.msra.mxu0 0.0
        %3405 = vmatprep.subr.mxu0 0.0
        %3406 = vmatpush1.msra.mxu0 0.0
        %3407 = vmatprep.subr.mxu0 0.0
        %3408 = vmatpush1.msra.mxu0 0.0
        %3409 = vmatprep.subr.mxu0 0.0
        %3410 = vmatpush1.msra.mxu0 0.0
        %3411 = vmatprep.subr.mxu0 0.0
        %3412 = vmatpush1.msra.mxu0 0.0
        %3413 = vmatprep.subr.mxu0 0.0
        %3414 = vmatpush1.msra.mxu0 0.0
        %3415 = vmatprep.mubr.f32.mxu0 0.0
        %3416 = vmatmul.mubr.f32.gmra.mrb[0].mxu0 %v3271
        %v3417 = vpop.f32.mrb[0].mxu0
        %v3418 = vadd.f32 0.0, %v3417
        %v3419 = vpop.f32.mrb[0].mxu0
        %3420 = vmatprep.mubr.f32.mxu0 0.0
        %3421 = vmatmul.mubr.f32.gmra.mrb[0].mxu0 %v3274
        %v3422 = vpop.f32.mrb[0].mxu0
        %v3423 = vadd.f32 0.0, %v3422
        %v3424 = vpop.f32.mrb[0].mxu0
        %3425 = vdwg.mxu0
        %3426 = vmatprep.subr.mxu0 0.0
        %3427 = vmatpush1.msra.mxu0 %v2668
        %3428 = vmatprep.subr.mxu0 0.0
        %3429 = vmatpush1.msra.mxu0 %v2669
        %3430 = vmatprep.subr.mxu0 0.0
        %3431 = vmatpush1.msra.mxu0 %v2670
        %3432 = vmatprep.subr.mxu0 0.0
        %3433 = vmatpush1.msra.mxu0 %v2671
        %3434 = vmatprep.subr.mxu0 0.0
        %3435 = vmatpush1.msra.mxu0 0.0
        %3436 = vmatprep.subr.mxu0 0.0
        %3437 = vmatpush1.msra.mxu0 0.0
        %3438 = vmatprep.subr.mxu0 0.0
        %3439 = vmatpush1.msra.mxu0 0.0
        %3440 = vmatprep.subr.mxu0 0.0
        %3441 = vmatpush1.msra.mxu0 0.0
        %3442 = vmatprep.subr.mxu0 0.0
        %3443 = vmatpush1.msra.mxu0 0.0
        %3444 = vmatprep.subr.mxu0 0.0
        %3445 = vmatpush1.msra.mxu0 0.0
        %3446 = vmatprep.subr.mxu0 0.0
        %3447 = vmatpush1.msra.mxu0 0.0
        %3448 = vmatprep.subr.mxu0 0.0
        %3449 = vmatpush1.msra.mxu0 0.0
        %3450 = vmatprep.subr.mxu0 0.0
        %3451 = vmatpush1.msra.mxu0 0.0
        %3452 = vmatprep.subr.mxu0 0.0
        %3453 = vmatpush1.msra.mxu0 0.0
        %3454 = vmatprep.subr.mxu0 0.0
        %3455 = vmatpush1.msra.mxu0 0.0
        %3456 = vmatprep.subr.mxu0 0.0
        %3457 = vmatpush1.msra.mxu0 0.0
        %3458 = vmatprep.subr.mxu0 0.0
        %3459 = vmatpush1.msra.mxu0 0.0
        %3460 = vmatprep.subr.mxu0 0.0
        %3461 = vmatpush1.msra.mxu0 0.0
        %3462 = vmatprep.subr.mxu0 0.0
        %3463 = vmatpush1.msra.mxu0 0.0
        %3464 = vmatprep.subr.mxu0 0.0
        %3465 = vmatpush1.msra.mxu0 0.0
        %3466 = vmatprep.subr.mxu0 0.0
        %3467 = vmatpush1.msra.mxu0 0.0
        %3468 = vmatprep.subr.mxu0 0.0
        %3469 = vmatpush1.msra.mxu0 0.0
        %3470 = vmatprep.subr.mxu0 0.0
        %3471 = vmatpush1.msra.mxu0 0.0
        %3472 = vmatprep.subr.mxu0 0.0
        %3473 = vmatpush1.msra.mxu0 0.0
        %3474 = vmatprep.subr.mxu0 0.0
        %3475 = vmatpush1.msra.mxu0 0.0
        %3476 = vmatprep.subr.mxu0 0.0
        %3477 = vmatpush1.msra.mxu0 0.0
        %3478 = vmatprep.subr.mxu0 0.0
        %3479 = vmatpush1.msra.mxu0 0.0
        %3480 = vmatprep.subr.mxu0 0.0
        %3481 = vmatpush1.msra.mxu0 0.0
        %3482 = vmatprep.subr.mxu0 0.0
        %3483 = vmatpush1.msra.mxu0 0.0
        %3484 = vmatprep.subr.mxu0 0.0
        %3485 = vmatpush1.msra.mxu0 0.0
        %3486 = vmatprep.subr.mxu0 0.0
        %3487 = vmatpush1.msra.mxu0 0.0
        %3488 = vmatprep.subr.mxu0 0.0
        %3489 = vmatpush1.msra.mxu0 0.0
        %3490 = vmatprep.mubr.f32.mxu0 0.0
        %3491 = vmatmul.mubr.f32.gmra.mrb[0].mxu0 %v3271
        %v3492 = vpop.f32.mrb[0].mxu0
        %v3493 = vadd.f32 0.0, %v3492
        %v3494 = vpop.f32.mrb[0].mxu0
        %3495 = vmatprep.mubr.f32.mxu0 0.0
        %3496 = vmatmul.mubr.f32.gmra.mrb[0].mxu0 %v3274
        %v3497 = vpop.f32.mrb[0].mxu0
        %v3498 = vadd.f32 0.0, %v3497
        %v3499 = vpop.f32.mrb[0].mxu0
        %3500 = vdwg.mxu0
        %3501 = vmatprep.subr.mxu0 0.0
        %3502 = vmatpush1.msra.mxu0 %v2672
        %3503 = vmatprep.subr.mxu0 0.0
        %3504 = vmatpush1.msra.mxu0 %v2673
        %3505 = vmatprep.subr.mxu0 0.0
        %3506 = vmatpush1.msra.mxu0 %v2674
        %3507 = vmatprep.subr.mxu0 0.0
        %3508 = vmatpush1.msra.mxu0 %v2675
        %3509 = vmatprep.subr.mxu0 0.0
        %3510 = vmatpush1.msra.mxu0 0.0
        %3511 = vmatprep.subr.mxu0 0.0
        %3512 = vmatpush1.msra.mxu0 0.0
        %3513 = vmatprep.subr.mxu0 0.0
        %3514 = vmatpush1.msra.mxu0 0.0
        %3515 = vmatprep.subr.mxu0 0.0
        %3516 = vmatpush1.msra.mxu0 0.0
        %3517 = vmatprep.subr.mxu0 0.0
        %3518 = vmatpush1.msra.mxu0 0.0
        %3519 = vmatprep.subr.mxu0 0.0
        %3520 = vmatpush1.msra.mxu0 0.0
        %3521 = vmatprep.subr.mxu0 0.0
        %3522 = vmatpush1.msra.mxu0 0.0
        %3523 = vmatprep.subr.mxu0 0.0
        %3524 = vmatpush1.msra.mxu0 0.0
        %3525 = vmatprep.subr.mxu0 0.0
        %3526 = vmatpush1.msra.mxu0 0.0
        %3527 = vmatprep.subr.mxu0 0.0
        %3528 = vmatpush1.msra.mxu0 0.0
        %3529 = vmatprep.subr.mxu0 0.0
        %3530 = vmatpush1.msra.mxu0 0.0
        %3531 = vmatprep.subr.mxu0 0.0
        %3532 = vmatpush1.msra.mxu0 0.0
        %3533 = vmatprep.subr.mxu0 0.0
        %3534 = vmatpush1.msra.mxu0 0.0
        %3535 = vmatprep.subr.mxu0 0.0
        %3536 = vmatpush1.msra.mxu0 0.0
        %3537 = vmatprep.subr.mxu0 0.0
        %3538 = vmatpush1.msra.mxu0 0.0
        %3539 = vmatprep.subr.mxu0 0.0
        %3540 = vmatpush1.msra.mxu0 0.0
        %3541 = vmatprep.subr.mxu0 0.0
        %3542 = vmatpush1.msra.mxu0 0.0
        %3543 = vmatprep.subr.mxu0 0.0
        %3544 = vmatpush1.msra.mxu0 0.0
        %3545 = vmatprep.subr.mxu0 0.0
        %3546 = vmatpush1.msra.mxu0 0.0
        %3547 = vmatprep.subr.mxu0 0.0
        %3548 = vmatpush1.msra.mxu0 0.0
        %3549 = vmatprep.subr.mxu0 0.0
        %3550 = vmatpush1.msra.mxu0 0.0
        %3551 = vmatprep.subr.mxu0 0.0
        %3552 = vmatpush1.msra.mxu0 0.0
        %3553 = vmatprep.subr.mxu0 0.0
        %3554 = vmatpush1.msra.mxu0 0.0
        %3555 = vmatprep.subr.mxu0 0.0
        %3556 = vmatpush1.msra.mxu0 0.0
        %3557 = vmatprep.subr.mxu0 0.0
        %3558 = vmatpush1.msra.mxu0 0.0
        %3559 = vmatprep.subr.mxu0 0.0
        %3560 = vmatpush1.msra.mxu0 0.0
        %3561 = vmatprep.subr.mxu0 0.0
        %3562 = vmatpush1.msra.mxu0 0.0
        %3563 = vmatprep.subr.mxu0 0.0
        %3564 = vmatpush1.msra.mxu0 0.0
        %3565 = vmatprep.mubr.f32.mxu0 0.0
        %3566 = vmatmul.mubr.f32.gmra.mrb[0].mxu0 %v3271
        %v3567 = vpop.f32.mrb[0].mxu0
        %v3568 = vadd.f32 0.0, %v3567
        %v3569 = vpop.f32.mrb[0].mxu0
        %3570 = vmatprep.mubr.f32.mxu0 0.0
        %3571 = vmatmul.mubr.f32.gmra.mrb[0].mxu0 %v3274
        %v3572 = vpop.f32.mrb[0].mxu0
        %v3573 = vadd.f32 0.0, %v3572
        %v3574 = vpop.f32.mrb[0].mxu0
        %3575 = vdwg.mxu0
        %v3577 = vsel %vm1650, %v2751, 0
        %v3580 = vsel %vm1650, %v3037, 0
        %v3583 = vsel %vm1650, %v3042, 0
        %3585 = vmatprep.subr.mxu0 0.0
        %3586 = vmatpush1.xpose.msra.mxu0 %v3580
        %3587 = vmatprep.subr.mxu0 0.0
        %3588 = vmatpush1.xpose.msra.mxu0 %v3583
        %3589 = vmatprep.subr.mxu0 0.0
        %3590 = vmatpush1.xpose.msra.mxu0 0.0
        %3591 = vmatprep.subr.mxu0 0.0
        %3592 = vmatpush1.xpose.msra.mxu0 0.0
        %3593 = vmatprep.subr.mxu0 0.0
        %3594 = vmatpush1.xpose.msra.mxu0 0.0
        %3595 = vmatprep.subr.mxu0 0.0
        %3596 = vmatpush1.xpose.msra.mxu0 0.0
        %3597 = vmatprep.subr.mxu0 0.0
        %3598 = vmatpush1.xpose.msra.mxu0 0.0
        %3599 = vmatprep.subr.mxu0 0.0
        %3600 = vmatpush1.xpose.msra.mxu0 0.0
        %3601 = vmatprep.subr.mxu0 0.0
        %3602 = vmatpush1.xpose.msra.mxu0 0.0
        %3603 = vmatprep.subr.mxu0 0.0
        %3604 = vmatpush1.xpose.msra.mxu0 0.0
        %3605 = vmatprep.subr.mxu0 0.0
        %3606 = vmatpush1.xpose.msra.mxu0 0.0
        %3607 = vmatprep.subr.mxu0 0.0
        %3608 = vmatpush1.xpose.msra.mxu0 0.0
        %3609 = vmatprep.subr.mxu0 0.0
        %3610 = vmatpush1.xpose.msra.mxu0 0.0
        %3611 = vmatprep.subr.mxu0 0.0
        %3612 = vmatpush1.xpose.msra.mxu0 0.0
        %3613 = vmatprep.subr.mxu0 0.0
        %3614 = vmatpush1.xpose.msra.mxu0 0.0
        %3615 = vmatprep.subr.mxu0 0.0
        %3616 = vmatpush1.xpose.msra.mxu0 0.0
        %3617 = vmatprep.subr.mxu0 0.0
        %3618 = vmatpush1.xpose.msra.mxu0 0.0
        %3619 = vmatprep.subr.mxu0 0.0
        %3620 = vmatpush1.xpose.msra.mxu0 0.0
        %3621 = vmatprep.subr.mxu0 0.0
        %3622 = vmatpush1.xpose.msra.mxu0 0.0
        %3623 = vmatprep.subr.mxu0 0.0
        %3624 = vmatpush1.xpose.msra.mxu0 0.0
        %3625 = vmatprep.subr.mxu0 0.0
        %3626 = vmatpush1.xpose.msra.mxu0 0.0
        %3627 = vmatprep.subr.mxu0 0.0
        %3628 = vmatpush1.xpose.msra.mxu0 0.0
        %3629 = vmatprep.subr.mxu0 0.0
        %3630 = vmatpush1.xpose.msra.mxu0 0.0
        %3631 = vmatprep.subr.mxu0 0.0
        %3632 = vmatpush1.xpose.msra.mxu0 0.0
        %3633 = vmatprep.subr.mxu0 0.0
        %3634 = vmatpush1.xpose.msra.mxu0 0.0
        %3635 = vmatprep.subr.mxu0 0.0
        %3636 = vmatpush1.xpose.msra.mxu0 0.0
        %3637 = vmatprep.subr.mxu0 0.0
        %3638 = vmatpush1.xpose.msra.mxu0 0.0
        %3639 = vmatprep.subr.mxu0 0.0
        %3640 = vmatpush1.xpose.msra.mxu0 0.0
        %3641 = vmatprep.subr.mxu0 0.0
        %3642 = vmatpush1.xpose.msra.mxu0 0.0
        %3643 = vmatprep.subr.mxu0 0.0
        %3644 = vmatpush1.xpose.msra.mxu0 0.0
        %3645 = vmatprep.subr.mxu0 0.0
        %3646 = vmatpush1.xpose.msra.mxu0 0.0
        %3647 = vmatprep.subr.mxu0 0.0
        %3648 = vmatpush1.xpose.msra.mxu0 0.0
        %3649 = vmatprep.mubr.f32.mxu0 0.0
        %3650 = vmatmul.mubr.f32.gmra.mrb[0].mxu0 %v3577
        %v3651 = vpop.f32.mrb[0].mxu0
        %v3652 = vadd.f32 0.0, %v3651
        %v3653 = vpop.f32.mrb[0].mxu0
        %3654 = vdwg.mxu0
        %v3656 = vsel %vm1650, %v2821, 0
        %v3659 = vsel %vm1650, %v3112, 0
        %v3662 = vsel %vm1650, %v3117, 0
        %3664 = vmatprep.subr.mxu0 0.0
        %3665 = vmatpush1.xpose.msra.mxu0 %v3659
        %3666 = vmatprep.subr.mxu0 0.0
        %3667 = vmatpush1.xpose.msra.mxu0 %v3662
        %3668 = vmatprep.subr.mxu0 0.0
        %3669 = vmatpush1.xpose.msra.mxu0 0.0
        %3670 = vmatprep.subr.mxu0 0.0
        %3671 = vmatpush1.xpose.msra.mxu0 0.0
        %3672 = vmatprep.subr.mxu0 0.0
        %3673 = vmatpush1.xpose.msra.mxu0 0.0
        %3674 = vmatprep.subr.mxu0 0.0
        %3675 = vmatpush1.xpose.msra.mxu0 0.0
        %3676 = vmatprep.subr.mxu0 0.0
        %3677 = vmatpush1.xpose.msra.mxu0 0.0
        %3678 = vmatprep.subr.mxu0 0.0
        %3679 = vmatpush1.xpose.msra.mxu0 0.0
        %3680 = vmatprep.subr.mxu0 0.0
        %3681 = vmatpush1.xpose.msra.mxu0 0.0
        %3682 = vmatprep.subr.mxu0 0.0
        %3683 = vmatpush1.xpose.msra.mxu0 0.0
        %3684 = vmatprep.subr.mxu0 0.0
        %3685 = vmatpush1.xpose.msra.mxu0 0.0
        %3686 = vmatprep.subr.mxu0 0.0
        %3687 = vmatpush1.xpose.msra.mxu0 0.0
        %3688 = vmatprep.subr.mxu0 0.0
        %3689 = vmatpush1.xpose.msra.mxu0 0.0
        %3690 = vmatprep.subr.mxu0 0.0
        %3691 = vmatpush1.xpose.msra.mxu0 0.0
        %3692 = vmatprep.subr.mxu0 0.0
        %3693 = vmatpush1.xpose.msra.mxu0 0.0
        %3694 = vmatprep.subr.mxu0 0.0
        %3695 = vmatpush1.xpose.msra.mxu0 0.0
        %3696 = vmatprep.subr.mxu0 0.0
        %3697 = vmatpush1.xpose.msra.mxu0 0.0
        %3698 = vmatprep.subr.mxu0 0.0
        %3699 = vmatpush1.xpose.msra.mxu0 0.0
        %3700 = vmatprep.subr.mxu0 0.0
        %3701 = vmatpush1.xpose.msra.mxu0 0.0
        %3702 = vmatprep.subr.mxu0 0.0
        %3703 = vmatpush1.xpose.msra.mxu0 0.0
        %3704 = vmatprep.subr.mxu0 0.0
        %3705 = vmatpush1.xpose.msra.mxu0 0.0
        %3706 = vmatprep.subr.mxu0 0.0
        %3707 = vmatpush1.xpose.msra.mxu0 0.0
        %3708 = vmatprep.subr.mxu0 0.0
        %3709 = vmatpush1.xpose.msra.mxu0 0.0
        %3710 = vmatprep.subr.mxu0 0.0
        %3711 = vmatpush1.xpose.msra.mxu0 0.0
        %3712 = vmatprep.subr.mxu0 0.0
        %3713 = vmatpush1.xpose.msra.mxu0 0.0
        %3714 = vmatprep.subr.mxu0 0.0
        %3715 = vmatpush1.xpose.msra.mxu0 0.0
        %3716 = vmatprep.subr.mxu0 0.0
        %3717 = vmatpush1.xpose.msra.mxu0 0.0
        %3718 = vmatprep.subr.mxu0 0.0
        %3719 = vmatpush1.xpose.msra.mxu0 0.0
        %3720 = vmatprep.subr.mxu0 0.0
        %3721 = vmatpush1.xpose.msra.mxu0 0.0
        %3722 = vmatprep.subr.mxu0 0.0
        %3723 = vmatpush1.xpose.msra.mxu0 0.0
        %3724 = vmatprep.subr.mxu0 0.0
        %3725 = vmatpush1.xpose.msra.mxu0 0.0
        %3726 = vmatprep.subr.mxu0 0.0
        %3727 = vmatpush1.xpose.msra.mxu0 0.0
        %3728 = vmatprep.mubr.f32.mxu0 0.0
        %3729 = vmatmul.mubr.f32.gmra.mrb[0].mxu0 %v3656
        %v3730 = vpop.f32.mrb[0].mxu0
        %v3731 = vadd.f32 0.0, %v3730
        %v3732 = vpop.f32.mrb[0].mxu0
        %3733 = vdwg.mxu0
        %v3735 = vsel %vm1650, %v2891, 0
        %v3738 = vsel %vm1650, %v3187, 0
        %v3741 = vsel %vm1650, %v3192, 0
        %3743 = vmatprep.subr.mxu0 0.0
        %3744 = vmatpush1.xpose.msra.mxu0 %v3738
        %3745 = vmatprep.subr.mxu0 0.0
        %3746 = vmatpush1.xpose.msra.mxu0 %v3741
        %3747 = vmatprep.subr.mxu0 0.0
        %3748 = vmatpush1.xpose.msra.mxu0 0.0
        %3749 = vmatprep.subr.mxu0 0.0
        %3750 = vmatpush1.xpose.msra.mxu0 0.0
        %3751 = vmatprep.subr.mxu0 0.0
        %3752 = vmatpush1.xpose.msra.mxu0 0.0
        %3753 = vmatprep.subr.mxu0 0.0
        %3754 = vmatpush1.xpose.msra.mxu0 0.0
        %3755 = vmatprep.subr.mxu0 0.0
        %3756 = vmatpush1.xpose.msra.mxu0 0.0
        %3757 = vmatprep.subr.mxu0 0.0
        %3758 = vmatpush1.xpose.msra.mxu0 0.0
        %3759 = vmatprep.subr.mxu0 0.0
        %3760 = vmatpush1.xpose.msra.mxu0 0.0
        %3761 = vmatprep.subr.mxu0 0.0
        %3762 = vmatpush1.xpose.msra.mxu0 0.0
        %3763 = vmatprep.subr.mxu0 0.0
        %3764 = vmatpush1.xpose.msra.mxu0 0.0
        %3765 = vmatprep.subr.mxu0 0.0
        %3766 = vmatpush1.xpose.msra.mxu0 0.0
        %3767 = vmatprep.subr.mxu0 0.0
        %3768 = vmatpush1.xpose.msra.mxu0 0.0
        %3769 = vmatprep.subr.mxu0 0.0
        %3770 = vmatpush1.xpose.msra.mxu0 0.0
        %3771 = vmatprep.subr.mxu0 0.0
        %3772 = vmatpush1.xpose.msra.mxu0 0.0
        %3773 = vmatprep.subr.mxu0 0.0
        %3774 = vmatpush1.xpose.msra.mxu0 0.0
        %3775 = vmatprep.subr.mxu0 0.0
        %3776 = vmatpush1.xpose.msra.mxu0 0.0
        %3777 = vmatprep.subr.mxu0 0.0
        %3778 = vmatpush1.xpose.msra.mxu0 0.0
        %3779 = vmatprep.subr.mxu0 0.0
        %3780 = vmatpush1.xpose.msra.mxu0 0.0
        %3781 = vmatprep.subr.mxu0 0.0
        %3782 = vmatpush1.xpose.msra.mxu0 0.0
        %3783 = vmatprep.subr.mxu0 0.0
        %3784 = vmatpush1.xpose.msra.mxu0 0.0
        %3785 = vmatprep.subr.mxu0 0.0
        %3786 = vmatpush1.xpose.msra.mxu0 0.0
        %3787 = vmatprep.subr.mxu0 0.0
        %3788 = vmatpush1.xpose.msra.mxu0 0.0
        %3789 = vmatprep.subr.mxu0 0.0
        %3790 = vmatpush1.xpose.msra.mxu0 0.0
        %3791 = vmatprep.subr.mxu0 0.0
        %3792 = vmatpush1.xpose.msra.mxu0 0.0
        %3793 = vmatprep.subr.mxu0 0.0
        %3794 = vmatpush1.xpose.msra.mxu0 0.0
        %3795 = vmatprep.subr.mxu0 0.0
        %3796 = vmatpush1.xpose.msra.mxu0 0.0
        %3797 = vmatprep.subr.mxu0 0.0
        %3798 = vmatpush1.xpose.msra.mxu0 0.0
        %3799 = vmatprep.subr.mxu0 0.0
        %3800 = vmatpush1.xpose.msra.mxu0 0.0
        %3801 = vmatprep.subr.mxu0 0.0
        %3802 = vmatpush1.xpose.msra.mxu0 0.0
        %3803 = vmatprep.subr.mxu0 0.0
        %3804 = vmatpush1.xpose.msra.mxu0 0.0
        %3805 = vmatprep.subr.mxu0 0.0
        %3806 = vmatpush1.xpose.msra.mxu0 0.0
        %3807 = vmatprep.mubr.f32.mxu0 0.0
        %3808 = vmatmul.mubr.f32.gmra.mrb[0].mxu0 %v3735
        %v3809 = vpop.f32.mrb[0].mxu0
        %v3810 = vadd.f32 0.0, %v3809
        %v3811 = vpop.f32.mrb[0].mxu0
        %3812 = vdwg.mxu0
        %v3814 = vsel %vm1650, %v2961, 0
        %v3817 = vsel %vm1650, %v3262, 0
        %v3820 = vsel %vm1650, %v3267, 0
        %3822 = vmatprep.subr.mxu0 0.0
        %3823 = vmatpush1.xpose.msra.mxu0 %v3817
        %3824 = vmatprep.subr.mxu0 0.0
        %3825 = vmatpush1.xpose.msra.mxu0 %v3820
        %3826 = vmatprep.subr.mxu0 0.0
        %3827 = vmatpush1.xpose.msra.mxu0 0.0
        %3828 = vmatprep.subr.mxu0 0.0
        %3829 = vmatpush1.xpose.msra.mxu0 0.0
        %3830 = vmatprep.subr.mxu0 0.0
        %3831 = vmatpush1.xpose.msra.mxu0 0.0
        %3832 = vmatprep.subr.mxu0 0.0
        %3833 = vmatpush1.xpose.msra.mxu0 0.0
        %3834 = vmatprep.subr.mxu0 0.0
        %3835 = vmatpush1.xpose.msra.mxu0 0.0
        %3836 = vmatprep.subr.mxu0 0.0
        %3837 = vmatpush1.xpose.msra.mxu0 0.0
        %3838 = vmatprep.subr.mxu0 0.0
        %3839 = vmatpush1.xpose.msra.mxu0 0.0
        %3840 = vmatprep.subr.mxu0 0.0
        %3841 = vmatpush1.xpose.msra.mxu0 0.0
        %3842 = vmatprep.subr.mxu0 0.0
        %3843 = vmatpush1.xpose.msra.mxu0 0.0
        %3844 = vmatprep.subr.mxu0 0.0
        %3845 = vmatpush1.xpose.msra.mxu0 0.0
        %3846 = vmatprep.subr.mxu0 0.0
        %3847 = vmatpush1.xpose.msra.mxu0 0.0
        %3848 = vmatprep.subr.mxu0 0.0
        %3849 = vmatpush1.xpose.msra.mxu0 0.0
        %3850 = vmatprep.subr.mxu0 0.0
        %3851 = vmatpush1.xpose.msra.mxu0 0.0
        %3852 = vmatprep.subr.mxu0 0.0
        %3853 = vmatpush1.xpose.msra.mxu0 0.0
        %3854 = vmatprep.subr.mxu0 0.0
        %3855 = vmatpush1.xpose.msra.mxu0 0.0
        %3856 = vmatprep.subr.mxu0 0.0
        %3857 = vmatpush1.xpose.msra.mxu0 0.0
        %3858 = vmatprep.subr.mxu0 0.0
        %3859 = vmatpush1.xpose.msra.mxu0 0.0
        %3860 = vmatprep.subr.mxu0 0.0
        %3861 = vmatpush1.xpose.msra.mxu0 0.0
        %3862 = vmatprep.subr.mxu0 0.0
        %3863 = vmatpush1.xpose.msra.mxu0 0.0
        %3864 = vmatprep.subr.mxu0 0.0
        %3865 = vmatpush1.xpose.msra.mxu0 0.0
        %3866 = vmatprep.subr.mxu0 0.0
        %3867 = vmatpush1.xpose.msra.mxu0 0.0
        %3868 = vmatprep.subr.mxu0 0.0
        %3869 = vmatpush1.xpose.msra.mxu0 0.0
        %3870 = vmatprep.subr.mxu0 0.0
        %3871 = vmatpush1.xpose.msra.mxu0 0.0
        %3872 = vmatprep.subr.mxu0 0.0
        %3873 = vmatpush1.xpose.msra.mxu0 0.0
        %3874 = vmatprep.subr.mxu0 0.0
        %3875 = vmatpush1.xpose.msra.mxu0 0.0
        %3876 = vmatprep.subr.mxu0 0.0
        %3877 = vmatpush1.xpose.msra.mxu0 0.0
        %3878 = vmatprep.subr.mxu0 0.0
        %3879 = vmatpush1.xpose.msra.mxu0 0.0
        %3880 = vmatprep.subr.mxu0 0.0
        %3881 = vmatpush1.xpose.msra.mxu0 0.0
        %3882 = vmatprep.subr.mxu0 0.0
        %3883 = vmatpush1.xpose.msra.mxu0 0.0
        %3884 = vmatprep.subr.mxu0 0.0
        %3885 = vmatpush1.xpose.msra.mxu0 0.0
        %3886 = vmatprep.mubr.f32.mxu0 0.0
        %3887 = vmatmul.mubr.f32.gmra.mrb[0].mxu0 %v3814
        %v3888 = vpop.f32.mrb[0].mxu0
        %v3889 = vadd.f32 0.0, %v3888
        %v3890 = vpop.f32.mrb[0].mxu0
        %3891 = vdwg.mxu0
        %vm3892 = vcmask 130048
        %v3893 = vsel %vm3892, %v3652, -inf
        %3894 = vmax.xlane.f32.xlu0 %v3893
        %v3895 = vpop.xlane.xlu0 %3894
        %v3896 = vsel %vm3892, %v3731, -inf
        %3897 = vmax.xlane.f32.xlu0 %v3896
        %v3898 = vpop.xlane.xlu0 %3897
        %v3899 = vsel %vm3892, %v3810, -inf
        %3900 = vmax.xlane.f32.xlu0 %v3899
        %v3901 = vpop.xlane.xlu0 %3900
        %v3902 = vsel %vm3892, %v3889, -inf
        %3903 = vmax.xlane.f32.xlu0 %v3902
        %v3904 = vpop.xlane.xlu0 %3903
        %v3905 = vsub.f32 %v3652, %v3895
        %v3906 = vsub.f32 %v3731, %v3898
        %v3907 = vsub.f32 %v3810, %v3901
        %v3908 = vsub.f32 %v3889, %v3904
        %v3909 = vmul.f32 %v3905, 1.442695
        %v3910 = vpow.pop %v3909
        %v3911 = vmul.f32 %v3906, 1.442695
        %v3912 = vpow.pop %v3911
        %v3913 = vmul.f32 %v3907, 1.442695
        %v3914 = vpow.pop %v3913
        %v3915 = vmul.f32 %v3908, 1.442695
        %v3916 = vpow.pop %v3915
        %v3917 = vsel %vm3892, %v3910, 0.0
        %3918 = vadd.xlane.f32.xlu0 %v3917
        %v3919 = vpop.xlane.xlu0 %3918
        %v3920 = vsel %vm3892, %v3912, 0.0
        %3921 = vadd.xlane.f32.xlu0 %v3920
        %v3922 = vpop.xlane.xlu0 %3921
        %v3923 = vsel %vm3892, %v3914, 0.0
        %3924 = vadd.xlane.f32.xlu0 %v3923
        %v3925 = vpop.xlane.xlu0 %3924
        %v3926 = vsel %vm3892, %v3916, 0.0
        %3927 = vadd.xlane.f32.xlu0 %v3926
        %v3928 = vpop.xlane.xlu0 %3927
        %v3929 = vrcp.pop %v3919
        %v3930 = vrcp.pop %v3922
        %v3931 = vrcp.pop %v3925
        %v3932 = vrcp.pop %v3928
        %v3933 = vmul.f32 %v3910, %v3929
        %v3934 = vmul.f32 %v3912, %v3930
        %v3935 = vmul.f32 %v3914, %v3931
        %v3936 = vmul.f32 %v3916, %v3932
        %v3938 = vsel %vm3892, %v3933, 0
        %3940 = vmatprep.subr.mxu0 0.0
        %3941 = vmatpush1.msra.mxu0 %v3343
        %3942 = vmatprep.subr.mxu0 0.0
        %3943 = vmatpush1.msra.mxu0 %v3348
        %3944 = vmatprep.subr.mxu0 0.0
        %3945 = vmatpush1.msra.mxu0 0.0
        %3946 = vmatprep.subr.mxu0 0.0
        %3947 = vmatpush1.msra.mxu0 0.0
        %3948 = vmatprep.subr.mxu0 0.0
        %3949 = vmatpush1.msra.mxu0 0.0
        %3950 = vmatprep.subr.mxu0 0.0
        %3951 = vmatpush1.msra.mxu0 0.0
        %3952 = vmatprep.subr.mxu0 0.0
        %3953 = vmatpush1.msra.mxu0 0.0
        %3954 = vmatprep.subr.mxu0 0.0
        %3955 = vmatpush1.msra.mxu0 0.0
        %3956 = vmatprep.subr.mxu0 0.0
        %3957 = vmatpush1.msra.mxu0 0.0
        %3958 = vmatprep.subr.mxu0 0.0
        %3959 = vmatpush1.msra.mxu0 0.0
        %3960 = vmatprep.subr.mxu0 0.0
        %3961 = vmatpush1.msra.mxu0 0.0
        %3962 = vmatprep.subr.mxu0 0.0
        %3963 = vmatpush1.msra.mxu0 0.0
        %3964 = vmatprep.subr.mxu0 0.0
        %3965 = vmatpush1.msra.mxu0 0.0
        %3966 = vmatprep.subr.mxu0 0.0
        %3967 = vmatpush1.msra.mxu0 0.0
        %3968 = vmatprep.subr.mxu0 0.0
        %3969 = vmatpush1.msra.mxu0 0.0
        %3970 = vmatprep.subr.mxu0 0.0
        %3971 = vmatpush1.msra.mxu0 0.0
        %3972 = vmatprep.subr.mxu0 0.0
        %3973 = vmatpush1.msra.mxu0 0.0
        %3974 = vmatprep.subr.mxu0 0.0
        %3975 = vmatpush1.msra.mxu0 0.0
        %3976 = vmatprep.subr.mxu0 0.0
        %3977 = vmatpush1.msra.mxu0 0.0
        %3978 = vmatprep.subr.mxu0 0.0
        %3979 = vmatpush1.msra.mxu0 0.0
        %3980 = vmatprep.subr.mxu0 0.0
        %3981 = vmatpush1.msra.mxu0 0.0
        %3982 = vmatprep.subr.mxu0 0.0
        %3983 = vmatpush1.msra.mxu0 0.0
        %3984 = vmatprep.subr.mxu0 0.0
        %3985 = vmatpush1.msra.mxu0 0.0
        %3986 = vmatprep.subr.mxu0 0.0
        %3987 = vmatpush1.msra.mxu0 0.0
        %3988 = vmatprep.subr.mxu0 0.0
        %3989 = vmatpush1.msra.mxu0 0.0
        %3990 = vmatprep.subr.mxu0 0.0
        %3991 = vmatpush1.msra.mxu0 0.0
        %3992 = vmatprep.subr.mxu0 0.0
        %3993 = vmatpush1.msra.mxu0 0.0
        %3994 = vmatprep.subr.mxu0 0.0
        %3995 = vmatpush1.msra.mxu0 0.0
        %3996 = vmatprep.subr.mxu0 0.0
        %3997 = vmatpush1.msra.mxu0 0.0
        %3998 = vmatprep.subr.mxu0 0.0
        %3999 = vmatpush1.msra.mxu0 0.0
        %4000 = vmatprep.subr.mxu0 0.0
        %4001 = vmatpush1.msra.mxu0 0.0
        %4002 = vmatprep.subr.mxu0 0.0
        %4003 = vmatpush1.msra.mxu0 0.0
        %4004 = vmatprep.mubr.f32.mxu0 0.0
        %4005 = vmatmul.mubr.f32.gmra.mrb[0].mxu0 %v3938
        %v4006 = vpop.f32.mrb[0].mxu0
        %v4007 = vadd.f32 0.0, %v4006
        %v4008 = vpop.f32.mrb[0].mxu0
        %4009 = vdwg.mxu0
        %v4011 = vsel %vm3892, %v3934, 0
        %4013 = vmatprep.subr.mxu0 0.0
        %4014 = vmatpush1.msra.mxu0 %v3418
        %4015 = vmatprep.subr.mxu0 0.0
        %4016 = vmatpush1.msra.mxu0 %v3423
        %4017 = vmatprep.subr.mxu0 0.0
        %4018 = vmatpush1.msra.mxu0 0.0
        %4019 = vmatprep.subr.mxu0 0.0
        %4020 = vmatpush1.msra.mxu0 0.0
        %4021 = vmatprep.subr.mxu0 0.0
        %4022 = vmatpush1.msra.mxu0 0.0
        %4023 = vmatprep.subr.mxu0 0.0
        %4024 = vmatpush1.msra.mxu0 0.0
        %4025 = vmatprep.subr.mxu0 0.0
        %4026 = vmatpush1.msra.mxu0 0.0
        %4027 = vmatprep.subr.mxu0 0.0
        %4028 = vmatpush1.msra.mxu0 0.0
        %4029 = vmatprep.subr.mxu0 0.0
        %4030 = vmatpush1.msra.mxu0 0.0
        %4031 = vmatprep.subr.mxu0 0.0
        %4032 = vmatpush1.msra.mxu0 0.0
        %4033 = vmatprep.subr.mxu0 0.0
        %4034 = vmatpush1.msra.mxu0 0.0
        %4035 = vmatprep.subr.mxu0 0.0
        %4036 = vmatpush1.msra.mxu0 0.0
        %4037 = vmatprep.subr.mxu0 0.0
        %4038 = vmatpush1.msra.mxu0 0.0
        %4039 = vmatprep.subr.mxu0 0.0
        %4040 = vmatpush1.msra.mxu0 0.0
        %4041 = vmatprep.subr.mxu0 0.0
        %4042 = vmatpush1.msra.mxu0 0.0
        %4043 = vmatprep.subr.mxu0 0.0
        %4044 = vmatpush1.msra.mxu0 0.0
        %4045 = vmatprep.subr.mxu0 0.0
        %4046 = vmatpush1.msra.mxu0 0.0
        %4047 = vmatprep.subr.mxu0 0.0
        %4048 = vmatpush1.msra.mxu0 0.0
        %4049 = vmatprep.subr.mxu0 0.0
        %4050 = vmatpush1.msra.mxu0 0.0
        %4051 = vmatprep.subr.mxu0 0.0
        %4052 = vmatpush1.msra.mxu0 0.0
        %4053 = vmatprep.subr.mxu0 0.0
        %4054 = vmatpush1.msra.mxu0 0.0
        %4055 = vmatprep.subr.mxu0 0.0
        %4056 = vmatpush1.msra.mxu0 0.0
        %4057 = vmatprep.subr.mxu0 0.0
        %4058 = vmatpush1.msra.mxu0 0.0
        %4059 = vmatprep.subr.mxu0 0.0
        %4060 = vmatpush1.msra.mxu0 0.0
        %4061 = vmatprep.subr.mxu0 0.0
        %4062 = vmatpush1.msra.mxu0 0.0
        %4063 = vmatprep.subr.mxu0 0.0
        %4064 = vmatpush1.msra.mxu0 0.0
        %4065 = vmatprep.subr.mxu0 0.0
        %4066 = vmatpush1.msra.mxu0 0.0
        %4067 = vmatprep.subr.mxu0 0.0
        %4068 = vmatpush1.msra.mxu0 0.0
        %4069 = vmatprep.subr.mxu0 0.0
        %4070 = vmatpush1.msra.mxu0 0.0
        %4071 = vmatprep.subr.mxu0 0.0
        %4072 = vmatpush1.msra.mxu0 0.0
        %4073 = vmatprep.subr.mxu0 0.0
        %4074 = vmatpush1.msra.mxu0 0.0
        %4075 = vmatprep.subr.mxu0 0.0
        %4076 = vmatpush1.msra.mxu0 0.0
        %4077 = vmatprep.mubr.f32.mxu0 0.0
        %4078 = vmatmul.mubr.f32.gmra.mrb[0].mxu0 %v4011
        %v4079 = vpop.f32.mrb[0].mxu0
        %v4080 = vadd.f32 0.0, %v4079
        %v4081 = vpop.f32.mrb[0].mxu0
        %4082 = vdwg.mxu0
        %v4084 = vsel %vm3892, %v3935, 0
        %4086 = vmatprep.subr.mxu0 0.0
        %4087 = vmatpush1.msra.mxu0 %v3493
        %4088 = vmatprep.subr.mxu0 0.0
        %4089 = vmatpush1.msra.mxu0 %v3498
        %4090 = vmatprep.subr.mxu0 0.0
        %4091 = vmatpush1.msra.mxu0 0.0
        %4092 = vmatprep.subr.mxu0 0.0
        %4093 = vmatpush1.msra.mxu0 0.0
        %4094 = vmatprep.subr.mxu0 0.0
        %4095 = vmatpush1.msra.mxu0 0.0
        %4096 = vmatprep.subr.mxu0 0.0
        %4097 = vmatpush1.msra.mxu0 0.0
        %4098 = vmatprep.subr.mxu0 0.0
        %4099 = vmatpush1.msra.mxu0 0.0
        %4100 = vmatprep.subr.mxu0 0.0
        %4101 = vmatpush1.msra.mxu0 0.0
        %4102 = vmatprep.subr.mxu0 0.0
        %4103 = vmatpush1.msra.mxu0 0.0
        %4104 = vmatprep.subr.mxu0 0.0
        %4105 = vmatpush1.msra.mxu0 0.0
        %4106 = vmatprep.subr.mxu0 0.0
        %4107 = vmatpush1.msra.mxu0 0.0
        %4108 = vmatprep.subr.mxu0 0.0
        %4109 = vmatpush1.msra.mxu0 0.0
        %4110 = vmatprep.subr.mxu0 0.0
        %4111 = vmatpush1.msra.mxu0 0.0
        %4112 = vmatprep.subr.mxu0 0.0
        %4113 = vmatpush1.msra.mxu0 0.0
        %4114 = vmatprep.subr.mxu0 0.0
        %4115 = vmatpush1.msra.mxu0 0.0
        %4116 = vmatprep.subr.mxu0 0.0
        %4117 = vmatpush1.msra.mxu0 0.0
        %4118 = vmatprep.subr.mxu0 0.0
        %4119 = vmatpush1.msra.mxu0 0.0
        %4120 = vmatprep.subr.mxu0 0.0
        %4121 = vmatpush1.msra.mxu0 0.0
        %4122 = vmatprep.subr.mxu0 0.0
        %4123 = vmatpush1.msra.mxu0 0.0
        %4124 = vmatprep.subr.mxu0 0.0
        %4125 = vmatpush1.msra.mxu0 0.0
        %4126 = vmatprep.subr.mxu0 0.0
        %4127 = vmatpush1.msra.mxu0 0.0
        %4128 = vmatprep.subr.mxu0 0.0
        %4129 = vmatpush1.msra.mxu0 0.0
        %4130 = vmatprep.subr.mxu0 0.0
        %4131 = vmatpush1.msra.mxu0 0.0
        %4132 = vmatprep.subr.mxu0 0.0
        %4133 = vmatpush1.msra.mxu0 0.0
        %4134 = vmatprep.subr.mxu0 0.0
        %4135 = vmatpush1.msra.mxu0 0.0
        %4136 = vmatprep.subr.mxu0 0.0
        %4137 = vmatpush1.msra.mxu0 0.0
        %4138 = vmatprep.subr.mxu0 0.0
        %4139 = vmatpush1.msra.mxu0 0.0
        %4140 = vmatprep.subr.mxu0 0.0
        %4141 = vmatpush1.msra.mxu0 0.0
        %4142 = vmatprep.subr.mxu0 0.0
        %4143 = vmatpush1.msra.mxu0 0.0
        %4144 = vmatprep.subr.mxu0 0.0
        %4145 = vmatpush1.msra.mxu0 0.0
        %4146 = vmatprep.subr.mxu0 0.0
        %4147 = vmatpush1.msra.mxu0 0.0
        %4148 = vmatprep.subr.mxu0 0.0
        %4149 = vmatpush1.msra.mxu0 0.0
        %4150 = vmatprep.mubr.f32.mxu0 0.0
        %4151 = vmatmul.mubr.f32.gmra.mrb[0].mxu0 %v4084
        %v4152 = vpop.f32.mrb[0].mxu0
        %v4153 = vadd.f32 0.0, %v4152
        %v4154 = vpop.f32.mrb[0].mxu0
        %4155 = vdwg.mxu0
        %v4157 = vsel %vm3892, %v3936, 0
        %4159 = vmatprep.subr.mxu0 0.0
        %4160 = vmatpush1.msra.mxu0 %v3568
        %4161 = vmatprep.subr.mxu0 0.0
        %4162 = vmatpush1.msra.mxu0 %v3573
        %4163 = vmatprep.subr.mxu0 0.0
        %4164 = vmatpush1.msra.mxu0 0.0
        %4165 = vmatprep.subr.mxu0 0.0
        %4166 = vmatpush1.msra.mxu0 0.0
        %4167 = vmatprep.subr.mxu0 0.0
        %4168 = vmatpush1.msra.mxu0 0.0
        %4169 = vmatprep.subr.mxu0 0.0
        %4170 = vmatpush1.msra.mxu0 0.0
        %4171 = vmatprep.subr.mxu0 0.0
        %4172 = vmatpush1.msra.mxu0 0.0
        %4173 = vmatprep.subr.mxu0 0.0
        %4174 = vmatpush1.msra.mxu0 0.0
        %4175 = vmatprep.subr.mxu0 0.0
        %4176 = vmatpush1.msra.mxu0 0.0
        %4177 = vmatprep.subr.mxu0 0.0
        %4178 = vmatpush1.msra.mxu0 0.0
        %4179 = vmatprep.subr.mxu0 0.0
        %4180 = vmatpush1.msra.mxu0 0.0
        %4181 = vmatprep.subr.mxu0 0.0
        %4182 = vmatpush1.msra.mxu0 0.0
        %4183 = vmatprep.subr.mxu0 0.0
        %4184 = vmatpush1.msra.mxu0 0.0
        %4185 = vmatprep.subr.mxu0 0.0
        %4186 = vmatpush1.msra.mxu0 0.0
        %4187 = vmatprep.subr.mxu0 0.0
        %4188 = vmatpush1.msra.mxu0 0.0
        %4189 = vmatprep.subr.mxu0 0.0
        %4190 = vmatpush1.msra.mxu0 0.0
        %4191 = vmatprep.subr.mxu0 0.0
        %4192 = vmatpush1.msra.mxu0 0.0
        %4193 = vmatprep.subr.mxu0 0.0
        %4194 = vmatpush1.msra.mxu0 0.0
        %4195 = vmatprep.subr.mxu0 0.0
        %4196 = vmatpush1.msra.mxu0 0.0
        %4197 = vmatprep.subr.mxu0 0.0
        %4198 = vmatpush1.msra.mxu0 0.0
        %4199 = vmatprep.subr.mxu0 0.0
        %4200 = vmatpush1.msra.mxu0 0.0
        %4201 = vmatprep.subr.mxu0 0.0
        %4202 = vmatpush1.msra.mxu0 0.0
        %4203 = vmatprep.subr.mxu0 0.0
        %4204 = vmatpush1.msra.mxu0 0.0
        %4205 = vmatprep.subr.mxu0 0.0
        %4206 = vmatpush1.msra.mxu0 0.0
        %4207 = vmatprep.subr.mxu0 0.0
        %4208 = vmatpush1.msra.mxu0 0.0
        %4209 = vmatprep.subr.mxu0 0.0
        %4210 = vmatpush1.msra.mxu0 0.0
        %4211 = vmatprep.subr.mxu0 0.0
        %4212 = vmatpush1.msra.mxu0 0.0
        %4213 = vmatprep.subr.mxu0 0.0
        %4214 = vmatpush1.msra.mxu0 0.0
        %4215 = vmatprep.subr.mxu0 0.0
        %4216 = vmatpush1.msra.mxu0 0.0
        %4217 = vmatprep.subr.mxu0 0.0
        %4218 = vmatpush1.msra.mxu0 0.0
        %4219 = vmatprep.subr.mxu0 0.0
        %4220 = vmatpush1.msra.mxu0 0.0
        %4221 = vmatprep.subr.mxu0 0.0
        %4222 = vmatpush1.msra.mxu0 0.0
        %4223 = vmatprep.mubr.f32.mxu0 0.0
        %4224 = vmatmul.mubr.f32.gmra.mrb[0].mxu0 %v4157
        %v4225 = vpop.f32.mrb[0].mxu0
        %v4226 = vadd.f32 0.0, %v4225
        %v4227 = vpop.f32.mrb[0].mxu0
        %4228 = vdwg.mxu0
        %v4230 = vsel %vm1650, %v4007, 0
        %4232 = vmatprep.subr.mxu0 0.0
        %4233 = vmatpush1.msra.mxu0 %v2676
        %4234 = vmatprep.subr.mxu0 0.0
        %4235 = vmatpush1.msra.mxu0 0.0
        %4236 = vmatprep.subr.mxu0 0.0
        %4237 = vmatpush1.msra.mxu0 0.0
        %4238 = vmatprep.subr.mxu0 0.0
        %4239 = vmatpush1.msra.mxu0 0.0
        %4240 = vmatprep.subr.mxu0 0.0
        %4241 = vmatpush1.msra.mxu0 0.0
        %4242 = vmatprep.subr.mxu0 0.0
        %4243 = vmatpush1.msra.mxu0 0.0
        %4244 = vmatprep.subr.mxu0 0.0
        %4245 = vmatpush1.msra.mxu0 0.0
        %4246 = vmatprep.subr.mxu0 0.0
        %4247 = vmatpush1.msra.mxu0 0.0
        %4248 = vmatprep.subr.mxu0 0.0
        %4249 = vmatpush1.msra.mxu0 0.0
        %4250 = vmatprep.subr.mxu0 0.0
        %4251 = vmatpush1.msra.mxu0 0.0
        %4252 = vmatprep.subr.mxu0 0.0
        %4253 = vmatpush1.msra.mxu0 0.0
        %4254 = vmatprep.subr.mxu0 0.0
        %4255 = vmatpush1.msra.mxu0 0.0
        %4256 = vmatprep.subr.mxu0 0.0
        %4257 = vmatpush1.msra.mxu0 0.0
        %4258 = vmatprep.subr.mxu0 0.0
        %4259 = vmatpush1.msra.mxu0 0.0
        %4260 = vmatprep.subr.mxu0 0.0
        %4261 = vmatpush1.msra.mxu0 0.0
        %4262 = vmatprep.subr.mxu0 0.0
        %4263 = vmatpush1.msra.mxu0 0.0
        %4264 = vmatprep.subr.mxu0 0.0
        %4265 = vmatpush1.msra.mxu0 0.0
        %4266 = vmatprep.subr.mxu0 0.0
        %4267 = vmatpush1.msra.mxu0 0.0
        %4268 = vmatprep.subr.mxu0 0.0
        %4269 = vmatpush1.msra.mxu0 0.0
        %4270 = vmatprep.subr.mxu0 0.0
        %4271 = vmatpush1.msra.mxu0 0.0
        %4272 = vmatprep.subr.mxu0 0.0
        %4273 = vmatpush1.msra.mxu0 0.0
        %4274 = vmatprep.subr.mxu0 0.0
        %4275 = vmatpush1.msra.mxu0 0.0
        %4276 = vmatprep.subr.mxu0 0.0
        %4277 = vmatpush1.msra.mxu0 0.0
        %4278 = vmatprep.subr.mxu0 0.0
        %4279 = vmatpush1.msra.mxu0 0.0
        %4280 = vmatprep.subr.mxu0 0.0
        %4281 = vmatpush1.msra.mxu0 0.0
        %4282 = vmatprep.subr.mxu0 0.0
        %4283 = vmatpush1.msra.mxu0 0.0
        %4284 = vmatprep.subr.mxu0 0.0
        %4285 = vmatpush1.msra.mxu0 0.0
        %4286 = vmatprep.subr.mxu0 0.0
        %4287 = vmatpush1.msra.mxu0 0.0
        %4288 = vmatprep.subr.mxu0 0.0
        %4289 = vmatpush1.msra.mxu0 0.0
        %4290 = vmatprep.subr.mxu0 0.0
        %4291 = vmatpush1.msra.mxu0 0.0
        %4292 = vmatprep.subr.mxu0 0.0
        %4293 = vmatpush1.msra.mxu0 0.0
        %4294 = vmatprep.subr.mxu0 0.0
        %4295 = vmatpush1.msra.mxu0 0.0
        %4296 = vmatprep.mubr.f32.mxu0 0.0
        %4297 = vmatmul.mubr.f32.gmra.mrb[0].mxu0 %v4230
        %v4298 = vpop.f32.mrb[0].mxu0
        %v4299 = vadd.f32 0.0, %v4298
        %v4300 = vpop.f32.mrb[0].mxu0
        %4301 = vdwg.mxu0
        %v4303 = vsel %vm1650, %v4080, 0
        %4305 = vmatprep.subr.mxu0 0.0
        %4306 = vmatpush1.msra.mxu0 %v2677
        %4307 = vmatprep.subr.mxu0 0.0
        %4308 = vmatpush1.msra.mxu0 0.0
        %4309 = vmatprep.subr.mxu0 0.0
        %4310 = vmatpush1.msra.mxu0 0.0
        %4311 = vmatprep.subr.mxu0 0.0
        %4312 = vmatpush1.msra.mxu0 0.0
        %4313 = vmatprep.subr.mxu0 0.0
        %4314 = vmatpush1.msra.mxu0 0.0
        %4315 = vmatprep.subr.mxu0 0.0
        %4316 = vmatpush1.msra.mxu0 0.0
        %4317 = vmatprep.subr.mxu0 0.0
        %4318 = vmatpush1.msra.mxu0 0.0
        %4319 = vmatprep.subr.mxu0 0.0
        %4320 = vmatpush1.msra.mxu0 0.0
        %4321 = vmatprep.subr.mxu0 0.0
        %4322 = vmatpush1.msra.mxu0 0.0
        %4323 = vmatprep.subr.mxu0 0.0
        %4324 = vmatpush1.msra.mxu0 0.0
        %4325 = vmatprep.subr.mxu0 0.0
        %4326 = vmatpush1.msra.mxu0 0.0
        %4327 = vmatprep.subr.mxu0 0.0
        %4328 = vmatpush1.msra.mxu0 0.0
        %4329 = vmatprep.subr.mxu0 0.0
        %4330 = vmatpush1.msra.mxu0 0.0
        %4331 = vmatprep.subr.mxu0 0.0
        %4332 = vmatpush1.msra.mxu0 0.0
        %4333 = vmatprep.subr.mxu0 0.0
        %4334 = vmatpush1.msra.mxu0 0.0
        %4335 = vmatprep.subr.mxu0 0.0
        %4336 = vmatpush1.msra.mxu0 0.0
        %4337 = vmatprep.subr.mxu0 0.0
        %4338 = vmatpush1.msra.mxu0 0.0
        %4339 = vmatprep.subr.mxu0 0.0
        %4340 = vmatpush1.msra.mxu0 0.0
        %4341 = vmatprep.subr.mxu0 0.0
        %4342 = vmatpush1.msra.mxu0 0.0
        %4343 = vmatprep.subr.mxu0 0.0
        %4344 = vmatpush1.msra.mxu0 0.0
        %4345 = vmatprep.subr.mxu0 0.0
        %4346 = vmatpush1.msra.mxu0 0.0
        %4347 = vmatprep.subr.mxu0 0.0
        %4348 = vmatpush1.msra.mxu0 0.0
        %4349 = vmatprep.subr.mxu0 0.0
        %4350 = vmatpush1.msra.mxu0 0.0
        %4351 = vmatprep.subr.mxu0 0.0
        %4352 = vmatpush1.msra.mxu0 0.0
        %4353 = vmatprep.subr.mxu0 0.0
        %4354 = vmatpush1.msra.mxu0 0.0
        %4355 = vmatprep.subr.mxu0 0.0
        %4356 = vmatpush1.msra.mxu0 0.0
        %4357 = vmatprep.subr.mxu0 0.0
        %4358 = vmatpush1.msra.mxu0 0.0
        %4359 = vmatprep.subr.mxu0 0.0
        %4360 = vmatpush1.msra.mxu0 0.0
        %4361 = vmatprep.subr.mxu0 0.0
        %4362 = vmatpush1.msra.mxu0 0.0
        %4363 = vmatprep.subr.mxu0 0.0
        %4364 = vmatpush1.msra.mxu0 0.0
        %4365 = vmatprep.subr.mxu0 0.0
        %4366 = vmatpush1.msra.mxu0 0.0
        %4367 = vmatprep.subr.mxu0 0.0
        %4368 = vmatpush1.msra.mxu0 0.0
        %4369 = vmatprep.mubr.f32.mxu0 0.0
        %4370 = vmatmul.mubr.f32.gmra.mrb[0].mxu0 %v4303
        %v4371 = vpop.f32.mrb[0].mxu0
        %v4372 = vadd.f32 0.0, %v4371
        %v4373 = vpop.f32.mrb[0].mxu0
        %4374 = vdwg.mxu0
        %v4376 = vsel %vm1650, %v4153, 0
        %4378 = vmatprep.subr.mxu0 0.0
        %4379 = vmatpush1.msra.mxu0 %v2678
        %4380 = vmatprep.subr.mxu0 0.0
        %4381 = vmatpush1.msra.mxu0 0.0
        %4382 = vmatprep.subr.mxu0 0.0
        %4383 = vmatpush1.msra.mxu0 0.0
        %4384 = vmatprep.subr.mxu0 0.0
        %4385 = vmatpush1.msra.mxu0 0.0
        %4386 = vmatprep.subr.mxu0 0.0
        %4387 = vmatpush1.msra.mxu0 0.0
        %4388 = vmatprep.subr.mxu0 0.0
        %4389 = vmatpush1.msra.mxu0 0.0
        %4390 = vmatprep.subr.mxu0 0.0
        %4391 = vmatpush1.msra.mxu0 0.0
        %4392 = vmatprep.subr.mxu0 0.0
        %4393 = vmatpush1.msra.mxu0 0.0
        %4394 = vmatprep.subr.mxu0 0.0
        %4395 = vmatpush1.msra.mxu0 0.0
        %4396 = vmatprep.subr.mxu0 0.0
        %4397 = vmatpush1.msra.mxu0 0.0
        %4398 = vmatprep.subr.mxu0 0.0
        %4399 = vmatpush1.msra.mxu0 0.0
        %4400 = vmatprep.subr.mxu0 0.0
        %4401 = vmatpush1.msra.mxu0 0.0
        %4402 = vmatprep.subr.mxu0 0.0
        %4403 = vmatpush1.msra.mxu0 0.0
        %4404 = vmatprep.subr.mxu0 0.0
        %4405 = vmatpush1.msra.mxu0 0.0
        %4406 = vmatprep.subr.mxu0 0.0
        %4407 = vmatpush1.msra.mxu0 0.0
        %4408 = vmatprep.subr.mxu0 0.0
        %4409 = vmatpush1.msra.mxu0 0.0
        %4410 = vmatprep.subr.mxu0 0.0
        %4411 = vmatpush1.msra.mxu0 0.0
        %4412 = vmatprep.subr.mxu0 0.0
        %4413 = vmatpush1.msra.mxu0 0.0
        %4414 = vmatprep.subr.mxu0 0.0
        %4415 = vmatpush1.msra.mxu0 0.0
        %4416 = vmatprep.subr.mxu0 0.0
        %4417 = vmatpush1.msra.mxu0 0.0
        %4418 = vmatprep.subr.mxu0 0.0
        %4419 = vmatpush1.msra.mxu0 0.0
        %4420 = vmatprep.subr.mxu0 0.0
        %4421 = vmatpush1.msra.mxu0 0.0
        %4422 = vmatprep.subr.mxu0 0.0
        %4423 = vmatpush1.msra.mxu0 0.0
        %4424 = vmatprep.subr.mxu0 0.0
        %4425 = vmatpush1.msra.mxu0 0.0
        %4426 = vmatprep.subr.mxu0 0.0
        %4427 = vmatpush1.msra.mxu0 0.0
        %4428 = vmatprep.subr.mxu0 0.0
        %4429 = vmatpush1.msra.mxu0 0.0
        %4430 = vmatprep.subr.mxu0 0.0
        %4431 = vmatpush1.msra.mxu0 0.0
        %4432 = vmatprep.subr.mxu0 0.0
        %4433 = vmatpush1.msra.mxu0 0.0
        %4434 = vmatprep.subr.mxu0 0.0
        %4435 = vmatpush1.msra.mxu0 0.0
        %4436 = vmatprep.subr.mxu0 0.0
        %4437 = vmatpush1.msra.mxu0 0.0
        %4438 = vmatprep.subr.mxu0 0.0
        %4439 = vmatpush1.msra.mxu0 0.0
        %4440 = vmatprep.subr.mxu0 0.0
        %4441 = vmatpush1.msra.mxu0 0.0
        %4442 = vmatprep.mubr.f32.mxu0 0.0
        %4443 = vmatmul.mubr.f32.gmra.mrb[0].mxu0 %v4376
        %v4444 = vpop.f32.mrb[0].mxu0
        %v4445 = vadd.f32 0.0, %v4444
        %v4446 = vpop.f32.mrb[0].mxu0
        %4447 = vdwg.mxu0
        %v4449 = vsel %vm1650, %v4226, 0
        %4451 = vmatprep.subr.mxu0 0.0
        %4452 = vmatpush1.msra.mxu0 %v2679
        %4453 = vmatprep.subr.mxu0 0.0
        %4454 = vmatpush1.msra.mxu0 0.0
        %4455 = vmatprep.subr.mxu0 0.0
        %4456 = vmatpush1.msra.mxu0 0.0
        %4457 = vmatprep.subr.mxu0 0.0
        %4458 = vmatpush1.msra.mxu0 0.0
        %4459 = vmatprep.subr.mxu0 0.0
        %4460 = vmatpush1.msra.mxu0 0.0
        %4461 = vmatprep.subr.mxu0 0.0
        %4462 = vmatpush1.msra.mxu0 0.0
        %4463 = vmatprep.subr.mxu0 0.0
        %4464 = vmatpush1.msra.mxu0 0.0
        %4465 = vmatprep.subr.mxu0 0.0
        %4466 = vmatpush1.msra.mxu0 0.0
        %4467 = vmatprep.subr.mxu0 0.0
        %4468 = vmatpush1.msra.mxu0 0.0
        %4469 = vmatprep.subr.mxu0 0.0
        %4470 = vmatpush1.msra.mxu0 0.0
        %4471 = vmatprep.subr.mxu0 0.0
        %4472 = vmatpush1.msra.mxu0 0.0
        %4473 = vmatprep.subr.mxu0 0.0
        %4474 = vmatpush1.msra.mxu0 0.0
        %4475 = vmatprep.subr.mxu0 0.0
        %4476 = vmatpush1.msra.mxu0 0.0
        %4477 = vmatprep.subr.mxu0 0.0
        %4478 = vmatpush1.msra.mxu0 0.0
        %4479 = vmatprep.subr.mxu0 0.0
        %4480 = vmatpush1.msra.mxu0 0.0
        %4481 = vmatprep.subr.mxu0 0.0
        %4482 = vmatpush1.msra.mxu0 0.0
        %4483 = vmatprep.subr.mxu0 0.0
        %4484 = vmatpush1.msra.mxu0 0.0
        %4485 = vmatprep.subr.mxu0 0.0
        %4486 = vmatpush1.msra.mxu0 0.0
        %4487 = vmatprep.subr.mxu0 0.0
        %4488 = vmatpush1.msra.mxu0 0.0
        %4489 = vmatprep.subr.mxu0 0.0
        %4490 = vmatpush1.msra.mxu0 0.0
        %4491 = vmatprep.subr.mxu0 0.0
        %4492 = vmatpush1.msra.mxu0 0.0
        %4493 = vmatprep.subr.mxu0 0.0
        %4494 = vmatpush1.msra.mxu0 0.0
        %4495 = vmatprep.subr.mxu0 0.0
        %4496 = vmatpush1.msra.mxu0 0.0
        %4497 = vmatprep.subr.mxu0 0.0
        %4498 = vmatpush1.msra.mxu0 0.0
        %4499 = vmatprep.subr.mxu0 0.0
        %4500 = vmatpush1.msra.mxu0 0.0
        %4501 = vmatprep.subr.mxu0 0.0
        %4502 = vmatpush1.msra.mxu0 0.0
        %4503 = vmatprep.subr.mxu0 0.0
        %4504 = vmatpush1.msra.mxu0 0.0
        %4505 = vmatprep.subr.mxu0 0.0
        %4506 = vmatpush1.msra.mxu0 0.0
        %4507 = vmatprep.subr.mxu0 0.0
        %4508 = vmatpush1.msra.mxu0 0.0
        %4509 = vmatprep.subr.mxu0 0.0
        %4510 = vmatpush1.msra.mxu0 0.0
        %4511 = vmatprep.subr.mxu0 0.0
        %4512 = vmatpush1.msra.mxu0 0.0
        %4513 = vmatprep.subr.mxu0 0.0
        %4514 = vmatpush1.msra.mxu0 0.0
        %4515 = vmatprep.mubr.f32.mxu0 0.0
        %4516 = vmatmul.mubr.f32.gmra.mrb[0].mxu0 %v4449
        %v4517 = vpop.f32.mrb[0].mxu0
        %v4518 = vadd.f32 0.0, %v4517
        %v4519 = vpop.f32.mrb[0].mxu0
        %4520 = vdwg.mxu0
        %v4521 = vsel %vm806, %v4299, 0.0
        %v4522 = vsel %vm806, %v4372, 0.0
        %v4523 = vadd.f32 %v4521, %v4522
        %v4524 = vsel %vm806, %v4445, 0.0
        %v4525 = vadd.f32 %v4523, %v4524
        %v4526 = vsel %vm806, %v4518, 0.0
        %v4527 = vadd.f32 %v4525, %v4526
        %v4529 = vlaneseq
        %v4530 = vshrl.u32 %v4529, 7
        %v4531 = vsub.s32 0, %v4530
        %v4532 = vrot.slane %v2680, %v4531
        %v4534 = vadd.f32 %v4527, %v4532
        %v4535 = vadd.f32 %v2626, %v4534
        %v4536 = vld [vmem:[%s19] sm:$0x1]
        %v4537 = vld [vmem:[%s20] sm:$0x1]
        %v4538 = vsel %vm806, %v4535, 0.0
        %4539 = vadd.xlane.f32.xlu0 %v4538
        %v4540 = vpop.xlane.xlu0 %4539
        %v4541 = vmul.f32 %v4540, %v2602
        %v4542 = vsub.f32 %v4535, %v4541
        %v4543 = vmul.f32 %v4542, %v4542
        %v4544 = vsel %vm806, %v4543, 0.0
        %4545 = vadd.xlane.f32.xlu0 %v4544
        %v4546 = vpop.xlane.xlu0 %4545
        %v4547 = vmul.f32 %v4546, %v2602
        %v4548 = vadd.f32 %v4547, 1e-05
        %v4549 = vrsqrt.pop %v4548
        %v4550 = vmul.f32 %v4542, %v4549
        %v4552 = vlaneseq
        %v4553 = vshrl.u32 %v4552, 7
        %v4554 = vsub.s32 0, %v4553
        %v4555 = vrot.slane %v4536, %v4554
        %v4557 = vmul.f32 %v4550, %v4555
        %v4559 = vlaneseq
        %v4560 = vshrl.u32 %v4559, 7
        %v4561 = vsub.s32 0, %v4560
        %v4562 = vrot.slane %v4537, %v4561
        %v4564 = vadd.f32 %v4557, %v4562
        %v4565 = vld [vmem:[%s13] sm:$0xff]
        %v4566 = vld [vmem:[%s13 + $0x8] sm:$0xff]
        %v4567 = vld [vmem:[%s13 + $0x10] sm:$0xff]
        %v4568 = vld [vmem:[%s13 + $0x18] sm:$0xff]
        %v4569 = vld [vmem:[%s14] sm:$0x1]
        %v4571 = vlaneseq
        %v4572 = vshrl.u32 %v4571, 7
        %v4573 = vsub.s32 0, %v4572
        %v4574 = vrot.slane %v4569, %v4573
        %v4577 = vsel %vm806, %v4564, 0
        %4579 = vmatprep.subr.mxu0 0.0
        %4580 = vmatpush1.msra.mxu0 %v4565
        %4581 = vmatprep.subr.mxu0 0.0
        %4582 = vmatpush1.msra.mxu0 %v4566
        %4583 = vmatprep.subr.mxu0 0.0
        %4584 = vmatpush1.msra.mxu0 %v4567
        %4585 = vmatprep.subr.mxu0 0.0
        %4586 = vmatpush1.msra.mxu0 %v4568
        %4587 = vmatprep.subr.mxu0 0.0
        %4588 = vmatpush1.msra.mxu0 0.0
        %4589 = vmatprep.subr.mxu0 0.0
        %4590 = vmatpush1.msra.mxu0 0.0
        %4591 = vmatprep.subr.mxu0 0.0
        %4592 = vmatpush1.msra.mxu0 0.0
        %4593 = vmatprep.subr.mxu0 0.0
        %4594 = vmatpush1.msra.mxu0 0.0
        %4595 = vmatprep.subr.mxu0 0.0
        %4596 = vmatpush1.msra.mxu0 0.0
        %4597 = vmatprep.subr.mxu0 0.0
        %4598 = vmatpush1.msra.mxu0 0.0
        %4599 = vmatprep.subr.mxu0 0.0
        %4600 = vmatpush1.msra.mxu0 0.0
        %4601 = vmatprep.subr.mxu0 0.0
        %4602 = vmatpush1.msra.mxu0 0.0
        %4603 = vmatprep.subr.mxu0 0.0
        %4604 = vmatpush1.msra.mxu0 0.0
        %4605 = vmatprep.subr.mxu0 0.0
        %4606 = vmatpush1.msra.mxu0 0.0
        %4607 = vmatprep.subr.mxu0 0.0
        %4608 = vmatpush1.msra.mxu0 0.0
        %4609 = vmatprep.subr.mxu0 0.0
        %4610 = vmatpush1.msra.mxu0 0.0
        %4611 = vmatprep.subr.mxu0 0.0
        %4612 = vmatpush1.msra.mxu0 0.0
        %4613 = vmatprep.subr.mxu0 0.0
        %4614 = vmatpush1.msra.mxu0 0.0
        %4615 = vmatprep.subr.mxu0 0.0
        %4616 = vmatpush1.msra.mxu0 0.0
        %4617 = vmatprep.subr.mxu0 0.0
        %4618 = vmatpush1.msra.mxu0 0.0
        %4619 = vmatprep.subr.mxu0 0.0
        %4620 = vmatpush1.msra.mxu0 0.0
        %4621 = vmatprep.subr.mxu0 0.0
        %4622 = vmatpush1.msra.mxu0 0.0
        %4623 = vmatprep.subr.mxu0 0.0
        %4624 = vmatpush1.msra.mxu0 0.0
        %4625 = vmatprep.subr.mxu0 0.0
        %4626 = vmatpush1.msra.mxu0 0.0
        %4627 = vmatprep.subr.mxu0 0.0
        %4628 = vmatpush1.msra.mxu0 0.0
        %4629 = vmatprep.subr.mxu0 0.0
        %4630 = vmatpush1.msra.mxu0 0.0
        %4631 = vmatprep.subr.mxu0 0.0
        %4632 = vmatpush1.msra.mxu0 0.0
        %4633 = vmatprep.subr.mxu0 0.0
        %4634 = vmatpush1.msra.mxu0 0.0
        %4635 = vmatprep.subr.mxu0 0.0
        %4636 = vmatpush1.msra.mxu0 0.0
        %4637 = vmatprep.subr.mxu0 0.0
        %4638 = vmatpush1.msra.mxu0 0.0
        %4639 = vmatprep.subr.mxu0 0.0
        %4640 = vmatpush1.msra.mxu0 0.0
        %4641 = vmatprep.subr.mxu0 0.0
        %4642 = vmatpush1.msra.mxu0 0.0
        %4643 = vmatprep.mubr.f32.mxu0 0.0
        %4644 = vmatmul.mubr.f32.gmra.mrb[0].mxu0 %v4577
        %v4645 = vpop.f32.mrb[0].mxu0
        %v4646 = vadd.f32 %v4574, %v4645
        %v4647 = vpop.f32.mrb[0].mxu0
        %4648 = vdwg.mxu0
        %v4649 = vmul.f32 %v4646, 0.5
        %v4650 = vmul.f32 %v4646, 0.70710677
        %vm4651 = vcmp.ge.f32.partialorder %v4650, 0.0
        %v4652 = vsel %vm4651, 1.0, -1.0
        %v4653 = vand.u32 2147483647, %v4650
        %v4654 = vmul.f32 %v4653, 0.3275911
        %v4655 = vadd.f32 %v4654, 1.0
        %v4656 = vrcp.pop %v4655
        %v4657 = vmul.f32 1.0, %v4656
        %v4658 = vmul.f32 %v4657, 1.0614054
        %v4659 = vadd.f32 %v4658, -1.4531521
        %v4660 = vmul.f32 %v4659, %v4657
        %v4661 = vadd.f32 %v4660, 1.4214138
        %v4662 = vmul.f32 %v4661, %v4657
        %v4663 = vadd.f32 %v4662, -0.28449672
        %v4664 = vmul.f32 %v4663, %v4657
        %v4665 = vadd.f32 %v4664, 0.2548296
        %v4666 = vmul.f32 %v4665, %v4657
        %v4667 = vsub.f32 0.0, %v4653
        %v4668 = vmul.f32 %v4667, %v4653
        %v4669 = vmul.f32 %v4668, 1.442695
        %v4670 = vpow.pop %v4669
        %v4671 = vmul.f32 %v4666, %v4670
        %v4672 = vsub.f32 1.0, %v4671
        %v4673 = vmul.f32 %v4652, %v4672
        %v4674 = vadd.f32 %v4673, 1.0
        %v4675 = vmul.f32 %v4649, %v4674
        %v4676 = vld [vmem:[%s15] sm:$0xff]
        %v4677 = vld [vmem:[%s15 + $0x8] sm:$0xff]
        %v4678 = vld [vmem:[%s15 + $0x10] sm:$0xff]
        %v4679 = vld [vmem:[%s15 + $0x18] sm:$0xff]
        %v4680 = vld [vmem:[%s15 + $0x20] sm:$0xff]
        %v4681 = vld [vmem:[%s15 + $0x28] sm:$0xff]
        %v4682 = vld [vmem:[%s15 + $0x30] sm:$0xff]
        %v4683 = vld [vmem:[%s15 + $0x38] sm:$0xff]
        %v4684 = vld [vmem:[%s16] sm:$0x1]
        %v4686 = vlaneseq
        %v4687 = vshrl.u32 %v4686, 7
        %v4688 = vsub.s32 0, %v4687
        %v4689 = vrot.slane %v4684, %v4688
        %vm4691 = vcmask 523264
        %v4693 = vsel %vm4691, %v4675, 0
        %4695 = vmatprep.subr.mxu0 0.0
        %4696 = vmatpush1.msra.mxu0 %v4676
        %4697 = vmatprep.subr.mxu0 0.0
        %4698 = vmatpush1.msra.mxu0 %v4677
        %4699 = vmatprep.subr.mxu0 0.0
        %4700 = vmatpush1.msra.mxu0 %v4678
        %4701 = vmatprep.subr.mxu0 0.0
        %4702 = vmatpush1.msra.mxu0 %v4679
        %4703 = vmatprep.subr.mxu0 0.0
        %4704 = vmatpush1.msra.mxu0 %v4680
        %4705 = vmatprep.subr.mxu0 0.0
        %4706 = vmatpush1.msra.mxu0 %v4681
        %4707 = vmatprep.subr.mxu0 0.0
        %4708 = vmatpush1.msra.mxu0 %v4682
        %4709 = vmatprep.subr.mxu0 0.0
        %4710 = vmatpush1.msra.mxu0 %v4683
        %4711 = vmatprep.subr.mxu0 0.0
        %4712 = vmatpush1.msra.mxu0 0.0
        %4713 = vmatprep.subr.mxu0 0.0
        %4714 = vmatpush1.msra.mxu0 0.0
        %4715 = vmatprep.subr.mxu0 0.0
        %4716 = vmatpush1.msra.mxu0 0.0
        %4717 = vmatprep.subr.mxu0 0.0
        %4718 = vmatpush1.msra.mxu0 0.0
        %4719 = vmatprep.subr.mxu0 0.0
        %4720 = vmatpush1.msra.mxu0 0.0
        %4721 = vmatprep.subr.mxu0 0.0
        %4722 = vmatpush1.msra.mxu0 0.0
        %4723 = vmatprep.subr.mxu0 0.0
        %4724 = vmatpush1.msra.mxu0 0.0
        %4725 = vmatprep.subr.mxu0 0.0
        %4726 = vmatpush1.msra.mxu0 0.0
        %4727 = vmatprep.subr.mxu0 0.0
        %4728 = vmatpush1.msra.mxu0 0.0
        %4729 = vmatprep.subr.mxu0 0.0
        %4730 = vmatpush1.msra.mxu0 0.0
        %4731 = vmatprep.subr.mxu0 0.0
        %4732 = vmatpush1.msra.mxu0 0.0
        %4733 = vmatprep.subr.mxu0 0.0
        %4734 = vmatpush1.msra.mxu0 0.0
        %4735 = vmatprep.subr.mxu0 0.0
        %4736 = vmatpush1.msra.mxu0 0.0
        %4737 = vmatprep.subr.mxu0 0.0
        %4738 = vmatpush1.msra.mxu0 0.0
        %4739 = vmatprep.subr.mxu0 0.0
        %4740 = vmatpush1.msra.mxu0 0.0
        %4741 = vmatprep.subr.mxu0 0.0
        %4742 = vmatpush1.msra.mxu0 0.0
        %4743 = vmatprep.subr.mxu0 0.0
        %4744 = vmatpush1.msra.mxu0 0.0
        %4745 = vmatprep.subr.mxu0 0.0
        %4746 = vmatpush1.msra.mxu0 0.0
        %4747 = vmatprep.subr.mxu0 0.0
        %4748 = vmatpush1.msra.mxu0 0.0
        %4749 = vmatprep.subr.mxu0 0.0
        %4750 = vmatpush1.msra.mxu0 0.0
        %4751 = vmatprep.subr.mxu0 0.0
        %4752 = vmatpush1.msra.mxu0 0.0
        %4753 = vmatprep.subr.mxu0 0.0
        %4754 = vmatpush1.msra.mxu0 0.0
        %4755 = vmatprep.subr.mxu0 0.0
        %4756 = vmatpush1.msra.mxu0 0.0
        %4757 = vmatprep.subr.mxu0 0.0
        %4758 = vmatpush1.msra.mxu0 0.0
        %4759 = vmatprep.mubr.f32.mxu0 0.0
        %4760 = vmatmul.mubr.f32.gmra.mrb[0].mxu0 %v4693
        %v4761 = vpop.f32.mrb[0].mxu0
        %v4762 = vadd.f32 %v4689, %v4761
        %v4763 = vpop.f32.mrb[0].mxu0
        %4764 = vdwg.mxu0
        %v4765 = vadd.f32 %v4564, %v4762
        %v4766 = vld [vmem:[%s21] sm:$0x1]
        %v4767 = vld [vmem:[%s22] sm:$0x1]
        %v4768 = vsel %vm806, %v4765, 0.0
        %4769 = vadd.xlane.f32.xlu0 %v4768
        %v4770 = vpop.xlane.xlu0 %4769
        %v4771 = vmul.f32 %v4770, %v2602
        %v4772 = vsub.f32 %v4765, %v4771
        %v4773 = vmul.f32 %v4772, %v4772
        %v4774 = vsel %vm806, %v4773, 0.0
        %4775 = vadd.xlane.f32.xlu0 %v4774
        %v4776 = vpop.xlane.xlu0 %4775
        %v4777 = vmul.f32 %v4776, %v2602
        %v4778 = vadd.f32 %v4777, 1e-05
        %v4779 = vrsqrt.pop %v4778
        %v4780 = vmul.f32 %v4772, %v4779
        %v4782 = vlaneseq
        %v4783 = vshrl.u32 %v4782, 7
        %v4784 = vsub.s32 0, %v4783
        %v4785 = vrot.slane %v4766, %v4784
        %v4787 = vmul.f32 %v4780, %v4785
        %v4789 = vlaneseq
        %v4790 = vshrl.u32 %v4789, 7
        %v4791 = vsub.s32 0, %v4790
        %v4792 = vrot.slane %v4767, %v4791
        %v4794 = vadd.f32 %v4787, %v4792
        %v4795 = vadd.f32 %v4794, %v746
        %s4796 = scalar_lea.vmem %s3, 128
        %v4797 = vld [vmem:[%s4796] sm:$0xff]
        %v4798 = vld [vmem:[%s4796 + $0x8] sm:$0xff]
        %v4799 = vld [vmem:[%s4796 + $0x10] sm:$0xff]
        %v4800 = vld [vmem:[%s4796 + $0x18] sm:$0xff]
        %v4801 = vld [vmem:[%s4796 + $0x20] sm:$0xff]
        %v4802 = vld [vmem:[%s4796 + $0x28] sm:$0xff]
        %v4803 = vld [vmem:[%s4796 + $0x30] sm:$0xff]
        %v4804 = vld [vmem:[%s4796 + $0x38] sm:$0xff]
        %v4805 = vld [vmem:[%s4796 + $0x40] sm:$0xff]
        %v4806 = vld [vmem:[%s4796 + $0x48] sm:$0xff]
        %v4807 = vld [vmem:[%s4796 + $0x50] sm:$0xff]
        %v4808 = vld [vmem:[%s4796 + $0x58] sm:$0xff]
        %v4809 = vld [vmem:[%s4796 + $0x60] sm:$0xff]
        %v4810 = vld [vmem:[%s4796 + $0x68] sm:$0xff]
        %v4811 = vld [vmem:[%s4796 + $0x70] sm:$0xff]
        %v4812 = vld [vmem:[%s4796 + $0x78] sm:$0xff]
        %s4813 = scalar_lea.vmem %s4, 128
        %v4814 = vld [vmem:[%s4813] sm:$0xff]
        %v4815 = vld [vmem:[%s4813 + $0x8] sm:$0xff]
        %v4816 = vld [vmem:[%s4813 + $0x10] sm:$0xff]
        %v4817 = vld [vmem:[%s4813 + $0x18] sm:$0xff]
        %v4818 = vld [vmem:[%s4813 + $0x20] sm:$0xff]
        %v4819 = vld [vmem:[%s4813 + $0x28] sm:$0xff]
        %v4820 = vld [vmem:[%s4813 + $0x30] sm:$0xff]
        %v4821 = vld [vmem:[%s4813 + $0x38] sm:$0xff]
        %v4822 = vld [vmem:[%s4813 + $0x40] sm:$0xff]
        %v4823 = vld [vmem:[%s4813 + $0x48] sm:$0xff]
        %v4824 = vld [vmem:[%s4813 + $0x50] sm:$0xff]
        %v4825 = vld [vmem:[%s4813 + $0x58] sm:$0xff]
        %v4826 = vld [vmem:[%s4813 + $0x60] sm:$0xff]
        %v4827 = vld [vmem:[%s4813 + $0x68] sm:$0xff]
        %v4828 = vld [vmem:[%s4813 + $0x70] sm:$0xff]
        %v4829 = vld [vmem:[%s4813 + $0x78] sm:$0xff]
        %s4830 = scalar_lea.vmem %s5, 128
        %v4831 = vld [vmem:[%s4830] sm:$0xff]
        %v4832 = vld [vmem:[%s4830 + $0x8] sm:$0xff]
        %v4833 = vld [vmem:[%s4830 + $0x10] sm:$0xff]
        %v4834 = vld [vmem:[%s4830 + $0x18] sm:$0xff]
        %v4835 = vld [vmem:[%s4830 + $0x20] sm:$0xff]
        %v4836 = vld [vmem:[%s4830 + $0x28] sm:$0xff]
        %v4837 = vld [vmem:[%s4830 + $0x30] sm:$0xff]
        %v4838 = vld [vmem:[%s4830 + $0x38] sm:$0xff]
        %v4839 = vld [vmem:[%s4830 + $0x40] sm:$0xff]
        %v4840 = vld [vmem:[%s4830 + $0x48] sm:$0xff]
        %v4841 = vld [vmem:[%s4830 + $0x50] sm:$0xff]
        %v4842 = vld [vmem:[%s4830 + $0x58] sm:$0xff]
        %v4843 = vld [vmem:[%s4830 + $0x60] sm:$0xff]
        %v4844 = vld [vmem:[%s4830 + $0x68] sm:$0xff]
        %v4845 = vld [vmem:[%s4830 + $0x70] sm:$0xff]
        %v4846 = vld [vmem:[%s4830 + $0x78] sm:$0xff]
        %s4847 = scalar_lea.vmem %s6, 32
        %v4848 = vld [vmem:[%s4847] sm:$0xff]
        %v4849 = vld [vmem:[%s4847 + $0x8] sm:$0xff]
        %v4850 = vld [vmem:[%s4847 + $0x10] sm:$0xff]
        %v4851 = vld [vmem:[%s4847 + $0x18] sm:$0xff]
        %s4852 = scalar_lea.vmem %s7, 1
        %v4853 = vld [vmem:[%s4852] sm:$0x1]
        %v4855 = vsel %vm806, %v4795, 0
        %4857 = vmatprep.subr.mxu0 0.0
        %4858 = vmatpush1.msra.mxu0 %v4797
        %4859 = vmatprep.subr.mxu0 0.0
        %4860 = vmatpush1.msra.mxu0 %v4798
        %4861 = vmatprep.subr.mxu0 0.0
        %4862 = vmatpush1.msra.mxu0 %v4799
        %4863 = vmatprep.subr.mxu0 0.0
        %4864 = vmatpush1.msra.mxu0 %v4800
        %4865 = vmatprep.subr.mxu0 0.0
        %4866 = vmatpush1.msra.mxu0 0.0
        %4867 = vmatprep.subr.mxu0 0.0
        %4868 = vmatpush1.msra.mxu0 0.0
        %4869 = vmatprep.subr.mxu0 0.0
        %4870 = vmatpush1.msra.mxu0 0.0
        %4871 = vmatprep.subr.mxu0 0.0
        %4872 = vmatpush1.msra.mxu0 0.0
        %4873 = vmatprep.subr.mxu0 0.0
        %4874 = vmatpush1.msra.mxu0 0.0
        %4875 = vmatprep.subr.mxu0 0.0
        %4876 = vmatpush1.msra.mxu0 0.0
        %4877 = vmatprep.subr.mxu0 0.0
        %4878 = vmatpush1.msra.mxu0 0.0
        %4879 = vmatprep.subr.mxu0 0.0
        %4880 = vmatpush1.msra.mxu0 0.0
        %4881 = vmatprep.subr.mxu0 0.0
        %4882 = vmatpush1.msra.mxu0 0.0
        %4883 = vmatprep.subr.mxu0 0.0
        %4884 = vmatpush1.msra.mxu0 0.0
        %4885 = vmatprep.subr.mxu0 0.0
        %4886 = vmatpush1.msra.mxu0 0.0
        %4887 = vmatprep.subr.mxu0 0.0
        %4888 = vmatpush1.msra.mxu0 0.0
        %4889 = vmatprep.subr.mxu0 0.0
        %4890 = vmatpush1.msra.mxu0 0.0
        %4891 = vmatprep.subr.mxu0 0.0
        %4892 = vmatpush1.msra.mxu0 0.0
        %4893 = vmatprep.subr.mxu0 0.0
        %4894 = vmatpush1.msra.mxu0 0.0
        %4895 = vmatprep.subr.mxu0 0.0
        %4896 = vmatpush1.msra.mxu0 0.0
        %4897 = vmatprep.subr.mxu0 0.0
        %4898 = vmatpush1.msra.mxu0 0.0
        %4899 = vmatprep.subr.mxu0 0.0
        %4900 = vmatpush1.msra.mxu0 0.0
        %4901 = vmatprep.subr.mxu0 0.0
        %4902 = vmatpush1.msra.mxu0 0.0
        %4903 = vmatprep.subr.mxu0 0.0
        %4904 = vmatpush1.msra.mxu0 0.0
        %4905 = vmatprep.subr.mxu0 0.0
        %4906 = vmatpush1.msra.mxu0 0.0
        %4907 = vmatprep.subr.mxu0 0.0
        %4908 = vmatpush1.msra.mxu0 0.0
        %4909 = vmatprep.subr.mxu0 0.0
        %4910 = vmatpush1.msra.mxu0 0.0
        %4911 = vmatprep.subr.mxu0 0.0
        %4912 = vmatpush1.msra.mxu0 0.0
        %4913 = vmatprep.subr.mxu0 0.0
        %4914 = vmatpush1.msra.mxu0 0.0
        %4915 = vmatprep.subr.mxu0 0.0
        %4916 = vmatpush1.msra.mxu0 0.0
        %4917 = vmatprep.subr.mxu0 0.0
        %4918 = vmatpush1.msra.mxu0 0.0
        %4919 = vmatprep.subr.mxu0 0.0
        %4920 = vmatpush1.msra.mxu0 0.0
        %4921 = vmatprep.mubr.f32.mxu0 0.0
        %4922 = vmatmul.mubr.f32.gmra.mrb[0].mxu0 %v4855
        %v4923 = vpop.f32.mrb[0].mxu0
        %v4924 = vadd.f32 0.0, %v4923
        %v4925 = vpop.f32.mrb[0].mxu0
        %4926 = vdwg.mxu0
        %4927 = vmatprep.subr.mxu0 0.0
        %4928 = vmatpush1.msra.mxu0 %v4801
        %4929 = vmatprep.subr.mxu0 0.0
        %4930 = vmatpush1.msra.mxu0 %v4802
        %4931 = vmatprep.subr.mxu0 0.0
        %4932 = vmatpush1.msra.mxu0 %v4803
        %4933 = vmatprep.subr.mxu0 0.0
        %4934 = vmatpush1.msra.mxu0 %v4804
        %4935 = vmatprep.subr.mxu0 0.0
        %4936 = vmatpush1.msra.mxu0 0.0
        %4937 = vmatprep.subr.mxu0 0.0
        %4938 = vmatpush1.msra.mxu0 0.0
        %4939 = vmatprep.subr.mxu0 0.0
        %4940 = vmatpush1.msra.mxu0 0.0
        %4941 = vmatprep.subr.mxu0 0.0
        %4942 = vmatpush1.msra.mxu0 0.0
        %4943 = vmatprep.subr.mxu0 0.0
        %4944 = vmatpush1.msra.mxu0 0.0
        %4945 = vmatprep.subr.mxu0 0.0
        %4946 = vmatpush1.msra.mxu0 0.0
        %4947 = vmatprep.subr.mxu0 0.0
        %4948 = vmatpush1.msra.mxu0 0.0
        %4949 = vmatprep.subr.mxu0 0.0
        %4950 = vmatpush1.msra.mxu0 0.0
        %4951 = vmatprep.subr.mxu0 0.0
        %4952 = vmatpush1.msra.mxu0 0.0
        %4953 = vmatprep.subr.mxu0 0.0
        %4954 = vmatpush1.msra.mxu0 0.0
        %4955 = vmatprep.subr.mxu0 0.0
        %4956 = vmatpush1.msra.mxu0 0.0
        %4957 = vmatprep.subr.mxu0 0.0
        %4958 = vmatpush1.msra.mxu0 0.0
        %4959 = vmatprep.subr.mxu0 0.0
        %4960 = vmatpush1.msra.mxu0 0.0
        %4961 = vmatprep.subr.mxu0 0.0
        %4962 = vmatpush1.msra.mxu0 0.0
        %4963 = vmatprep.subr.mxu0 0.0
        %4964 = vmatpush1.msra.mxu0 0.0
        %4965 = vmatprep.subr.mxu0 0.0
        %4966 = vmatpush1.msra.mxu0 0.0
        %4967 = vmatprep.subr.mxu0 0.0
        %4968 = vmatpush1.msra.mxu0 0.0
        %4969 = vmatprep.subr.mxu0 0.0
        %4970 = vmatpush1.msra.mxu0 0.0
        %4971 = vmatprep.subr.mxu0 0.0
        %4972 = vmatpush1.msra.mxu0 0.0
        %4973 = vmatprep.subr.mxu0 0.0
        %4974 = vmatpush1.msra.mxu0 0.0
        %4975 = vmatprep.subr.mxu0 0.0
        %4976 = vmatpush1.msra.mxu0 0.0
        %4977 = vmatprep.subr.mxu0 0.0
        %4978 = vmatpush1.msra.mxu0 0.0
        %4979 = vmatprep.subr.mxu0 0.0
        %4980 = vmatpush1.msra.mxu0 0.0
        %4981 = vmatprep.subr.mxu0 0.0
        %4982 = vmatpush1.msra.mxu0 0.0
        %4983 = vmatprep.subr.mxu0 0.0
        %4984 = vmatpush1.msra.mxu0 0.0
        %4985 = vmatprep.subr.mxu0 0.0
        %4986 = vmatpush1.msra.mxu0 0.0
        %4987 = vmatprep.subr.mxu0 0.0
        %4988 = vmatpush1.msra.mxu0 0.0
        %4989 = vmatprep.subr.mxu0 0.0
        %4990 = vmatpush1.msra.mxu0 0.0
        %4991 = vmatprep.mubr.f32.mxu0 0.0
        %4992 = vmatmul.mubr.f32.gmra.mrb[0].mxu0 %v4855
        %v4993 = vpop.f32.mrb[0].mxu0
        %v4994 = vadd.f32 0.0, %v4993
        %v4995 = vpop.f32.mrb[0].mxu0
        %4996 = vdwg.mxu0
        %4997 = vmatprep.subr.mxu0 0.0
        %4998 = vmatpush1.msra.mxu0 %v4805
        %4999 = vmatprep.subr.mxu0 0.0
        %5000 = vmatpush1.msra.mxu0 %v4806
        %5001 = vmatprep.subr.mxu0 0.0
        %5002 = vmatpush1.msra.mxu0 %v4807
        %5003 = vmatprep.subr.mxu0 0.0
        %5004 = vmatpush1.msra.mxu0 %v4808
        %5005 = vmatprep.subr.mxu0 0.0
        %5006 = vmatpush1.msra.mxu0 0.0
        %5007 = vmatprep.subr.mxu0 0.0
        %5008 = vmatpush1.msra.mxu0 0.0
        %5009 = vmatprep.subr.mxu0 0.0
        %5010 = vmatpush1.msra.mxu0 0.0
        %5011 = vmatprep.subr.mxu0 0.0
        %5012 = vmatpush1.msra.mxu0 0.0
        %5013 = vmatprep.subr.mxu0 0.0
        %5014 = vmatpush1.msra.mxu0 0.0
        %5015 = vmatprep.subr.mxu0 0.0
        %5016 = vmatpush1.msra.mxu0 0.0
        %5017 = vmatprep.subr.mxu0 0.0
        %5018 = vmatpush1.msra.mxu0 0.0
        %5019 = vmatprep.subr.mxu0 0.0
        %5020 = vmatpush1.msra.mxu0 0.0
        %5021 = vmatprep.subr.mxu0 0.0
        %5022 = vmatpush1.msra.mxu0 0.0
        %5023 = vmatprep.subr.mxu0 0.0
        %5024 = vmatpush1.msra.mxu0 0.0
        %5025 = vmatprep.subr.mxu0 0.0
        %5026 = vmatpush1.msra.mxu0 0.0
        %5027 = vmatprep.subr.mxu0 0.0
        %5028 = vmatpush1.msra.mxu0 0.0
        %5029 = vmatprep.subr.mxu0 0.0
        %5030 = vmatpush1.msra.mxu0 0.0
        %5031 = vmatprep.subr.mxu0 0.0
        %5032 = vmatpush1.msra.mxu0 0.0
        %5033 = vmatprep.subr.mxu0 0.0
        %5034 = vmatpush1.msra.mxu0 0.0
        %5035 = vmatprep.subr.mxu0 0.0
        %5036 = vmatpush1.msra.mxu0 0.0
        %5037 = vmatprep.subr.mxu0 0.0
        %5038 = vmatpush1.msra.mxu0 0.0
        %5039 = vmatprep.subr.mxu0 0.0
        %5040 = vmatpush1.msra.mxu0 0.0
        %5041 = vmatprep.subr.mxu0 0.0
        %5042 = vmatpush1.msra.mxu0 0.0
        %5043 = vmatprep.subr.mxu0 0.0
        %5044 = vmatpush1.msra.mxu0 0.0
        %5045 = vmatprep.subr.mxu0 0.0
        %5046 = vmatpush1.msra.mxu0 0.0
        %5047 = vmatprep.subr.mxu0 0.0
        %5048 = vmatpush1.msra.mxu0 0.0
        %5049 = vmatprep.subr.mxu0 0.0
        %5050 = vmatpush1.msra.mxu0 0.0
        %5051 = vmatprep.subr.mxu0 0.0
        %5052 = vmatpush1.msra.mxu0 0.0
        %5053 = vmatprep.subr.mxu0 0.0
        %5054 = vmatpush1.msra.mxu0 0.0
        %5055 = vmatprep.subr.mxu0 0.0
        %5056 = vmatpush1.msra.mxu0 0.0
        %5057 = vmatprep.subr.mxu0 0.0
        %5058 = vmatpush1.msra.mxu0 0.0
        %5059 = vmatprep.subr.mxu0 0.0
        %5060 = vmatpush1.msra.mxu0 0.0
        %5061 = vmatprep.mubr.f32.mxu0 0.0
        %5062 = vmatmul.mubr.f32.gmra.mrb[0].mxu0 %v4855
        %v5063 = vpop.f32.mrb[0].mxu0
        %v5064 = vadd.f32 0.0, %v5063
        %v5065 = vpop.f32.mrb[0].mxu0
        %5066 = vdwg.mxu0
        %5067 = vmatprep.subr.mxu0 0.0
        %5068 = vmatpush1.msra.mxu0 %v4809
        %5069 = vmatprep.subr.mxu0 0.0
        %5070 = vmatpush1.msra.mxu0 %v4810
        %5071 = vmatprep.subr.mxu0 0.0
        %5072 = vmatpush1.msra.mxu0 %v4811
        %5073 = vmatprep.subr.mxu0 0.0
        %5074 = vmatpush1.msra.mxu0 %v4812
        %5075 = vmatprep.subr.mxu0 0.0
        %5076 = vmatpush1.msra.mxu0 0.0
        %5077 = vmatprep.subr.mxu0 0.0
        %5078 = vmatpush1.msra.mxu0 0.0
        %5079 = vmatprep.subr.mxu0 0.0
        %5080 = vmatpush1.msra.mxu0 0.0
        %5081 = vmatprep.subr.mxu0 0.0
        %5082 = vmatpush1.msra.mxu0 0.0
        %5083 = vmatprep.subr.mxu0 0.0
        %5084 = vmatpush1.msra.mxu0 0.0
        %5085 = vmatprep.subr.mxu0 0.0
        %5086 = vmatpush1.msra.mxu0 0.0
        %5087 = vmatprep.subr.mxu0 0.0
        %5088 = vmatpush1.msra.mxu0 0.0
        %5089 = vmatprep.subr.mxu0 0.0
        %5090 = vmatpush1.msra.mxu0 0.0
        %5091 = vmatprep.subr.mxu0 0.0
        %5092 = vmatpush1.msra.mxu0 0.0
        %5093 = vmatprep.subr.mxu0 0.0
        %5094 = vmatpush1.msra.mxu0 0.0
        %5095 = vmatprep.subr.mxu0 0.0
        %5096 = vmatpush1.msra.mxu0 0.0
        %5097 = vmatprep.subr.mxu0 0.0
        %5098 = vmatpush1.msra.mxu0 0.0
        %5099 = vmatprep.subr.mxu0 0.0
        %5100 = vmatpush1.msra.mxu0 0.0
        %5101 = vmatprep.subr.mxu0 0.0
        %5102 = vmatpush1.msra.mxu0 0.0
        %5103 = vmatprep.subr.mxu0 0.0
        %5104 = vmatpush1.msra.mxu0 0.0
        %5105 = vmatprep.subr.mxu0 0.0
        %5106 = vmatpush1.msra.mxu0 0.0
        %5107 = vmatprep.subr.mxu0 0.0
        %5108 = vmatpush1.msra.mxu0 0.0
        %5109 = vmatprep.subr.mxu0 0.0
        %5110 = vmatpush1.msra.mxu0 0.0
        %5111 = vmatprep.subr.mxu0 0.0
        %5112 = vmatpush1.msra.mxu0 0.0
        %5113 = vmatprep.subr.mxu0 0.0
        %5114 = vmatpush1.msra.mxu0 0.0
        %5115 = vmatprep.subr.mxu0 0.0
        %5116 = vmatpush1.msra.mxu0 0.0
        %5117 = vmatprep.subr.mxu0 0.0
        %5118 = vmatpush1.msra.mxu0 0.0
        %5119 = vmatprep.subr.mxu0 0.0
        %5120 = vmatpush1.msra.mxu0 0.0
        %5121 = vmatprep.subr.mxu0 0.0
        %5122 = vmatpush1.msra.mxu0 0.0
        %5123 = vmatprep.subr.mxu0 0.0
        %5124 = vmatpush1.msra.mxu0 0.0
        %5125 = vmatprep.subr.mxu0 0.0
        %5126 = vmatpush1.msra.mxu0 0.0
        %5127 = vmatprep.subr.mxu0 0.0
        %5128 = vmatpush1.msra.mxu0 0.0
        %5129 = vmatprep.subr.mxu0 0.0
        %5130 = vmatpush1.msra.mxu0 0.0
        %5131 = vmatprep.mubr.f32.mxu0 0.0
        %5132 = vmatmul.mubr.f32.gmra.mrb[0].mxu0 %v4855
        %v5133 = vpop.f32.mrb[0].mxu0
        %v5134 = vadd.f32 0.0, %v5133
        %v5135 = vpop.f32.mrb[0].mxu0
        %5136 = vdwg.mxu0
        %5137 = vmatprep.subr.mxu0 0.0
        %5138 = vmatpush1.msra.mxu0 %v4814
        %5139 = vmatprep.subr.mxu0 0.0
        %5140 = vmatpush1.msra.mxu0 %v4815
        %5141 = vmatprep.subr.mxu0 0.0
        %5142 = vmatpush1.msra.mxu0 %v4816
        %5143 = vmatprep.subr.mxu0 0.0
        %5144 = vmatpush1.msra.mxu0 %v4817
        %5145 = vmatprep.subr.mxu0 0.0
        %5146 = vmatpush1.msra.mxu0 0.0
        %5147 = vmatprep.subr.mxu0 0.0
        %5148 = vmatpush1.msra.mxu0 0.0
        %5149 = vmatprep.subr.mxu0 0.0
        %5150 = vmatpush1.msra.mxu0 0.0
        %5151 = vmatprep.subr.mxu0 0.0
        %5152 = vmatpush1.msra.mxu0 0.0
        %5153 = vmatprep.subr.mxu0 0.0
        %5154 = vmatpush1.msra.mxu0 0.0
        %5155 = vmatprep.subr.mxu0 0.0
        %5156 = vmatpush1.msra.mxu0 0.0
        %5157 = vmatprep.subr.mxu0 0.0
        %5158 = vmatpush1.msra.mxu0 0.0
        %5159 = vmatprep.subr.mxu0 0.0
        %5160 = vmatpush1.msra.mxu0 0.0
        %5161 = vmatprep.subr.mxu0 0.0
        %5162 = vmatpush1.msra.mxu0 0.0
        %5163 = vmatprep.subr.mxu0 0.0
        %5164 = vmatpush1.msra.mxu0 0.0
        %5165 = vmatprep.subr.mxu0 0.0
        %5166 = vmatpush1.msra.mxu0 0.0
        %5167 = vmatprep.subr.mxu0 0.0
        %5168 = vmatpush1.msra.mxu0 0.0
        %5169 = vmatprep.subr.mxu0 0.0
        %5170 = vmatpush1.msra.mxu0 0.0
        %5171 = vmatprep.subr.mxu0 0.0
        %5172 = vmatpush1.msra.mxu0 0.0
        %5173 = vmatprep.subr.mxu0 0.0
        %5174 = vmatpush1.msra.mxu0 0.0
        %5175 = vmatprep.subr.mxu0 0.0
        %5176 = vmatpush1.msra.mxu0 0.0
        %5177 = vmatprep.subr.mxu0 0.0
        %5178 = vmatpush1.msra.mxu0 0.0
        %5179 = vmatprep.subr.mxu0 0.0
        %5180 = vmatpush1.msra.mxu0 0.0
        %5181 = vmatprep.subr.mxu0 0.0
        %5182 = vmatpush1.msra.mxu0 0.0
        %5183 = vmatprep.subr.mxu0 0.0
        %5184 = vmatpush1.msra.mxu0 0.0
        %5185 = vmatprep.subr.mxu0 0.0
        %5186 = vmatpush1.msra.mxu0 0.0
        %5187 = vmatprep.subr.mxu0 0.0
        %5188 = vmatpush1.msra.mxu0 0.0
        %5189 = vmatprep.subr.mxu0 0.0
        %5190 = vmatpush1.msra.mxu0 0.0
        %5191 = vmatprep.subr.mxu0 0.0
        %5192 = vmatpush1.msra.mxu0 0.0
        %5193 = vmatprep.subr.mxu0 0.0
        %5194 = vmatpush1.msra.mxu0 0.0
        %5195 = vmatprep.subr.mxu0 0.0
        %5196 = vmatpush1.msra.mxu0 0.0
        %5197 = vmatprep.subr.mxu0 0.0
        %5198 = vmatpush1.msra.mxu0 0.0
        %5199 = vmatprep.subr.mxu0 0.0
        %5200 = vmatpush1.msra.mxu0 0.0
        %5201 = vmatprep.mubr.f32.mxu0 0.0
        %5202 = vmatmul.mubr.f32.gmra.mrb[0].mxu0 %v4855
        %v5203 = vpop.f32.mrb[0].mxu0
        %v5204 = vadd.f32 0.0, %v5203
        %v5205 = vpop.f32.mrb[0].mxu0
        %5206 = vdwg.mxu0
        %5207 = vmatprep.subr.mxu0 0.0
        %5208 = vmatpush1.msra.mxu0 %v4818
        %5209 = vmatprep.subr.mxu0 0.0
        %5210 = vmatpush1.msra.mxu0 %v4819
        %5211 = vmatprep.subr.mxu0 0.0
        %5212 = vmatpush1.msra.mxu0 %v4820
        %5213 = vmatprep.subr.mxu0 0.0
        %5214 = vmatpush1.msra.mxu0 %v4821
        %5215 = vmatprep.subr.mxu0 0.0
        %5216 = vmatpush1.msra.mxu0 0.0
        %5217 = vmatprep.subr.mxu0 0.0
        %5218 = vmatpush1.msra.mxu0 0.0
        %5219 = vmatprep.subr.mxu0 0.0
        %5220 = vmatpush1.msra.mxu0 0.0
        %5221 = vmatprep.subr.mxu0 0.0
        %5222 = vmatpush1.msra.mxu0 0.0
        %5223 = vmatprep.subr.mxu0 0.0
        %5224 = vmatpush1.msra.mxu0 0.0
        %5225 = vmatprep.subr.mxu0 0.0
        %5226 = vmatpush1.msra.mxu0 0.0
        %5227 = vmatprep.subr.mxu0 0.0
        %5228 = vmatpush1.msra.mxu0 0.0
        %5229 = vmatprep.subr.mxu0 0.0
        %5230 = vmatpush1.msra.mxu0 0.0
        %5231 = vmatprep.subr.mxu0 0.0
        %5232 = vmatpush1.msra.mxu0 0.0
        %5233 = vmatprep.subr.mxu0 0.0
        %5234 = vmatpush1.msra.mxu0 0.0
        %5235 = vmatprep.subr.mxu0 0.0
        %5236 = vmatpush1.msra.mxu0 0.0
        %5237 = vmatprep.subr.mxu0 0.0
        %5238 = vmatpush1.msra.mxu0 0.0
        %5239 = vmatprep.subr.mxu0 0.0
        %5240 = vmatpush1.msra.mxu0 0.0
        %5241 = vmatprep.subr.mxu0 0.0
        %5242 = vmatpush1.msra.mxu0 0.0
        %5243 = vmatprep.subr.mxu0 0.0
        %5244 = vmatpush1.msra.mxu0 0.0
        %5245 = vmatprep.subr.mxu0 0.0
        %5246 = vmatpush1.msra.mxu0 0.0
        %5247 = vmatprep.subr.mxu0 0.0
        %5248 = vmatpush1.msra.mxu0 0.0
        %5249 = vmatprep.subr.mxu0 0.0
        %5250 = vmatpush1.msra.mxu0 0.0
        %5251 = vmatprep.subr.mxu0 0.0
        %5252 = vmatpush1.msra.mxu0 0.0
        %5253 = vmatprep.subr.mxu0 0.0
        %5254 = vmatpush1.msra.mxu0 0.0
        %5255 = vmatprep.subr.mxu0 0.0
        %5256 = vmatpush1.msra.mxu0 0.0
        %5257 = vmatprep.subr.mxu0 0.0
        %5258 = vmatpush1.msra.mxu0 0.0
        %5259 = vmatprep.subr.mxu0 0.0
        %5260 = vmatpush1.msra.mxu0 0.0
        %5261 = vmatprep.subr.mxu0 0.0
        %5262 = vmatpush1.msra.mxu0 0.0
        %5263 = vmatprep.subr.mxu0 0.0
        %5264 = vmatpush1.msra.mxu0 0.0
        %5265 = vmatprep.subr.mxu0 0.0
        %5266 = vmatpush1.msra.mxu0 0.0
        %5267 = vmatprep.subr.mxu0 0.0
        %5268 = vmatpush1.msra.mxu0 0.0
        %5269 = vmatprep.subr.mxu0 0.0
        %5270 = vmatpush1.msra.mxu0 0.0
        %5271 = vmatprep.mubr.f32.mxu0 0.0
        %5272 = vmatmul.mubr.f32.gmra.mrb[0].mxu0 %v4855
        %v5273 = vpop.f32.mrb[0].mxu0
        %v5274 = vadd.f32 0.0, %v5273
        %v5275 = vpop.f32.mrb[0].mxu0
        %5276 = vdwg.mxu0
        %5277 = vmatprep.subr.mxu0 0.0
        %5278 = vmatpush1.msra.mxu0 %v4822
        %5279 = vmatprep.subr.mxu0 0.0
        %5280 = vmatpush1.msra.mxu0 %v4823
        %5281 = vmatprep.subr.mxu0 0.0
        %5282 = vmatpush1.msra.mxu0 %v4824
        %5283 = vmatprep.subr.mxu0 0.0
        %5284 = vmatpush1.msra.mxu0 %v4825
        %5285 = vmatprep.subr.mxu0 0.0
        %5286 = vmatpush1.msra.mxu0 0.0
        %5287 = vmatprep.subr.mxu0 0.0
        %5288 = vmatpush1.msra.mxu0 0.0
        %5289 = vmatprep.subr.mxu0 0.0
        %5290 = vmatpush1.msra.mxu0 0.0
        %5291 = vmatprep.subr.mxu0 0.0
        %5292 = vmatpush1.msra.mxu0 0.0
        %5293 = vmatprep.subr.mxu0 0.0
        %5294 = vmatpush1.msra.mxu0 0.0
        %5295 = vmatprep.subr.mxu0 0.0
        %5296 = vmatpush1.msra.mxu0 0.0
        %5297 = vmatprep.subr.mxu0 0.0
        %5298 = vmatpush1.msra.mxu0 0.0
        %5299 = vmatprep.subr.mxu0 0.0
        %5300 = vmatpush1.msra.mxu0 0.0
        %5301 = vmatprep.subr.mxu0 0.0
        %5302 = vmatpush1.msra.mxu0 0.0
        %5303 = vmatprep.subr.mxu0 0.0
        %5304 = vmatpush1.msra.mxu0 0.0
        %5305 = vmatprep.subr.mxu0 0.0
        %5306 = vmatpush1.msra.mxu0 0.0
        %5307 = vmatprep.subr.mxu0 0.0
        %5308 = vmatpush1.msra.mxu0 0.0
        %5309 = vmatprep.subr.mxu0 0.0
        %5310 = vmatpush1.msra.mxu0 0.0
        %5311 = vmatprep.subr.mxu0 0.0
        %5312 = vmatpush1.msra.mxu0 0.0
        %5313 = vmatprep.subr.mxu0 0.0
        %5314 = vmatpush1.msra.mxu0 0.0
        %5315 = vmatprep.subr.mxu0 0.0
        %5316 = vmatpush1.msra.mxu0 0.0
        %5317 = vmatprep.subr.mxu0 0.0
        %5318 = vmatpush1.msra.mxu0 0.0
        %5319 = vmatprep.subr.mxu0 0.0
        %5320 = vmatpush1.msra.mxu0 0.0
        %5321 = vmatprep.subr.mxu0 0.0
        %5322 = vmatpush1.msra.mxu0 0.0
        %5323 = vmatprep.subr.mxu0 0.0
        %5324 = vmatpush1.msra.mxu0 0.0
        %5325 = vmatprep.subr.mxu0 0.0
        %5326 = vmatpush1.msra.mxu0 0.0
        %5327 = vmatprep.subr.mxu0 0.0
        %5328 = vmatpush1.msra.mxu0 0.0
        %5329 = vmatprep.subr.mxu0 0.0
        %5330 = vmatpush1.msra.mxu0 0.0
        %5331 = vmatprep.subr.mxu0 0.0
        %5332 = vmatpush1.msra.mxu0 0.0
        %5333 = vmatprep.subr.mxu0 0.0
        %5334 = vmatpush1.msra.mxu0 0.0
        %5335 = vmatprep.subr.mxu0 0.0
        %5336 = vmatpush1.msra.mxu0 0.0
        %5337 = vmatprep.subr.mxu0 0.0
        %5338 = vmatpush1.msra.mxu0 0.0
        %5339 = vmatprep.subr.mxu0 0.0
        %5340 = vmatpush1.msra.mxu0 0.0
        %5341 = vmatprep.mubr.f32.mxu0 0.0
        %5342 = vmatmul.mubr.f32.gmra.mrb[0].mxu0 %v4855
        %v5343 = vpop.f32.mrb[0].mxu0
        %v5344 = vadd.f32 0.0, %v5343
        %v5345 = vpop.f32.mrb[0].mxu0
        %5346 = vdwg.mxu0
        %5347 = vmatprep.subr.mxu0 0.0
        %5348 = vmatpush1.msra.mxu0 %v4826
        %5349 = vmatprep.subr.mxu0 0.0
        %5350 = vmatpush1.msra.mxu0 %v4827
        %5351 = vmatprep.subr.mxu0 0.0
        %5352 = vmatpush1.msra.mxu0 %v4828
        %5353 = vmatprep.subr.mxu0 0.0
        %5354 = vmatpush1.msra.mxu0 %v4829
        %5355 = vmatprep.subr.mxu0 0.0
        %5356 = vmatpush1.msra.mxu0 0.0
        %5357 = vmatprep.subr.mxu0 0.0
        %5358 = vmatpush1.msra.mxu0 0.0
        %5359 = vmatprep.subr.mxu0 0.0
        %5360 = vmatpush1.msra.mxu0 0.0
        %5361 = vmatprep.subr.mxu0 0.0
        %5362 = vmatpush1.msra.mxu0 0.0
        %5363 = vmatprep.subr.mxu0 0.0
        %5364 = vmatpush1.msra.mxu0 0.0
        %5365 = vmatprep.subr.mxu0 0.0
        %5366 = vmatpush1.msra.mxu0 0.0
        %5367 = vmatprep.subr.mxu0 0.0
        %5368 = vmatpush1.msra.mxu0 0.0
        %5369 = vmatprep.subr.mxu0 0.0
        %5370 = vmatpush1.msra.mxu0 0.0
        %5371 = vmatprep.subr.mxu0 0.0
        %5372 = vmatpush1.msra.mxu0 0.0
        %5373 = vmatprep.subr.mxu0 0.0
        %5374 = vmatpush1.msra.mxu0 0.0
        %5375 = vmatprep.subr.mxu0 0.0
        %5376 = vmatpush1.msra.mxu0 0.0
        %5377 = vmatprep.subr.mxu0 0.0
        %5378 = vmatpush1.msra.mxu0 0.0
        %5379 = vmatprep.subr.mxu0 0.0
        %5380 = vmatpush1.msra.mxu0 0.0
        %5381 = vmatprep.subr.mxu0 0.0
        %5382 = vmatpush1.msra.mxu0 0.0
        %5383 = vmatprep.subr.mxu0 0.0
        %5384 = vmatpush1.msra.mxu0 0.0
        %5385 = vmatprep.subr.mxu0 0.0
        %5386 = vmatpush1.msra.mxu0 0.0
        %5387 = vmatprep.subr.mxu0 0.0
        %5388 = vmatpush1.msra.mxu0 0.0
        %5389 = vmatprep.subr.mxu0 0.0
        %5390 = vmatpush1.msra.mxu0 0.0
        %5391 = vmatprep.subr.mxu0 0.0
        %5392 = vmatpush1.msra.mxu0 0.0
        %5393 = vmatprep.subr.mxu0 0.0
        %5394 = vmatpush1.msra.mxu0 0.0
        %5395 = vmatprep.subr.mxu0 0.0
        %5396 = vmatpush1.msra.mxu0 0.0
        %5397 = vmatprep.subr.mxu0 0.0
        %5398 = vmatpush1.msra.mxu0 0.0
        %5399 = vmatprep.subr.mxu0 0.0
        %5400 = vmatpush1.msra.mxu0 0.0
        %5401 = vmatprep.subr.mxu0 0.0
        %5402 = vmatpush1.msra.mxu0 0.0
        %5403 = vmatprep.subr.mxu0 0.0
        %5404 = vmatpush1.msra.mxu0 0.0
        %5405 = vmatprep.subr.mxu0 0.0
        %5406 = vmatpush1.msra.mxu0 0.0
        %5407 = vmatprep.subr.mxu0 0.0
        %5408 = vmatpush1.msra.mxu0 0.0
        %5409 = vmatprep.subr.mxu0 0.0
        %5410 = vmatpush1.msra.mxu0 0.0
        %5411 = vmatprep.mubr.f32.mxu0 0.0
        %5412 = vmatmul.mubr.f32.gmra.mrb[0].mxu0 %v4855
        %v5413 = vpop.f32.mrb[0].mxu0
        %v5414 = vadd.f32 0.0, %v5413
        %v5415 = vpop.f32.mrb[0].mxu0
        %5416 = vdwg.mxu0
        %v5418 = vsel %vm806, %v4794, 0
        %5420 = vmatprep.subr.mxu0 0.0
        %5421 = vmatpush1.msra.mxu0 %v4831
        %5422 = vmatprep.subr.mxu0 0.0
        %5423 = vmatpush1.msra.mxu0 %v4832
        %5424 = vmatprep.subr.mxu0 0.0
        %5425 = vmatpush1.msra.mxu0 %v4833
        %5426 = vmatprep.subr.mxu0 0.0
        %5427 = vmatpush1.msra.mxu0 %v4834
        %5428 = vmatprep.subr.mxu0 0.0
        %5429 = vmatpush1.msra.mxu0 0.0
        %5430 = vmatprep.subr.mxu0 0.0
        %5431 = vmatpush1.msra.mxu0 0.0
        %5432 = vmatprep.subr.mxu0 0.0
        %5433 = vmatpush1.msra.mxu0 0.0
        %5434 = vmatprep.subr.mxu0 0.0
        %5435 = vmatpush1.msra.mxu0 0.0
        %5436 = vmatprep.subr.mxu0 0.0
        %5437 = vmatpush1.msra.mxu0 0.0
        %5438 = vmatprep.subr.mxu0 0.0
        %5439 = vmatpush1.msra.mxu0 0.0
        %5440 = vmatprep.subr.mxu0 0.0
        %5441 = vmatpush1.msra.mxu0 0.0
        %5442 = vmatprep.subr.mxu0 0.0
        %5443 = vmatpush1.msra.mxu0 0.0
        %5444 = vmatprep.subr.mxu0 0.0
        %5445 = vmatpush1.msra.mxu0 0.0
        %5446 = vmatprep.subr.mxu0 0.0
        %5447 = vmatpush1.msra.mxu0 0.0
        %5448 = vmatprep.subr.mxu0 0.0
        %5449 = vmatpush1.msra.mxu0 0.0
        %5450 = vmatprep.subr.mxu0 0.0
        %5451 = vmatpush1.msra.mxu0 0.0
        %5452 = vmatprep.subr.mxu0 0.0
        %5453 = vmatpush1.msra.mxu0 0.0
        %5454 = vmatprep.subr.mxu0 0.0
        %5455 = vmatpush1.msra.mxu0 0.0
        %5456 = vmatprep.subr.mxu0 0.0
        %5457 = vmatpush1.msra.mxu0 0.0
        %5458 = vmatprep.subr.mxu0 0.0
        %5459 = vmatpush1.msra.mxu0 0.0
        %5460 = vmatprep.subr.mxu0 0.0
        %5461 = vmatpush1.msra.mxu0 0.0
        %5462 = vmatprep.subr.mxu0 0.0
        %5463 = vmatpush1.msra.mxu0 0.0
        %5464 = vmatprep.subr.mxu0 0.0
        %5465 = vmatpush1.msra.mxu0 0.0
        %5466 = vmatprep.subr.mxu0 0.0
        %5467 = vmatpush1.msra.mxu0 0.0
        %5468 = vmatprep.subr.mxu0 0.0
        %5469 = vmatpush1.msra.mxu0 0.0
        %5470 = vmatprep.subr.mxu0 0.0
        %5471 = vmatpush1.msra.mxu0 0.0
        %5472 = vmatprep.subr.mxu0 0.0
        %5473 = vmatpush1.msra.mxu0 0.0
        %5474 = vmatprep.subr.mxu0 0.0
        %5475 = vmatpush1.msra.mxu0 0.0
        %5476 = vmatprep.subr.mxu0 0.0
        %5477 = vmatpush1.msra.mxu0 0.0
        %5478 = vmatprep.subr.mxu0 0.0
        %5479 = vmatpush1.msra.mxu0 0.0
        %5480 = vmatprep.subr.mxu0 0.0
        %5481 = vmatpush1.msra.mxu0 0.0
        %5482 = vmatprep.subr.mxu0 0.0
        %5483 = vmatpush1.msra.mxu0 0.0
        %5484 = vmatprep.mubr.f32.mxu0 0.0
        %5485 = vmatmul.mubr.f32.gmra.mrb[0].mxu0 %v5418
        %v5486 = vpop.f32.mrb[0].mxu0
        %v5487 = vadd.f32 0.0, %v5486
        %v5488 = vpop.f32.mrb[0].mxu0
        %5489 = vdwg.mxu0
        %5490 = vmatprep.subr.mxu0 0.0
        %5491 = vmatpush1.msra.mxu0 %v4835
        %5492 = vmatprep.subr.mxu0 0.0
        %5493 = vmatpush1.msra.mxu0 %v4836
        %5494 = vmatprep.subr.mxu0 0.0
        %5495 = vmatpush1.msra.mxu0 %v4837
        %5496 = vmatprep.subr.mxu0 0.0
        %5497 = vmatpush1.msra.mxu0 %v4838
        %5498 = vmatprep.subr.mxu0 0.0
        %5499 = vmatpush1.msra.mxu0 0.0
        %5500 = vmatprep.subr.mxu0 0.0
        %5501 = vmatpush1.msra.mxu0 0.0
        %5502 = vmatprep.subr.mxu0 0.0
        %5503 = vmatpush1.msra.mxu0 0.0
        %5504 = vmatprep.subr.mxu0 0.0
        %5505 = vmatpush1.msra.mxu0 0.0
        %5506 = vmatprep.subr.mxu0 0.0
        %5507 = vmatpush1.msra.mxu0 0.0
        %5508 = vmatprep.subr.mxu0 0.0
        %5509 = vmatpush1.msra.mxu0 0.0
        %5510 = vmatprep.subr.mxu0 0.0
        %5511 = vmatpush1.msra.mxu0 0.0
        %5512 = vmatprep.subr.mxu0 0.0
        %5513 = vmatpush1.msra.mxu0 0.0
        %5514 = vmatprep.subr.mxu0 0.0
        %5515 = vmatpush1.msra.mxu0 0.0
        %5516 = vmatprep.subr.mxu0 0.0
        %5517 = vmatpush1.msra.mxu0 0.0
        %5518 = vmatprep.subr.mxu0 0.0
        %5519 = vmatpush1.msra.mxu0 0.0
        %5520 = vmatprep.subr.mxu0 0.0
        %5521 = vmatpush1.msra.mxu0 0.0
        %5522 = vmatprep.subr.mxu0 0.0
        %5523 = vmatpush1.msra.mxu0 0.0
        %5524 = vmatprep.subr.mxu0 0.0
        %5525 = vmatpush1.msra.mxu0 0.0
        %5526 = vmatprep.subr.mxu0 0.0
        %5527 = vmatpush1.msra.mxu0 0.0
        %5528 = vmatprep.subr.mxu0 0.0
        %5529 = vmatpush1.msra.mxu0 0.0
        %5530 = vmatprep.subr.mxu0 0.0
        %5531 = vmatpush1.msra.mxu0 0.0
        %5532 = vmatprep.subr.mxu0 0.0
        %5533 = vmatpush1.msra.mxu0 0.0
        %5534 = vmatprep.subr.mxu0 0.0
        %5535 = vmatpush1.msra.mxu0 0.0
        %5536 = vmatprep.subr.mxu0 0.0
        %5537 = vmatpush1.msra.mxu0 0.0
        %5538 = vmatprep.subr.mxu0 0.0
        %5539 = vmatpush1.msra.mxu0 0.0
        %5540 = vmatprep.subr.mxu0 0.0
        %5541 = vmatpush1.msra.mxu0 0.0
        %5542 = vmatprep.subr.mxu0 0.0
        %5543 = vmatpush1.msra.mxu0 0.0
        %5544 = vmatprep.subr.mxu0 0.0
        %5545 = vmatpush1.msra.mxu0 0.0
        %5546 = vmatprep.subr.mxu0 0.0
        %5547 = vmatpush1.msra.mxu0 0.0
        %5548 = vmatprep.subr.mxu0 0.0
        %5549 = vmatpush1.msra.mxu0 0.0
        %5550 = vmatprep.subr.mxu0 0.0
        %5551 = vmatpush1.msra.mxu0 0.0
        %5552 = vmatprep.subr.mxu0 0.0
        %5553 = vmatpush1.msra.mxu0 0.0
        %5554 = vmatprep.mubr.f32.mxu0 0.0
        %5555 = vmatmul.mubr.f32.gmra.mrb[0].mxu0 %v5418
        %v5556 = vpop.f32.mrb[0].mxu0
        %v5557 = vadd.f32 0.0, %v5556
        %v5558 = vpop.f32.mrb[0].mxu0
        %5559 = vdwg.mxu0
        %5560 = vmatprep.subr.mxu0 0.0
        %5561 = vmatpush1.msra.mxu0 %v4839
        %5562 = vmatprep.subr.mxu0 0.0
        %5563 = vmatpush1.msra.mxu0 %v4840
        %5564 = vmatprep.subr.mxu0 0.0
        %5565 = vmatpush1.msra.mxu0 %v4841
        %5566 = vmatprep.subr.mxu0 0.0
        %5567 = vmatpush1.msra.mxu0 %v4842
        %5568 = vmatprep.subr.mxu0 0.0
        %5569 = vmatpush1.msra.mxu0 0.0
        %5570 = vmatprep.subr.mxu0 0.0
        %5571 = vmatpush1.msra.mxu0 0.0
        %5572 = vmatprep.subr.mxu0 0.0
        %5573 = vmatpush1.msra.mxu0 0.0
        %5574 = vmatprep.subr.mxu0 0.0
        %5575 = vmatpush1.msra.mxu0 0.0
        %5576 = vmatprep.subr.mxu0 0.0
        %5577 = vmatpush1.msra.mxu0 0.0
        %5578 = vmatprep.subr.mxu0 0.0
        %5579 = vmatpush1.msra.mxu0 0.0
        %5580 = vmatprep.subr.mxu0 0.0
        %5581 = vmatpush1.msra.mxu0 0.0
        %5582 = vmatprep.subr.mxu0 0.0
        %5583 = vmatpush1.msra.mxu0 0.0
        %5584 = vmatprep.subr.mxu0 0.0
        %5585 = vmatpush1.msra.mxu0 0.0
        %5586 = vmatprep.subr.mxu0 0.0
        %5587 = vmatpush1.msra.mxu0 0.0
        %5588 = vmatprep.subr.mxu0 0.0
        %5589 = vmatpush1.msra.mxu0 0.0
        %5590 = vmatprep.subr.mxu0 0.0
        %5591 = vmatpush1.msra.mxu0 0.0
        %5592 = vmatprep.subr.mxu0 0.0
        %5593 = vmatpush1.msra.mxu0 0.0
        %5594 = vmatprep.subr.mxu0 0.0
        %5595 = vmatpush1.msra.mxu0 0.0
        %5596 = vmatprep.subr.mxu0 0.0
        %5597 = vmatpush1.msra.mxu0 0.0
        %5598 = vmatprep.subr.mxu0 0.0
        %5599 = vmatpush1.msra.mxu0 0.0
        %5600 = vmatprep.subr.mxu0 0.0
        %5601 = vmatpush1.msra.mxu0 0.0
        %5602 = vmatprep.subr.mxu0 0.0
        %5603 = vmatpush1.msra.mxu0 0.0
        %5604 = vmatprep.subr.mxu0 0.0
        %5605 = vmatpush1.msra.mxu0 0.0
        %5606 = vmatprep.subr.mxu0 0.0
        %5607 = vmatpush1.msra.mxu0 0.0
        %5608 = vmatprep.subr.mxu0 0.0
        %5609 = vmatpush1.msra.mxu0 0.0
        %5610 = vmatprep.subr.mxu0 0.0
        %5611 = vmatpush1.msra.mxu0 0.0
        %5612 = vmatprep.subr.mxu0 0.0
        %5613 = vmatpush1.msra.mxu0 0.0
        %5614 = vmatprep.subr.mxu0 0.0
        %5615 = vmatpush1.msra.mxu0 0.0
        %5616 = vmatprep.subr.mxu0 0.0
        %5617 = vmatpush1.msra.mxu0 0.0
        %5618 = vmatprep.subr.mxu0 0.0
        %5619 = vmatpush1.msra.mxu0 0.0
        %5620 = vmatprep.subr.mxu0 0.0
        %5621 = vmatpush1.msra.mxu0 0.0
        %5622 = vmatprep.subr.mxu0 0.0
        %5623 = vmatpush1.msra.mxu0 0.0
        %5624 = vmatprep.mubr.f32.mxu0 0.0
        %5625 = vmatmul.mubr.f32.gmra.mrb[0].mxu0 %v5418
        %v5626 = vpop.f32.mrb[0].mxu0
        %v5627 = vadd.f32 0.0, %v5626
        %v5628 = vpop.f32.mrb[0].mxu0
        %5629 = vdwg.mxu0
        %5630 = vmatprep.subr.mxu0 0.0
        %5631 = vmatpush1.msra.mxu0 %v4843
        %5632 = vmatprep.subr.mxu0 0.0
        %5633 = vmatpush1.msra.mxu0 %v4844
        %5634 = vmatprep.subr.mxu0 0.0
        %5635 = vmatpush1.msra.mxu0 %v4845
        %5636 = vmatprep.subr.mxu0 0.0
        %5637 = vmatpush1.msra.mxu0 %v4846
        %5638 = vmatprep.subr.mxu0 0.0
        %5639 = vmatpush1.msra.mxu0 0.0
        %5640 = vmatprep.subr.mxu0 0.0
        %5641 = vmatpush1.msra.mxu0 0.0
        %5642 = vmatprep.subr.mxu0 0.0
        %5643 = vmatpush1.msra.mxu0 0.0
        %5644 = vmatprep.subr.mxu0 0.0
        %5645 = vmatpush1.msra.mxu0 0.0
        %5646 = vmatprep.subr.mxu0 0.0
        %5647 = vmatpush1.msra.mxu0 0.0
        %5648 = vmatprep.subr.mxu0 0.0
        %5649 = vmatpush1.msra.mxu0 0.0
        %5650 = vmatprep.subr.mxu0 0.0
        %5651 = vmatpush1.msra.mxu0 0.0
        %5652 = vmatprep.subr.mxu0 0.0
        %5653 = vmatpush1.msra.mxu0 0.0
        %5654 = vmatprep.subr.mxu0 0.0
        %5655 = vmatpush1.msra.mxu0 0.0
        %5656 = vmatprep.subr.mxu0 0.0
        %5657 = vmatpush1.msra.mxu0 0.0
        %5658 = vmatprep.subr.mxu0 0.0
        %5659 = vmatpush1.msra.mxu0 0.0
        %5660 = vmatprep.subr.mxu0 0.0
        %5661 = vmatpush1.msra.mxu0 0.0
        %5662 = vmatprep.subr.mxu0 0.0
        %5663 = vmatpush1.msra.mxu0 0.0
        %5664 = vmatprep.subr.mxu0 0.0
        %5665 = vmatpush1.msra.mxu0 0.0
        %5666 = vmatprep.subr.mxu0 0.0
        %5667 = vmatpush1.msra.mxu0 0.0
        %5668 = vmatprep.subr.mxu0 0.0
        %5669 = vmatpush1.msra.mxu0 0.0
        %5670 = vmatprep.subr.mxu0 0.0
        %5671 = vmatpush1.msra.mxu0 0.0
        %5672 = vmatprep.subr.mxu0 0.0
        %5673 = vmatpush1.msra.mxu0 0.0
        %5674 = vmatprep.subr.mxu0 0.0
        %5675 = vmatpush1.msra.mxu0 0.0
        %5676 = vmatprep.subr.mxu0 0.0
        %5677 = vmatpush1.msra.mxu0 0.0
        %5678 = vmatprep.subr.mxu0 0.0
        %5679 = vmatpush1.msra.mxu0 0.0
        %5680 = vmatprep.subr.mxu0 0.0
        %5681 = vmatpush1.msra.mxu0 0.0
        %5682 = vmatprep.subr.mxu0 0.0
        %5683 = vmatpush1.msra.mxu0 0.0
        %5684 = vmatprep.subr.mxu0 0.0
        %5685 = vmatpush1.msra.mxu0 0.0
        %5686 = vmatprep.subr.mxu0 0.0
        %5687 = vmatpush1.msra.mxu0 0.0
        %5688 = vmatprep.subr.mxu0 0.0
        %5689 = vmatpush1.msra.mxu0 0.0
        %5690 = vmatprep.subr.mxu0 0.0
        %5691 = vmatpush1.msra.mxu0 0.0
        %5692 = vmatprep.subr.mxu0 0.0
        %5693 = vmatpush1.msra.mxu0 0.0
        %5694 = vmatprep.mubr.f32.mxu0 0.0
        %5695 = vmatmul.mubr.f32.gmra.mrb[0].mxu0 %v5418
        %v5696 = vpop.f32.mrb[0].mxu0
        %v5697 = vadd.f32 0.0, %v5696
        %v5698 = vpop.f32.mrb[0].mxu0
        %5699 = vdwg.mxu0
        %v5701 = vsel %vm1650, %v4924, 0
        %v5704 = vsel %vm1650, %v5204, 0
        %5706 = vmatprep.subr.mxu0 0.0
        %5707 = vmatpush1.xpose.msra.mxu0 %v5704
        %5708 = vmatprep.subr.mxu0 0.0
        %5709 = vmatpush1.xpose.msra.mxu0 0.0
        %5710 = vmatprep.subr.mxu0 0.0
        %5711 = vmatpush1.xpose.msra.mxu0 0.0
        %5712 = vmatprep.subr.mxu0 0.0
        %5713 = vmatpush1.xpose.msra.mxu0 0.0
        %5714 = vmatprep.subr.mxu0 0.0
        %5715 = vmatpush1.xpose.msra.mxu0 0.0
        %5716 = vmatprep.subr.mxu0 0.0
        %5717 = vmatpush1.xpose.msra.mxu0 0.0
        %5718 = vmatprep.subr.mxu0 0.0
        %5719 = vmatpush1.xpose.msra.mxu0 0.0
        %5720 = vmatprep.subr.mxu0 0.0
        %5721 = vmatpush1.xpose.msra.mxu0 0.0
        %5722 = vmatprep.subr.mxu0 0.0
        %5723 = vmatpush1.xpose.msra.mxu0 0.0
        %5724 = vmatprep.subr.mxu0 0.0
        %5725 = vmatpush1.xpose.msra.mxu0 0.0
        %5726 = vmatprep.subr.mxu0 0.0
        %5727 = vmatpush1.xpose.msra.mxu0 0.0
        %5728 = vmatprep.subr.mxu0 0.0
        %5729 = vmatpush1.xpose.msra.mxu0 0.0
        %5730 = vmatprep.subr.mxu0 0.0
        %5731 = vmatpush1.xpose.msra.mxu0 0.0
        %5732 = vmatprep.subr.mxu0 0.0
        %5733 = vmatpush1.xpose.msra.mxu0 0.0
        %5734 = vmatprep.subr.mxu0 0.0
        %5735 = vmatpush1.xpose.msra.mxu0 0.0
        %5736 = vmatprep.subr.mxu0 0.0
        %5737 = vmatpush1.xpose.msra.mxu0 0.0
        %5738 = vmatprep.subr.mxu0 0.0
        %5739 = vmatpush1.xpose.msra.mxu0 0.0
        %5740 = vmatprep.subr.mxu0 0.0
        %5741 = vmatpush1.xpose.msra.mxu0 0.0
        %5742 = vmatprep.subr.mxu0 0.0
        %5743 = vmatpush1.xpose.msra.mxu0 0.0
        %5744 = vmatprep.subr.mxu0 0.0
        %5745 = vmatpush1.xpose.msra.mxu0 0.0
        %5746 = vmatprep.subr.mxu0 0.0
        %5747 = vmatpush1.xpose.msra.mxu0 0.0
        %5748 = vmatprep.subr.mxu0 0.0
        %5749 = vmatpush1.xpose.msra.mxu0 0.0
        %5750 = vmatprep.subr.mxu0 0.0
        %5751 = vmatpush1.xpose.msra.mxu0 0.0
        %5752 = vmatprep.subr.mxu0 0.0
        %5753 = vmatpush1.xpose.msra.mxu0 0.0
        %5754 = vmatprep.subr.mxu0 0.0
        %5755 = vmatpush1.xpose.msra.mxu0 0.0
        %5756 = vmatprep.subr.mxu0 0.0
        %5757 = vmatpush1.xpose.msra.mxu0 0.0
        %5758 = vmatprep.subr.mxu0 0.0
        %5759 = vmatpush1.xpose.msra.mxu0 0.0
        %5760 = vmatprep.subr.mxu0 0.0
        %5761 = vmatpush1.xpose.msra.mxu0 0.0
        %5762 = vmatprep.subr.mxu0 0.0
        %5763 = vmatpush1.xpose.msra.mxu0 0.0
        %5764 = vmatprep.subr.mxu0 0.0
        %5765 = vmatpush1.xpose.msra.mxu0 0.0
        %5766 = vmatprep.subr.mxu0 0.0
        %5767 = vmatpush1.xpose.msra.mxu0 0.0
        %5768 = vmatprep.subr.mxu0 0.0
        %5769 = vmatpush1.xpose.msra.mxu0 0.0
        %5770 = vmatprep.mubr.f32.mxu0 0.0
        %5771 = vmatmul.mubr.f32.gmra.mrb[0].mxu0 %v5701
        %v5772 = vpop.f32.mrb[0].mxu0
        %v5773 = vadd.f32 0.0, %v5772
        %v5774 = vpop.f32.mrb[0].mxu0
        %5775 = vdwg.mxu0
        %v5777 = vsel %vm1650, %v4994, 0
        %v5780 = vsel %vm1650, %v5274, 0
        %5782 = vmatprep.subr.mxu0 0.0
        %5783 = vmatpush1.xpose.msra.mxu0 %v5780
        %5784 = vmatprep.subr.mxu0 0.0
        %5785 = vmatpush1.xpose.msra.mxu0 0.0
        %5786 = vmatprep.subr.mxu0 0.0
        %5787 = vmatpush1.xpose.msra.mxu0 0.0
        %5788 = vmatprep.subr.mxu0 0.0
        %5789 = vmatpush1.xpose.msra.mxu0 0.0
        %5790 = vmatprep.subr.mxu0 0.0
        %5791 = vmatpush1.xpose.msra.mxu0 0.0
        %5792 = vmatprep.subr.mxu0 0.0
        %5793 = vmatpush1.xpose.msra.mxu0 0.0
        %5794 = vmatprep.subr.mxu0 0.0
        %5795 = vmatpush1.xpose.msra.mxu0 0.0
        %5796 = vmatprep.subr.mxu0 0.0
        %5797 = vmatpush1.xpose.msra.mxu0 0.0
        %5798 = vmatprep.subr.mxu0 0.0
        %5799 = vmatpush1.xpose.msra.mxu0 0.0
        %5800 = vmatprep.subr.mxu0 0.0
        %5801 = vmatpush1.xpose.msra.mxu0 0.0
        %5802 = vmatprep.subr.mxu0 0.0
        %5803 = vmatpush1.xpose.msra.mxu0 0.0
        %5804 = vmatprep.subr.mxu0 0.0
        %5805 = vmatpush1.xpose.msra.mxu0 0.0
        %5806 = vmatprep.subr.mxu0 0.0
        %5807 = vmatpush1.xpose.msra.mxu0 0.0
        %5808 = vmatprep.subr.mxu0 0.0
        %5809 = vmatpush1.xpose.msra.mxu0 0.0
        %5810 = vmatprep.subr.mxu0 0.0
        %5811 = vmatpush1.xpose.msra.mxu0 0.0
        %5812 = vmatprep.subr.mxu0 0.0
        %5813 = vmatpush1.xpose.msra.mxu0 0.0
        %5814 = vmatprep.subr.mxu0 0.0
        %5815 = vmatpush1.xpose.msra.mxu0 0.0
        %5816 = vmatprep.subr.mxu0 0.0
        %5817 = vmatpush1.xpose.msra.mxu0 0.0
        %5818 = vmatprep.subr.mxu0 0.0
        %5819 = vmatpush1.xpose.msra.mxu0 0.0
        %5820 = vmatprep.subr.mxu0 0.0
        %5821 = vmatpush1.xpose.msra.mxu0 0.0
        %5822 = vmatprep.subr.mxu0 0.0
        %5823 = vmatpush1.xpose.msra.mxu0 0.0
        %5824 = vmatprep.subr.mxu0 0.0
        %5825 = vmatpush1.xpose.msra.mxu0 0.0
        %5826 = vmatprep.subr.mxu0 0.0
        %5827 = vmatpush1.xpose.msra.mxu0 0.0
        %5828 = vmatprep.subr.mxu0 0.0
        %5829 = vmatpush1.xpose.msra.mxu0 0.0
        %5830 = vmatprep.subr.mxu0 0.0
        %5831 = vmatpush1.xpose.msra.mxu0 0.0
        %5832 = vmatprep.subr.mxu0 0.0
        %5833 = vmatpush1.xpose.msra.mxu0 0.0
        %5834 = vmatprep.subr.mxu0 0.0
        %5835 = vmatpush1.xpose.msra.mxu0 0.0
        %5836 = vmatprep.subr.mxu0 0.0
        %5837 = vmatpush1.xpose.msra.mxu0 0.0
        %5838 = vmatprep.subr.mxu0 0.0
        %5839 = vmatpush1.xpose.msra.mxu0 0.0
        %5840 = vmatprep.subr.mxu0 0.0
        %5841 = vmatpush1.xpose.msra.mxu0 0.0
        %5842 = vmatprep.subr.mxu0 0.0
        %5843 = vmatpush1.xpose.msra.mxu0 0.0
        %5844 = vmatprep.subr.mxu0 0.0
        %5845 = vmatpush1.xpose.msra.mxu0 0.0
        %5846 = vmatprep.mubr.f32.mxu0 0.0
        %5847 = vmatmul.mubr.f32.gmra.mrb[0].mxu0 %v5777
        %v5848 = vpop.f32.mrb[0].mxu0
        %v5849 = vadd.f32 0.0, %v5848
        %v5850 = vpop.f32.mrb[0].mxu0
        %5851 = vdwg.mxu0
        %v5853 = vsel %vm1650, %v5064, 0
        %v5856 = vsel %vm1650, %v5344, 0
        %5858 = vmatprep.subr.mxu0 0.0
        %5859 = vmatpush1.xpose.msra.mxu0 %v5856
        %5860 = vmatprep.subr.mxu0 0.0
        %5861 = vmatpush1.xpose.msra.mxu0 0.0
        %5862 = vmatprep.subr.mxu0 0.0
        %5863 = vmatpush1.xpose.msra.mxu0 0.0
        %5864 = vmatprep.subr.mxu0 0.0
        %5865 = vmatpush1.xpose.msra.mxu0 0.0
        %5866 = vmatprep.subr.mxu0 0.0
        %5867 = vmatpush1.xpose.msra.mxu0 0.0
        %5868 = vmatprep.subr.mxu0 0.0
        %5869 = vmatpush1.xpose.msra.mxu0 0.0
        %5870 = vmatprep.subr.mxu0 0.0
        %5871 = vmatpush1.xpose.msra.mxu0 0.0
        %5872 = vmatprep.subr.mxu0 0.0
        %5873 = vmatpush1.xpose.msra.mxu0 0.0
        %5874 = vmatprep.subr.mxu0 0.0
        %5875 = vmatpush1.xpose.msra.mxu0 0.0
        %5876 = vmatprep.subr.mxu0 0.0
        %5877 = vmatpush1.xpose.msra.mxu0 0.0
        %5878 = vmatprep.subr.mxu0 0.0
        %5879 = vmatpush1.xpose.msra.mxu0 0.0
        %5880 = vmatprep.subr.mxu0 0.0
        %5881 = vmatpush1.xpose.msra.mxu0 0.0
        %5882 = vmatprep.subr.mxu0 0.0
        %5883 = vmatpush1.xpose.msra.mxu0 0.0
        %5884 = vmatprep.subr.mxu0 0.0
        %5885 = vmatpush1.xpose.msra.mxu0 0.0
        %5886 = vmatprep.subr.mxu0 0.0
        %5887 = vmatpush1.xpose.msra.mxu0 0.0
        %5888 = vmatprep.subr.mxu0 0.0
        %5889 = vmatpush1.xpose.msra.mxu0 0.0
        %5890 = vmatprep.subr.mxu0 0.0
        %5891 = vmatpush1.xpose.msra.mxu0 0.0
        %5892 = vmatprep.subr.mxu0 0.0
        %5893 = vmatpush1.xpose.msra.mxu0 0.0
        %5894 = vmatprep.subr.mxu0 0.0
        %5895 = vmatpush1.xpose.msra.mxu0 0.0
        %5896 = vmatprep.subr.mxu0 0.0
        %5897 = vmatpush1.xpose.msra.mxu0 0.0
        %5898 = vmatprep.subr.mxu0 0.0
        %5899 = vmatpush1.xpose.msra.mxu0 0.0
        %5900 = vmatprep.subr.mxu0 0.0
        %5901 = vmatpush1.xpose.msra.mxu0 0.0
        %5902 = vmatprep.subr.mxu0 0.0
        %5903 = vmatpush1.xpose.msra.mxu0 0.0
        %5904 = vmatprep.subr.mxu0 0.0
        %5905 = vmatpush1.xpose.msra.mxu0 0.0
        %5906 = vmatprep.subr.mxu0 0.0
        %5907 = vmatpush1.xpose.msra.mxu0 0.0
        %5908 = vmatprep.subr.mxu0 0.0
        %5909 = vmatpush1.xpose.msra.mxu0 0.0
        %5910 = vmatprep.subr.mxu0 0.0
        %5911 = vmatpush1.xpose.msra.mxu0 0.0
        %5912 = vmatprep.subr.mxu0 0.0
        %5913 = vmatpush1.xpose.msra.mxu0 0.0
        %5914 = vmatprep.subr.mxu0 0.0
        %5915 = vmatpush1.xpose.msra.mxu0 0.0
        %5916 = vmatprep.subr.mxu0 0.0
        %5917 = vmatpush1.xpose.msra.mxu0 0.0
        %5918 = vmatprep.subr.mxu0 0.0
        %5919 = vmatpush1.xpose.msra.mxu0 0.0
        %5920 = vmatprep.subr.mxu0 0.0
        %5921 = vmatpush1.xpose.msra.mxu0 0.0
        %5922 = vmatprep.mubr.f32.mxu0 0.0
        %5923 = vmatmul.mubr.f32.gmra.mrb[0].mxu0 %v5853
        %v5924 = vpop.f32.mrb[0].mxu0
        %v5925 = vadd.f32 0.0, %v5924
        %v5926 = vpop.f32.mrb[0].mxu0
        %5927 = vdwg.mxu0
        %v5929 = vsel %vm1650, %v5134, 0
        %v5932 = vsel %vm1650, %v5414, 0
        %5934 = vmatprep.subr.mxu0 0.0
        %5935 = vmatpush1.xpose.msra.mxu0 %v5932
        %5936 = vmatprep.subr.mxu0 0.0
        %5937 = vmatpush1.xpose.msra.mxu0 0.0
        %5938 = vmatprep.subr.mxu0 0.0
        %5939 = vmatpush1.xpose.msra.mxu0 0.0
        %5940 = vmatprep.subr.mxu0 0.0
        %5941 = vmatpush1.xpose.msra.mxu0 0.0
        %5942 = vmatprep.subr.mxu0 0.0
        %5943 = vmatpush1.xpose.msra.mxu0 0.0
        %5944 = vmatprep.subr.mxu0 0.0
        %5945 = vmatpush1.xpose.msra.mxu0 0.0
        %5946 = vmatprep.subr.mxu0 0.0
        %5947 = vmatpush1.xpose.msra.mxu0 0.0
        %5948 = vmatprep.subr.mxu0 0.0
        %5949 = vmatpush1.xpose.msra.mxu0 0.0
        %5950 = vmatprep.subr.mxu0 0.0
        %5951 = vmatpush1.xpose.msra.mxu0 0.0
        %5952 = vmatprep.subr.mxu0 0.0
        %5953 = vmatpush1.xpose.msra.mxu0 0.0
        %5954 = vmatprep.subr.mxu0 0.0
        %5955 = vmatpush1.xpose.msra.mxu0 0.0
        %5956 = vmatprep.subr.mxu0 0.0
        %5957 = vmatpush1.xpose.msra.mxu0 0.0
        %5958 = vmatprep.subr.mxu0 0.0
        %5959 = vmatpush1.xpose.msra.mxu0 0.0
        %5960 = vmatprep.subr.mxu0 0.0
        %5961 = vmatpush1.xpose.msra.mxu0 0.0
        %5962 = vmatprep.subr.mxu0 0.0
        %5963 = vmatpush1.xpose.msra.mxu0 0.0
        %5964 = vmatprep.subr.mxu0 0.0
        %5965 = vmatpush1.xpose.msra.mxu0 0.0
        %5966 = vmatprep.subr.mxu0 0.0
        %5967 = vmatpush1.xpose.msra.mxu0 0.0
        %5968 = vmatprep.subr.mxu0 0.0
        %5969 = vmatpush1.xpose.msra.mxu0 0.0
        %5970 = vmatprep.subr.mxu0 0.0
        %5971 = vmatpush1.xpose.msra.mxu0 0.0
        %5972 = vmatprep.subr.mxu0 0.0
        %5973 = vmatpush1.xpose.msra.mxu0 0.0
        %5974 = vmatprep.subr.mxu0 0.0
        %5975 = vmatpush1.xpose.msra.mxu0 0.0
        %5976 = vmatprep.subr.mxu0 0.0
        %5977 = vmatpush1.xpose.msra.mxu0 0.0
        %5978 = vmatprep.subr.mxu0 0.0
        %5979 = vmatpush1.xpose.msra.mxu0 0.0
        %5980 = vmatprep.subr.mxu0 0.0
        %5981 = vmatpush1.xpose.msra.mxu0 0.0
        %5982 = vmatprep.subr.mxu0 0.0
        %5983 = vmatpush1.xpose.msra.mxu0 0.0
        %5984 = vmatprep.subr.mxu0 0.0
        %5985 = vmatpush1.xpose.msra.mxu0 0.0
        %5986 = vmatprep.subr.mxu0 0.0
        %5987 = vmatpush1.xpose.msra.mxu0 0.0
        %5988 = vmatprep.subr.mxu0 0.0
        %5989 = vmatpush1.xpose.msra.mxu0 0.0
        %5990 = vmatprep.subr.mxu0 0.0
        %5991 = vmatpush1.xpose.msra.mxu0 0.0
        %5992 = vmatprep.subr.mxu0 0.0
        %5993 = vmatpush1.xpose.msra.mxu0 0.0
        %5994 = vmatprep.subr.mxu0 0.0
        %5995 = vmatpush1.xpose.msra.mxu0 0.0
        %5996 = vmatprep.subr.mxu0 0.0
        %5997 = vmatpush1.xpose.msra.mxu0 0.0
        %5998 = vmatprep.mubr.f32.mxu0 0.0
        %5999 = vmatmul.mubr.f32.gmra.mrb[0].mxu0 %v5929
        %v6000 = vpop.f32.mrb[0].mxu0
        %v6001 = vadd.f32 0.0, %v6000
        %v6002 = vpop.f32.mrb[0].mxu0
        %6003 = vdwg.mxu0
        %v6004 = vsel %vm1650, %v5773, -inf
        %6005 = vmax.xlane.f32.xlu0 %v6004
        %v6006 = vpop.xlane.xlu0 %6005
        %v6007 = vsel %vm1650, %v5849, -inf
        %6008 = vmax.xlane.f32.xlu0 %v6007
        %v6009 = vpop.xlane.xlu0 %6008
        %v6010 = vsel %vm1650, %v5925, -inf
        %6011 = vmax.xlane.f32.xlu0 %v6010
        %v6012 = vpop.xlane.xlu0 %6011
        %v6013 = vsel %vm1650, %v6001, -inf
        %6014 = vmax.xlane.f32.xlu0 %v6013
        %v6015 = vpop.xlane.xlu0 %6014
        %v6016 = vsub.f32 %v5773, %v6006
        %v6017 = vsub.f32 %v5849, %v6009
        %v6018 = vsub.f32 %v5925, %v6012
        %v6019 = vsub.f32 %v6001, %v6015
        %v6020 = vmul.f32 %v6016, 1.442695
        %v6021 = vpow.pop %v6020
        %v6022 = vmul.f32 %v6017, 1.442695
        %v6023 = vpow.pop %v6022
        %v6024 = vmul.f32 %v6018, 1.442695
        %v6025 = vpow.pop %v6024
        %v6026 = vmul.f32 %v6019, 1.442695
        %v6027 = vpow.pop %v6026
        %v6028 = vsel %vm1650, %v6021, 0.0
        %6029 = vadd.xlane.f32.xlu0 %v6028
        %v6030 = vpop.xlane.xlu0 %6029
        %v6031 = vsel %vm1650, %v6023, 0.0
        %6032 = vadd.xlane.f32.xlu0 %v6031
        %v6033 = vpop.xlane.xlu0 %6032
        %v6034 = vsel %vm1650, %v6025, 0.0
        %6035 = vadd.xlane.f32.xlu0 %v6034
        %v6036 = vpop.xlane.xlu0 %6035
        %v6037 = vsel %vm1650, %v6027, 0.0
        %6038 = vadd.xlane.f32.xlu0 %v6037
        %v6039 = vpop.xlane.xlu0 %6038
        %v6040 = vrcp.pop %v6030
        %v6041 = vrcp.pop %v6033
        %v6042 = vrcp.pop %v6036
        %v6043 = vrcp.pop %v6039
        %v6044 = vmul.f32 %v6021, %v6040
        %v6045 = vmul.f32 %v6023, %v6041
        %v6046 = vmul.f32 %v6025, %v6042
        %v6047 = vmul.f32 %v6027, %v6043
        %v6049 = vsel %vm1650, %v6044, 0
        %6051 = vmatprep.subr.mxu0 0.0
        %6052 = vmatpush1.msra.mxu0 %v5487
        %6053 = vmatprep.subr.mxu0 0.0
        %6054 = vmatpush1.msra.mxu0 0.0
        %6055 = vmatprep.subr.mxu0 0.0
        %6056 = vmatpush1.msra.mxu0 0.0
        %6057 = vmatprep.subr.mxu0 0.0
        %6058 = vmatpush1.msra.mxu0 0.0
        %6059 = vmatprep.subr.mxu0 0.0
        %6060 = vmatpush1.msra.mxu0 0.0
        %6061 = vmatprep.subr.mxu0 0.0
        %6062 = vmatpush1.msra.mxu0 0.0
        %6063 = vmatprep.subr.mxu0 0.0
        %6064 = vmatpush1.msra.mxu0 0.0
        %6065 = vmatprep.subr.mxu0 0.0
        %6066 = vmatpush1.msra.mxu0 0.0
        %6067 = vmatprep.subr.mxu0 0.0
        %6068 = vmatpush1.msra.mxu0 0.0
        %6069 = vmatprep.subr.mxu0 0.0
        %6070 = vmatpush1.msra.mxu0 0.0
        %6071 = vmatprep.subr.mxu0 0.0
        %6072 = vmatpush1.msra.mxu0 0.0
        %6073 = vmatprep.subr.mxu0 0.0
        %6074 = vmatpush1.msra.mxu0 0.0
        %6075 = vmatprep.subr.mxu0 0.0
        %6076 = vmatpush1.msra.mxu0 0.0
        %6077 = vmatprep.subr.mxu0 0.0
        %6078 = vmatpush1.msra.mxu0 0.0
        %6079 = vmatprep.subr.mxu0 0.0
        %6080 = vmatpush1.msra.mxu0 0.0
        %6081 = vmatprep.subr.mxu0 0.0
        %6082 = vmatpush1.msra.mxu0 0.0
        %6083 = vmatprep.subr.mxu0 0.0
        %6084 = vmatpush1.msra.mxu0 0.0
        %6085 = vmatprep.subr.mxu0 0.0
        %6086 = vmatpush1.msra.mxu0 0.0
        %6087 = vmatprep.subr.mxu0 0.0
        %6088 = vmatpush1.msra.mxu0 0.0
        %6089 = vmatprep.subr.mxu0 0.0
        %6090 = vmatpush1.msra.mxu0 0.0
        %6091 = vmatprep.subr.mxu0 0.0
        %6092 = vmatpush1.msra.mxu0 0.0
        %6093 = vmatprep.subr.mxu0 0.0
        %6094 = vmatpush1.msra.mxu0 0.0
        %6095 = vmatprep.subr.mxu0 0.0
        %6096 = vmatpush1.msra.mxu0 0.0
        %6097 = vmatprep.subr.mxu0 0.0
        %6098 = vmatpush1.msra.mxu0 0.0
        %6099 = vmatprep.subr.mxu0 0.0
        %6100 = vmatpush1.msra.mxu0 0.0
        %6101 = vmatprep.subr.mxu0 0.0
        %6102 = vmatpush1.msra.mxu0 0.0
        %6103 = vmatprep.subr.mxu0 0.0
        %6104 = vmatpush1.msra.mxu0 0.0
        %6105 = vmatprep.subr.mxu0 0.0
        %6106 = vmatpush1.msra.mxu0 0.0
        %6107 = vmatprep.subr.mxu0 0.0
        %6108 = vmatpush1.msra.mxu0 0.0
        %6109 = vmatprep.subr.mxu0 0.0
        %6110 = vmatpush1.msra.mxu0 0.0
        %6111 = vmatprep.subr.mxu0 0.0
        %6112 = vmatpush1.msra.mxu0 0.0
        %6113 = vmatprep.subr.mxu0 0.0
        %6114 = vmatpush1.msra.mxu0 0.0
        %6115 = vmatprep.mubr.f32.mxu0 0.0
        %6116 = vmatmul.mubr.f32.gmra.mrb[0].mxu0 %v6049
        %v6117 = vpop.f32.mrb[0].mxu0
        %v6118 = vadd.f32 0.0, %v6117
        %v6119 = vpop.f32.mrb[0].mxu0
        %6120 = vdwg.mxu0
        %v6122 = vsel %vm1650, %v6045, 0
        %6124 = vmatprep.subr.mxu0 0.0
        %6125 = vmatpush1.msra.mxu0 %v5557
        %6126 = vmatprep.subr.mxu0 0.0
        %6127 = vmatpush1.msra.mxu0 0.0
        %6128 = vmatprep.subr.mxu0 0.0
        %6129 = vmatpush1.msra.mxu0 0.0
        %6130 = vmatprep.subr.mxu0 0.0
        %6131 = vmatpush1.msra.mxu0 0.0
        %6132 = vmatprep.subr.mxu0 0.0
        %6133 = vmatpush1.msra.mxu0 0.0
        %6134 = vmatprep.subr.mxu0 0.0
        %6135 = vmatpush1.msra.mxu0 0.0
        %6136 = vmatprep.subr.mxu0 0.0
        %6137 = vmatpush1.msra.mxu0 0.0
        %6138 = vmatprep.subr.mxu0 0.0
        %6139 = vmatpush1.msra.mxu0 0.0
        %6140 = vmatprep.subr.mxu0 0.0
        %6141 = vmatpush1.msra.mxu0 0.0
        %6142 = vmatprep.subr.mxu0 0.0
        %6143 = vmatpush1.msra.mxu0 0.0
        %6144 = vmatprep.subr.mxu0 0.0
        %6145 = vmatpush1.msra.mxu0 0.0
        %6146 = vmatprep.subr.mxu0 0.0
        %6147 = vmatpush1.msra.mxu0 0.0
        %6148 = vmatprep.subr.mxu0 0.0
        %6149 = vmatpush1.msra.mxu0 0.0
        %6150 = vmatprep.subr.mxu0 0.0
        %6151 = vmatpush1.msra.mxu0 0.0
        %6152 = vmatprep.subr.mxu0 0.0
        %6153 = vmatpush1.msra.mxu0 0.0
        %6154 = vmatprep.subr.mxu0 0.0
        %6155 = vmatpush1.msra.mxu0 0.0
        %6156 = vmatprep.subr.mxu0 0.0
        %6157 = vmatpush1.msra.mxu0 0.0
        %6158 = vmatprep.subr.mxu0 0.0
        %6159 = vmatpush1.msra.mxu0 0.0
        %6160 = vmatprep.subr.mxu0 0.0
        %6161 = vmatpush1.msra.mxu0 0.0
        %6162 = vmatprep.subr.mxu0 0.0
        %6163 = vmatpush1.msra.mxu0 0.0
        %6164 = vmatprep.subr.mxu0 0.0
        %6165 = vmatpush1.msra.mxu0 0.0
        %6166 = vmatprep.subr.mxu0 0.0
        %6167 = vmatpush1.msra.mxu0 0.0
        %6168 = vmatprep.subr.mxu0 0.0
        %6169 = vmatpush1.msra.mxu0 0.0
        %6170 = vmatprep.subr.mxu0 0.0
        %6171 = vmatpush1.msra.mxu0 0.0
        %6172 = vmatprep.subr.mxu0 0.0
        %6173 = vmatpush1.msra.mxu0 0.0
        %6174 = vmatprep.subr.mxu0 0.0
        %6175 = vmatpush1.msra.mxu0 0.0
        %6176 = vmatprep.subr.mxu0 0.0
        %6177 = vmatpush1.msra.mxu0 0.0
        %6178 = vmatprep.subr.mxu0 0.0
        %6179 = vmatpush1.msra.mxu0 0.0
        %6180 = vmatprep.subr.mxu0 0.0
        %6181 = vmatpush1.msra.mxu0 0.0
        %6182 = vmatprep.subr.mxu0 0.0
        %6183 = vmatpush1.msra.mxu0 0.0
        %6184 = vmatprep.subr.mxu0 0.0
        %6185 = vmatpush1.msra.mxu0 0.0
        %6186 = vmatprep.subr.mxu0 0.0
        %6187 = vmatpush1.msra.mxu0 0.0
        %6188 = vmatprep.mubr.f32.mxu0 0.0
        %6189 = vmatmul.mubr.f32.gmra.mrb[0].mxu0 %v6122
        %v6190 = vpop.f32.mrb[0].mxu0
        %v6191 = vadd.f32 0.0, %v6190
        %v6192 = vpop.f32.mrb[0].mxu0
        %6193 = vdwg.mxu0
        %v6195 = vsel %vm1650, %v6046, 0
        %6197 = vmatprep.subr.mxu0 0.0
        %6198 = vmatpush1.msra.mxu0 %v5627
        %6199 = vmatprep.subr.mxu0 0.0
        %6200 = vmatpush1.msra.mxu0 0.0
        %6201 = vmatprep.subr.mxu0 0.0
        %6202 = vmatpush1.msra.mxu0 0.0
        %6203 = vmatprep.subr.mxu0 0.0
        %6204 = vmatpush1.msra.mxu0 0.0
        %6205 = vmatprep.subr.mxu0 0.0
        %6206 = vmatpush1.msra.mxu0 0.0
        %6207 = vmatprep.subr.mxu0 0.0
        %6208 = vmatpush1.msra.mxu0 0.0
        %6209 = vmatprep.subr.mxu0 0.0
        %6210 = vmatpush1.msra.mxu0 0.0
        %6211 = vmatprep.subr.mxu0 0.0
        %6212 = vmatpush1.msra.mxu0 0.0
        %6213 = vmatprep.subr.mxu0 0.0
        %6214 = vmatpush1.msra.mxu0 0.0
        %6215 = vmatprep.subr.mxu0 0.0
        %6216 = vmatpush1.msra.mxu0 0.0
        %6217 = vmatprep.subr.mxu0 0.0
        %6218 = vmatpush1.msra.mxu0 0.0
        %6219 = vmatprep.subr.mxu0 0.0
        %6220 = vmatpush1.msra.mxu0 0.0
        %6221 = vmatprep.subr.mxu0 0.0
        %6222 = vmatpush1.msra.mxu0 0.0
        %6223 = vmatprep.subr.mxu0 0.0
        %6224 = vmatpush1.msra.mxu0 0.0
        %6225 = vmatprep.subr.mxu0 0.0
        %6226 = vmatpush1.msra.mxu0 0.0
        %6227 = vmatprep.subr.mxu0 0.0
        %6228 = vmatpush1.msra.mxu0 0.0
        %6229 = vmatprep.subr.mxu0 0.0
        %6230 = vmatpush1.msra.mxu0 0.0
        %6231 = vmatprep.subr.mxu0 0.0
        %6232 = vmatpush1.msra.mxu0 0.0
        %6233 = vmatprep.subr.mxu0 0.0
        %6234 = vmatpush1.msra.mxu0 0.0
        %6235 = vmatprep.subr.mxu0 0.0
        %6236 = vmatpush1.msra.mxu0 0.0
        %6237 = vmatprep.subr.mxu0 0.0
        %6238 = vmatpush1.msra.mxu0 0.0
        %6239 = vmatprep.subr.mxu0 0.0
        %6240 = vmatpush1.msra.mxu0 0.0
        %6241 = vmatprep.subr.mxu0 0.0
        %6242 = vmatpush1.msra.mxu0 0.0
        %6243 = vmatprep.subr.mxu0 0.0
        %6244 = vmatpush1.msra.mxu0 0.0
        %6245 = vmatprep.subr.mxu0 0.0
        %6246 = vmatpush1.msra.mxu0 0.0
        %6247 = vmatprep.subr.mxu0 0.0
        %6248 = vmatpush1.msra.mxu0 0.0
        %6249 = vmatprep.subr.mxu0 0.0
        %6250 = vmatpush1.msra.mxu0 0.0
        %6251 = vmatprep.subr.mxu0 0.0
        %6252 = vmatpush1.msra.mxu0 0.0
        %6253 = vmatprep.subr.mxu0 0.0
        %6254 = vmatpush1.msra.mxu0 0.0
        %6255 = vmatprep.subr.mxu0 0.0
        %6256 = vmatpush1.msra.mxu0 0.0
        %6257 = vmatprep.subr.mxu0 0.0
        %6258 = vmatpush1.msra.mxu0 0.0
        %6259 = vmatprep.subr.mxu0 0.0
        %6260 = vmatpush1.msra.mxu0 0.0
        %6261 = vmatprep.mubr.f32.mxu0 0.0
        %6262 = vmatmul.mubr.f32.gmra.mrb[0].mxu0 %v6195
        %v6263 = vpop.f32.mrb[0].mxu0
        %v6264 = vadd.f32 0.0, %v6263
        %v6265 = vpop.f32.mrb[0].mxu0
        %6266 = vdwg.mxu0
        %v6268 = vsel %vm1650, %v6047, 0
        %6270 = vmatprep.subr.mxu0 0.0
        %6271 = vmatpush1.msra.mxu0 %v5697
        %6272 = vmatprep.subr.mxu0 0.0
        %6273 = vmatpush1.msra.mxu0 0.0
        %6274 = vmatprep.subr.mxu0 0.0
        %6275 = vmatpush1.msra.mxu0 0.0
        %6276 = vmatprep.subr.mxu0 0.0
        %6277 = vmatpush1.msra.mxu0 0.0
        %6278 = vmatprep.subr.mxu0 0.0
        %6279 = vmatpush1.msra.mxu0 0.0
        %6280 = vmatprep.subr.mxu0 0.0
        %6281 = vmatpush1.msra.mxu0 0.0
        %6282 = vmatprep.subr.mxu0 0.0
        %6283 = vmatpush1.msra.mxu0 0.0
        %6284 = vmatprep.subr.mxu0 0.0
        %6285 = vmatpush1.msra.mxu0 0.0
        %6286 = vmatprep.subr.mxu0 0.0
        %6287 = vmatpush1.msra.mxu0 0.0
        %6288 = vmatprep.subr.mxu0 0.0
        %6289 = vmatpush1.msra.mxu0 0.0
        %6290 = vmatprep.subr.mxu0 0.0
        %6291 = vmatpush1.msra.mxu0 0.0
        %6292 = vmatprep.subr.mxu0 0.0
        %6293 = vmatpush1.msra.mxu0 0.0
        %6294 = vmatprep.subr.mxu0 0.0
        %6295 = vmatpush1.msra.mxu0 0.0
        %6296 = vmatprep.subr.mxu0 0.0
        %6297 = vmatpush1.msra.mxu0 0.0
        %6298 = vmatprep.subr.mxu0 0.0
        %6299 = vmatpush1.msra.mxu0 0.0
        %6300 = vmatprep.subr.mxu0 0.0
        %6301 = vmatpush1.msra.mxu0 0.0
        %6302 = vmatprep.subr.mxu0 0.0
        %6303 = vmatpush1.msra.mxu0 0.0
        %6304 = vmatprep.subr.mxu0 0.0
        %6305 = vmatpush1.msra.mxu0 0.0
        %6306 = vmatprep.subr.mxu0 0.0
        %6307 = vmatpush1.msra.mxu0 0.0
        %6308 = vmatprep.subr.mxu0 0.0
        %6309 = vmatpush1.msra.mxu0 0.0
        %6310 = vmatprep.subr.mxu0 0.0
        %6311 = vmatpush1.msra.mxu0 0.0
        %6312 = vmatprep.subr.mxu0 0.0
        %6313 = vmatpush1.msra.mxu0 0.0
        %6314 = vmatprep.subr.mxu0 0.0
        %6315 = vmatpush1.msra.mxu0 0.0
        %6316 = vmatprep.subr.mxu0 0.0
        %6317 = vmatpush1.msra.mxu0 0.0
        %6318 = vmatprep.subr.mxu0 0.0
        %6319 = vmatpush1.msra.mxu0 0.0
        %6320 = vmatprep.subr.mxu0 0.0
        %6321 = vmatpush1.msra.mxu0 0.0
        %6322 = vmatprep.subr.mxu0 0.0
        %6323 = vmatpush1.msra.mxu0 0.0
        %6324 = vmatprep.subr.mxu0 0.0
        %6325 = vmatpush1.msra.mxu0 0.0
        %6326 = vmatprep.subr.mxu0 0.0
        %6327 = vmatpush1.msra.mxu0 0.0
        %6328 = vmatprep.subr.mxu0 0.0
        %6329 = vmatpush1.msra.mxu0 0.0
        %6330 = vmatprep.subr.mxu0 0.0
        %6331 = vmatpush1.msra.mxu0 0.0
        %6332 = vmatprep.subr.mxu0 0.0
        %6333 = vmatpush1.msra.mxu0 0.0
        %6334 = vmatprep.mubr.f32.mxu0 0.0
        %6335 = vmatmul.mubr.f32.gmra.mrb[0].mxu0 %v6268
        %v6336 = vpop.f32.mrb[0].mxu0
        %v6337 = vadd.f32 0.0, %v6336
        %v6338 = vpop.f32.mrb[0].mxu0
        %6339 = vdwg.mxu0
        %v6341 = vsel %vm1650, %v6118, 0
        %6343 = vmatprep.subr.mxu0 0.0
        %6344 = vmatpush1.msra.mxu0 %v4848
        %6345 = vmatprep.subr.mxu0 0.0
        %6346 = vmatpush1.msra.mxu0 0.0
        %6347 = vmatprep.subr.mxu0 0.0
        %6348 = vmatpush1.msra.mxu0 0.0
        %6349 = vmatprep.subr.mxu0 0.0
        %6350 = vmatpush1.msra.mxu0 0.0
        %6351 = vmatprep.subr.mxu0 0.0
        %6352 = vmatpush1.msra.mxu0 0.0
        %6353 = vmatprep.subr.mxu0 0.0
        %6354 = vmatpush1.msra.mxu0 0.0
        %6355 = vmatprep.subr.mxu0 0.0
        %6356 = vmatpush1.msra.mxu0 0.0
        %6357 = vmatprep.subr.mxu0 0.0
        %6358 = vmatpush1.msra.mxu0 0.0
        %6359 = vmatprep.subr.mxu0 0.0
        %6360 = vmatpush1.msra.mxu0 0.0
        %6361 = vmatprep.subr.mxu0 0.0
        %6362 = vmatpush1.msra.mxu0 0.0
        %6363 = vmatprep.subr.mxu0 0.0
        %6364 = vmatpush1.msra.mxu0 0.0
        %6365 = vmatprep.subr.mxu0 0.0
        %6366 = vmatpush1.msra.mxu0 0.0
        %6367 = vmatprep.subr.mxu0 0.0
        %6368 = vmatpush1.msra.mxu0 0.0
        %6369 = vmatprep.subr.mxu0 0.0
        %6370 = vmatpush1.msra.mxu0 0.0
        %6371 = vmatprep.subr.mxu0 0.0
        %6372 = vmatpush1.msra.mxu0 0.0
        %6373 = vmatprep.subr.mxu0 0.0
        %6374 = vmatpush1.msra.mxu0 0.0
        %6375 = vmatprep.subr.mxu0 0.0
        %6376 = vmatpush1.msra.mxu0 0.0
        %6377 = vmatprep.subr.mxu0 0.0
        %6378 = vmatpush1.msra.mxu0 0.0
        %6379 = vmatprep.subr.mxu0 0.0
        %6380 = vmatpush1.msra.mxu0 0.0
        %6381 = vmatprep.subr.mxu0 0.0
        %6382 = vmatpush1.msra.mxu0 0.0
        %6383 = vmatprep.subr.mxu0 0.0
        %6384 = vmatpush1.msra.mxu0 0.0
        %6385 = vmatprep.subr.mxu0 0.0
        %6386 = vmatpush1.msra.mxu0 0.0
        %6387 = vmatprep.subr.mxu0 0.0
        %6388 = vmatpush1.msra.mxu0 0.0
        %6389 = vmatprep.subr.mxu0 0.0
        %6390 = vmatpush1.msra.mxu0 0.0
        %6391 = vmatprep.subr.mxu0 0.0
        %6392 = vmatpush1.msra.mxu0 0.0
        %6393 = vmatprep.subr.mxu0 0.0
        %6394 = vmatpush1.msra.mxu0 0.0
        %6395 = vmatprep.subr.mxu0 0.0
        %6396 = vmatpush1.msra.mxu0 0.0
        %6397 = vmatprep.subr.mxu0 0.0
        %6398 = vmatpush1.msra.mxu0 0.0
        %6399 = vmatprep.subr.mxu0 0.0
        %6400 = vmatpush1.msra.mxu0 0.0
        %6401 = vmatprep.subr.mxu0 0.0
        %6402 = vmatpush1.msra.mxu0 0.0
        %6403 = vmatprep.subr.mxu0 0.0
        %6404 = vmatpush1.msra.mxu0 0.0
        %6405 = vmatprep.subr.mxu0 0.0
        %6406 = vmatpush1.msra.mxu0 0.0
        %6407 = vmatprep.mubr.f32.mxu0 0.0
        %6408 = vmatmul.mubr.f32.gmra.mrb[0].mxu0 %v6341
        %v6409 = vpop.f32.mrb[0].mxu0
        %v6410 = vadd.f32 0.0, %v6409
        %v6411 = vpop.f32.mrb[0].mxu0
        %6412 = vdwg.mxu0
        %v6414 = vsel %vm1650, %v6191, 0
        %6416 = vmatprep.subr.mxu0 0.0
        %6417 = vmatpush1.msra.mxu0 %v4849
        %6418 = vmatprep.subr.mxu0 0.0
        %6419 = vmatpush1.msra.mxu0 0.0
        %6420 = vmatprep.subr.mxu0 0.0
        %6421 = vmatpush1.msra.mxu0 0.0
        %6422 = vmatprep.subr.mxu0 0.0
        %6423 = vmatpush1.msra.mxu0 0.0
        %6424 = vmatprep.subr.mxu0 0.0
        %6425 = vmatpush1.msra.mxu0 0.0
        %6426 = vmatprep.subr.mxu0 0.0
        %6427 = vmatpush1.msra.mxu0 0.0
        %6428 = vmatprep.subr.mxu0 0.0
        %6429 = vmatpush1.msra.mxu0 0.0
        %6430 = vmatprep.subr.mxu0 0.0
        %6431 = vmatpush1.msra.mxu0 0.0
        %6432 = vmatprep.subr.mxu0 0.0
        %6433 = vmatpush1.msra.mxu0 0.0
        %6434 = vmatprep.subr.mxu0 0.0
        %6435 = vmatpush1.msra.mxu0 0.0
        %6436 = vmatprep.subr.mxu0 0.0
        %6437 = vmatpush1.msra.mxu0 0.0
        %6438 = vmatprep.subr.mxu0 0.0
        %6439 = vmatpush1.msra.mxu0 0.0
        %6440 = vmatprep.subr.mxu0 0.0
        %6441 = vmatpush1.msra.mxu0 0.0
        %6442 = vmatprep.subr.mxu0 0.0
        %6443 = vmatpush1.msra.mxu0 0.0
        %6444 = vmatprep.subr.mxu0 0.0
        %6445 = vmatpush1.msra.mxu0 0.0
        %6446 = vmatprep.subr.mxu0 0.0
        %6447 = vmatpush1.msra.mxu0 0.0
        %6448 = vmatprep.subr.mxu0 0.0
        %6449 = vmatpush1.msra.mxu0 0.0
        %6450 = vmatprep.subr.mxu0 0.0
        %6451 = vmatpush1.msra.mxu0 0.0
        %6452 = vmatprep.subr.mxu0 0.0
        %6453 = vmatpush1.msra.mxu0 0.0
        %6454 = vmatprep.subr.mxu0 0.0
        %6455 = vmatpush1.msra.mxu0 0.0
        %6456 = vmatprep.subr.mxu0 0.0
        %6457 = vmatpush1.msra.mxu0 0.0
        %6458 = vmatprep.subr.mxu0 0.0
        %6459 = vmatpush1.msra.mxu0 0.0
        %6460 = vmatprep.subr.mxu0 0.0
        %6461 = vmatpush1.msra.mxu0 0.0
        %6462 = vmatprep.subr.mxu0 0.0
        %6463 = vmatpush1.msra.mxu0 0.0
        %6464 = vmatprep.subr.mxu0 0.0
        %6465 = vmatpush1.msra.mxu0 0.0
        %6466 = vmatprep.subr.mxu0 0.0
        %6467 = vmatpush1.msra.mxu0 0.0
        %6468 = vmatprep.subr.mxu0 0.0
        %6469 = vmatpush1.msra.mxu0 0.0
        %6470 = vmatprep.subr.mxu0 0.0
        %6471 = vmatpush1.msra.mxu0 0.0
        %6472 = vmatprep.subr.mxu0 0.0
        %6473 = vmatpush1.msra.mxu0 0.0
        %6474 = vmatprep.subr.mxu0 0.0
        %6475 = vmatpush1.msra.mxu0 0.0
        %6476 = vmatprep.subr.mxu0 0.0
        %6477 = vmatpush1.msra.mxu0 0.0
        %6478 = vmatprep.subr.mxu0 0.0
        %6479 = vmatpush1.msra.mxu0 0.0
        %6480 = vmatprep.mubr.f32.mxu0 0.0
        %6481 = vmatmul.mubr.f32.gmra.mrb[0].mxu0 %v6414
        %v6482 = vpop.f32.mrb[0].mxu0
        %v6483 = vadd.f32 0.0, %v6482
        %v6484 = vpop.f32.mrb[0].mxu0
        %6485 = vdwg.mxu0
        %v6487 = vsel %vm1650, %v6264, 0
        %6489 = vmatprep.subr.mxu0 0.0
        %6490 = vmatpush1.msra.mxu0 %v4850
        %6491 = vmatprep.subr.mxu0 0.0
        %6492 = vmatpush1.msra.mxu0 0.0
        %6493 = vmatprep.subr.mxu0 0.0
        %6494 = vmatpush1.msra.mxu0 0.0
        %6495 = vmatprep.subr.mxu0 0.0
        %6496 = vmatpush1.msra.mxu0 0.0
        %6497 = vmatprep.subr.mxu0 0.0
        %6498 = vmatpush1.msra.mxu0 0.0
        %6499 = vmatprep.subr.mxu0 0.0
        %6500 = vmatpush1.msra.mxu0 0.0
        %6501 = vmatprep.subr.mxu0 0.0
        %6502 = vmatpush1.msra.mxu0 0.0
        %6503 = vmatprep.subr.mxu0 0.0
        %6504 = vmatpush1.msra.mxu0 0.0
        %6505 = vmatprep.subr.mxu0 0.0
        %6506 = vmatpush1.msra.mxu0 0.0
        %6507 = vmatprep.subr.mxu0 0.0
        %6508 = vmatpush1.msra.mxu0 0.0
        %6509 = vmatprep.subr.mxu0 0.0
        %6510 = vmatpush1.msra.mxu0 0.0
        %6511 = vmatprep.subr.mxu0 0.0
        %6512 = vmatpush1.msra.mxu0 0.0
        %6513 = vmatprep.subr.mxu0 0.0
        %6514 = vmatpush1.msra.mxu0 0.0
        %6515 = vmatprep.subr.mxu0 0.0
        %6516 = vmatpush1.msra.mxu0 0.0
        %6517 = vmatprep.subr.mxu0 0.0
        %6518 = vmatpush1.msra.mxu0 0.0
        %6519 = vmatprep.subr.mxu0 0.0
        %6520 = vmatpush1.msra.mxu0 0.0
        %6521 = vmatprep.subr.mxu0 0.0
        %6522 = vmatpush1.msra.mxu0 0.0
        %6523 = vmatprep.subr.mxu0 0.0
        %6524 = vmatpush1.msra.mxu0 0.0
        %6525 = vmatprep.subr.mxu0 0.0
        %6526 = vmatpush1.msra.mxu0 0.0
        %6527 = vmatprep.subr.mxu0 0.0
        %6528 = vmatpush1.msra.mxu0 0.0
        %6529 = vmatprep.subr.mxu0 0.0
        %6530 = vmatpush1.msra.mxu0 0.0
        %6531 = vmatprep.subr.mxu0 0.0
        %6532 = vmatpush1.msra.mxu0 0.0
        %6533 = vmatprep.subr.mxu0 0.0
        %6534 = vmatpush1.msra.mxu0 0.0
        %6535 = vmatprep.subr.mxu0 0.0
        %6536 = vmatpush1.msra.mxu0 0.0
        %6537 = vmatprep.subr.mxu0 0.0
        %6538 = vmatpush1.msra.mxu0 0.0
        %6539 = vmatprep.subr.mxu0 0.0
        %6540 = vmatpush1.msra.mxu0 0.0
        %6541 = vmatprep.subr.mxu0 0.0
        %6542 = vmatpush1.msra.mxu0 0.0
        %6543 = vmatprep.subr.mxu0 0.0
        %6544 = vmatpush1.msra.mxu0 0.0
        %6545 = vmatprep.subr.mxu0 0.0
        %6546 = vmatpush1.msra.mxu0 0.0
        %6547 = vmatprep.subr.mxu0 0.0
        %6548 = vmatpush1.msra.mxu0 0.0
        %6549 = vmatprep.subr.mxu0 0.0
        %6550 = vmatpush1.msra.mxu0 0.0
        %6551 = vmatprep.subr.mxu0 0.0
        %6552 = vmatpush1.msra.mxu0 0.0
        %6553 = vmatprep.mubr.f32.mxu0 0.0
        %6554 = vmatmul.mubr.f32.gmra.mrb[0].mxu0 %v6487
        %v6555 = vpop.f32.mrb[0].mxu0
        %v6556 = vadd.f32 0.0, %v6555
        %v6557 = vpop.f32.mrb[0].mxu0
        %6558 = vdwg.mxu0
        %v6560 = vsel %vm1650, %v6337, 0
        %6562 = vmatprep.subr.mxu0 0.0
        %6563 = vmatpush1.msra.mxu0 %v4851
        %6564 = vmatprep.subr.mxu0 0.0
        %6565 = vmatpush1.msra.mxu0 0.0
        %6566 = vmatprep.subr.mxu0 0.0
        %6567 = vmatpush1.msra.mxu0 0.0
        %6568 = vmatprep.subr.mxu0 0.0
        %6569 = vmatpush1.msra.mxu0 0.0
        %6570 = vmatprep.subr.mxu0 0.0
        %6571 = vmatpush1.msra.mxu0 0.0
        %6572 = vmatprep.subr.mxu0 0.0
        %6573 = vmatpush1.msra.mxu0 0.0
        %6574 = vmatprep.subr.mxu0 0.0
        %6575 = vmatpush1.msra.mxu0 0.0
        %6576 = vmatprep.subr.mxu0 0.0
        %6577 = vmatpush1.msra.mxu0 0.0
        %6578 = vmatprep.subr.mxu0 0.0
        %6579 = vmatpush1.msra.mxu0 0.0
        %6580 = vmatprep.subr.mxu0 0.0
        %6581 = vmatpush1.msra.mxu0 0.0
        %6582 = vmatprep.subr.mxu0 0.0
        %6583 = vmatpush1.msra.mxu0 0.0
        %6584 = vmatprep.subr.mxu0 0.0
        %6585 = vmatpush1.msra.mxu0 0.0
        %6586 = vmatprep.subr.mxu0 0.0
        %6587 = vmatpush1.msra.mxu0 0.0
        %6588 = vmatprep.subr.mxu0 0.0
        %6589 = vmatpush1.msra.mxu0 0.0
        %6590 = vmatprep.subr.mxu0 0.0
        %6591 = vmatpush1.msra.mxu0 0.0
        %6592 = vmatprep.subr.mxu0 0.0
        %6593 = vmatpush1.msra.mxu0 0.0
        %6594 = vmatprep.subr.mxu0 0.0
        %6595 = vmatpush1.msra.mxu0 0.0
        %6596 = vmatprep.subr.mxu0 0.0
        %6597 = vmatpush1.msra.mxu0 0.0
        %6598 = vmatprep.subr.mxu0 0.0
        %6599 = vmatpush1.msra.mxu0 0.0
        %6600 = vmatprep.subr.mxu0 0.0
        %6601 = vmatpush1.msra.mxu0 0.0
        %6602 = vmatprep.subr.mxu0 0.0
        %6603 = vmatpush1.msra.mxu0 0.0
        %6604 = vmatprep.subr.mxu0 0.0
        %6605 = vmatpush1.msra.mxu0 0.0
        %6606 = vmatprep.subr.mxu0 0.0
        %6607 = vmatpush1.msra.mxu0 0.0
        %6608 = vmatprep.subr.mxu0 0.0
        %6609 = vmatpush1.msra.mxu0 0.0
        %6610 = vmatprep.subr.mxu0 0.0
        %6611 = vmatpush1.msra.mxu0 0.0
        %6612 = vmatprep.subr.mxu0 0.0
        %6613 = vmatpush1.msra.mxu0 0.0
        %6614 = vmatprep.subr.mxu0 0.0
        %6615 = vmatpush1.msra.mxu0 0.0
        %6616 = vmatprep.subr.mxu0 0.0
        %6617 = vmatpush1.msra.mxu0 0.0
        %6618 = vmatprep.subr.mxu0 0.0
        %6619 = vmatpush1.msra.mxu0 0.0
        %6620 = vmatprep.subr.mxu0 0.0
        %6621 = vmatpush1.msra.mxu0 0.0
        %6622 = vmatprep.subr.mxu0 0.0
        %6623 = vmatpush1.msra.mxu0 0.0
        %6624 = vmatprep.subr.mxu0 0.0
        %6625 = vmatpush1.msra.mxu0 0.0
        %6626 = vmatprep.mubr.f32.mxu0 0.0
        %6627 = vmatmul.mubr.f32.gmra.mrb[0].mxu0 %v6560
        %v6628 = vpop.f32.mrb[0].mxu0
        %v6629 = vadd.f32 0.0, %v6628
        %v6630 = vpop.f32.mrb[0].mxu0
        %6631 = vdwg.mxu0
        %v6632 = vsel %vm806, %v6410, 0.0
        %v6633 = vsel %vm806, %v6483, 0.0
        %v6634 = vadd.f32 %v6632, %v6633
        %v6635 = vsel %vm806, %v6556, 0.0
        %v6636 = vadd.f32 %v6634, %v6635
        %v6637 = vsel %vm806, %v6629, 0.0
        %v6638 = vadd.f32 %v6636, %v6637
        %v6640 = vlaneseq
        %v6641 = vshrl.u32 %v6640, 7
        %v6642 = vsub.s32 0, %v6641
        %v6643 = vrot.slane %v4853, %v6642
        %v6645 = vadd.f32 %v6638, %v6643
        %v6646 = vadd.f32 %v4794, %v6645
        %s6647 = scalar_lea.vmem %s17, 1
        %v6648 = vld [vmem:[%s6647] sm:$0x1]
        %s6649 = scalar_lea.vmem %s18, 1
        %v6650 = vld [vmem:[%s6649] sm:$0x1]
        %v6651 = vsel %vm806, %v6646, 0.0
        %6652 = vadd.xlane.f32.xlu0 %v6651
        %v6653 = vpop.xlane.xlu0 %6652
        %v6654 = vmul.f32 %v6653, %v2602
        %v6655 = vsub.f32 %v6646, %v6654
        %v6656 = vmul.f32 %v6655, %v6655
        %v6657 = vsel %vm806, %v6656, 0.0
        %6658 = vadd.xlane.f32.xlu0 %v6657
        %v6659 = vpop.xlane.xlu0 %6658
        %v6660 = vmul.f32 %v6659, %v2602
        %v6661 = vadd.f32 %v6660, 1e-05
        %v6662 = vrsqrt.pop %v6661
        %v6663 = vmul.f32 %v6655, %v6662
        %v6665 = vlaneseq
        %v6666 = vshrl.u32 %v6665, 7
        %v6667 = vsub.s32 0, %v6666
        %v6668 = vrot.slane %v6648, %v6667
        %v6670 = vmul.f32 %v6663, %v6668
        %v6672 = vlaneseq
        %v6673 = vshrl.u32 %v6672, 7
        %v6674 = vsub.s32 0, %v6673
        %v6675 = vrot.slane %v6650, %v6674
        %v6677 = vadd.f32 %v6670, %v6675
        %v6678 = vadd.f32 %v6677, %v746
        %s6679 = scalar_lea.vmem %s8, 128
        %v6680 = vld [vmem:[%s6679] sm:$0xff]
        %v6681 = vld [vmem:[%s6679 + $0x8] sm:$0xff]
        %v6682 = vld [vmem:[%s6679 + $0x10] sm:$0xff]
        %v6683 = vld [vmem:[%s6679 + $0x18] sm:$0xff]
        %v6684 = vld [vmem:[%s6679 + $0x20] sm:$0xff]
        %v6685 = vld [vmem:[%s6679 + $0x28] sm:$0xff]
        %v6686 = vld [vmem:[%s6679 + $0x30] sm:$0xff]
        %v6687 = vld [vmem:[%s6679 + $0x38] sm:$0xff]
        %v6688 = vld [vmem:[%s6679 + $0x40] sm:$0xff]
        %v6689 = vld [vmem:[%s6679 + $0x48] sm:$0xff]
        %v6690 = vld [vmem:[%s6679 + $0x50] sm:$0xff]
        %v6691 = vld [vmem:[%s6679 + $0x58] sm:$0xff]
        %v6692 = vld [vmem:[%s6679 + $0x60] sm:$0xff]
        %v6693 = vld [vmem:[%s6679 + $0x68] sm:$0xff]
        %v6694 = vld [vmem:[%s6679 + $0x70] sm:$0xff]
        %v6695 = vld [vmem:[%s6679 + $0x78] sm:$0xff]
        %s6696 = scalar_lea.vmem %s9, 128
        %v6697 = vld [vmem:[%s6696] sm:$0xff]
        %v6698 = vld [vmem:[%s6696 + $0x8] sm:$0xff]
        %v6699 = vld [vmem:[%s6696 + $0x10] sm:$0xff]
        %v6700 = vld [vmem:[%s6696 + $0x18] sm:$0xff]
        %v6701 = vld [vmem:[%s6696 + $0x20] sm:$0xff]
        %v6702 = vld [vmem:[%s6696 + $0x28] sm:$0xff]
        %v6703 = vld [vmem:[%s6696 + $0x30] sm:$0xff]
        %v6704 = vld [vmem:[%s6696 + $0x38] sm:$0xff]
        %v6705 = vld [vmem:[%s6696 + $0x40] sm:$0xff]
        %v6706 = vld [vmem:[%s6696 + $0x48] sm:$0xff]
        %v6707 = vld [vmem:[%s6696 + $0x50] sm:$0xff]
        %v6708 = vld [vmem:[%s6696 + $0x58] sm:$0xff]
        %v6709 = vld [vmem:[%s6696 + $0x60] sm:$0xff]
        %v6710 = vld [vmem:[%s6696 + $0x68] sm:$0xff]
        %v6711 = vld [vmem:[%s6696 + $0x70] sm:$0xff]
        %v6712 = vld [vmem:[%s6696 + $0x78] sm:$0xff]
        %s6713 = scalar_lea.vmem %s10, 128
        %v6714 = vld [vmem:[%s6713] sm:$0xff]
        %v6715 = vld [vmem:[%s6713 + $0x8] sm:$0xff]
        %v6716 = vld [vmem:[%s6713 + $0x10] sm:$0xff]
        %v6717 = vld [vmem:[%s6713 + $0x18] sm:$0xff]
        %v6718 = vld [vmem:[%s6713 + $0x20] sm:$0xff]
        %v6719 = vld [vmem:[%s6713 + $0x28] sm:$0xff]
        %v6720 = vld [vmem:[%s6713 + $0x30] sm:$0xff]
        %v6721 = vld [vmem:[%s6713 + $0x38] sm:$0xff]
        %v6722 = vld [vmem:[%s6713 + $0x40] sm:$0xff]
        %v6723 = vld [vmem:[%s6713 + $0x48] sm:$0xff]
        %v6724 = vld [vmem:[%s6713 + $0x50] sm:$0xff]
        %v6725 = vld [vmem:[%s6713 + $0x58] sm:$0xff]
        %v6726 = vld [vmem:[%s6713 + $0x60] sm:$0xff]
        %v6727 = vld [vmem:[%s6713 + $0x68] sm:$0xff]
        %v6728 = vld [vmem:[%s6713 + $0x70] sm:$0xff]
        %v6729 = vld [vmem:[%s6713 + $0x78] sm:$0xff]
        %s6730 = scalar_lea.vmem %s11, 32
        %v6731 = vld [vmem:[%s6730] sm:$0xff]
        %v6732 = vld [vmem:[%s6730 + $0x8] sm:$0xff]
        %v6733 = vld [vmem:[%s6730 + $0x10] sm:$0xff]
        %v6734 = vld [vmem:[%s6730 + $0x18] sm:$0xff]
        %s6735 = scalar_lea.vmem %s12, 1
        %v6736 = vld [vmem:[%s6735] sm:$0x1]
        %v6738 = vsel %vm806, %v6678, 0
        %6740 = vmatprep.subr.mxu0 0.0
        %6741 = vmatpush1.msra.mxu0 %v6680
        %6742 = vmatprep.subr.mxu0 0.0
        %6743 = vmatpush1.msra.mxu0 %v6681
        %6744 = vmatprep.subr.mxu0 0.0
        %6745 = vmatpush1.msra.mxu0 %v6682
        %6746 = vmatprep.subr.mxu0 0.0
        %6747 = vmatpush1.msra.mxu0 %v6683
        %6748 = vmatprep.subr.mxu0 0.0
        %6749 = vmatpush1.msra.mxu0 0.0
        %6750 = vmatprep.subr.mxu0 0.0
        %6751 = vmatpush1.msra.mxu0 0.0
        %6752 = vmatprep.subr.mxu0 0.0
        %6753 = vmatpush1.msra.mxu0 0.0
        %6754 = vmatprep.subr.mxu0 0.0
        %6755 = vmatpush1.msra.mxu0 0.0
        %6756 = vmatprep.subr.mxu0 0.0
        %6757 = vmatpush1.msra.mxu0 0.0
        %6758 = vmatprep.subr.mxu0 0.0
        %6759 = vmatpush1.msra.mxu0 0.0
        %6760 = vmatprep.subr.mxu0 0.0
        %6761 = vmatpush1.msra.mxu0 0.0
        %6762 = vmatprep.subr.mxu0 0.0
        %6763 = vmatpush1.msra.mxu0 0.0
        %6764 = vmatprep.subr.mxu0 0.0
        %6765 = vmatpush1.msra.mxu0 0.0
        %6766 = vmatprep.subr.mxu0 0.0
        %6767 = vmatpush1.msra.mxu0 0.0
        %6768 = vmatprep.subr.mxu0 0.0
        %6769 = vmatpush1.msra.mxu0 0.0
        %6770 = vmatprep.subr.mxu0 0.0
        %6771 = vmatpush1.msra.mxu0 0.0
        %6772 = vmatprep.subr.mxu0 0.0
        %6773 = vmatpush1.msra.mxu0 0.0
        %6774 = vmatprep.subr.mxu0 0.0
        %6775 = vmatpush1.msra.mxu0 0.0
        %6776 = vmatprep.subr.mxu0 0.0
        %6777 = vmatpush1.msra.mxu0 0.0
        %6778 = vmatprep.subr.mxu0 0.0
        %6779 = vmatpush1.msra.mxu0 0.0
        %6780 = vmatprep.subr.mxu0 0.0
        %6781 = vmatpush1.msra.mxu0 0.0
        %6782 = vmatprep.subr.mxu0 0.0
        %6783 = vmatpush1.msra.mxu0 0.0
        %6784 = vmatprep.subr.mxu0 0.0
        %6785 = vmatpush1.msra.mxu0 0.0
        %6786 = vmatprep.subr.mxu0 0.0
        %6787 = vmatpush1.msra.mxu0 0.0
        %6788 = vmatprep.subr.mxu0 0.0
        %6789 = vmatpush1.msra.mxu0 0.0
        %6790 = vmatprep.subr.mxu0 0.0
        %6791 = vmatpush1.msra.mxu0 0.0
        %6792 = vmatprep.subr.mxu0 0.0
        %6793 = vmatpush1.msra.mxu0 0.0
        %6794 = vmatprep.subr.mxu0 0.0
        %6795 = vmatpush1.msra.mxu0 0.0
        %6796 = vmatprep.subr.mxu0 0.0
        %6797 = vmatpush1.msra.mxu0 0.0
        %6798 = vmatprep.subr.mxu0 0.0
        %6799 = vmatpush1.msra.mxu0 0.0
        %6800 = vmatprep.subr.mxu0 0.0
        %6801 = vmatpush1.msra.mxu0 0.0
        %6802 = vmatprep.subr.mxu0 0.0
        %6803 = vmatpush1.msra.mxu0 0.0
        %6804 = vmatprep.mubr.f32.mxu0 0.0
        %6805 = vmatmul.mubr.f32.gmra.mrb[0].mxu0 %v6738
        %v6806 = vpop.f32.mrb[0].mxu0
        %v6807 = vadd.f32 0.0, %v6806
        %v6808 = vpop.f32.mrb[0].mxu0
        %6809 = vdwg.mxu0
        %6810 = vmatprep.subr.mxu0 0.0
        %6811 = vmatpush1.msra.mxu0 %v6684
        %6812 = vmatprep.subr.mxu0 0.0
        %6813 = vmatpush1.msra.mxu0 %v6685
        %6814 = vmatprep.subr.mxu0 0.0
        %6815 = vmatpush1.msra.mxu0 %v6686
        %6816 = vmatprep.subr.mxu0 0.0
        %6817 = vmatpush1.msra.mxu0 %v6687
        %6818 = vmatprep.subr.mxu0 0.0
        %6819 = vmatpush1.msra.mxu0 0.0
        %6820 = vmatprep.subr.mxu0 0.0
        %6821 = vmatpush1.msra.mxu0 0.0
        %6822 = vmatprep.subr.mxu0 0.0
        %6823 = vmatpush1.msra.mxu0 0.0
        %6824 = vmatprep.subr.mxu0 0.0
        %6825 = vmatpush1.msra.mxu0 0.0
        %6826 = vmatprep.subr.mxu0 0.0
        %6827 = vmatpush1.msra.mxu0 0.0
        %6828 = vmatprep.subr.mxu0 0.0
        %6829 = vmatpush1.msra.mxu0 0.0
        %6830 = vmatprep.subr.mxu0 0.0
        %6831 = vmatpush1.msra.mxu0 0.0
        %6832 = vmatprep.subr.mxu0 0.0
        %6833 = vmatpush1.msra.mxu0 0.0
        %6834 = vmatprep.subr.mxu0 0.0
        %6835 = vmatpush1.msra.mxu0 0.0
        %6836 = vmatprep.subr.mxu0 0.0
        %6837 = vmatpush1.msra.mxu0 0.0
        %6838 = vmatprep.subr.mxu0 0.0
        %6839 = vmatpush1.msra.mxu0 0.0
        %6840 = vmatprep.subr.mxu0 0.0
        %6841 = vmatpush1.msra.mxu0 0.0
        %6842 = vmatprep.subr.mxu0 0.0
        %6843 = vmatpush1.msra.mxu0 0.0
        %6844 = vmatprep.subr.mxu0 0.0
        %6845 = vmatpush1.msra.mxu0 0.0
        %6846 = vmatprep.subr.mxu0 0.0
        %6847 = vmatpush1.msra.mxu0 0.0
        %6848 = vmatprep.subr.mxu0 0.0
        %6849 = vmatpush1.msra.mxu0 0.0
        %6850 = vmatprep.subr.mxu0 0.0
        %6851 = vmatpush1.msra.mxu0 0.0
        %6852 = vmatprep.subr.mxu0 0.0
        %6853 = vmatpush1.msra.mxu0 0.0
        %6854 = vmatprep.subr.mxu0 0.0
        %6855 = vmatpush1.msra.mxu0 0.0
        %6856 = vmatprep.subr.mxu0 0.0
        %6857 = vmatpush1.msra.mxu0 0.0
        %6858 = vmatprep.subr.mxu0 0.0
        %6859 = vmatpush1.msra.mxu0 0.0
        %6860 = vmatprep.subr.mxu0 0.0
        %6861 = vmatpush1.msra.mxu0 0.0
        %6862 = vmatprep.subr.mxu0 0.0
        %6863 = vmatpush1.msra.mxu0 0.0
        %6864 = vmatprep.subr.mxu0 0.0
        %6865 = vmatpush1.msra.mxu0 0.0
        %6866 = vmatprep.subr.mxu0 0.0
        %6867 = vmatpush1.msra.mxu0 0.0
        %6868 = vmatprep.subr.mxu0 0.0
        %6869 = vmatpush1.msra.mxu0 0.0
        %6870 = vmatprep.subr.mxu0 0.0
        %6871 = vmatpush1.msra.mxu0 0.0
        %6872 = vmatprep.subr.mxu0 0.0
        %6873 = vmatpush1.msra.mxu0 0.0
        %6874 = vmatprep.mubr.f32.mxu0 0.0
        %6875 = vmatmul.mubr.f32.gmra.mrb[0].mxu0 %v6738
        %v6876 = vpop.f32.mrb[0].mxu0
        %v6877 = vadd.f32 0.0, %v6876
        %v6878 = vpop.f32.mrb[0].mxu0
        %6879 = vdwg.mxu0
        %6880 = vmatprep.subr.mxu0 0.0
        %6881 = vmatpush1.msra.mxu0 %v6688
        %6882 = vmatprep.subr.mxu0 0.0
        %6883 = vmatpush1.msra.mxu0 %v6689
        %6884 = vmatprep.subr.mxu0 0.0
        %6885 = vmatpush1.msra.mxu0 %v6690
        %6886 = vmatprep.subr.mxu0 0.0
        %6887 = vmatpush1.msra.mxu0 %v6691
        %6888 = vmatprep.subr.mxu0 0.0
        %6889 = vmatpush1.msra.mxu0 0.0
        %6890 = vmatprep.subr.mxu0 0.0
        %6891 = vmatpush1.msra.mxu0 0.0
        %6892 = vmatprep.subr.mxu0 0.0
        %6893 = vmatpush1.msra.mxu0 0.0
        %6894 = vmatprep.subr.mxu0 0.0
        %6895 = vmatpush1.msra.mxu0 0.0
        %6896 = vmatprep.subr.mxu0 0.0
        %6897 = vmatpush1.msra.mxu0 0.0
        %6898 = vmatprep.subr.mxu0 0.0
        %6899 = vmatpush1.msra.mxu0 0.0
        %6900 = vmatprep.subr.mxu0 0.0
        %6901 = vmatpush1.msra.mxu0 0.0
        %6902 = vmatprep.subr.mxu0 0.0
        %6903 = vmatpush1.msra.mxu0 0.0
        %6904 = vmatprep.subr.mxu0 0.0
        %6905 = vmatpush1.msra.mxu0 0.0
        %6906 = vmatprep.subr.mxu0 0.0
        %6907 = vmatpush1.msra.mxu0 0.0
        %6908 = vmatprep.subr.mxu0 0.0
        %6909 = vmatpush1.msra.mxu0 0.0
        %6910 = vmatprep.subr.mxu0 0.0
        %6911 = vmatpush1.msra.mxu0 0.0
        %6912 = vmatprep.subr.mxu0 0.0
        %6913 = vmatpush1.msra.mxu0 0.0
        %6914 = vmatprep.subr.mxu0 0.0
        %6915 = vmatpush1.msra.mxu0 0.0
        %6916 = vmatprep.subr.mxu0 0.0
        %6917 = vmatpush1.msra.mxu0 0.0
        %6918 = vmatprep.subr.mxu0 0.0
        %6919 = vmatpush1.msra.mxu0 0.0
        %6920 = vmatprep.subr.mxu0 0.0
        %6921 = vmatpush1.msra.mxu0 0.0
        %6922 = vmatprep.subr.mxu0 0.0
        %6923 = vmatpush1.msra.mxu0 0.0
        %6924 = vmatprep.subr.mxu0 0.0
        %6925 = vmatpush1.msra.mxu0 0.0
        %6926 = vmatprep.subr.mxu0 0.0
        %6927 = vmatpush1.msra.mxu0 0.0
        %6928 = vmatprep.subr.mxu0 0.0
        %6929 = vmatpush1.msra.mxu0 0.0
        %6930 = vmatprep.subr.mxu0 0.0
        %6931 = vmatpush1.msra.mxu0 0.0
        %6932 = vmatprep.subr.mxu0 0.0
        %6933 = vmatpush1.msra.mxu0 0.0
        %6934 = vmatprep.subr.mxu0 0.0
        %6935 = vmatpush1.msra.mxu0 0.0
        %6936 = vmatprep.subr.mxu0 0.0
        %6937 = vmatpush1.msra.mxu0 0.0
        %6938 = vmatprep.subr.mxu0 0.0
        %6939 = vmatpush1.msra.mxu0 0.0
        %6940 = vmatprep.subr.mxu0 0.0
        %6941 = vmatpush1.msra.mxu0 0.0
        %6942 = vmatprep.subr.mxu0 0.0
        %6943 = vmatpush1.msra.mxu0 0.0
        %6944 = vmatprep.mubr.f32.mxu0 0.0
        %6945 = vmatmul.mubr.f32.gmra.mrb[0].mxu0 %v6738
        %v6946 = vpop.f32.mrb[0].mxu0
        %v6947 = vadd.f32 0.0, %v6946
        %v6948 = vpop.f32.mrb[0].mxu0
        %6949 = vdwg.mxu0
        %6950 = vmatprep.subr.mxu0 0.0
        %6951 = vmatpush1.msra.mxu0 %v6692
        %6952 = vmatprep.subr.mxu0 0.0
        %6953 = vmatpush1.msra.mxu0 %v6693
        %6954 = vmatprep.subr.mxu0 0.0
        %6955 = vmatpush1.msra.mxu0 %v6694
        %6956 = vmatprep.subr.mxu0 0.0
        %6957 = vmatpush1.msra.mxu0 %v6695
        %6958 = vmatprep.subr.mxu0 0.0
        %6959 = vmatpush1.msra.mxu0 0.0
        %6960 = vmatprep.subr.mxu0 0.0
        %6961 = vmatpush1.msra.mxu0 0.0
        %6962 = vmatprep.subr.mxu0 0.0
        %6963 = vmatpush1.msra.mxu0 0.0
        %6964 = vmatprep.subr.mxu0 0.0
        %6965 = vmatpush1.msra.mxu0 0.0
        %6966 = vmatprep.subr.mxu0 0.0
        %6967 = vmatpush1.msra.mxu0 0.0
        %6968 = vmatprep.subr.mxu0 0.0
        %6969 = vmatpush1.msra.mxu0 0.0
        %6970 = vmatprep.subr.mxu0 0.0
        %6971 = vmatpush1.msra.mxu0 0.0
        %6972 = vmatprep.subr.mxu0 0.0
        %6973 = vmatpush1.msra.mxu0 0.0
        %6974 = vmatprep.subr.mxu0 0.0
        %6975 = vmatpush1.msra.mxu0 0.0
        %6976 = vmatprep.subr.mxu0 0.0
        %6977 = vmatpush1.msra.mxu0 0.0
        %6978 = vmatprep.subr.mxu0 0.0
        %6979 = vmatpush1.msra.mxu0 0.0
        %6980 = vmatprep.subr.mxu0 0.0
        %6981 = vmatpush1.msra.mxu0 0.0
        %6982 = vmatprep.subr.mxu0 0.0
        %6983 = vmatpush1.msra.mxu0 0.0
        %6984 = vmatprep.subr.mxu0 0.0
        %6985 = vmatpush1.msra.mxu0 0.0
        %6986 = vmatprep.subr.mxu0 0.0
        %6987 = vmatpush1.msra.mxu0 0.0
        %6988 = vmatprep.subr.mxu0 0.0
        %6989 = vmatpush1.msra.mxu0 0.0
        %6990 = vmatprep.subr.mxu0 0.0
        %6991 = vmatpush1.msra.mxu0 0.0
        %6992 = vmatprep.subr.mxu0 0.0
        %6993 = vmatpush1.msra.mxu0 0.0
        %6994 = vmatprep.subr.mxu0 0.0
        %6995 = vmatpush1.msra.mxu0 0.0
        %6996 = vmatprep.subr.mxu0 0.0
        %6997 = vmatpush1.msra.mxu0 0.0
        %6998 = vmatprep.subr.mxu0 0.0
        %6999 = vmatpush1.msra.mxu0 0.0
        %7000 = vmatprep.subr.mxu0 0.0
        %7001 = vmatpush1.msra.mxu0 0.0
        %7002 = vmatprep.subr.mxu0 0.0
        %7003 = vmatpush1.msra.mxu0 0.0
        %7004 = vmatprep.subr.mxu0 0.0
        %7005 = vmatpush1.msra.mxu0 0.0
        %7006 = vmatprep.subr.mxu0 0.0
        %7007 = vmatpush1.msra.mxu0 0.0
        %7008 = vmatprep.subr.mxu0 0.0
        %7009 = vmatpush1.msra.mxu0 0.0
        %7010 = vmatprep.subr.mxu0 0.0
        %7011 = vmatpush1.msra.mxu0 0.0
        %7012 = vmatprep.subr.mxu0 0.0
        %7013 = vmatpush1.msra.mxu0 0.0
        %7014 = vmatprep.mubr.f32.mxu0 0.0
        %7015 = vmatmul.mubr.f32.gmra.mrb[0].mxu0 %v6738
        %v7016 = vpop.f32.mrb[0].mxu0
        %v7017 = vadd.f32 0.0, %v7016
        %v7018 = vpop.f32.mrb[0].mxu0
        %7019 = vdwg.mxu0
        %7020 = vmatprep.subr.mxu0 0.0
        %7021 = vmatpush1.msra.mxu0 %v6697
        %7022 = vmatprep.subr.mxu0 0.0
        %7023 = vmatpush1.msra.mxu0 %v6698
        %7024 = vmatprep.subr.mxu0 0.0
        %7025 = vmatpush1.msra.mxu0 %v6699
        %7026 = vmatprep.subr.mxu0 0.0
        %7027 = vmatpush1.msra.mxu0 %v6700
        %7028 = vmatprep.subr.mxu0 0.0
        %7029 = vmatpush1.msra.mxu0 0.0
        %7030 = vmatprep.subr.mxu0 0.0
        %7031 = vmatpush1.msra.mxu0 0.0
        %7032 = vmatprep.subr.mxu0 0.0
        %7033 = vmatpush1.msra.mxu0 0.0
        %7034 = vmatprep.subr.mxu0 0.0
        %7035 = vmatpush1.msra.mxu0 0.0
        %7036 = vmatprep.subr.mxu0 0.0
        %7037 = vmatpush1.msra.mxu0 0.0
        %7038 = vmatprep.subr.mxu0 0.0
        %7039 = vmatpush1.msra.mxu0 0.0
        %7040 = vmatprep.subr.mxu0 0.0
        %7041 = vmatpush1.msra.mxu0 0.0
        %7042 = vmatprep.subr.mxu0 0.0
        %7043 = vmatpush1.msra.mxu0 0.0
        %7044 = vmatprep.subr.mxu0 0.0
        %7045 = vmatpush1.msra.mxu0 0.0
        %7046 = vmatprep.subr.mxu0 0.0
        %7047 = vmatpush1.msra.mxu0 0.0
        %7048 = vmatprep.subr.mxu0 0.0
        %7049 = vmatpush1.msra.mxu0 0.0
        %7050 = vmatprep.subr.mxu0 0.0
        %7051 = vmatpush1.msra.mxu0 0.0
        %7052 = vmatprep.subr.mxu0 0.0
        %7053 = vmatpush1.msra.mxu0 0.0
        %7054 = vmatprep.subr.mxu0 0.0
        %7055 = vmatpush1.msra.mxu0 0.0
        %7056 = vmatprep.subr.mxu0 0.0
        %7057 = vmatpush1.msra.mxu0 0.0
        %7058 = vmatprep.subr.mxu0 0.0
        %7059 = vmatpush1.msra.mxu0 0.0
        %7060 = vmatprep.subr.mxu0 0.0
        %7061 = vmatpush1.msra.mxu0 0.0
        %7062 = vmatprep.subr.mxu0 0.0
        %7063 = vmatpush1.msra.mxu0 0.0
        %7064 = vmatprep.subr.mxu0 0.0
        %7065 = vmatpush1.msra.mxu0 0.0
        %7066 = vmatprep.subr.mxu0 0.0
        %7067 = vmatpush1.msra.mxu0 0.0
        %7068 = vmatprep.subr.mxu0 0.0
        %7069 = vmatpush1.msra.mxu0 0.0
        %7070 = vmatprep.subr.mxu0 0.0
        %7071 = vmatpush1.msra.mxu0 0.0
        %7072 = vmatprep.subr.mxu0 0.0
        %7073 = vmatpush1.msra.mxu0 0.0
        %7074 = vmatprep.subr.mxu0 0.0
        %7075 = vmatpush1.msra.mxu0 0.0
        %7076 = vmatprep.subr.mxu0 0.0
        %7077 = vmatpush1.msra.mxu0 0.0
        %7078 = vmatprep.subr.mxu0 0.0
        %7079 = vmatpush1.msra.mxu0 0.0
        %7080 = vmatprep.subr.mxu0 0.0
        %7081 = vmatpush1.msra.mxu0 0.0
        %7082 = vmatprep.subr.mxu0 0.0
        %7083 = vmatpush1.msra.mxu0 0.0
        %7084 = vmatprep.mubr.f32.mxu0 0.0
        %7085 = vmatmul.mubr.f32.gmra.mrb[0].mxu0 %v2965
        %v7086 = vpop.f32.mrb[0].mxu0
        %v7087 = vadd.f32 0.0, %v7086
        %v7088 = vpop.f32.mrb[0].mxu0
        %7089 = vmatprep.mubr.f32.mxu0 0.0
        %7090 = vmatmul.mubr.f32.gmra.mrb[0].mxu0 %v2968
        %v7091 = vpop.f32.mrb[0].mxu0
        %v7092 = vadd.f32 0.0, %v7091
        %v7093 = vpop.f32.mrb[0].mxu0
        %7094 = vdwg.mxu0
        %7095 = vmatprep.subr.mxu0 0.0
        %7096 = vmatpush1.msra.mxu0 %v6701
        %7097 = vmatprep.subr.mxu0 0.0
        %7098 = vmatpush1.msra.mxu0 %v6702
        %7099 = vmatprep.subr.mxu0 0.0
        %7100 = vmatpush1.msra.mxu0 %v6703
        %7101 = vmatprep.subr.mxu0 0.0
        %7102 = vmatpush1.msra.mxu0 %v6704
        %7103 = vmatprep.subr.mxu0 0.0
        %7104 = vmatpush1.msra.mxu0 0.0
        %7105 = vmatprep.subr.mxu0 0.0
        %7106 = vmatpush1.msra.mxu0 0.0
        %7107 = vmatprep.subr.mxu0 0.0
        %7108 = vmatpush1.msra.mxu0 0.0
        %7109 = vmatprep.subr.mxu0 0.0
        %7110 = vmatpush1.msra.mxu0 0.0
        %7111 = vmatprep.subr.mxu0 0.0
        %7112 = vmatpush1.msra.mxu0 0.0
        %7113 = vmatprep.subr.mxu0 0.0
        %7114 = vmatpush1.msra.mxu0 0.0
        %7115 = vmatprep.subr.mxu0 0.0
        %7116 = vmatpush1.msra.mxu0 0.0
        %7117 = vmatprep.subr.mxu0 0.0
        %7118 = vmatpush1.msra.mxu0 0.0
        %7119 = vmatprep.subr.mxu0 0.0
        %7120 = vmatpush1.msra.mxu0 0.0
        %7121 = vmatprep.subr.mxu0 0.0
        %7122 = vmatpush1.msra.mxu0 0.0
        %7123 = vmatprep.subr.mxu0 0.0
        %7124 = vmatpush1.msra.mxu0 0.0
        %7125 = vmatprep.subr.mxu0 0.0
        %7126 = vmatpush1.msra.mxu0 0.0
        %7127 = vmatprep.subr.mxu0 0.0
        %7128 = vmatpush1.msra.mxu0 0.0
        %7129 = vmatprep.subr.mxu0 0.0
        %7130 = vmatpush1.msra.mxu0 0.0
        %7131 = vmatprep.subr.mxu0 0.0
        %7132 = vmatpush1.msra.mxu0 0.0
        %7133 = vmatprep.subr.mxu0 0.0
        %7134 = vmatpush1.msra.mxu0 0.0
        %7135 = vmatprep.subr.mxu0 0.0
        %7136 = vmatpush1.msra.mxu0 0.0
        %7137 = vmatprep.subr.mxu0 0.0
        %7138 = vmatpush1.msra.mxu0 0.0
        %7139 = vmatprep.subr.mxu0 0.0
        %7140 = vmatpush1.msra.mxu0 0.0
        %7141 = vmatprep.subr.mxu0 0.0
        %7142 = vmatpush1.msra.mxu0 0.0
        %7143 = vmatprep.subr.mxu0 0.0
        %7144 = vmatpush1.msra.mxu0 0.0
        %7145 = vmatprep.subr.mxu0 0.0
        %7146 = vmatpush1.msra.mxu0 0.0
        %7147 = vmatprep.subr.mxu0 0.0
        %7148 = vmatpush1.msra.mxu0 0.0
        %7149 = vmatprep.subr.mxu0 0.0
        %7150 = vmatpush1.msra.mxu0 0.0
        %7151 = vmatprep.subr.mxu0 0.0
        %7152 = vmatpush1.msra.mxu0 0.0
        %7153 = vmatprep.subr.mxu0 0.0
        %7154 = vmatpush1.msra.mxu0 0.0
        %7155 = vmatprep.subr.mxu0 0.0
        %7156 = vmatpush1.msra.mxu0 0.0
        %7157 = vmatprep.subr.mxu0 0.0
        %7158 = vmatpush1.msra.mxu0 0.0
        %7159 = vmatprep.mubr.f32.mxu0 0.0
        %7160 = vmatmul.mubr.f32.gmra.mrb[0].mxu0 %v2965
        %v7161 = vpop.f32.mrb[0].mxu0
        %v7162 = vadd.f32 0.0, %v7161
        %v7163 = vpop.f32.mrb[0].mxu0
        %7164 = vmatprep.mubr.f32.mxu0 0.0
        %7165 = vmatmul.mubr.f32.gmra.mrb[0].mxu0 %v2968
        %v7166 = vpop.f32.mrb[0].mxu0
        %v7167 = vadd.f32 0.0, %v7166
        %v7168 = vpop.f32.mrb[0].mxu0
        %7169 = vdwg.mxu0
        %7170 = vmatprep.subr.mxu0 0.0
        %7171 = vmatpush1.msra.mxu0 %v6705
        %7172 = vmatprep.subr.mxu0 0.0
        %7173 = vmatpush1.msra.mxu0 %v6706
        %7174 = vmatprep.subr.mxu0 0.0
        %7175 = vmatpush1.msra.mxu0 %v6707
        %7176 = vmatprep.subr.mxu0 0.0
        %7177 = vmatpush1.msra.mxu0 %v6708
        %7178 = vmatprep.subr.mxu0 0.0
        %7179 = vmatpush1.msra.mxu0 0.0
        %7180 = vmatprep.subr.mxu0 0.0
        %7181 = vmatpush1.msra.mxu0 0.0
        %7182 = vmatprep.subr.mxu0 0.0
        %7183 = vmatpush1.msra.mxu0 0.0
        %7184 = vmatprep.subr.mxu0 0.0
        %7185 = vmatpush1.msra.mxu0 0.0
        %7186 = vmatprep.subr.mxu0 0.0
        %7187 = vmatpush1.msra.mxu0 0.0
        %7188 = vmatprep.subr.mxu0 0.0
        %7189 = vmatpush1.msra.mxu0 0.0
        %7190 = vmatprep.subr.mxu0 0.0
        %7191 = vmatpush1.msra.mxu0 0.0
        %7192 = vmatprep.subr.mxu0 0.0
        %7193 = vmatpush1.msra.mxu0 0.0
        %7194 = vmatprep.subr.mxu0 0.0
        %7195 = vmatpush1.msra.mxu0 0.0
        %7196 = vmatprep.subr.mxu0 0.0
        %7197 = vmatpush1.msra.mxu0 0.0
        %7198 = vmatprep.subr.mxu0 0.0
        %7199 = vmatpush1.msra.mxu0 0.0
        %7200 = vmatprep.subr.mxu0 0.0
        %7201 = vmatpush1.msra.mxu0 0.0
        %7202 = vmatprep.subr.mxu0 0.0
        %7203 = vmatpush1.msra.mxu0 0.0
        %7204 = vmatprep.subr.mxu0 0.0
        %7205 = vmatpush1.msra.mxu0 0.0
        %7206 = vmatprep.subr.mxu0 0.0
        %7207 = vmatpush1.msra.mxu0 0.0
        %7208 = vmatprep.subr.mxu0 0.0
        %7209 = vmatpush1.msra.mxu0 0.0
        %7210 = vmatprep.subr.mxu0 0.0
        %7211 = vmatpush1.msra.mxu0 0.0
        %7212 = vmatprep.subr.mxu0 0.0
        %7213 = vmatpush1.msra.mxu0 0.0
        %7214 = vmatprep.subr.mxu0 0.0
        %7215 = vmatpush1.msra.mxu0 0.0
        %7216 = vmatprep.subr.mxu0 0.0
        %7217 = vmatpush1.msra.mxu0 0.0
        %7218 = vmatprep.subr.mxu0 0.0
        %7219 = vmatpush1.msra.mxu0 0.0
        %7220 = vmatprep.subr.mxu0 0.0
        %7221 = vmatpush1.msra.mxu0 0.0
        %7222 = vmatprep.subr.mxu0 0.0
        %7223 = vmatpush1.msra.mxu0 0.0
        %7224 = vmatprep.subr.mxu0 0.0
        %7225 = vmatpush1.msra.mxu0 0.0
        %7226 = vmatprep.subr.mxu0 0.0
        %7227 = vmatpush1.msra.mxu0 0.0
        %7228 = vmatprep.subr.mxu0 0.0
        %7229 = vmatpush1.msra.mxu0 0.0
        %7230 = vmatprep.subr.mxu0 0.0
        %7231 = vmatpush1.msra.mxu0 0.0
        %7232 = vmatprep.subr.mxu0 0.0
        %7233 = vmatpush1.msra.mxu0 0.0
        %7234 = vmatprep.mubr.f32.mxu0 0.0
        %7235 = vmatmul.mubr.f32.gmra.mrb[0].mxu0 %v2965
        %v7236 = vpop.f32.mrb[0].mxu0
        %v7237 = vadd.f32 0.0, %v7236
        %v7238 = vpop.f32.mrb[0].mxu0
        %7239 = vmatprep.mubr.f32.mxu0 0.0
        %7240 = vmatmul.mubr.f32.gmra.mrb[0].mxu0 %v2968
        %v7241 = vpop.f32.mrb[0].mxu0
        %v7242 = vadd.f32 0.0, %v7241
        %v7243 = vpop.f32.mrb[0].mxu0
        %7244 = vdwg.mxu0
        %7245 = vmatprep.subr.mxu0 0.0
        %7246 = vmatpush1.msra.mxu0 %v6709
        %7247 = vmatprep.subr.mxu0 0.0
        %7248 = vmatpush1.msra.mxu0 %v6710
        %7249 = vmatprep.subr.mxu0 0.0
        %7250 = vmatpush1.msra.mxu0 %v6711
        %7251 = vmatprep.subr.mxu0 0.0
        %7252 = vmatpush1.msra.mxu0 %v6712
        %7253 = vmatprep.subr.mxu0 0.0
        %7254 = vmatpush1.msra.mxu0 0.0
        %7255 = vmatprep.subr.mxu0 0.0
        %7256 = vmatpush1.msra.mxu0 0.0
        %7257 = vmatprep.subr.mxu0 0.0
        %7258 = vmatpush1.msra.mxu0 0.0
        %7259 = vmatprep.subr.mxu0 0.0
        %7260 = vmatpush1.msra.mxu0 0.0
        %7261 = vmatprep.subr.mxu0 0.0
        %7262 = vmatpush1.msra.mxu0 0.0
        %7263 = vmatprep.subr.mxu0 0.0
        %7264 = vmatpush1.msra.mxu0 0.0
        %7265 = vmatprep.subr.mxu0 0.0
        %7266 = vmatpush1.msra.mxu0 0.0
        %7267 = vmatprep.subr.mxu0 0.0
        %7268 = vmatpush1.msra.mxu0 0.0
        %7269 = vmatprep.subr.mxu0 0.0
        %7270 = vmatpush1.msra.mxu0 0.0
        %7271 = vmatprep.subr.mxu0 0.0
        %7272 = vmatpush1.msra.mxu0 0.0
        %7273 = vmatprep.subr.mxu0 0.0
        %7274 = vmatpush1.msra.mxu0 0.0
        %7275 = vmatprep.subr.mxu0 0.0
        %7276 = vmatpush1.msra.mxu0 0.0
        %7277 = vmatprep.subr.mxu0 0.0
        %7278 = vmatpush1.msra.mxu0 0.0
        %7279 = vmatprep.subr.mxu0 0.0
        %7280 = vmatpush1.msra.mxu0 0.0
        %7281 = vmatprep.subr.mxu0 0.0
        %7282 = vmatpush1.msra.mxu0 0.0
        %7283 = vmatprep.subr.mxu0 0.0
        %7284 = vmatpush1.msra.mxu0 0.0
        %7285 = vmatprep.subr.mxu0 0.0
        %7286 = vmatpush1.msra.mxu0 0.0
        %7287 = vmatprep.subr.mxu0 0.0
        %7288 = vmatpush1.msra.mxu0 0.0
        %7289 = vmatprep.subr.mxu0 0.0
        %7290 = vmatpush1.msra.mxu0 0.0
        %7291 = vmatprep.subr.mxu0 0.0
        %7292 = vmatpush1.msra.mxu0 0.0
        %7293 = vmatprep.subr.mxu0 0.0
        %7294 = vmatpush1.msra.mxu0 0.0
        %7295 = vmatprep.subr.mxu0 0.0
        %7296 = vmatpush1.msra.mxu0 0.0
        %7297 = vmatprep.subr.mxu0 0.0
        %7298 = vmatpush1.msra.mxu0 0.0
        %7299 = vmatprep.subr.mxu0 0.0
        %7300 = vmatpush1.msra.mxu0 0.0
        %7301 = vmatprep.subr.mxu0 0.0
        %7302 = vmatpush1.msra.mxu0 0.0
        %7303 = vmatprep.subr.mxu0 0.0
        %7304 = vmatpush1.msra.mxu0 0.0
        %7305 = vmatprep.subr.mxu0 0.0
        %7306 = vmatpush1.msra.mxu0 0.0
        %7307 = vmatprep.subr.mxu0 0.0
        %7308 = vmatpush1.msra.mxu0 0.0
        %7309 = vmatprep.mubr.f32.mxu0 0.0
        %7310 = vmatmul.mubr.f32.gmra.mrb[0].mxu0 %v2965
        %v7311 = vpop.f32.mrb[0].mxu0
        %v7312 = vadd.f32 0.0, %v7311
        %v7313 = vpop.f32.mrb[0].mxu0
        %7314 = vmatprep.mubr.f32.mxu0 0.0
        %7315 = vmatmul.mubr.f32.gmra.mrb[0].mxu0 %v2968
        %v7316 = vpop.f32.mrb[0].mxu0
        %v7317 = vadd.f32 0.0, %v7316
        %v7318 = vpop.f32.mrb[0].mxu0
        %7319 = vdwg.mxu0
        %7320 = vmatprep.subr.mxu0 0.0
        %7321 = vmatpush1.msra.mxu0 %v6714
        %7322 = vmatprep.subr.mxu0 0.0
        %7323 = vmatpush1.msra.mxu0 %v6715
        %7324 = vmatprep.subr.mxu0 0.0
        %7325 = vmatpush1.msra.mxu0 %v6716
        %7326 = vmatprep.subr.mxu0 0.0
        %7327 = vmatpush1.msra.mxu0 %v6717
        %7328 = vmatprep.subr.mxu0 0.0
        %7329 = vmatpush1.msra.mxu0 0.0
        %7330 = vmatprep.subr.mxu0 0.0
        %7331 = vmatpush1.msra.mxu0 0.0
        %7332 = vmatprep.subr.mxu0 0.0
        %7333 = vmatpush1.msra.mxu0 0.0
        %7334 = vmatprep.subr.mxu0 0.0
        %7335 = vmatpush1.msra.mxu0 0.0
        %7336 = vmatprep.subr.mxu0 0.0
        %7337 = vmatpush1.msra.mxu0 0.0
        %7338 = vmatprep.subr.mxu0 0.0
        %7339 = vmatpush1.msra.mxu0 0.0
        %7340 = vmatprep.subr.mxu0 0.0
        %7341 = vmatpush1.msra.mxu0 0.0
        %7342 = vmatprep.subr.mxu0 0.0
        %7343 = vmatpush1.msra.mxu0 0.0
        %7344 = vmatprep.subr.mxu0 0.0
        %7345 = vmatpush1.msra.mxu0 0.0
        %7346 = vmatprep.subr.mxu0 0.0
        %7347 = vmatpush1.msra.mxu0 0.0
        %7348 = vmatprep.subr.mxu0 0.0
        %7349 = vmatpush1.msra.mxu0 0.0
        %7350 = vmatprep.subr.mxu0 0.0
        %7351 = vmatpush1.msra.mxu0 0.0
        %7352 = vmatprep.subr.mxu0 0.0
        %7353 = vmatpush1.msra.mxu0 0.0
        %7354 = vmatprep.subr.mxu0 0.0
        %7355 = vmatpush1.msra.mxu0 0.0
        %7356 = vmatprep.subr.mxu0 0.0
        %7357 = vmatpush1.msra.mxu0 0.0
        %7358 = vmatprep.subr.mxu0 0.0
        %7359 = vmatpush1.msra.mxu0 0.0
        %7360 = vmatprep.subr.mxu0 0.0
        %7361 = vmatpush1.msra.mxu0 0.0
        %7362 = vmatprep.subr.mxu0 0.0
        %7363 = vmatpush1.msra.mxu0 0.0
        %7364 = vmatprep.subr.mxu0 0.0
        %7365 = vmatpush1.msra.mxu0 0.0
        %7366 = vmatprep.subr.mxu0 0.0
        %7367 = vmatpush1.msra.mxu0 0.0
        %7368 = vmatprep.subr.mxu0 0.0
        %7369 = vmatpush1.msra.mxu0 0.0
        %7370 = vmatprep.subr.mxu0 0.0
        %7371 = vmatpush1.msra.mxu0 0.0
        %7372 = vmatprep.subr.mxu0 0.0
        %7373 = vmatpush1.msra.mxu0 0.0
        %7374 = vmatprep.subr.mxu0 0.0
        %7375 = vmatpush1.msra.mxu0 0.0
        %7376 = vmatprep.subr.mxu0 0.0
        %7377 = vmatpush1.msra.mxu0 0.0
        %7378 = vmatprep.subr.mxu0 0.0
        %7379 = vmatpush1.msra.mxu0 0.0
        %7380 = vmatprep.subr.mxu0 0.0
        %7381 = vmatpush1.msra.mxu0 0.0
        %7382 = vmatprep.subr.mxu0 0.0
        %7383 = vmatpush1.msra.mxu0 0.0
        %7384 = vmatprep.mubr.f32.mxu0 0.0
        %7385 = vmatmul.mubr.f32.gmra.mrb[0].mxu0 %v3271
        %v7386 = vpop.f32.mrb[0].mxu0
        %v7387 = vadd.f32 0.0, %v7386
        %v7388 = vpop.f32.mrb[0].mxu0
        %7389 = vmatprep.mubr.f32.mxu0 0.0
        %7390 = vmatmul.mubr.f32.gmra.mrb[0].mxu0 %v3274
        %v7391 = vpop.f32.mrb[0].mxu0
        %v7392 = vadd.f32 0.0, %v7391
        %v7393 = vpop.f32.mrb[0].mxu0
        %7394 = vdwg.mxu0
        %7395 = vmatprep.subr.mxu0 0.0
        %7396 = vmatpush1.msra.mxu0 %v6718
        %7397 = vmatprep.subr.mxu0 0.0
        %7398 = vmatpush1.msra.mxu0 %v6719
        %7399 = vmatprep.subr.mxu0 0.0
        %7400 = vmatpush1.msra.mxu0 %v6720
        %7401 = vmatprep.subr.mxu0 0.0
        %7402 = vmatpush1.msra.mxu0 %v6721
        %7403 = vmatprep.subr.mxu0 0.0
        %7404 = vmatpush1.msra.mxu0 0.0
        %7405 = vmatprep.subr.mxu0 0.0
        %7406 = vmatpush1.msra.mxu0 0.0
        %7407 = vmatprep.subr.mxu0 0.0
        %7408 = vmatpush1.msra.mxu0 0.0
        %7409 = vmatprep.subr.mxu0 0.0
        %7410 = vmatpush1.msra.mxu0 0.0
        %7411 = vmatprep.subr.mxu0 0.0
        %7412 = vmatpush1.msra.mxu0 0.0
        %7413 = vmatprep.subr.mxu0 0.0
        %7414 = vmatpush1.msra.mxu0 0.0
        %7415 = vmatprep.subr.mxu0 0.0
        %7416 = vmatpush1.msra.mxu0 0.0
        %7417 = vmatprep.subr.mxu0 0.0
        %7418 = vmatpush1.msra.mxu0 0.0
        %7419 = vmatprep.subr.mxu0 0.0
        %7420 = vmatpush1.msra.mxu0 0.0
        %7421 = vmatprep.subr.mxu0 0.0
        %7422 = vmatpush1.msra.mxu0 0.0
        %7423 = vmatprep.subr.mxu0 0.0
        %7424 = vmatpush1.msra.mxu0 0.0
        %7425 = vmatprep.subr.mxu0 0.0
        %7426 = vmatpush1.msra.mxu0 0.0
        %7427 = vmatprep.subr.mxu0 0.0
        %7428 = vmatpush1.msra.mxu0 0.0
        %7429 = vmatprep.subr.mxu0 0.0
        %7430 = vmatpush1.msra.mxu0 0.0
        %7431 = vmatprep.subr.mxu0 0.0
        %7432 = vmatpush1.msra.mxu0 0.0
        %7433 = vmatprep.subr.mxu0 0.0
        %7434 = vmatpush1.msra.mxu0 0.0
        %7435 = vmatprep.subr.mxu0 0.0
        %7436 = vmatpush1.msra.mxu0 0.0
        %7437 = vmatprep.subr.mxu0 0.0
        %7438 = vmatpush1.msra.mxu0 0.0
        %7439 = vmatprep.subr.mxu0 0.0
        %7440 = vmatpush1.msra.mxu0 0.0
        %7441 = vmatprep.subr.mxu0 0.0
        %7442 = vmatpush1.msra.mxu0 0.0
        %7443 = vmatprep.subr.mxu0 0.0
        %7444 = vmatpush1.msra.mxu0 0.0
        %7445 = vmatprep.subr.mxu0 0.0
        %7446 = vmatpush1.msra.mxu0 0.0
        %7447 = vmatprep.subr.mxu0 0.0
        %7448 = vmatpush1.msra.mxu0 0.0
        %7449 = vmatprep.subr.mxu0 0.0
        %7450 = vmatpush1.msra.mxu0 0.0
        %7451 = vmatprep.subr.mxu0 0.0
        %7452 = vmatpush1.msra.mxu0 0.0
        %7453 = vmatprep.subr.mxu0 0.0
        %7454 = vmatpush1.msra.mxu0 0.0
        %7455 = vmatprep.subr.mxu0 0.0
        %7456 = vmatpush1.msra.mxu0 0.0
        %7457 = vmatprep.subr.mxu0 0.0
        %7458 = vmatpush1.msra.mxu0 0.0
        %7459 = vmatprep.mubr.f32.mxu0 0.0
        %7460 = vmatmul.mubr.f32.gmra.mrb[0].mxu0 %v3271
        %v7461 = vpop.f32.mrb[0].mxu0
        %v7462 = vadd.f32 0.0, %v7461
        %v7463 = vpop.f32.mrb[0].mxu0
        %7464 = vmatprep.mubr.f32.mxu0 0.0
        %7465 = vmatmul.mubr.f32.gmra.mrb[0].mxu0 %v3274
        %v7466 = vpop.f32.mrb[0].mxu0
        %v7467 = vadd.f32 0.0, %v7466
        %v7468 = vpop.f32.mrb[0].mxu0
        %7469 = vdwg.mxu0
        %7470 = vmatprep.subr.mxu0 0.0
        %7471 = vmatpush1.msra.mxu0 %v6722
        %7472 = vmatprep.subr.mxu0 0.0
        %7473 = vmatpush1.msra.mxu0 %v6723
        %7474 = vmatprep.subr.mxu0 0.0
        %7475 = vmatpush1.msra.mxu0 %v6724
        %7476 = vmatprep.subr.mxu0 0.0
        %7477 = vmatpush1.msra.mxu0 %v6725
        %7478 = vmatprep.subr.mxu0 0.0
        %7479 = vmatpush1.msra.mxu0 0.0
        %7480 = vmatprep.subr.mxu0 0.0
        %7481 = vmatpush1.msra.mxu0 0.0
        %7482 = vmatprep.subr.mxu0 0.0
        %7483 = vmatpush1.msra.mxu0 0.0
        %7484 = vmatprep.subr.mxu0 0.0
        %7485 = vmatpush1.msra.mxu0 0.0
        %7486 = vmatprep.subr.mxu0 0.0
        %7487 = vmatpush1.msra.mxu0 0.0
        %7488 = vmatprep.subr.mxu0 0.0
        %7489 = vmatpush1.msra.mxu0 0.0
        %7490 = vmatprep.subr.mxu0 0.0
        %7491 = vmatpush1.msra.mxu0 0.0
        %7492 = vmatprep.subr.mxu0 0.0
        %7493 = vmatpush1.msra.mxu0 0.0
        %7494 = vmatprep.subr.mxu0 0.0
        %7495 = vmatpush1.msra.mxu0 0.0
        %7496 = vmatprep.subr.mxu0 0.0
        %7497 = vmatpush1.msra.mxu0 0.0
        %7498 = vmatprep.subr.mxu0 0.0
        %7499 = vmatpush1.msra.mxu0 0.0
        %7500 = vmatprep.subr.mxu0 0.0
        %7501 = vmatpush1.msra.mxu0 0.0
        %7502 = vmatprep.subr.mxu0 0.0
        %7503 = vmatpush1.msra.mxu0 0.0
        %7504 = vmatprep.subr.mxu0 0.0
        %7505 = vmatpush1.msra.mxu0 0.0
        %7506 = vmatprep.subr.mxu0 0.0
        %7507 = vmatpush1.msra.mxu0 0.0
        %7508 = vmatprep.subr.mxu0 0.0
        %7509 = vmatpush1.msra.mxu0 0.0
        %7510 = vmatprep.subr.mxu0 0.0
        %7511 = vmatpush1.msra.mxu0 0.0
        %7512 = vmatprep.subr.mxu0 0.0
        %7513 = vmatpush1.msra.mxu0 0.0
        %7514 = vmatprep.subr.mxu0 0.0
        %7515 = vmatpush1.msra.mxu0 0.0
        %7516 = vmatprep.subr.mxu0 0.0
        %7517 = vmatpush1.msra.mxu0 0.0
        %7518 = vmatprep.subr.mxu0 0.0
        %7519 = vmatpush1.msra.mxu0 0.0
        %7520 = vmatprep.subr.mxu0 0.0
        %7521 = vmatpush1.msra.mxu0 0.0
        %7522 = vmatprep.subr.mxu0 0.0
        %7523 = vmatpush1.msra.mxu0 0.0
        %7524 = vmatprep.subr.mxu0 0.0
        %7525 = vmatpush1.msra.mxu0 0.0
        %7526 = vmatprep.subr.mxu0 0.0
        %7527 = vmatpush1.msra.mxu0 0.0
        %7528 = vmatprep.subr.mxu0 0.0
        %7529 = vmatpush1.msra.mxu0 0.0
        %7530 = vmatprep.subr.mxu0 0.0
        %7531 = vmatpush1.msra.mxu0 0.0
        %7532 = vmatprep.subr.mxu0 0.0
        %7533 = vmatpush1.msra.mxu0 0.0
        %7534 = vmatprep.mubr.f32.mxu0 0.0
        %7535 = vmatmul.mubr.f32.gmra.mrb[0].mxu0 %v3271
        %v7536 = vpop.f32.mrb[0].mxu0
        %v7537 = vadd.f32 0.0, %v7536
        %v7538 = vpop.f32.mrb[0].mxu0
        %7539 = vmatprep.mubr.f32.mxu0 0.0
        %7540 = vmatmul.mubr.f32.gmra.mrb[0].mxu0 %v3274
        %v7541 = vpop.f32.mrb[0].mxu0
        %v7542 = vadd.f32 0.0, %v7541
        %v7543 = vpop.f32.mrb[0].mxu0
        %7544 = vdwg.mxu0
        %7545 = vmatprep.subr.mxu0 0.0
        %7546 = vmatpush1.msra.mxu0 %v6726
        %7547 = vmatprep.subr.mxu0 0.0
        %7548 = vmatpush1.msra.mxu0 %v6727
        %7549 = vmatprep.subr.mxu0 0.0
        %7550 = vmatpush1.msra.mxu0 %v6728
        %7551 = vmatprep.subr.mxu0 0.0
        %7552 = vmatpush1.msra.mxu0 %v6729
        %7553 = vmatprep.subr.mxu0 0.0
        %7554 = vmatpush1.msra.mxu0 0.0
        %7555 = vmatprep.subr.mxu0 0.0
        %7556 = vmatpush1.msra.mxu0 0.0
        %7557 = vmatprep.subr.mxu0 0.0
        %7558 = vmatpush1.msra.mxu0 0.0
        %7559 = vmatprep.subr.mxu0 0.0
        %7560 = vmatpush1.msra.mxu0 0.0
        %7561 = vmatprep.subr.mxu0 0.0
        %7562 = vmatpush1.msra.mxu0 0.0
        %7563 = vmatprep.subr.mxu0 0.0
        %7564 = vmatpush1.msra.mxu0 0.0
        %7565 = vmatprep.subr.mxu0 0.0
        %7566 = vmatpush1.msra.mxu0 0.0
        %7567 = vmatprep.subr.mxu0 0.0
        %7568 = vmatpush1.msra.mxu0 0.0
        %7569 = vmatprep.subr.mxu0 0.0
        %7570 = vmatpush1.msra.mxu0 0.0
        %7571 = vmatprep.subr.mxu0 0.0
        %7572 = vmatpush1.msra.mxu0 0.0
        %7573 = vmatprep.subr.mxu0 0.0
        %7574 = vmatpush1.msra.mxu0 0.0
        %7575 = vmatprep.subr.mxu0 0.0
        %7576 = vmatpush1.msra.mxu0 0.0
        %7577 = vmatprep.subr.mxu0 0.0
        %7578 = vmatpush1.msra.mxu0 0.0
        %7579 = vmatprep.subr.mxu0 0.0
        %7580 = vmatpush1.msra.mxu0 0.0
        %7581 = vmatprep.subr.mxu0 0.0
        %7582 = vmatpush1.msra.mxu0 0.0
        %7583 = vmatprep.subr.mxu0 0.0
        %7584 = vmatpush1.msra.mxu0 0.0
        %7585 = vmatprep.subr.mxu0 0.0
        %7586 = vmatpush1.msra.mxu0 0.0
        %7587 = vmatprep.subr.mxu0 0.0
        %7588 = vmatpush1.msra.mxu0 0.0
        %7589 = vmatprep.subr.mxu0 0.0
        %7590 = vmatpush1.msra.mxu0 0.0
        %7591 = vmatprep.subr.mxu0 0.0
        %7592 = vmatpush1.msra.mxu0 0.0
        %7593 = vmatprep.subr.mxu0 0.0
        %7594 = vmatpush1.msra.mxu0 0.0
        %7595 = vmatprep.subr.mxu0 0.0
        %7596 = vmatpush1.msra.mxu0 0.0
        %7597 = vmatprep.subr.mxu0 0.0
        %7598 = vmatpush1.msra.mxu0 0.0
        %7599 = vmatprep.subr.mxu0 0.0
        %7600 = vmatpush1.msra.mxu0 0.0
        %7601 = vmatprep.subr.mxu0 0.0
        %7602 = vmatpush1.msra.mxu0 0.0
        %7603 = vmatprep.subr.mxu0 0.0
        %7604 = vmatpush1.msra.mxu0 0.0
        %7605 = vmatprep.subr.mxu0 0.0
        %7606 = vmatpush1.msra.mxu0 0.0
        %7607 = vmatprep.subr.mxu0 0.0
        %7608 = vmatpush1.msra.mxu0 0.0
        %7609 = vmatprep.mubr.f32.mxu0 0.0
        %7610 = vmatmul.mubr.f32.gmra.mrb[0].mxu0 %v3271
        %v7611 = vpop.f32.mrb[0].mxu0
        %v7612 = vadd.f32 0.0, %v7611
        %v7613 = vpop.f32.mrb[0].mxu0
        %7614 = vmatprep.mubr.f32.mxu0 0.0
        %7615 = vmatmul.mubr.f32.gmra.mrb[0].mxu0 %v3274
        %v7616 = vpop.f32.mrb[0].mxu0
        %v7617 = vadd.f32 0.0, %v7616
        %v7618 = vpop.f32.mrb[0].mxu0
        %7619 = vdwg.mxu0
        %v7621 = vsel %vm1650, %v6807, 0
        %v7624 = vsel %vm1650, %v7087, 0
        %v7627 = vsel %vm1650, %v7092, 0
        %7629 = vmatprep.subr.mxu0 0.0
        %7630 = vmatpush1.xpose.msra.mxu0 %v7624
        %7631 = vmatprep.subr.mxu0 0.0
        %7632 = vmatpush1.xpose.msra.mxu0 %v7627
        %7633 = vmatprep.subr.mxu0 0.0
        %7634 = vmatpush1.xpose.msra.mxu0 0.0
        %7635 = vmatprep.subr.mxu0 0.0
        %7636 = vmatpush1.xpose.msra.mxu0 0.0
        %7637 = vmatprep.subr.mxu0 0.0
        %7638 = vmatpush1.xpose.msra.mxu0 0.0
        %7639 = vmatprep.subr.mxu0 0.0
        %7640 = vmatpush1.xpose.msra.mxu0 0.0
        %7641 = vmatprep.subr.mxu0 0.0
        %7642 = vmatpush1.xpose.msra.mxu0 0.0
        %7643 = vmatprep.subr.mxu0 0.0
        %7644 = vmatpush1.xpose.msra.mxu0 0.0
        %7645 = vmatprep.subr.mxu0 0.0
        %7646 = vmatpush1.xpose.msra.mxu0 0.0
        %7647 = vmatprep.subr.mxu0 0.0
        %7648 = vmatpush1.xpose.msra.mxu0 0.0
        %7649 = vmatprep.subr.mxu0 0.0
        %7650 = vmatpush1.xpose.msra.mxu0 0.0
        %7651 = vmatprep.subr.mxu0 0.0
        %7652 = vmatpush1.xpose.msra.mxu0 0.0
        %7653 = vmatprep.subr.mxu0 0.0
        %7654 = vmatpush1.xpose.msra.mxu0 0.0
        %7655 = vmatprep.subr.mxu0 0.0
        %7656 = vmatpush1.xpose.msra.mxu0 0.0
        %7657 = vmatprep.subr.mxu0 0.0
        %7658 = vmatpush1.xpose.msra.mxu0 0.0
        %7659 = vmatprep.subr.mxu0 0.0
        %7660 = vmatpush1.xpose.msra.mxu0 0.0
        %7661 = vmatprep.subr.mxu0 0.0
        %7662 = vmatpush1.xpose.msra.mxu0 0.0
        %7663 = vmatprep.subr.mxu0 0.0
        %7664 = vmatpush1.xpose.msra.mxu0 0.0
        %7665 = vmatprep.subr.mxu0 0.0
        %7666 = vmatpush1.xpose.msra.mxu0 0.0
        %7667 = vmatprep.subr.mxu0 0.0
        %7668 = vmatpush1.xpose.msra.mxu0 0.0
        %7669 = vmatprep.subr.mxu0 0.0
        %7670 = vmatpush1.xpose.msra.mxu0 0.0
        %7671 = vmatprep.subr.mxu0 0.0
        %7672 = vmatpush1.xpose.msra.mxu0 0.0
        %7673 = vmatprep.subr.mxu0 0.0
        %7674 = vmatpush1.xpose.msra.mxu0 0.0
        %7675 = vmatprep.subr.mxu0 0.0
        %7676 = vmatpush1.xpose.msra.mxu0 0.0
        %7677 = vmatprep.subr.mxu0 0.0
        %7678 = vmatpush1.xpose.msra.mxu0 0.0
        %7679 = vmatprep.subr.mxu0 0.0
        %7680 = vmatpush1.xpose.msra.mxu0 0.0
        %7681 = vmatprep.subr.mxu0 0.0
        %7682 = vmatpush1.xpose.msra.mxu0 0.0
        %7683 = vmatprep.subr.mxu0 0.0
        %7684 = vmatpush1.xpose.msra.mxu0 0.0
        %7685 = vmatprep.subr.mxu0 0.0
        %7686 = vmatpush1.xpose.msra.mxu0 0.0
        %7687 = vmatprep.subr.mxu0 0.0
        %7688 = vmatpush1.xpose.msra.mxu0 0.0
        %7689 = vmatprep.subr.mxu0 0.0
        %7690 = vmatpush1.xpose.msra.mxu0 0.0
        %7691 = vmatprep.subr.mxu0 0.0
        %7692 = vmatpush1.xpose.msra.mxu0 0.0
        %7693 = vmatprep.mubr.f32.mxu0 0.0
        %7694 = vmatmul.mubr.f32.gmra.mrb[0].mxu0 %v7621
        %v7695 = vpop.f32.mrb[0].mxu0
        %v7696 = vadd.f32 0.0, %v7695
        %v7697 = vpop.f32.mrb[0].mxu0
        %7698 = vdwg.mxu0
        %v7700 = vsel %vm1650, %v6877, 0
        %v7703 = vsel %vm1650, %v7162, 0
        %v7706 = vsel %vm1650, %v7167, 0
        %7708 = vmatprep.subr.mxu0 0.0
        %7709 = vmatpush1.xpose.msra.mxu0 %v7703
        %7710 = vmatprep.subr.mxu0 0.0
        %7711 = vmatpush1.xpose.msra.mxu0 %v7706
        %7712 = vmatprep.subr.mxu0 0.0
        %7713 = vmatpush1.xpose.msra.mxu0 0.0
        %7714 = vmatprep.subr.mxu0 0.0
        %7715 = vmatpush1.xpose.msra.mxu0 0.0
        %7716 = vmatprep.subr.mxu0 0.0
        %7717 = vmatpush1.xpose.msra.mxu0 0.0
        %7718 = vmatprep.subr.mxu0 0.0
        %7719 = vmatpush1.xpose.msra.mxu0 0.0
        %7720 = vmatprep.subr.mxu0 0.0
        %7721 = vmatpush1.xpose.msra.mxu0 0.0
        %7722 = vmatprep.subr.mxu0 0.0
        %7723 = vmatpush1.xpose.msra.mxu0 0.0
        %7724 = vmatprep.subr.mxu0 0.0
        %7725 = vmatpush1.xpose.msra.mxu0 0.0
        %7726 = vmatprep.subr.mxu0 0.0
        %7727 = vmatpush1.xpose.msra.mxu0 0.0
        %7728 = vmatprep.subr.mxu0 0.0
        %7729 = vmatpush1.xpose.msra.mxu0 0.0
        %7730 = vmatprep.subr.mxu0 0.0
        %7731 = vmatpush1.xpose.msra.mxu0 0.0
        %7732 = vmatprep.subr.mxu0 0.0
        %7733 = vmatpush1.xpose.msra.mxu0 0.0
        %7734 = vmatprep.subr.mxu0 0.0
        %7735 = vmatpush1.xpose.msra.mxu0 0.0
        %7736 = vmatprep.subr.mxu0 0.0
        %7737 = vmatpush1.xpose.msra.mxu0 0.0
        %7738 = vmatprep.subr.mxu0 0.0
        %7739 = vmatpush1.xpose.msra.mxu0 0.0
        %7740 = vmatprep.subr.mxu0 0.0
        %7741 = vmatpush1.xpose.msra.mxu0 0.0
        %7742 = vmatprep.subr.mxu0 0.0
        %7743 = vmatpush1.xpose.msra.mxu0 0.0
        %7744 = vmatprep.subr.mxu0 0.0
        %7745 = vmatpush1.xpose.msra.mxu0 0.0
        %7746 = vmatprep.subr.mxu0 0.0
        %7747 = vmatpush1.xpose.msra.mxu0 0.0
        %7748 = vmatprep.subr.mxu0 0.0
        %7749 = vmatpush1.xpose.msra.mxu0 0.0
        %7750 = vmatprep.subr.mxu0 0.0
        %7751 = vmatpush1.xpose.msra.mxu0 0.0
        %7752 = vmatprep.subr.mxu0 0.0
        %7753 = vmatpush1.xpose.msra.mxu0 0.0
        %7754 = vmatprep.subr.mxu0 0.0
        %7755 = vmatpush1.xpose.msra.mxu0 0.0
        %7756 = vmatprep.subr.mxu0 0.0
        %7757 = vmatpush1.xpose.msra.mxu0 0.0
        %7758 = vmatprep.subr.mxu0 0.0
        %7759 = vmatpush1.xpose.msra.mxu0 0.0
        %7760 = vmatprep.subr.mxu0 0.0
        %7761 = vmatpush1.xpose.msra.mxu0 0.0
        %7762 = vmatprep.subr.mxu0 0.0
        %7763 = vmatpush1.xpose.msra.mxu0 0.0
        %7764 = vmatprep.subr.mxu0 0.0
        %7765 = vmatpush1.xpose.msra.mxu0 0.0
        %7766 = vmatprep.subr.mxu0 0.0
        %7767 = vmatpush1.xpose.msra.mxu0 0.0
        %7768 = vmatprep.subr.mxu0 0.0
        %7769 = vmatpush1.xpose.msra.mxu0 0.0
        %7770 = vmatprep.subr.mxu0 0.0
        %7771 = vmatpush1.xpose.msra.mxu0 0.0
        %7772 = vmatprep.mubr.f32.mxu0 0.0
        %7773 = vmatmul.mubr.f32.gmra.mrb[0].mxu0 %v7700
        %v7774 = vpop.f32.mrb[0].mxu0
        %v7775 = vadd.f32 0.0, %v7774
        %v7776 = vpop.f32.mrb[0].mxu0
        %7777 = vdwg.mxu0
        %v7779 = vsel %vm1650, %v6947, 0
        %v7782 = vsel %vm1650, %v7237, 0
        %v7785 = vsel %vm1650, %v7242, 0
        %7787 = vmatprep.subr.mxu0 0.0
        %7788 = vmatpush1.xpose.msra.mxu0 %v7782
        %7789 = vmatprep.subr.mxu0 0.0
        %7790 = vmatpush1.xpose.msra.mxu0 %v7785
        %7791 = vmatprep.subr.mxu0 0.0
        %7792 = vmatpush1.xpose.msra.mxu0 0.0
        %7793 = vmatprep.subr.mxu0 0.0
        %7794 = vmatpush1.xpose.msra.mxu0 0.0
        %7795 = vmatprep.subr.mxu0 0.0
        %7796 = vmatpush1.xpose.msra.mxu0 0.0
        %7797 = vmatprep.subr.mxu0 0.0
        %7798 = vmatpush1.xpose.msra.mxu0 0.0
        %7799 = vmatprep.subr.mxu0 0.0
        %7800 = vmatpush1.xpose.msra.mxu0 0.0
        %7801 = vmatprep.subr.mxu0 0.0
        %7802 = vmatpush1.xpose.msra.mxu0 0.0
        %7803 = vmatprep.subr.mxu0 0.0
        %7804 = vmatpush1.xpose.msra.mxu0 0.0
        %7805 = vmatprep.subr.mxu0 0.0
        %7806 = vmatpush1.xpose.msra.mxu0 0.0
        %7807 = vmatprep.subr.mxu0 0.0
        %7808 = vmatpush1.xpose.msra.mxu0 0.0
        %7809 = vmatprep.subr.mxu0 0.0
        %7810 = vmatpush1.xpose.msra.mxu0 0.0
        %7811 = vmatprep.subr.mxu0 0.0
        %7812 = vmatpush1.xpose.msra.mxu0 0.0
        %7813 = vmatprep.subr.mxu0 0.0
        %7814 = vmatpush1.xpose.msra.mxu0 0.0
        %7815 = vmatprep.subr.mxu0 0.0
        %7816 = vmatpush1.xpose.msra.mxu0 0.0
        %7817 = vmatprep.subr.mxu0 0.0
        %7818 = vmatpush1.xpose.msra.mxu0 0.0
        %7819 = vmatprep.subr.mxu0 0.0
        %7820 = vmatpush1.xpose.msra.mxu0 0.0
        %7821 = vmatprep.subr.mxu0 0.0
        %7822 = vmatpush1.xpose.msra.mxu0 0.0
        %7823 = vmatprep.subr.mxu0 0.0
        %7824 = vmatpush1.xpose.msra.mxu0 0.0
        %7825 = vmatprep.subr.mxu0 0.0
        %7826 = vmatpush1.xpose.msra.mxu0 0.0
        %7827 = vmatprep.subr.mxu0 0.0
        %7828 = vmatpush1.xpose.msra.mxu0 0.0
        %7829 = vmatprep.subr.mxu0 0.0
        %7830 = vmatpush1.xpose.msra.mxu0 0.0
        %7831 = vmatprep.subr.mxu0 0.0
        %7832 = vmatpush1.xpose.msra.mxu0 0.0
        %7833 = vmatprep.subr.mxu0 0.0
        %7834 = vmatpush1.xpose.msra.mxu0 0.0
        %7835 = vmatprep.subr.mxu0 0.0
        %7836 = vmatpush1.xpose.msra.mxu0 0.0
        %7837 = vmatprep.subr.mxu0 0.0
        %7838 = vmatpush1.xpose.msra.mxu0 0.0
        %7839 = vmatprep.subr.mxu0 0.0
        %7840 = vmatpush1.xpose.msra.mxu0 0.0
        %7841 = vmatprep.subr.mxu0 0.0
        %7842 = vmatpush1.xpose.msra.mxu0 0.0
        %7843 = vmatprep.subr.mxu0 0.0
        %7844 = vmatpush1.xpose.msra.mxu0 0.0
        %7845 = vmatprep.subr.mxu0 0.0
        %7846 = vmatpush1.xpose.msra.mxu0 0.0
        %7847 = vmatprep.subr.mxu0 0.0
        %7848 = vmatpush1.xpose.msra.mxu0 0.0
        %7849 = vmatprep.subr.mxu0 0.0
        %7850 = vmatpush1.xpose.msra.mxu0 0.0
        %7851 = vmatprep.mubr.f32.mxu0 0.0
        %7852 = vmatmul.mubr.f32.gmra.mrb[0].mxu0 %v7779
        %v7853 = vpop.f32.mrb[0].mxu0
        %v7854 = vadd.f32 0.0, %v7853
        %v7855 = vpop.f32.mrb[0].mxu0
        %7856 = vdwg.mxu0
        %v7858 = vsel %vm1650, %v7017, 0
        %v7861 = vsel %vm1650, %v7312, 0
        %v7864 = vsel %vm1650, %v7317, 0
        %7866 = vmatprep.subr.mxu0 0.0
        %7867 = vmatpush1.xpose.msra.mxu0 %v7861
        %7868 = vmatprep.subr.mxu0 0.0
        %7869 = vmatpush1.xpose.msra.mxu0 %v7864
        %7870 = vmatprep.subr.mxu0 0.0
        %7871 = vmatpush1.xpose.msra.mxu0 0.0
        %7872 = vmatprep.subr.mxu0 0.0
        %7873 = vmatpush1.xpose.msra.mxu0 0.0
        %7874 = vmatprep.subr.mxu0 0.0
        %7875 = vmatpush1.xpose.msra.mxu0 0.0
        %7876 = vmatprep.subr.mxu0 0.0
        %7877 = vmatpush1.xpose.msra.mxu0 0.0
        %7878 = vmatprep.subr.mxu0 0.0
        %7879 = vmatpush1.xpose.msra.mxu0 0.0
        %7880 = vmatprep.subr.mxu0 0.0
        %7881 = vmatpush1.xpose.msra.mxu0 0.0
        %7882 = vmatprep.subr.mxu0 0.0
        %7883 = vmatpush1.xpose.msra.mxu0 0.0
        %7884 = vmatprep.subr.mxu0 0.0
        %7885 = vmatpush1.xpose.msra.mxu0 0.0
        %7886 = vmatprep.subr.mxu0 0.0
        %7887 = vmatpush1.xpose.msra.mxu0 0.0
        %7888 = vmatprep.subr.mxu0 0.0
        %7889 = vmatpush1.xpose.msra.mxu0 0.0
        %7890 = vmatprep.subr.mxu0 0.0
        %7891 = vmatpush1.xpose.msra.mxu0 0.0
        %7892 = vmatprep.subr.mxu0 0.0
        %7893 = vmatpush1.xpose.msra.mxu0 0.0
        %7894 = vmatprep.subr.mxu0 0.0
        %7895 = vmatpush1.xpose.msra.mxu0 0.0
        %7896 = vmatprep.subr.mxu0 0.0
        %7897 = vmatpush1.xpose.msra.mxu0 0.0
        %7898 = vmatprep.subr.mxu0 0.0
        %7899 = vmatpush1.xpose.msra.mxu0 0.0
        %7900 = vmatprep.subr.mxu0 0.0
        %7901 = vmatpush1.xpose.msra.mxu0 0.0
        %7902 = vmatprep.subr.mxu0 0.0
        %7903 = vmatpush1.xpose.msra.mxu0 0.0
        %7904 = vmatprep.subr.mxu0 0.0
        %7905 = vmatpush1.xpose.msra.mxu0 0.0
        %7906 = vmatprep.subr.mxu0 0.0
        %7907 = vmatpush1.xpose.msra.mxu0 0.0
        %7908 = vmatprep.subr.mxu0 0.0
        %7909 = vmatpush1.xpose.msra.mxu0 0.0
        %7910 = vmatprep.subr.mxu0 0.0
        %7911 = vmatpush1.xpose.msra.mxu0 0.0
        %7912 = vmatprep.subr.mxu0 0.0
        %7913 = vmatpush1.xpose.msra.mxu0 0.0
        %7914 = vmatprep.subr.mxu0 0.0
        %7915 = vmatpush1.xpose.msra.mxu0 0.0
        %7916 = vmatprep.subr.mxu0 0.0
        %7917 = vmatpush1.xpose.msra.mxu0 0.0
        %7918 = vmatprep.subr.mxu0 0.0
        %7919 = vmatpush1.xpose.msra.mxu0 0.0
        %7920 = vmatprep.subr.mxu0 0.0
        %7921 = vmatpush1.xpose.msra.mxu0 0.0
        %7922 = vmatprep.subr.mxu0 0.0
        %7923 = vmatpush1.xpose.msra.mxu0 0.0
        %7924 = vmatprep.subr.mxu0 0.0
        %7925 = vmatpush1.xpose.msra.mxu0 0.0
        %7926 = vmatprep.subr.mxu0 0.0
        %7927 = vmatpush1.xpose.msra.mxu0 0.0
        %7928 = vmatprep.subr.mxu0 0.0
        %7929 = vmatpush1.xpose.msra.mxu0 0.0
        %7930 = vmatprep.mubr.f32.mxu0 0.0
        %7931 = vmatmul.mubr.f32.gmra.mrb[0].mxu0 %v7858
        %v7932 = vpop.f32.mrb[0].mxu0
        %v7933 = vadd.f32 0.0, %v7932
        %v7934 = vpop.f32.mrb[0].mxu0
        %7935 = vdwg.mxu0
        %v7936 = vsel %vm3892, %v7696, -inf
        %7937 = vmax.xlane.f32.xlu0 %v7936
        %v7938 = vpop.xlane.xlu0 %7937
        %v7939 = vsel %vm3892, %v7775, -inf
        %7940 = vmax.xlane.f32.xlu0 %v7939
        %v7941 = vpop.xlane.xlu0 %7940
        %v7942 = vsel %vm3892, %v7854, -inf
        %7943 = vmax.xlane.f32.xlu0 %v7942
        %v7944 = vpop.xlane.xlu0 %7943
        %v7945 = vsel %vm3892, %v7933, -inf
        %7946 = vmax.xlane.f32.xlu0 %v7945
        %v7947 = vpop.xlane.xlu0 %7946
        %v7948 = vsub.f32 %v7696, %v7938
        %v7949 = vsub.f32 %v7775, %v7941
        %v7950 = vsub.f32 %v7854, %v7944
        %v7951 = vsub.f32 %v7933, %v7947
        %v7952 = vmul.f32 %v7948, 1.442695
        %v7953 = vpow.pop %v7952
        %v7954 = vmul.f32 %v7949, 1.442695
        %v7955 = vpow.pop %v7954
        %v7956 = vmul.f32 %v7950, 1.442695
        %v7957 = vpow.pop %v7956
        %v7958 = vmul.f32 %v7951, 1.442695
        %v7959 = vpow.pop %v7958
        %v7960 = vsel %vm3892, %v7953, 0.0
        %7961 = vadd.xlane.f32.xlu0 %v7960
        %v7962 = vpop.xlane.xlu0 %7961
        %v7963 = vsel %vm3892, %v7955, 0.0
        %7964 = vadd.xlane.f32.xlu0 %v7963
        %v7965 = vpop.xlane.xlu0 %7964
        %v7966 = vsel %vm3892, %v7957, 0.0
        %7967 = vadd.xlane.f32.xlu0 %v7966
        %v7968 = vpop.xlane.xlu0 %7967
        %v7969 = vsel %vm3892, %v7959, 0.0
        %7970 = vadd.xlane.f32.xlu0 %v7969
        %v7971 = vpop.xlane.xlu0 %7970
        %v7972 = vrcp.pop %v7962
        %v7973 = vrcp.pop %v7965
        %v7974 = vrcp.pop %v7968
        %v7975 = vrcp.pop %v7971
        %v7976 = vmul.f32 %v7953, %v7972
        %v7977 = vmul.f32 %v7955, %v7973
        %v7978 = vmul.f32 %v7957, %v7974
        %v7979 = vmul.f32 %v7959, %v7975
        %v7981 = vsel %vm3892, %v7976, 0
        %7983 = vmatprep.subr.mxu0 0.0
        %7984 = vmatpush1.msra.mxu0 %v7387
        %7985 = vmatprep.subr.mxu0 0.0
        %7986 = vmatpush1.msra.mxu0 %v7392
        %7987 = vmatprep.subr.mxu0 0.0
        %7988 = vmatpush1.msra.mxu0 0.0
        %7989 = vmatprep.subr.mxu0 0.0
        %7990 = vmatpush1.msra.mxu0 0.0
        %7991 = vmatprep.subr.mxu0 0.0
        %7992 = vmatpush1.msra.mxu0 0.0
        %7993 = vmatprep.subr.mxu0 0.0
        %7994 = vmatpush1.msra.mxu0 0.0
        %7995 = vmatprep.subr.mxu0 0.0
        %7996 = vmatpush1.msra.mxu0 0.0
        %7997 = vmatprep.subr.mxu0 0.0
        %7998 = vmatpush1.msra.mxu0 0.0
        %7999 = vmatprep.subr.mxu0 0.0
        %8000 = vmatpush1.msra.mxu0 0.0
        %8001 = vmatprep.subr.mxu0 0.0
        %8002 = vmatpush1.msra.mxu0 0.0
        %8003 = vmatprep.subr.mxu0 0.0
        %8004 = vmatpush1.msra.mxu0 0.0
        %8005 = vmatprep.subr.mxu0 0.0
        %8006 = vmatpush1.msra.mxu0 0.0
        %8007 = vmatprep.subr.mxu0 0.0
        %8008 = vmatpush1.msra.mxu0 0.0
        %8009 = vmatprep.subr.mxu0 0.0
        %8010 = vmatpush1.msra.mxu0 0.0
        %8011 = vmatprep.subr.mxu0 0.0
        %8012 = vmatpush1.msra.mxu0 0.0
        %8013 = vmatprep.subr.mxu0 0.0
        %8014 = vmatpush1.msra.mxu0 0.0
        %8015 = vmatprep.subr.mxu0 0.0
        %8016 = vmatpush1.msra.mxu0 0.0
        %8017 = vmatprep.subr.mxu0 0.0
        %8018 = vmatpush1.msra.mxu0 0.0
        %8019 = vmatprep.subr.mxu0 0.0
        %8020 = vmatpush1.msra.mxu0 0.0
        %8021 = vmatprep.subr.mxu0 0.0
        %8022 = vmatpush1.msra.mxu0 0.0
        %8023 = vmatprep.subr.mxu0 0.0
        %8024 = vmatpush1.msra.mxu0 0.0
        %8025 = vmatprep.subr.mxu0 0.0
        %8026 = vmatpush1.msra.mxu0 0.0
        %8027 = vmatprep.subr.mxu0 0.0
        %8028 = vmatpush1.msra.mxu0 0.0
        %8029 = vmatprep.subr.mxu0 0.0
        %8030 = vmatpush1.msra.mxu0 0.0
        %8031 = vmatprep.subr.mxu0 0.0
        %8032 = vmatpush1.msra.mxu0 0.0
        %8033 = vmatprep.subr.mxu0 0.0
        %8034 = vmatpush1.msra.mxu0 0.0
        %8035 = vmatprep.subr.mxu0 0.0
        %8036 = vmatpush1.msra.mxu0 0.0
        %8037 = vmatprep.subr.mxu0 0.0
        %8038 = vmatpush1.msra.mxu0 0.0
        %8039 = vmatprep.subr.mxu0 0.0
        %8040 = vmatpush1.msra.mxu0 0.0
        %8041 = vmatprep.subr.mxu0 0.0
        %8042 = vmatpush1.msra.mxu0 0.0
        %8043 = vmatprep.subr.mxu0 0.0
        %8044 = vmatpush1.msra.mxu0 0.0
        %8045 = vmatprep.subr.mxu0 0.0
        %8046 = vmatpush1.msra.mxu0 0.0
        %8047 = vmatprep.mubr.f32.mxu0 0.0
        %8048 = vmatmul.mubr.f32.gmra.mrb[0].mxu0 %v7981
        %v8049 = vpop.f32.mrb[0].mxu0
        %v8050 = vadd.f32 0.0, %v8049
        %v8051 = vpop.f32.mrb[0].mxu0
        %8052 = vdwg.mxu0
        %v8054 = vsel %vm3892, %v7977, 0
        %8056 = vmatprep.subr.mxu0 0.0
        %8057 = vmatpush1.msra.mxu0 %v7462
        %8058 = vmatprep.subr.mxu0 0.0
        %8059 = vmatpush1.msra.mxu0 %v7467
        %8060 = vmatprep.subr.mxu0 0.0
        %8061 = vmatpush1.msra.mxu0 0.0
        %8062 = vmatprep.subr.mxu0 0.0
        %8063 = vmatpush1.msra.mxu0 0.0
        %8064 = vmatprep.subr.mxu0 0.0
        %8065 = vmatpush1.msra.mxu0 0.0
        %8066 = vmatprep.subr.mxu0 0.0
        %8067 = vmatpush1.msra.mxu0 0.0
        %8068 = vmatprep.subr.mxu0 0.0
        %8069 = vmatpush1.msra.mxu0 0.0
        %8070 = vmatprep.subr.mxu0 0.0
        %8071 = vmatpush1.msra.mxu0 0.0
        %8072 = vmatprep.subr.mxu0 0.0
        %8073 = vmatpush1.msra.mxu0 0.0
        %8074 = vmatprep.subr.mxu0 0.0
        %8075 = vmatpush1.msra.mxu0 0.0
        %8076 = vmatprep.subr.mxu0 0.0
        %8077 = vmatpush1.msra.mxu0 0.0
        %8078 = vmatprep.subr.mxu0 0.0
        %8079 = vmatpush1.msra.mxu0 0.0
        %8080 = vmatprep.subr.mxu0 0.0
        %8081 = vmatpush1.msra.mxu0 0.0
        %8082 = vmatprep.subr.mxu0 0.0
        %8083 = vmatpush1.msra.mxu0 0.0
        %8084 = vmatprep.subr.mxu0 0.0
        %8085 = vmatpush1.msra.mxu0 0.0
        %8086 = vmatprep.subr.mxu0 0.0
        %8087 = vmatpush1.msra.mxu0 0.0
        %8088 = vmatprep.subr.mxu0 0.0
        %8089 = vmatpush1.msra.mxu0 0.0
        %8090 = vmatprep.subr.mxu0 0.0
        %8091 = vmatpush1.msra.mxu0 0.0
        %8092 = vmatprep.subr.mxu0 0.0
        %8093 = vmatpush1.msra.mxu0 0.0
        %8094 = vmatprep.subr.mxu0 0.0
        %8095 = vmatpush1.msra.mxu0 0.0
        %8096 = vmatprep.subr.mxu0 0.0
        %8097 = vmatpush1.msra.mxu0 0.0
        %8098 = vmatprep.subr.mxu0 0.0
        %8099 = vmatpush1.msra.mxu0 0.0
        %8100 = vmatprep.subr.mxu0 0.0
        %8101 = vmatpush1.msra.mxu0 0.0
        %8102 = vmatprep.subr.mxu0 0.0
        %8103 = vmatpush1.msra.mxu0 0.0
        %8104 = vmatprep.subr.mxu0 0.0
        %8105 = vmatpush1.msra.mxu0 0.0
        %8106 = vmatprep.subr.mxu0 0.0
        %8107 = vmatpush1.msra.mxu0 0.0
        %8108 = vmatprep.subr.mxu0 0.0
        %8109 = vmatpush1.msra.mxu0 0.0
        %8110 = vmatprep.subr.mxu0 0.0
        %8111 = vmatpush1.msra.mxu0 0.0
        %8112 = vmatprep.subr.mxu0 0.0
        %8113 = vmatpush1.msra.mxu0 0.0
        %8114 = vmatprep.subr.mxu0 0.0
        %8115 = vmatpush1.msra.mxu0 0.0
        %8116 = vmatprep.subr.mxu0 0.0
        %8117 = vmatpush1.msra.mxu0 0.0
        %8118 = vmatprep.subr.mxu0 0.0
        %8119 = vmatpush1.msra.mxu0 0.0
        %8120 = vmatprep.mubr.f32.mxu0 0.0
        %8121 = vmatmul.mubr.f32.gmra.mrb[0].mxu0 %v8054
        %v8122 = vpop.f32.mrb[0].mxu0
        %v8123 = vadd.f32 0.0, %v8122
        %v8124 = vpop.f32.mrb[0].mxu0
        %8125 = vdwg.mxu0
        %v8127 = vsel %vm3892, %v7978, 0
        %8129 = vmatprep.subr.mxu0 0.0
        %8130 = vmatpush1.msra.mxu0 %v7537
        %8131 = vmatprep.subr.mxu0 0.0
        %8132 = vmatpush1.msra.mxu0 %v7542
        %8133 = vmatprep.subr.mxu0 0.0
        %8134 = vmatpush1.msra.mxu0 0.0
        %8135 = vmatprep.subr.mxu0 0.0
        %8136 = vmatpush1.msra.mxu0 0.0
        %8137 = vmatprep.subr.mxu0 0.0
        %8138 = vmatpush1.msra.mxu0 0.0
        %8139 = vmatprep.subr.mxu0 0.0
        %8140 = vmatpush1.msra.mxu0 0.0
        %8141 = vmatprep.subr.mxu0 0.0
        %8142 = vmatpush1.msra.mxu0 0.0
        %8143 = vmatprep.subr.mxu0 0.0
        %8144 = vmatpush1.msra.mxu0 0.0
        %8145 = vmatprep.subr.mxu0 0.0
        %8146 = vmatpush1.msra.mxu0 0.0
        %8147 = vmatprep.subr.mxu0 0.0
        %8148 = vmatpush1.msra.mxu0 0.0
        %8149 = vmatprep.subr.mxu0 0.0
        %8150 = vmatpush1.msra.mxu0 0.0
        %8151 = vmatprep.subr.mxu0 0.0
        %8152 = vmatpush1.msra.mxu0 0.0
        %8153 = vmatprep.subr.mxu0 0.0
        %8154 = vmatpush1.msra.mxu0 0.0
        %8155 = vmatprep.subr.mxu0 0.0
        %8156 = vmatpush1.msra.mxu0 0.0
        %8157 = vmatprep.subr.mxu0 0.0
        %8158 = vmatpush1.msra.mxu0 0.0
        %8159 = vmatprep.subr.mxu0 0.0
        %8160 = vmatpush1.msra.mxu0 0.0
        %8161 = vmatprep.subr.mxu0 0.0
        %8162 = vmatpush1.msra.mxu0 0.0
        %8163 = vmatprep.subr.mxu0 0.0
        %8164 = vmatpush1.msra.mxu0 0.0
        %8165 = vmatprep.subr.mxu0 0.0
        %8166 = vmatpush1.msra.mxu0 0.0
        %8167 = vmatprep.subr.mxu0 0.0
        %8168 = vmatpush1.msra.mxu0 0.0
        %8169 = vmatprep.subr.mxu0 0.0
        %8170 = vmatpush1.msra.mxu0 0.0
        %8171 = vmatprep.subr.mxu0 0.0
        %8172 = vmatpush1.msra.mxu0 0.0
        %8173 = vmatprep.subr.mxu0 0.0
        %8174 = vmatpush1.msra.mxu0 0.0
        %8175 = vmatprep.subr.mxu0 0.0
        %8176 = vmatpush1.msra.mxu0 0.0
        %8177 = vmatprep.subr.mxu0 0.0
        %8178 = vmatpush1.msra.mxu0 0.0
        %8179 = vmatprep.subr.mxu0 0.0
        %8180 = vmatpush1.msra.mxu0 0.0
        %8181 = vmatprep.subr.mxu0 0.0
        %8182 = vmatpush1.msra.mxu0 0.0
        %8183 = vmatprep.subr.mxu0 0.0
        %8184 = vmatpush1.msra.mxu0 0.0
        %8185 = vmatprep.subr.mxu0 0.0
        %8186 = vmatpush1.msra.mxu0 0.0
        %8187 = vmatprep.subr.mxu0 0.0
        %8188 = vmatpush1.msra.mxu0 0.0
        %8189 = vmatprep.subr.mxu0 0.0
        %8190 = vmatpush1.msra.mxu0 0.0
        %8191 = vmatprep.subr.mxu0 0.0
        %8192 = vmatpush1.msra.mxu0 0.0
        %8193 = vmatprep.mubr.f32.mxu0 0.0
        %8194 = vmatmul.mubr.f32.gmra.mrb[0].mxu0 %v8127
        %v8195 = vpop.f32.mrb[0].mxu0
        %v8196 = vadd.f32 0.0, %v8195
        %v8197 = vpop.f32.mrb[0].mxu0
        %8198 = vdwg.mxu0
        %v8200 = vsel %vm3892, %v7979, 0
        %8202 = vmatprep.subr.mxu0 0.0
        %8203 = vmatpush1.msra.mxu0 %v7612
        %8204 = vmatprep.subr.mxu0 0.0
        %8205 = vmatpush1.msra.mxu0 %v7617
        %8206 = vmatprep.subr.mxu0 0.0
        %8207 = vmatpush1.msra.mxu0 0.0
        %8208 = vmatprep.subr.mxu0 0.0
        %8209 = vmatpush1.msra.mxu0 0.0
        %8210 = vmatprep.subr.mxu0 0.0
        %8211 = vmatpush1.msra.mxu0 0.0
        %8212 = vmatprep.subr.mxu0 0.0
        %8213 = vmatpush1.msra.mxu0 0.0
        %8214 = vmatprep.subr.mxu0 0.0
        %8215 = vmatpush1.msra.mxu0 0.0
        %8216 = vmatprep.subr.mxu0 0.0
        %8217 = vmatpush1.msra.mxu0 0.0
        %8218 = vmatprep.subr.mxu0 0.0
        %8219 = vmatpush1.msra.mxu0 0.0
        %8220 = vmatprep.subr.mxu0 0.0
        %8221 = vmatpush1.msra.mxu0 0.0
        %8222 = vmatprep.subr.mxu0 0.0
        %8223 = vmatpush1.msra.mxu0 0.0
        %8224 = vmatprep.subr.mxu0 0.0
        %8225 = vmatpush1.msra.mxu0 0.0
        %8226 = vmatprep.subr.mxu0 0.0
        %8227 = vmatpush1.msra.mxu0 0.0
        %8228 = vmatprep.subr.mxu0 0.0
        %8229 = vmatpush1.msra.mxu0 0.0
        %8230 = vmatprep.subr.mxu0 0.0
        %8231 = vmatpush1.msra.mxu0 0.0
        %8232 = vmatprep.subr.mxu0 0.0
        %8233 = vmatpush1.msra.mxu0 0.0
        %8234 = vmatprep.subr.mxu0 0.0
        %8235 = vmatpush1.msra.mxu0 0.0
        %8236 = vmatprep.subr.mxu0 0.0
        %8237 = vmatpush1.msra.mxu0 0.0
        %8238 = vmatprep.subr.mxu0 0.0
        %8239 = vmatpush1.msra.mxu0 0.0
        %8240 = vmatprep.subr.mxu0 0.0
        %8241 = vmatpush1.msra.mxu0 0.0
        %8242 = vmatprep.subr.mxu0 0.0
        %8243 = vmatpush1.msra.mxu0 0.0
        %8244 = vmatprep.subr.mxu0 0.0
        %8245 = vmatpush1.msra.mxu0 0.0
        %8246 = vmatprep.subr.mxu0 0.0
        %8247 = vmatpush1.msra.mxu0 0.0
        %8248 = vmatprep.subr.mxu0 0.0
        %8249 = vmatpush1.msra.mxu0 0.0
        %8250 = vmatprep.subr.mxu0 0.0
        %8251 = vmatpush1.msra.mxu0 0.0
        %8252 = vmatprep.subr.mxu0 0.0
        %8253 = vmatpush1.msra.mxu0 0.0
        %8254 = vmatprep.subr.mxu0 0.0
        %8255 = vmatpush1.msra.mxu0 0.0
        %8256 = vmatprep.subr.mxu0 0.0
        %8257 = vmatpush1.msra.mxu0 0.0
        %8258 = vmatprep.subr.mxu0 0.0
        %8259 = vmatpush1.msra.mxu0 0.0
        %8260 = vmatprep.subr.mxu0 0.0
        %8261 = vmatpush1.msra.mxu0 0.0
        %8262 = vmatprep.subr.mxu0 0.0
        %8263 = vmatpush1.msra.mxu0 0.0
        %8264 = vmatprep.subr.mxu0 0.0
        %8265 = vmatpush1.msra.mxu0 0.0
        %8266 = vmatprep.mubr.f32.mxu0 0.0
        %8267 = vmatmul.mubr.f32.gmra.mrb[0].mxu0 %v8200
        %v8268 = vpop.f32.mrb[0].mxu0
        %v8269 = vadd.f32 0.0, %v8268
        %v8270 = vpop.f32.mrb[0].mxu0
        %8271 = vdwg.mxu0
        %v8273 = vsel %vm1650, %v8050, 0
        %8275 = vmatprep.subr.mxu0 0.0
        %8276 = vmatpush1.msra.mxu0 %v6731
        %8277 = vmatprep.subr.mxu0 0.0
        %8278 = vmatpush1.msra.mxu0 0.0
        %8279 = vmatprep.subr.mxu0 0.0
        %8280 = vmatpush1.msra.mxu0 0.0
        %8281 = vmatprep.subr.mxu0 0.0
        %8282 = vmatpush1.msra.mxu0 0.0
        %8283 = vmatprep.subr.mxu0 0.0
        %8284 = vmatpush1.msra.mxu0 0.0
        %8285 = vmatprep.subr.mxu0 0.0
        %8286 = vmatpush1.msra.mxu0 0.0
        %8287 = vmatprep.subr.mxu0 0.0
        %8288 = vmatpush1.msra.mxu0 0.0
        %8289 = vmatprep.subr.mxu0 0.0
        %8290 = vmatpush1.msra.mxu0 0.0
        %8291 = vmatprep.subr.mxu0 0.0
        %8292 = vmatpush1.msra.mxu0 0.0
        %8293 = vmatprep.subr.mxu0 0.0
        %8294 = vmatpush1.msra.mxu0 0.0
        %8295 = vmatprep.subr.mxu0 0.0
        %8296 = vmatpush1.msra.mxu0 0.0
        %8297 = vmatprep.subr.mxu0 0.0
        %8298 = vmatpush1.msra.mxu0 0.0
        %8299 = vmatprep.subr.mxu0 0.0
        %8300 = vmatpush1.msra.mxu0 0.0
        %8301 = vmatprep.subr.mxu0 0.0
        %8302 = vmatpush1.msra.mxu0 0.0
        %8303 = vmatprep.subr.mxu0 0.0
        %8304 = vmatpush1.msra.mxu0 0.0
        %8305 = vmatprep.subr.mxu0 0.0
        %8306 = vmatpush1.msra.mxu0 0.0
        %8307 = vmatprep.subr.mxu0 0.0
        %8308 = vmatpush1.msra.mxu0 0.0
        %8309 = vmatprep.subr.mxu0 0.0
        %8310 = vmatpush1.msra.mxu0 0.0
        %8311 = vmatprep.subr.mxu0 0.0
        %8312 = vmatpush1.msra.mxu0 0.0
        %8313 = vmatprep.subr.mxu0 0.0
        %8314 = vmatpush1.msra.mxu0 0.0
        %8315 = vmatprep.subr.mxu0 0.0
        %8316 = vmatpush1.msra.mxu0 0.0
        %8317 = vmatprep.subr.mxu0 0.0
        %8318 = vmatpush1.msra.mxu0 0.0
        %8319 = vmatprep.subr.mxu0 0.0
        %8320 = vmatpush1.msra.mxu0 0.0
        %8321 = vmatprep.subr.mxu0 0.0
        %8322 = vmatpush1.msra.mxu0 0.0
        %8323 = vmatprep.subr.mxu0 0.0
        %8324 = vmatpush1.msra.mxu0 0.0
        %8325 = vmatprep.subr.mxu0 0.0
        %8326 = vmatpush1.msra.mxu0 0.0
        %8327 = vmatprep.subr.mxu0 0.0
        %8328 = vmatpush1.msra.mxu0 0.0
        %8329 = vmatprep.subr.mxu0 0.0
        %8330 = vmatpush1.msra.mxu0 0.0
        %8331 = vmatprep.subr.mxu0 0.0
        %8332 = vmatpush1.msra.mxu0 0.0
        %8333 = vmatprep.subr.mxu0 0.0
        %8334 = vmatpush1.msra.mxu0 0.0
        %8335 = vmatprep.subr.mxu0 0.0
        %8336 = vmatpush1.msra.mxu0 0.0
        %8337 = vmatprep.subr.mxu0 0.0
        %8338 = vmatpush1.msra.mxu0 0.0
        %8339 = vmatprep.mubr.f32.mxu0 0.0
        %8340 = vmatmul.mubr.f32.gmra.mrb[0].mxu0 %v8273
        %v8341 = vpop.f32.mrb[0].mxu0
        %v8342 = vadd.f32 0.0, %v8341
        %v8343 = vpop.f32.mrb[0].mxu0
        %8344 = vdwg.mxu0
        %v8346 = vsel %vm1650, %v8123, 0
        %8348 = vmatprep.subr.mxu0 0.0
        %8349 = vmatpush1.msra.mxu0 %v6732
        %8350 = vmatprep.subr.mxu0 0.0
        %8351 = vmatpush1.msra.mxu0 0.0
        %8352 = vmatprep.subr.mxu0 0.0
        %8353 = vmatpush1.msra.mxu0 0.0
        %8354 = vmatprep.subr.mxu0 0.0
        %8355 = vmatpush1.msra.mxu0 0.0
        %8356 = vmatprep.subr.mxu0 0.0
        %8357 = vmatpush1.msra.mxu0 0.0
        %8358 = vmatprep.subr.mxu0 0.0
        %8359 = vmatpush1.msra.mxu0 0.0
        %8360 = vmatprep.subr.mxu0 0.0
        %8361 = vmatpush1.msra.mxu0 0.0
        %8362 = vmatprep.subr.mxu0 0.0
        %8363 = vmatpush1.msra.mxu0 0.0
        %8364 = vmatprep.subr.mxu0 0.0
        %8365 = vmatpush1.msra.mxu0 0.0
        %8366 = vmatprep.subr.mxu0 0.0
        %8367 = vmatpush1.msra.mxu0 0.0
        %8368 = vmatprep.subr.mxu0 0.0
        %8369 = vmatpush1.msra.mxu0 0.0
        %8370 = vmatprep.subr.mxu0 0.0
        %8371 = vmatpush1.msra.mxu0 0.0
        %8372 = vmatprep.subr.mxu0 0.0
        %8373 = vmatpush1.msra.mxu0 0.0
        %8374 = vmatprep.subr.mxu0 0.0
        %8375 = vmatpush1.msra.mxu0 0.0
        %8376 = vmatprep.subr.mxu0 0.0
        %8377 = vmatpush1.msra.mxu0 0.0
        %8378 = vmatprep.subr.mxu0 0.0
        %8379 = vmatpush1.msra.mxu0 0.0
        %8380 = vmatprep.subr.mxu0 0.0
        %8381 = vmatpush1.msra.mxu0 0.0
        %8382 = vmatprep.subr.mxu0 0.0
        %8383 = vmatpush1.msra.mxu0 0.0
        %8384 = vmatprep.subr.mxu0 0.0
        %8385 = vmatpush1.msra.mxu0 0.0
        %8386 = vmatprep.subr.mxu0 0.0
        %8387 = vmatpush1.msra.mxu0 0.0
        %8388 = vmatprep.subr.mxu0 0.0
        %8389 = vmatpush1.msra.mxu0 0.0
        %8390 = vmatprep.subr.mxu0 0.0
        %8391 = vmatpush1.msra.mxu0 0.0
        %8392 = vmatprep.subr.mxu0 0.0
        %8393 = vmatpush1.msra.mxu0 0.0
        %8394 = vmatprep.subr.mxu0 0.0
        %8395 = vmatpush1.msra.mxu0 0.0
        %8396 = vmatprep.subr.mxu0 0.0
        %8397 = vmatpush1.msra.mxu0 0.0
        %8398 = vmatprep.subr.mxu0 0.0
        %8399 = vmatpush1.msra.mxu0 0.0
        %8400 = vmatprep.subr.mxu0 0.0
        %8401 = vmatpush1.msra.mxu0 0.0
        %8402 = vmatprep.subr.mxu0 0.0
        %8403 = vmatpush1.msra.mxu0 0.0
        %8404 = vmatprep.subr.mxu0 0.0
        %8405 = vmatpush1.msra.mxu0 0.0
        %8406 = vmatprep.subr.mxu0 0.0
        %8407 = vmatpush1.msra.mxu0 0.0
        %8408 = vmatprep.subr.mxu0 0.0
        %8409 = vmatpush1.msra.mxu0 0.0
        %8410 = vmatprep.subr.mxu0 0.0
        %8411 = vmatpush1.msra.mxu0 0.0
        %8412 = vmatprep.mubr.f32.mxu0 0.0
        %8413 = vmatmul.mubr.f32.gmra.mrb[0].mxu0 %v8346
        %v8414 = vpop.f32.mrb[0].mxu0
        %v8415 = vadd.f32 0.0, %v8414
        %v8416 = vpop.f32.mrb[0].mxu0
        %8417 = vdwg.mxu0
        %v8419 = vsel %vm1650, %v8196, 0
        %8421 = vmatprep.subr.mxu0 0.0
        %8422 = vmatpush1.msra.mxu0 %v6733
        %8423 = vmatprep.subr.mxu0 0.0
        %8424 = vmatpush1.msra.mxu0 0.0
        %8425 = vmatprep.subr.mxu0 0.0
        %8426 = vmatpush1.msra.mxu0 0.0
        %8427 = vmatprep.subr.mxu0 0.0
        %8428 = vmatpush1.msra.mxu0 0.0
        %8429 = vmatprep.subr.mxu0 0.0
        %8430 = vmatpush1.msra.mxu0 0.0
        %8431 = vmatprep.subr.mxu0 0.0
        %8432 = vmatpush1.msra.mxu0 0.0
        %8433 = vmatprep.subr.mxu0 0.0
        %8434 = vmatpush1.msra.mxu0 0.0
        %8435 = vmatprep.subr.mxu0 0.0
        %8436 = vmatpush1.msra.mxu0 0.0
        %8437 = vmatprep.subr.mxu0 0.0
        %8438 = vmatpush1.msra.mxu0 0.0
        %8439 = vmatprep.subr.mxu0 0.0
        %8440 = vmatpush1.msra.mxu0 0.0
        %8441 = vmatprep.subr.mxu0 0.0
        %8442 = vmatpush1.msra.mxu0 0.0
        %8443 = vmatprep.subr.mxu0 0.0
        %8444 = vmatpush1.msra.mxu0 0.0
        %8445 = vmatprep.subr.mxu0 0.0
        %8446 = vmatpush1.msra.mxu0 0.0
        %8447 = vmatprep.subr.mxu0 0.0
        %8448 = vmatpush1.msra.mxu0 0.0
        %8449 = vmatprep.subr.mxu0 0.0
        %8450 = vmatpush1.msra.mxu0 0.0
        %8451 = vmatprep.subr.mxu0 0.0
        %8452 = vmatpush1.msra.mxu0 0.0
        %8453 = vmatprep.subr.mxu0 0.0
        %8454 = vmatpush1.msra.mxu0 0.0
        %8455 = vmatprep.subr.mxu0 0.0
        %8456 = vmatpush1.msra.mxu0 0.0
        %8457 = vmatprep.subr.mxu0 0.0
        %8458 = vmatpush1.msra.mxu0 0.0
        %8459 = vmatprep.subr.mxu0 0.0
        %8460 = vmatpush1.msra.mxu0 0.0
        %8461 = vmatprep.subr.mxu0 0.0
        %8462 = vmatpush1.msra.mxu0 0.0
        %8463 = vmatprep.subr.mxu0 0.0
        %8464 = vmatpush1.msra.mxu0 0.0
        %8465 = vmatprep.subr.mxu0 0.0
        %8466 = vmatpush1.msra.mxu0 0.0
        %8467 = vmatprep.subr.mxu0 0.0
        %8468 = vmatpush1.msra.mxu0 0.0
        %8469 = vmatprep.subr.mxu0 0.0
        %8470 = vmatpush1.msra.mxu0 0.0
        %8471 = vmatprep.subr.mxu0 0.0
        %8472 = vmatpush1.msra.mxu0 0.0
        %8473 = vmatprep.subr.mxu0 0.0
        %8474 = vmatpush1.msra.mxu0 0.0
        %8475 = vmatprep.subr.mxu0 0.0
        %8476 = vmatpush1.msra.mxu0 0.0
        %8477 = vmatprep.subr.mxu0 0.0
        %8478 = vmatpush1.msra.mxu0 0.0
        %8479 = vmatprep.subr.mxu0 0.0
        %8480 = vmatpush1.msra.mxu0 0.0
        %8481 = vmatprep.subr.mxu0 0.0
        %8482 = vmatpush1.msra.mxu0 0.0
        %8483 = vmatprep.subr.mxu0 0.0
        %8484 = vmatpush1.msra.mxu0 0.0
        %8485 = vmatprep.mubr.f32.mxu0 0.0
        %8486 = vmatmul.mubr.f32.gmra.mrb[0].mxu0 %v8419
        %v8487 = vpop.f32.mrb[0].mxu0
        %v8488 = vadd.f32 0.0, %v8487
        %v8489 = vpop.f32.mrb[0].mxu0
        %8490 = vdwg.mxu0
        %v8492 = vsel %vm1650, %v8269, 0
        %8494 = vmatprep.subr.mxu0 0.0
        %8495 = vmatpush1.msra.mxu0 %v6734
        %8496 = vmatprep.subr.mxu0 0.0
        %8497 = vmatpush1.msra.mxu0 0.0
        %8498 = vmatprep.subr.mxu0 0.0
        %8499 = vmatpush1.msra.mxu0 0.0
        %8500 = vmatprep.subr.mxu0 0.0
        %8501 = vmatpush1.msra.mxu0 0.0
        %8502 = vmatprep.subr.mxu0 0.0
        %8503 = vmatpush1.msra.mxu0 0.0
        %8504 = vmatprep.subr.mxu0 0.0
        %8505 = vmatpush1.msra.mxu0 0.0
        %8506 = vmatprep.subr.mxu0 0.0
        %8507 = vmatpush1.msra.mxu0 0.0
        %8508 = vmatprep.subr.mxu0 0.0
        %8509 = vmatpush1.msra.mxu0 0.0
        %8510 = vmatprep.subr.mxu0 0.0
        %8511 = vmatpush1.msra.mxu0 0.0
        %8512 = vmatprep.subr.mxu0 0.0
        %8513 = vmatpush1.msra.mxu0 0.0
        %8514 = vmatprep.subr.mxu0 0.0
        %8515 = vmatpush1.msra.mxu0 0.0
        %8516 = vmatprep.subr.mxu0 0.0
        %8517 = vmatpush1.msra.mxu0 0.0
        %8518 = vmatprep.subr.mxu0 0.0
        %8519 = vmatpush1.msra.mxu0 0.0
        %8520 = vmatprep.subr.mxu0 0.0
        %8521 = vmatpush1.msra.mxu0 0.0
        %8522 = vmatprep.subr.mxu0 0.0
        %8523 = vmatpush1.msra.mxu0 0.0
        %8524 = vmatprep.subr.mxu0 0.0
        %8525 = vmatpush1.msra.mxu0 0.0
        %8526 = vmatprep.subr.mxu0 0.0
        %8527 = vmatpush1.msra.mxu0 0.0
        %8528 = vmatprep.subr.mxu0 0.0
        %8529 = vmatpush1.msra.mxu0 0.0
        %8530 = vmatprep.subr.mxu0 0.0
        %8531 = vmatpush1.msra.mxu0 0.0
        %8532 = vmatprep.subr.mxu0 0.0
        %8533 = vmatpush1.msra.mxu0 0.0
        %8534 = vmatprep.subr.mxu0 0.0
        %8535 = vmatpush1.msra.mxu0 0.0
        %8536 = vmatprep.subr.mxu0 0.0
        %8537 = vmatpush1.msra.mxu0 0.0
        %8538 = vmatprep.subr.mxu0 0.0
        %8539 = vmatpush1.msra.mxu0 0.0
        %8540 = vmatprep.subr.mxu0 0.0
        %8541 = vmatpush1.msra.mxu0 0.0
        %8542 = vmatprep.subr.mxu0 0.0
        %8543 = vmatpush1.msra.mxu0 0.0
        %8544 = vmatprep.subr.mxu0 0.0
        %8545 = vmatpush1.msra.mxu0 0.0
        %8546 = vmatprep.subr.mxu0 0.0
        %8547 = vmatpush1.msra.mxu0 0.0
        %8548 = vmatprep.subr.mxu0 0.0
        %8549 = vmatpush1.msra.mxu0 0.0
        %8550 = vmatprep.subr.mxu0 0.0
        %8551 = vmatpush1.msra.mxu0 0.0
        %8552 = vmatprep.subr.mxu0 0.0
        %8553 = vmatpush1.msra.mxu0 0.0
        %8554 = vmatprep.subr.mxu0 0.0
        %8555 = vmatpush1.msra.mxu0 0.0
        %8556 = vmatprep.subr.mxu0 0.0
        %8557 = vmatpush1.msra.mxu0 0.0
        %8558 = vmatprep.mubr.f32.mxu0 0.0
        %8559 = vmatmul.mubr.f32.gmra.mrb[0].mxu0 %v8492
        %v8560 = vpop.f32.mrb[0].mxu0
        %v8561 = vadd.f32 0.0, %v8560
        %v8562 = vpop.f32.mrb[0].mxu0
        %8563 = vdwg.mxu0
        %v8564 = vsel %vm806, %v8342, 0.0
        %v8565 = vsel %vm806, %v8415, 0.0
        %v8566 = vadd.f32 %v8564, %v8565
        %v8567 = vsel %vm806, %v8488, 0.0
        %v8568 = vadd.f32 %v8566, %v8567
        %v8569 = vsel %vm806, %v8561, 0.0
        %v8570 = vadd.f32 %v8568, %v8569
        %v8572 = vlaneseq
        %v8573 = vshrl.u32 %v8572, 7
        %v8574 = vsub.s32 0, %v8573
        %v8575 = vrot.slane %v6736, %v8574
        %v8577 = vadd.f32 %v8570, %v8575
        %v8578 = vadd.f32 %v6677, %v8577
        %s8579 = scalar_lea.vmem %s19, 1
        %v8580 = vld [vmem:[%s8579] sm:$0x1]
        %s8581 = scalar_lea.vmem %s20, 1
        %v8582 = vld [vmem:[%s8581] sm:$0x1]
        %v8583 = vsel %vm806, %v8578, 0.0
        %8584 = vadd.xlane.f32.xlu0 %v8583
        %v8585 = vpop.xlane.xlu0 %8584
        %v8586 = vmul.f32 %v8585, %v2602
        %v8587 = vsub.f32 %v8578, %v8586
        %v8588 = vmul.f32 %v8587, %v8587
        %v8589 = vsel %vm806, %v8588, 0.0
        %8590 = vadd.xlane.f32.xlu0 %v8589
        %v8591 = vpop.xlane.xlu0 %8590
        %v8592 = vmul.f32 %v8591, %v2602
        %v8593 = vadd.f32 %v8592, 1e-05
        %v8594 = vrsqrt.pop %v8593
        %v8595 = vmul.f32 %v8587, %v8594
        %v8597 = vlaneseq
        %v8598 = vshrl.u32 %v8597, 7
        %v8599 = vsub.s32 0, %v8598
        %v8600 = vrot.slane %v8580, %v8599
        %v8602 = vmul.f32 %v8595, %v8600
        %v8604 = vlaneseq
        %v8605 = vshrl.u32 %v8604, 7
        %v8606 = vsub.s32 0, %v8605
        %v8607 = vrot.slane %v8582, %v8606
        %v8609 = vadd.f32 %v8602, %v8607
        %s8610 = scalar_lea.vmem %s13, 32
        %v8611 = vld [vmem:[%s8610] sm:$0xff]
        %v8612 = vld [vmem:[%s8610 + $0x8] sm:$0xff]
        %v8613 = vld [vmem:[%s8610 + $0x10] sm:$0xff]
        %v8614 = vld [vmem:[%s8610 + $0x18] sm:$0xff]
        %s8615 = scalar_lea.vmem %s14, 1
        %v8616 = vld [vmem:[%s8615] sm:$0x1]
        %v8618 = vlaneseq
        %v8619 = vshrl.u32 %v8618, 7
        %v8620 = vsub.s32 0, %v8619
        %v8621 = vrot.slane %v8616, %v8620
        %v8624 = vsel %vm806, %v8609, 0
        %8626 = vmatprep.subr.mxu0 0.0
        %8627 = vmatpush1.msra.mxu0 %v8611
        %8628 = vmatprep.subr.mxu0 0.0
        %8629 = vmatpush1.msra.mxu0 %v8612
        %8630 = vmatprep.subr.mxu0 0.0
        %8631 = vmatpush1.msra.mxu0 %v8613
        %8632 = vmatprep.subr.mxu0 0.0
        %8633 = vmatpush1.msra.mxu0 %v8614
        %8634 = vmatprep.subr.mxu0 0.0
        %8635 = vmatpush1.msra.mxu0 0.0
        %8636 = vmatprep.subr.mxu0 0.0
        %8637 = vmatpush1.msra.mxu0 0.0
        %8638 = vmatprep.subr.mxu0 0.0
        %8639 = vmatpush1.msra.mxu0 0.0
        %8640 = vmatprep.subr.mxu0 0.0
        %8641 = vmatpush1.msra.mxu0 0.0
        %8642 = vmatprep.subr.mxu0 0.0
        %8643 = vmatpush1.msra.mxu0 0.0
        %8644 = vmatprep.subr.mxu0 0.0
        %8645 = vmatpush1.msra.mxu0 0.0
        %8646 = vmatprep.subr.mxu0 0.0
        %8647 = vmatpush1.msra.mxu0 0.0
        %8648 = vmatprep.subr.mxu0 0.0
        %8649 = vmatpush1.msra.mxu0 0.0
        %8650 = vmatprep.subr.mxu0 0.0
        %8651 = vmatpush1.msra.mxu0 0.0
        %8652 = vmatprep.subr.mxu0 0.0
        %8653 = vmatpush1.msra.mxu0 0.0
        %8654 = vmatprep.subr.mxu0 0.0
        %8655 = vmatpush1.msra.mxu0 0.0
        %8656 = vmatprep.subr.mxu0 0.0
        %8657 = vmatpush1.msra.mxu0 0.0
        %8658 = vmatprep.subr.mxu0 0.0
        %8659 = vmatpush1.msra.mxu0 0.0
        %8660 = vmatprep.subr.mxu0 0.0
        %8661 = vmatpush1.msra.mxu0 0.0
        %8662 = vmatprep.subr.mxu0 0.0
        %8663 = vmatpush1.msra.mxu0 0.0
        %8664 = vmatprep.subr.mxu0 0.0
        %8665 = vmatpush1.msra.mxu0 0.0
        %8666 = vmatprep.subr.mxu0 0.0
        %8667 = vmatpush1.msra.mxu0 0.0
        %8668 = vmatprep.subr.mxu0 0.0
        %8669 = vmatpush1.msra.mxu0 0.0
        %8670 = vmatprep.subr.mxu0 0.0
        %8671 = vmatpush1.msra.mxu0 0.0
        %8672 = vmatprep.subr.mxu0 0.0
        %8673 = vmatpush1.msra.mxu0 0.0
        %8674 = vmatprep.subr.mxu0 0.0
        %8675 = vmatpush1.msra.mxu0 0.0
        %8676 = vmatprep.subr.mxu0 0.0
        %8677 = vmatpush1.msra.mxu0 0.0
        %8678 = vmatprep.subr.mxu0 0.0
        %8679 = vmatpush1.msra.mxu0 0.0
        %8680 = vmatprep.subr.mxu0 0.0
        %8681 = vmatpush1.msra.mxu0 0.0
        %8682 = vmatprep.subr.mxu0 0.0
        %8683 = vmatpush1.msra.mxu0 0.0
        %8684 = vmatprep.subr.mxu0 0.0
        %8685 = vmatpush1.msra.mxu0 0.0
        %8686 = vmatprep.subr.mxu0 0.0
        %8687 = vmatpush1.msra.mxu0 0.0
        %8688 = vmatprep.subr.mxu0 0.0
        %8689 = vmatpush1.msra.mxu0 0.0
        %8690 = vmatprep.mubr.f32.mxu0 0.0
        %8691 = vmatmul.mubr.f32.gmra.mrb[0].mxu0 %v8624
        %v8692 = vpop.f32.mrb[0].mxu0
        %v8693 = vadd.f32 %v8621, %v8692
        %v8694 = vpop.f32.mrb[0].mxu0
        %8695 = vdwg.mxu0
        %v8696 = vmul.f32 %v8693, 0.5
        %v8697 = vmul.f32 %v8693, 0.70710677
        %vm8698 = vcmp.ge.f32.partialorder %v8697, 0.0
        %v8699 = vsel %vm8698, 1.0, -1.0
        %v8700 = vand.u32 2147483647, %v8697
        %v8701 = vmul.f32 %v8700, 0.3275911
        %v8702 = vadd.f32 %v8701, 1.0
        %v8703 = vrcp.pop %v8702
        %v8704 = vmul.f32 1.0, %v8703
        %v8705 = vmul.f32 %v8704, 1.0614054
        %v8706 = vadd.f32 %v8705, -1.4531521
        %v8707 = vmul.f32 %v8706, %v8704
        %v8708 = vadd.f32 %v8707, 1.4214138
        %v8709 = vmul.f32 %v8708, %v8704
        %v8710 = vadd.f32 %v8709, -0.28449672
        %v8711 = vmul.f32 %v8710, %v8704
        %v8712 = vadd.f32 %v8711, 0.2548296
        %v8713 = vmul.f32 %v8712, %v8704
        %v8714 = vsub.f32 0.0, %v8700
        %v8715 = vmul.f32 %v8714, %v8700
        %v8716 = vmul.f32 %v8715, 1.442695
        %v8717 = vpow.pop %v8716
        %v8718 = vmul.f32 %v8713, %v8717
        %v8719 = vsub.f32 1.0, %v8718
        %v8720 = vmul.f32 %v8699, %v8719
        %v8721 = vadd.f32 %v8720, 1.0
        %v8722 = vmul.f32 %v8696, %v8721
        %s8723 = scalar_lea.vmem %s15, 64
        %v8724 = vld [vmem:[%s8723] sm:$0xff]
        %v8725 = vld [vmem:[%s8723 + $0x8] sm:$0xff]
        %v8726 = vld [vmem:[%s8723 + $0x10] sm:$0xff]
        %v8727 = vld [vmem:[%s8723 + $0x18] sm:$0xff]
        %v8728 = vld [vmem:[%s8723 + $0x20] sm:$0xff]
        %v8729 = vld [vmem:[%s8723 + $0x28] sm:$0xff]
        %v8730 = vld [vmem:[%s8723 + $0x30] sm:$0xff]
        %v8731 = vld [vmem:[%s8723 + $0x38] sm:$0xff]
        %s8732 = scalar_lea.vmem %s16, 1
        %v8733 = vld [vmem:[%s8732] sm:$0x1]
        %v8735 = vlaneseq
        %v8736 = vshrl.u32 %v8735, 7
        %v8737 = vsub.s32 0, %v8736
        %v8738 = vrot.slane %v8733, %v8737
        %v8741 = vsel %vm4691, %v8722, 0
        %8743 = vmatprep.subr.mxu0 0.0
        %8744 = vmatpush1.msra.mxu0 %v8724
        %8745 = vmatprep.subr.mxu0 0.0
        %8746 = vmatpush1.msra.mxu0 %v8725
        %8747 = vmatprep.subr.mxu0 0.0
        %8748 = vmatpush1.msra.mxu0 %v8726
        %8749 = vmatprep.subr.mxu0 0.0
        %8750 = vmatpush1.msra.mxu0 %v8727
        %8751 = vmatprep.subr.mxu0 0.0
        %8752 = vmatpush1.msra.mxu0 %v8728
        %8753 = vmatprep.subr.mxu0 0.0
        %8754 = vmatpush1.msra.mxu0 %v8729
        %8755 = vmatprep.subr.mxu0 0.0
        %8756 = vmatpush1.msra.mxu0 %v8730
        %8757 = vmatprep.subr.mxu0 0.0
        %8758 = vmatpush1.msra.mxu0 %v8731
        %8759 = vmatprep.subr.mxu0 0.0
        %8760 = vmatpush1.msra.mxu0 0.0
        %8761 = vmatprep.subr.mxu0 0.0
        %8762 = vmatpush1.msra.mxu0 0.0
        %8763 = vmatprep.subr.mxu0 0.0
        %8764 = vmatpush1.msra.mxu0 0.0
        %8765 = vmatprep.subr.mxu0 0.0
        %8766 = vmatpush1.msra.mxu0 0.0
        %8767 = vmatprep.subr.mxu0 0.0
        %8768 = vmatpush1.msra.mxu0 0.0
        %8769 = vmatprep.subr.mxu0 0.0
        %8770 = vmatpush1.msra.mxu0 0.0
        %8771 = vmatprep.subr.mxu0 0.0
        %8772 = vmatpush1.msra.mxu0 0.0
        %8773 = vmatprep.subr.mxu0 0.0
        %8774 = vmatpush1.msra.mxu0 0.0
        %8775 = vmatprep.subr.mxu0 0.0
        %8776 = vmatpush1.msra.mxu0 0.0
        %8777 = vmatprep.subr.mxu0 0.0
        %8778 = vmatpush1.msra.mxu0 0.0
        %8779 = vmatprep.subr.mxu0 0.0
        %8780 = vmatpush1.msra.mxu0 0.0
        %8781 = vmatprep.subr.mxu0 0.0
        %8782 = vmatpush1.msra.mxu0 0.0
        %8783 = vmatprep.subr.mxu0 0.0
        %8784 = vmatpush1.msra.mxu0 0.0
        %8785 = vmatprep.subr.mxu0 0.0
        %8786 = vmatpush1.msra.mxu0 0.0
        %8787 = vmatprep.subr.mxu0 0.0
        %8788 = vmatpush1.msra.mxu0 0.0
        %8789 = vmatprep.subr.mxu0 0.0
        %8790 = vmatpush1.msra.mxu0 0.0
        %8791 = vmatprep.subr.mxu0 0.0
        %8792 = vmatpush1.msra.mxu0 0.0
        %8793 = vmatprep.subr.mxu0 0.0
        %8794 = vmatpush1.msra.mxu0 0.0
        %8795 = vmatprep.subr.mxu0 0.0
        %8796 = vmatpush1.msra.mxu0 0.0
        %8797 = vmatprep.subr.mxu0 0.0
        %8798 = vmatpush1.msra.mxu0 0.0
        %8799 = vmatprep.subr.mxu0 0.0
        %8800 = vmatpush1.msra.mxu0 0.0
        %8801 = vmatprep.subr.mxu0 0.0
        %8802 = vmatpush1.msra.mxu0 0.0
        %8803 = vmatprep.subr.mxu0 0.0
        %8804 = vmatpush1.msra.mxu0 0.0
        %8805 = vmatprep.subr.mxu0 0.0
        %8806 = vmatpush1.msra.mxu0 0.0
        %8807 = vmatprep.mubr.f32.mxu0 0.0
        %8808 = vmatmul.mubr.f32.gmra.mrb[0].mxu0 %v8741
        %v8809 = vpop.f32.mrb[0].mxu0
        %v8810 = vadd.f32 %v8738, %v8809
        %v8811 = vpop.f32.mrb[0].mxu0
        %8812 = vdwg.mxu0
        %v8813 = vadd.f32 %v8609, %v8810
        %s8814 = scalar_lea.vmem %s21, 1
        %v8815 = vld [vmem:[%s8814] sm:$0x1]
        %s8816 = scalar_lea.vmem %s22, 1
        %v8817 = vld [vmem:[%s8816] sm:$0x1]
        %v8818 = vsel %vm806, %v8813, 0.0
        %8819 = vadd.xlane.f32.xlu0 %v8818
        %v8820 = vpop.xlane.xlu0 %8819
        %v8821 = vmul.f32 %v8820, %v2602
        %v8822 = vsub.f32 %v8813, %v8821
        %v8823 = vmul.f32 %v8822, %v8822
        %v8824 = vsel %vm806, %v8823, 0.0
        %8825 = vadd.xlane.f32.xlu0 %v8824
        %v8826 = vpop.xlane.xlu0 %8825
        %v8827 = vmul.f32 %v8826, %v2602
        %v8828 = vadd.f32 %v8827, 1e-05
        %v8829 = vrsqrt.pop %v8828
        %v8830 = vmul.f32 %v8822, %v8829
        %v8832 = vlaneseq
        %v8833 = vshrl.u32 %v8832, 7
        %v8834 = vsub.s32 0, %v8833
        %v8835 = vrot.slane %v8815, %v8834
        %v8837 = vmul.f32 %v8830, %v8835
        %v8839 = vlaneseq
        %v8840 = vshrl.u32 %v8839, 7
        %v8841 = vsub.s32 0, %v8840
        %v8842 = vrot.slane %v8817, %v8841
        %v8844 = vadd.f32 %v8837, %v8842
        %8845 = vst.msk [vmem:[%s731] sm:$0xff] %vm806, %v8844
        %s8846 = sand.u32 %s543, 1
        %s8847 = scalar_lea.sflag [#allocation3], %s8846
        %s8848 = sand.u32 %s543, 1
        %s8849 = smul.addr %s8848, 8
        %s8850 = scalar_lea.vmem [#allocation2], %s8849
        // Predicated region
        $region113: #{transformer_decoder_forward.1} parent=111 // pred_check
          %p8851 = pneg %p553
        $region114: #{transformer_decoder_forward.1} parent=111 // pred_check_branch
          %8853 = sbr.rel (%p8851) target = $region116
        $region115: #{transformer_decoder_forward.1} parent=111 // pred_region
          %s8855 = ssub.s32 128, 128
          %8856 = vsyncadd %s8847, %s8855
          %s8857 = smul.addr %s37, 128
          %s8858 = scalar_lea.hbm %s23, %s8857
          %s8860 = sshll.u32 %s8850, 4
          %s8861 = int_to_ptr.vmem [resolvable:$true] %s8860
          %8863 = dma.vmem_to_hbm [thread:$0]  %s8861, 128, %s8858, %s8847
        $region116: #{transformer_decoder_forward.1} parent=111 // pred_fallthru
          _
      $region112: #{transformer_decoder_forward.1} parent=5 // pred_fallthru
        _
      %p8864 = scmp.le.s32.totalorder 2, %s32
      // Predicated region
      $region117: #{transformer_decoder_forward.1} parent=5 // pred_check
        %p8865 = pneg %p8864
      $region118: #{transformer_decoder_forward.1} parent=5 // pred_check_branch
        %8867 = sbr.rel (%p8865) target = $region120
      $region119: #{transformer_decoder_forward.1} parent=5 // pred_region
        %s8868 = ssub.s32 %s32, 2
        // Predicated region
        $region121: #{transformer_decoder_forward.1} parent=119 // pred_check
          %p8869 = pneg %p559
        $region122: #{transformer_decoder_forward.1} parent=119 // pred_check_branch
          %8871 = sbr.rel (%p8869) target = $region124
        $region123: #{transformer_decoder_forward.1} parent=119 // pred_region
          %s8872 = sand.u32 %s544, 1
          %s8873 = scalar_lea.sflag [#allocation3], %s8872
          %s8874 = sand.u32 %s544, 1
          %s8875 = smul.addr %s8874, 8
          %s8876 = scalar_lea.vmem [#allocation2], %s8875
          %8877 = dma.done %s8873, 128
        $region124: #{transformer_decoder_forward.1} parent=119 // pred_fallthru
          _
      $region120: #{transformer_decoder_forward.1} parent=5 // pred_fallthru
        _
    $region6: #{transformer_decoder_forward.1} parent=1 // loop_footer
      %s36 = sadd.s32 1, %s32
    $region7: #{transformer_decoder_forward.1} parent=1 // loop_footer_branch
      %31 = sbr.rel target = $region3
    $region8: #{transformer_decoder_forward.1} parent=1 // loop_exit
      _
    %8878 = vsyncpa [#allocation3], 1
    %s8879 = scalar_lea.sflag [#allocation3], 1
    %8880 = vsyncpa %s8879, 1

</llo_original>
